<compile_context>
chip_gen: v7x
topology: tpu7x:2x2x1
jax: 0.10.0
libtpu: 0.0.40
codegen_flags: <defaults>
</compile_context>

<pallas_src>
import functools

import jax
import jax.numpy as jnp
from jax.experimental import pallas as pl
from jax.experimental.pallas import tpu as pltpu

_EPS = 1e-5          # nn.InstanceNorm3d default
_NEG_SLOPE = 0.01    # nn.LeakyReLU default


# ---------------------------------------------------------------------------
# K1 / K3: 3x3x3 conv (input already zero-padded) + bias + per-(n,c) stats.
# ---------------------------------------------------------------------------
def _make_conv_stats_kernel(Cin, Cout, H, W):
    def kernel(x0_ref, x1_ref, x2_ref, w_ref, b_ref, y_ref, st_ref):
        planes = (x0_ref[0, 0], x1_ref[0, 0], x2_ref[0, 0])   # (H+2, W+2, Cin)
        acc = jnp.zeros((H * W, Cout), jnp.float32)
        for kd in range(3):
            for kh in range(3):
                rows = planes[kd][kh:kh + H]                  # (H, W+2, Cin)
                for kw in range(3):
                    patch = rows[:, kw:kw + W, :].reshape(H * W, Cin)
                    acc = acc + jnp.dot(
                        patch, w_ref[kd * 9 + kh * 3 + kw],
                        preferred_element_type=jnp.float32)
        y = acc + b_ref[0]                                    # (H*W, Cout)
        y_ref[...] = y.reshape(1, 1, H, W, Cout).astype(y_ref.dtype)

        @pl.when(pl.program_id(1) == 0)
        def _init():
            st_ref[...] = jnp.zeros_like(st_ref)

        s = jnp.sum(y, axis=0).reshape(1, Cout)
        ss = jnp.sum(y * y, axis=0).reshape(1, Cout)
        st_ref[...] += jnp.concatenate([s, ss], axis=0)[None]
    return kernel


def _conv3x3x3_stats(x_pad, w_r, b, out_dtype):
    """x_pad: (N, D+2, H+2, W+2, Cin); w_r: (27, Cin, Cout); b: (Cout,)."""
    N, Dp2, Hp2, Wp2, Cin = x_pad.shape
    D, H, W = Dp2 - 2, Hp2 - 2, Wp2 - 2
    Cout = w_r.shape[-1]
    kernel = _make_conv_stats_kernel(Cin, Cout, H, W)
    return pl.pallas_call(
        kernel,
        out_shape=(
            jax.ShapeDtypeStruct((N, D, H, W, Cout), out_dtype),
            jax.ShapeDtypeStruct((N, 2, Cout), jnp.float32),
        ),
        grid_spec=pltpu.PrefetchScalarGridSpec(
            num_scalar_prefetch=0,
            grid=(N, D),
            in_specs=[
                pl.BlockSpec((1, 1, Hp2, Wp2, Cin), lambda n, d: (n, d, 0, 0, 0)),
                pl.BlockSpec((1, 1, Hp2, Wp2, Cin), lambda n, d: (n, d + 1, 0, 0, 0)),
                pl.BlockSpec((1, 1, Hp2, Wp2, Cin), lambda n, d: (n, d + 2, 0, 0, 0)),
                pl.BlockSpec((27, Cin, Cout), lambda n, d: (0, 0, 0)),
                pl.BlockSpec((1, Cout), lambda n, d: (0, 0)),
            ],
            out_specs=(
                pl.BlockSpec((1, 1, H, W, Cout), lambda n, d: (n, d, 0, 0, 0)),
                pl.BlockSpec((1, 2, Cout), lambda n, d: (n, 0, 0)),
            ),
        ),
        compiler_params=pltpu.CompilerParams(
            dimension_semantics=("parallel", "arbitrary")),
    )(x_pad, x_pad, x_pad, w_r, b.reshape(1, Cout))


# ---------------------------------------------------------------------------
# K2: InstanceNorm affine + LeakyReLU, written straight into a zero-padded
#     (halo) buffer so conv2 can consume it without any wrapper jnp.pad pass.
# ---------------------------------------------------------------------------
def _make_normact_pad_kernel(D, H, W, neg_slope):
    def kernel(y_ref, sc_ref, sh_ref, o_ref):
        dp = pl.program_id(1)
        o_ref[...] = jnp.zeros_like(o_ref)

        @pl.when(jnp.logical_and(dp >= 1, dp <= D))
        def _interior():
            z = y_ref[0, 0] * sc_ref[0, 0] + sh_ref[0, 0]     # (H, W, C)
            z = jnp.where(z >= 0, z, neg_slope * z)
            o_ref[0, 0, 1:1 + H, 1:1 + W, :] = z.astype(o_ref.dtype)
    return kernel


def _normact_pad(y, scale, shift, neg_slope):
    """y: (N, D, H, W, C); scale/shift: (N, 1, C) ->
       zero-padded LeakyReLU(y*scale+shift), shape (N, D+2, H+2, W+2, C)."""
    N, D, H, W, C = y.shape
    kernel = _make_normact_pad_kernel(D, H, W, neg_slope)
    return pl.pallas_call(
        kernel,
        out_shape=jax.ShapeDtypeStruct((N, D + 2, H + 2, W + 2, C), y.dtype),
        grid_spec=pltpu.PrefetchScalarGridSpec(
            num_scalar_prefetch=0,
            grid=(N, D + 2),
            in_specs=[
                pl.BlockSpec(
                    (1, 1, H, W, C),
                    lambda n, dp: (n, jnp.minimum(jnp.maximum(dp - 1, 0), D - 1),
                                   0, 0, 0)),
                pl.BlockSpec((1, 1, C), lambda n, dp: (n, 0, 0)),
                pl.BlockSpec((1, 1, C), lambda n, dp: (n, 0, 0)),
            ],
            out_specs=pl.BlockSpec((1, 1, H + 2, W + 2, C),
                                   lambda n, dp: (n, dp, 0, 0, 0)),
        ),
        compiler_params=pltpu.CompilerParams(
            dimension_semantics=("parallel", "parallel")),
    )(y, scale, shift)


# ---------------------------------------------------------------------------
# K4: InstanceNorm2 affine + residual add (+ optional 1x1x1 conv3) + LeakyReLU.
# ---------------------------------------------------------------------------
def _make_final_kernel(H, W, Cin, Cout, neg_slope, use_1x1conv):
    if use_1x1conv:
        def kernel(y_ref, x_ref, sc_ref, sh_ref, w3_ref, b3_ref, o_ref):
            skip = jnp.dot(x_ref[0, 0].reshape(H * W, Cin), w3_ref[...],
                           preferred_element_type=jnp.float32) + b3_ref[0]
            z = y_ref[0, 0] * sc_ref[0, 0] + sh_ref[0, 0] + skip.reshape(H, W, Cout)
            o_ref[0, 0] = jnp.where(z >= 0, z, neg_slope * z).astype(o_ref.dtype)
    else:
        def kernel(y_ref, x_ref, sc_ref, sh_ref, o_ref):
            z = y_ref[0, 0] * sc_ref[0, 0] + sh_ref[0, 0] + x_ref[0, 0]
            o_ref[0, 0] = jnp.where(z >= 0, z, neg_slope * z).astype(o_ref.dtype)
    return kernel


def _final_fuse(y2, x_cl, scale2, shift2, neg_slope, w3=None, b3=None):
    N, D, H, W, Cout = y2.shape
    Cin = x_cl.shape[-1]
    use_1x1 = w3 is not None
    kernel = _make_final_kernel(H, W, Cin, Cout, neg_slope, use_1x1)
    in_specs = [
        pl.BlockSpec((1, 1, H, W, Cout), lambda n, d: (n, d, 0, 0, 0)),
        pl.BlockSpec((1, 1, H, W, Cin), lambda n, d: (n, d, 0, 0, 0)),
        pl.BlockSpec((1, 1, Cout), lambda n, d: (n, 0, 0)),
        pl.BlockSpec((1, 1, Cout), lambda n, d: (n, 0, 0)),
    ]
    args = [y2, x_cl, scale2, shift2]
    if use_1x1:
        in_specs.append(pl.BlockSpec((Cin, Cout), lambda n, d: (0, 0)))
        in_specs.append(pl.BlockSpec((1, Cout), lambda n, d: (0, 0)))
        args += [w3, b3.reshape(1, Cout)]
    return pl.pallas_call(
        kernel,
        out_shape=jax.ShapeDtypeStruct((N, D, H, W, Cout), y2.dtype),
        grid_spec=pltpu.PrefetchScalarGridSpec(
            num_scalar_prefetch=0,
            grid=(N, D),
            in_specs=in_specs,
            out_specs=pl.BlockSpec((1, 1, H, W, Cout),
                                   lambda n, d: (n, d, 0, 0, 0)),
        ),
        compiler_params=pltpu.CompilerParams(
            dimension_semantics=("parallel", "parallel")),
    )(*args)


def _affine_from_stats(stats, gamma, beta, count, eps):
    """stats: (N, 2, C) with [sum, sumsq] -> per-(n,c) scale/shift, (N,1,C)."""
    mean = stats[:, 0, :] / count
    var = jnp.maximum(stats[:, 1, :] / count - mean * mean, 0.0)
    scale = gamma[None, :] * jax.lax.rsqrt(var + eps)
    shift = beta[None, :] - mean * scale
    return scale[:, None, :], shift[:, None, :]


@functools.partial(jax.jit, static_argnames=("use_1x1conv",))
def basic_res_block_forward(x_ncdhw, params, use_1x1conv=False):
    """BasicResBlock forward.  x_ncdhw: (N, Cin, D, H, W) (PyTorch layout)."""
    # TODO(synk): stride != 1 (conv1/conv3) not implemented; module defaults
    # (kernel_size=3, padding=1, stride=1) are covered.
    N, Cin, D, H, W = x_ncdhw.shape
    Cout = params["conv1_w"].shape[0]
    count = float(D * H * W)

    x_cl = jnp.transpose(x_ncdhw, (0, 2, 3, 4, 1))              # (N, D, H, W, Cin)
    x_pad = jnp.pad(x_cl, ((0, 0), (1, 1), (1, 1), (1, 1), (0, 0)))

    w1_r = jnp.transpose(params["conv1_w"], (2, 3, 4, 1, 0)).reshape(27, Cin, Cout)
    w2_r = jnp.transpose(params["conv2_w"], (2, 3, 4, 1, 0)).reshape(27, Cout, Cout)

    # conv1 + InstanceNorm1 statistics (one fused pass)
    y1, st1 = _conv3x3x3_stats(x_pad, w1_r, params["conv1_b"], x_cl.dtype)
    sc1, sh1 = _affine_from_stats(st1, params["norm1_w"], params["norm1_b"],
                                  count, _EPS)
    # norm1 + LeakyReLU written directly into the halo-padded buffer for conv2
    z1_pad = _normact_pad(y1, sc1, sh1, _NEG_SLOPE)
    # conv2 + InstanceNorm2 statistics
    y2, st2 = _conv3x3x3_stats(z1_pad, w2_r, params["conv2_b"], x_cl.dtype)
    sc2, sh2 = _affine_from_stats(st2, params["norm2_w"], params["norm2_b"],
                                  count, _EPS)
    # norm2 + residual (+ optional fused 1x1x1 conv3 on skip) + LeakyReLU
    if use_1x1conv:
        w3_r = jnp.transpose(params["conv3_w"].reshape(Cout, Cin))   # (Cin, Cout)
        out_cl = _final_fuse(y2, x_cl, sc2, sh2, _NEG_SLOPE,
                             w3=w3_r, b3=params["conv3_b"])
    else:
        out_cl = _final_fuse(y2, x_cl, sc2, sh2, _NEG_SLOPE)
    return jnp.transpose(out_cl, (0, 4, 1, 2, 3))                # back to NCDHW


# ---------------------------------------------------------------------------
# Pure-JAX reference (matches PyTorch module semantics).
# ---------------------------------------------------------------------------
def _reference(x, params, use_1x1conv=False):
    def conv(x, w, b, pad):
        out = jax.lax.conv_general_dilated(
            x, w, window_strides=(1, 1, 1), padding=[(pad, pad)] * 3,
            dimension_numbers=("NCDHW", "OIDHW", "NCDHW"),
            precision=jax.lax.Precision.HIGHEST)
        return out + b[None, :, None, None, None]

    def inorm(x, g, b):
        m = jnp.mean(x, axis=(2, 3, 4), keepdims=True)
        v = jnp.var(x, axis=(2, 3, 4), keepdims=True)
        return ((x - m) * jax.lax.rsqrt(v + _EPS)
                * g[None, :, None, None, None] + b[None, :, None, None, None])

    def lrelu(x):
        return jnp.where(x >= 0, x, _NEG_SLOPE * x)

    y = conv(x, params["conv1_w"], params["conv1_b"], 1)
    y = lrelu(inorm(y, params["norm1_w"], params["norm1_b"]))
    y = inorm(conv(y, params["conv2_w"], params["conv2_b"], 1),
              params["norm2_w"], params["norm2_b"])
    skip = conv(x, params["conv3_w"], params["conv3_b"], 0) if use_1x1conv else x
    return lrelu(y + skip)


def _make_params(key, Cin, Cout, use_1x1conv):
    ks = jax.random.split(key, 10)
    p = {
        "conv1_w": 0.1 * jax.random.normal(ks[0], (Cout, Cin, 3, 3, 3), jnp.float32),
        "conv1_b": 0.1 * jax.random.normal(ks[1], (Cout,), jnp.float32),
        "norm1_w": 1.0 + 0.1 * jax.random.normal(ks[2], (Cout,), jnp.float32),
        "norm1_b": 0.1 * jax.random.normal(ks[3], (Cout,), jnp.float32),
        "conv2_w": 0.1 * jax.random.normal(ks[4], (Cout, Cout, 3, 3, 3), jnp.float32),
        "conv2_b": 0.1 * jax.random.normal(ks[5], (Cout,), jnp.float32),
        "norm2_w": 1.0 + 0.1 * jax.random.normal(ks[6], (Cout,), jnp.float32),
        "norm2_b": 0.1 * jax.random.normal(ks[7], (Cout,), jnp.float32),
    }
    if use_1x1conv:
        p["conv3_w"] = 0.1 * jax.random.normal(ks[8], (Cout, Cin, 1, 1, 1), jnp.float32)
        p["conv3_b"] = 0.1 * jax.random.normal(ks[9], (Cout,), jnp.float32)
    return p


if __name__ == "__main__":
    key = jax.random.PRNGKey(0)
    k_p1, k_x1, k_p2, k_x2 = jax.random.split(key, 4)

    # Case 1: module defaults (use_1x1conv=False -> identity skip, Cin == Cout)
    N, C, D, H, W = 2, 8, 4, 8, 16
    params1 = _make_params(k_p1, C, C, use_1x1conv=False)
    x1 = jax.random.normal(k_x1, (N, C, D, H, W), jnp.float32)
    out1 = jax.block_until_ready(basic_res_block_forward(x1, params1))
    ref1 = _reference(x1, params1)
    assert out1.shape == ref1.shape == (N, C, D, H, W)
    assert jnp.allclose(out1, ref1, atol=5e-3, rtol=5e-3), \
        float(jnp.max(jnp.abs(out1 - ref1)))

    # Case 2: use_1x1conv=True (projection skip, Cin != Cout), stride=1
    Cin2, Cout2 = 4, 8
    params2 = _make_params(k_p2, Cin2, Cout2, use_1x1conv=True)
    x2 = jax.random.normal(k_x2, (N, Cin2, D, H, W), jnp.float32)
    out2 = jax.block_until_ready(
        basic_res_block_forward(x2, params2, use_1x1conv=True))
    ref2 = _reference(x2, params2, use_1x1conv=True)
    assert out2.shape == ref2.shape == (N, Cout2, D, H, W)
    assert jnp.allclose(out2, ref2, atol=5e-3, rtol=5e-3), \
        float(jnp.max(jnp.abs(out2 - ref2)))

    print("KERNEL_OK")
</pallas_src>

<mosaic_0001>
module attributes {stable_mosaic.version = 11 : i64} {
  func.func @kernel(%arg0: i32, %arg1: i32, %arg2: memref<1x1x10x18x8xf32, #tpu.memory_space<vmem>>, %arg3: memref<1x1x10x18x8xf32, #tpu.memory_space<vmem>>, %arg4: memref<1x1x10x18x8xf32, #tpu.memory_space<vmem>>, %arg5: memref<27x8x8xf32, #tpu.memory_space<vmem>>, %arg6: memref<1x8xf32, #tpu.memory_space<vmem>>, %arg7: memref<1x1x8x16x8xf32, #tpu.memory_space<vmem>>, %arg8: memref<1x2x8xf32, #tpu.memory_space<vmem>>) attributes {dimension_semantics = [#tpu.dimension_semantics<parallel>, #tpu.dimension_semantics<arbitrary>], iteration_bounds = array<i64: 2, 4>, scalar_prefetch = 0 : i64, scratch_operands = 0 : i64, tpu.core_type = #tpu.core_type<tc>, window_params = [{transform_indices = @transform_0, window_bounds = array<i64: 1, 1, 10, 18, 8>}, {transform_indices = @transform_1, window_bounds = array<i64: 1, 1, 10, 18, 8>}, {transform_indices = @transform_2, window_bounds = array<i64: 1, 1, 10, 18, 8>}, {pipeline_mode = #tpu.pipeline_mode<synchronous>, transform_indices = @transform_3, window_bounds = array<i64: 27, 8, 8>}, {pipeline_mode = #tpu.pipeline_mode<synchronous>, transform_indices = @transform_4, window_bounds = array<i64: 1, 8>}, {transform_indices = @transform_5, window_bounds = array<i64: 1, 1, 8, 16, 8>}, {transform_indices = @transform_6, window_bounds = array<i64: 1, 2, 8>}]} {
    %c0 = arith.constant 0 : index
    %c0_0 = arith.constant 0 : index
    %c0_1 = arith.constant 0 : index
    %c0_2 = arith.constant 0 : index
    %c0_3 = arith.constant 0 : index
    %0 = vector.load %arg2[%c0, %c0_0, %c0_1, %c0_2, %c0_3] : memref<1x1x10x18x8xf32, #tpu.memory_space<vmem>>, vector<1x1x10x18x8xf32>
    %1 = vector.shape_cast %0 : vector<1x1x10x18x8xf32> to vector<10x18x8xf32>
    %c0_4 = arith.constant 0 : index
    %c0_5 = arith.constant 0 : index
    %c0_6 = arith.constant 0 : index
    %c0_7 = arith.constant 0 : index
    %c0_8 = arith.constant 0 : index
    %2 = vector.load %arg3[%c0_4, %c0_5, %c0_6, %c0_7, %c0_8] : memref<1x1x10x18x8xf32, #tpu.memory_space<vmem>>, vector<1x1x10x18x8xf32>
    %3 = vector.shape_cast %2 : vector<1x1x10x18x8xf32> to vector<10x18x8xf32>
    %c0_9 = arith.constant 0 : index
    %c0_10 = arith.constant 0 : index
    %c0_11 = arith.constant 0 : index
    %c0_12 = arith.constant 0 : index
    %c0_13 = arith.constant 0 : index
    %4 = vector.load %arg4[%c0_9, %c0_10, %c0_11, %c0_12, %c0_13] : memref<1x1x10x18x8xf32, #tpu.memory_space<vmem>>, vector<1x1x10x18x8xf32>
    %5 = vector.shape_cast %4 : vector<1x1x10x18x8xf32> to vector<10x18x8xf32>
    %cst = arith.constant 0.000000e+00 : f32
    %6 = vector.broadcast %cst : f32 to vector<128x8xf32>
    %7 = vector.extract_strided_slice %1 {offsets = [0, 0, 0], sizes = [8, 18, 8], strides = [1, 1, 1]} : vector<10x18x8xf32> to vector<8x18x8xf32>
    %8 = vector.extract_strided_slice %7 {offsets = [0, 0, 0], sizes = [8, 16, 8], strides = [1, 1, 1]} : vector<8x18x8xf32> to vector<8x16x8xf32>
    %9 = vector.shape_cast %8 : vector<8x16x8xf32> to vector<128x8xf32>
    %c0_14 = arith.constant 0 : index
    %c0_15 = arith.constant 0 : index
    %c0_16 = arith.constant 0 : index
    %10 = vector.load %arg5[%c0_14, %c0_15, %c0_16] : memref<27x8x8xf32, #tpu.memory_space<vmem>>, vector<1x8x8xf32>
    %11 = vector.shape_cast %10 : vector<1x8x8xf32> to vector<8x8xf32>
    %cst_17 = arith.constant dense<0.000000e+00> : vector<128x8xf32>
    %12 = tpu.matmul %9, %11, %cst_17 {dimension_numbers = #tpu.dot_dimension_numbers<[1], [0], [0], [1], [0, 0, 1, 1], [], []>} : vector<128x8xf32>, vector<8x8xf32>, vector<128x8xf32> -> vector<128x8xf32>
    %13 = arith.addf %6, %12 : vector<128x8xf32>
    %14 = vector.extract_strided_slice %7 {offsets = [0, 1, 0], sizes = [8, 16, 8], strides = [1, 1, 1]} : vector<8x18x8xf32> to vector<8x16x8xf32>
    %15 = vector.shape_cast %14 : vector<8x16x8xf32> to vector<128x8xf32>
    %c1 = arith.constant 1 : index
    %c0_18 = arith.constant 0 : index
    %c0_19 = arith.constant 0 : index
    %16 = vector.load %arg5[%c1, %c0_18, %c0_19] : memref<27x8x8xf32, #tpu.memory_space<vmem>>, vector<1x8x8xf32>
    %17 = vector.shape_cast %16 : vector<1x8x8xf32> to vector<8x8xf32>
    %cst_20 = arith.constant dense<0.000000e+00> : vector<128x8xf32>
    %18 = tpu.matmul %15, %17, %cst_20 {dimension_numbers = #tpu.dot_dimension_numbers<[1], [0], [0], [1], [0, 0, 1, 1], [], []>} : vector<128x8xf32>, vector<8x8xf32>, vector<128x8xf32> -> vector<128x8xf32>
    %19 = arith.addf %13, %18 : vector<128x8xf32>
    %20 = vector.extract_strided_slice %7 {offsets = [0, 2, 0], sizes = [8, 16, 8], strides = [1, 1, 1]} : vector<8x18x8xf32> to vector<8x16x8xf32>
    %21 = vector.shape_cast %20 : vector<8x16x8xf32> to vector<128x8xf32>
    %c2 = arith.constant 2 : index
    %c0_21 = arith.constant 0 : index
    %c0_22 = arith.constant 0 : index
    %22 = vector.load %arg5[%c2, %c0_21, %c0_22] : memref<27x8x8xf32, #tpu.memory_space<vmem>>, vector<1x8x8xf32>
    %23 = vector.shape_cast %22 : vector<1x8x8xf32> to vector<8x8xf32>
    %cst_23 = arith.constant dense<0.000000e+00> : vector<128x8xf32>
    %24 = tpu.matmul %21, %23, %cst_23 {dimension_numbers = #tpu.dot_dimension_numbers<[1], [0], [0], [1], [0, 0, 1, 1], [], []>} : vector<128x8xf32>, vector<8x8xf32>, vector<128x8xf32> -> vector<128x8xf32>
    %25 = arith.addf %19, %24 : vector<128x8xf32>
    %26 = vector.extract_strided_slice %1 {offsets = [1, 0, 0], sizes = [8, 18, 8], strides = [1, 1, 1]} : vector<10x18x8xf32> to vector<8x18x8xf32>
    %27 = vector.extract_strided_slice %26 {offsets = [0, 0, 0], sizes = [8, 16, 8], strides = [1, 1, 1]} : vector<8x18x8xf32> to vector<8x16x8xf32>
    %28 = vector.shape_cast %27 : vector<8x16x8xf32> to vector<128x8xf32>
    %c3 = arith.constant 3 : index
    %c0_24 = arith.constant 0 : index
    %c0_25 = arith.constant 0 : index
    %29 = vector.load %arg5[%c3, %c0_24, %c0_25] : memref<27x8x8xf32, #tpu.memory_space<vmem>>, vector<1x8x8xf32>
    %30 = vector.shape_cast %29 : vector<1x8x8xf32> to vector<8x8xf32>
    %cst_26 = arith.constant dense<0.000000e+00> : vector<128x8xf32>
    %31 = tpu.matmul %28, %30, %cst_26 {dimension_numbers = #tpu.dot_dimension_numbers<[1], [0], [0], [1], [0, 0, 1, 1], [], []>} : vector<128x8xf32>, vector<8x8xf32>, vector<128x8xf32> -> vector<128x8xf32>
    %32 = arith.addf %25, %31 : vector<128x8xf32>
    %33 = vector.extract_strided_slice %26 {offsets = [0, 1, 0], sizes = [8, 16, 8], strides = [1, 1, 1]} : vector<8x18x8xf32> to vector<8x16x8xf32>
    %34 = vector.shape_cast %33 : vector<8x16x8xf32> to vector<128x8xf32>
    %c4 = arith.constant 4 : index
    %c0_27 = arith.constant 0 : index
    %c0_28 = arith.constant 0 : index
    %35 = vector.load %arg5[%c4, %c0_27, %c0_28] : memref<27x8x8xf32, #tpu.memory_space<vmem>>, vector<1x8x8xf32>
    %36 = vector.shape_cast %35 : vector<1x8x8xf32> to vector<8x8xf32>
    %cst_29 = arith.constant dense<0.000000e+00> : vector<128x8xf32>
    %37 = tpu.matmul %34, %36, %cst_29 {dimension_numbers = #tpu.dot_dimension_numbers<[1], [0], [0], [1], [0, 0, 1, 1], [], []>} : vector<128x8xf32>, vector<8x8xf32>, vector<128x8xf32> -> vector<128x8xf32>
    %38 = arith.addf %32, %37 : vector<128x8xf32>
    %39 = vector.extract_strided_slice %26 {offsets = [0, 2, 0], sizes = [8, 16, 8], strides = [1, 1, 1]} : vector<8x18x8xf32> to vector<8x16x8xf32>
    %40 = vector.shape_cast %39 : vector<8x16x8xf32> to vector<128x8xf32>
    %c5 = arith.constant 5 : index
    %c0_30 = arith.constant 0 : index
    %c0_31 = arith.constant 0 : index
    %41 = vector.load %arg5[%c5, %c0_30, %c0_31] : memref<27x8x8xf32, #tpu.memory_space<vmem>>, vector<1x8x8xf32>
    %42 = vector.shape_cast %41 : vector<1x8x8xf32> to vector<8x8xf32>
    %cst_32 = arith.constant dense<0.000000e+00> : vector<128x8xf32>
    %43 = tpu.matmul %40, %42, %cst_32 {dimension_numbers = #tpu.dot_dimension_numbers<[1], [0], [0], [1], [0, 0, 1, 1], [], []>} : vector<128x8xf32>, vector<8x8xf32>, vector<128x8xf32> -> vector<128x8xf32>
    %44 = arith.addf %38, %43 : vector<128x8xf32>
    %45 = vector.extract_strided_slice %1 {offsets = [2, 0, 0], sizes = [8, 18, 8], strides = [1, 1, 1]} : vector<10x18x8xf32> to vector<8x18x8xf32>
    %46 = vector.extract_strided_slice %45 {offsets = [0, 0, 0], sizes = [8, 16, 8], strides = [1, 1, 1]} : vector<8x18x8xf32> to vector<8x16x8xf32>
    %47 = vector.shape_cast %46 : vector<8x16x8xf32> to vector<128x8xf32>
    %c6 = arith.constant 6 : index
    %c0_33 = arith.constant 0 : index
    %c0_34 = arith.constant 0 : index
    %48 = vector.load %arg5[%c6, %c0_33, %c0_34] : memref<27x8x8xf32, #tpu.memory_space<vmem>>, vector<1x8x8xf32>
    %49 = vector.shape_cast %48 : vector<1x8x8xf32> to vector<8x8xf32>
    %cst_35 = arith.constant dense<0.000000e+00> : vector<128x8xf32>
    %50 = tpu.matmul %47, %49, %cst_35 {dimension_numbers = #tpu.dot_dimension_numbers<[1], [0], [0], [1], [0, 0, 1, 1], [], []>} : vector<128x8xf32>, vector<8x8xf32>, vector<128x8xf32> -> vector<128x8xf32>
    %51 = arith.addf %44, %50 : vector<128x8xf32>
    %52 = vector.extract_strided_slice %45 {offsets = [0, 1, 0], sizes = [8, 16, 8], strides = [1, 1, 1]} : vector<8x18x8xf32> to vector<8x16x8xf32>
    %53 = vector.shape_cast %52 : vector<8x16x8xf32> to vector<128x8xf32>
    %c7 = arith.constant 7 : index
    %c0_36 = arith.constant 0 : index
    %c0_37 = arith.constant 0 : index
    %54 = vector.load %arg5[%c7, %c0_36, %c0_37] : memref<27x8x8xf32, #tpu.memory_space<vmem>>, vector<1x8x8xf32>
    %55 = vector.shape_cast %54 : vector<1x8x8xf32> to vector<8x8xf32>
    %cst_38 = arith.constant dense<0.000000e+00> : vector<128x8xf32>
    %56 = tpu.matmul %53, %55, %cst_38 {dimension_numbers = #tpu.dot_dimension_numbers<[1], [0], [0], [1], [0, 0, 1, 1], [], []>} : vector<128x8xf32>, vector<8x8xf32>, vector<128x8xf32> -> vector<128x8xf32>
    %57 = arith.addf %51, %56 : vector<128x8xf32>
    %58 = vector.extract_strided_slice %45 {offsets = [0, 2, 0], sizes = [8, 16, 8], strides = [1, 1, 1]} : vector<8x18x8xf32> to vector<8x16x8xf32>
    %59 = vector.shape_cast %58 : vector<8x16x8xf32> to vector<128x8xf32>
    %c8 = arith.constant 8 : index
    %c0_39 = arith.constant 0 : index
    %c0_40 = arith.constant 0 : index
    %60 = vector.load %arg5[%c8, %c0_39, %c0_40] : memref<27x8x8xf32, #tpu.memory_space<vmem>>, vector<1x8x8xf32>
    %61 = vector.shape_cast %60 : vector<1x8x8xf32> to vector<8x8xf32>
    %cst_41 = arith.constant dense<0.000000e+00> : vector<128x8xf32>
    %62 = tpu.matmul %59, %61, %cst_41 {dimension_numbers = #tpu.dot_dimension_numbers<[1], [0], [0], [1], [0, 0, 1, 1], [], []>} : vector<128x8xf32>, vector<8x8xf32>, vector<128x8xf32> -> vector<128x8xf32>
    %63 = arith.addf %57, %62 : vector<128x8xf32>
    %64 = vector.extract_strided_slice %3 {offsets = [0, 0, 0], sizes = [8, 18, 8], strides = [1, 1, 1]} : vector<10x18x8xf32> to vector<8x18x8xf32>
    %65 = vector.extract_strided_slice %64 {offsets = [0, 0, 0], sizes = [8, 16, 8], strides = [1, 1, 1]} : vector<8x18x8xf32> to vector<8x16x8xf32>
    %66 = vector.shape_cast %65 : vector<8x16x8xf32> to vector<128x8xf32>
    %c9 = arith.constant 9 : index
    %c0_42 = arith.constant 0 : index
    %c0_43 = arith.constant 0 : index
    %67 = vector.load %arg5[%c9, %c0_42, %c0_43] : memref<27x8x8xf32, #tpu.memory_space<vmem>>, vector<1x8x8xf32>
    %68 = vector.shape_cast %67 : vector<1x8x8xf32> to vector<8x8xf32>
    %cst_44 = arith.constant dense<0.000000e+00> : vector<128x8xf32>
    %69 = tpu.matmul %66, %68, %cst_44 {dimension_numbers = #tpu.dot_dimension_numbers<[1], [0], [0], [1], [0, 0, 1, 1], [], []>} : vector<128x8xf32>, vector<8x8xf32>, vector<128x8xf32> -> vector<128x8xf32>
    %70 = arith.addf %63, %69 : vector<128x8xf32>
    %71 = vector.extract_strided_slice %64 {offsets = [0, 1, 0], sizes = [8, 16, 8], strides = [1, 1, 1]} : vector<8x18x8xf32> to vector<8x16x8xf32>
    %72 = vector.shape_cast %71 : vector<8x16x8xf32> to vector<128x8xf32>
    %c10 = arith.constant 10 : index
    %c0_45 = arith.constant 0 : index
    %c0_46 = arith.constant 0 : index
    %73 = vector.load %arg5[%c10, %c0_45, %c0_46] : memref<27x8x8xf32, #tpu.memory_space<vmem>>, vector<1x8x8xf32>
    %74 = vector.shape_cast %73 : vector<1x8x8xf32> to vector<8x8xf32>
    %cst_47 = arith.constant dense<0.000000e+00> : vector<128x8xf32>
    %75 = tpu.matmul %72, %74, %cst_47 {dimension_numbers = #tpu.dot_dimension_numbers<[1], [0], [0], [1], [0, 0, 1, 1], [], []>} : vector<128x8xf32>, vector<8x8xf32>, vector<128x8xf32> -> vector<128x8xf32>
    %76 = arith.addf %70, %75 : vector<128x8xf32>
    %77 = vector.extract_strided_slice %64 {offsets = [0, 2, 0], sizes = [8, 16, 8], strides = [1, 1, 1]} : vector<8x18x8xf32> to vector<8x16x8xf32>
    %78 = vector.shape_cast %77 : vector<8x16x8xf32> to vector<128x8xf32>
    %c11 = arith.constant 11 : index
    %c0_48 = arith.constant 0 : index
    %c0_49 = arith.constant 0 : index
    %79 = vector.load %arg5[%c11, %c0_48, %c0_49] : memref<27x8x8xf32, #tpu.memory_space<vmem>>, vector<1x8x8xf32>
    %80 = vector.shape_cast %79 : vector<1x8x8xf32> to vector<8x8xf32>
    %cst_50 = arith.constant dense<0.000000e+00> : vector<128x8xf32>
    %81 = tpu.matmul %78, %80, %cst_50 {dimension_numbers = #tpu.dot_dimension_numbers<[1], [0], [0], [1], [0, 0, 1, 1], [], []>} : vector<128x8xf32>, vector<8x8xf32>, vector<128x8xf32> -> vector<128x8xf32>
    %82 = arith.addf %76, %81 : vector<128x8xf32>
    %83 = vector.extract_strided_slice %3 {offsets = [1, 0, 0], sizes = [8, 18, 8], strides = [1, 1, 1]} : vector<10x18x8xf32> to vector<8x18x8xf32>
    %84 = vector.extract_strided_slice %83 {offsets = [0, 0, 0], sizes = [8, 16, 8], strides = [1, 1, 1]} : vector<8x18x8xf32> to vector<8x16x8xf32>
    %85 = vector.shape_cast %84 : vector<8x16x8xf32> to vector<128x8xf32>
    %c12 = arith.constant 12 : index
    %c0_51 = arith.constant 0 : index
    %c0_52 = arith.constant 0 : index
    %86 = vector.load %arg5[%c12, %c0_51, %c0_52] : memref<27x8x8xf32, #tpu.memory_space<vmem>>, vector<1x8x8xf32>
    %87 = vector.shape_cast %86 : vector<1x8x8xf32> to vector<8x8xf32>
    %cst_53 = arith.constant dense<0.000000e+00> : vector<128x8xf32>
    %88 = tpu.matmul %85, %87, %cst_53 {dimension_numbers = #tpu.dot_dimension_numbers<[1], [0], [0], [1], [0, 0, 1, 1], [], []>} : vector<128x8xf32>, vector<8x8xf32>, vector<128x8xf32> -> vector<128x8xf32>
    %89 = arith.addf %82, %88 : vector<128x8xf32>
    %90 = vector.extract_strided_slice %83 {offsets = [0, 1, 0], sizes = [8, 16, 8], strides = [1, 1, 1]} : vector<8x18x8xf32> to vector<8x16x8xf32>
    %91 = vector.shape_cast %90 : vector<8x16x8xf32> to vector<128x8xf32>
    %c13 = arith.constant 13 : index
    %c0_54 = arith.constant 0 : index
    %c0_55 = arith.constant 0 : index
    %92 = vector.load %arg5[%c13, %c0_54, %c0_55] : memref<27x8x8xf32, #tpu.memory_space<vmem>>, vector<1x8x8xf32>
    %93 = vector.shape_cast %92 : vector<1x8x8xf32> to vector<8x8xf32>
    %cst_56 = arith.constant dense<0.000000e+00> : vector<128x8xf32>
    %94 = tpu.matmul %91, %93, %cst_56 {dimension_numbers = #tpu.dot_dimension_numbers<[1], [0], [0], [1], [0, 0, 1, 1], [], []>} : vector<128x8xf32>, vector<8x8xf32>, vector<128x8xf32> -> vector<128x8xf32>
    %95 = arith.addf %89, %94 : vector<128x8xf32>
    %96 = vector.extract_strided_slice %83 {offsets = [0, 2, 0], sizes = [8, 16, 8], strides = [1, 1, 1]} : vector<8x18x8xf32> to vector<8x16x8xf32>
    %97 = vector.shape_cast %96 : vector<8x16x8xf32> to vector<128x8xf32>
    %c14 = arith.constant 14 : index
    %c0_57 = arith.constant 0 : index
    %c0_58 = arith.constant 0 : index
    %98 = vector.load %arg5[%c14, %c0_57, %c0_58] : memref<27x8x8xf32, #tpu.memory_space<vmem>>, vector<1x8x8xf32>
    %99 = vector.shape_cast %98 : vector<1x8x8xf32> to vector<8x8xf32>
    %cst_59 = arith.constant dense<0.000000e+00> : vector<128x8xf32>
    %100 = tpu.matmul %97, %99, %cst_59 {dimension_numbers = #tpu.dot_dimension_numbers<[1], [0], [0], [1], [0, 0, 1, 1], [], []>} : vector<128x8xf32>, vector<8x8xf32>, vector<128x8xf32> -> vector<128x8xf32>
    %101 = arith.addf %95, %100 : vector<128x8xf32>
    %102 = vector.extract_strided_slice %3 {offsets = [2, 0, 0], sizes = [8, 18, 8], strides = [1, 1, 1]} : vector<10x18x8xf32> to vector<8x18x8xf32>
    %103 = vector.extract_strided_slice %102 {offsets = [0, 0, 0], sizes = [8, 16, 8], strides = [1, 1, 1]} : vector<8x18x8xf32> to vector<8x16x8xf32>
    %104 = vector.shape_cast %103 : vector<8x16x8xf32> to vector<128x8xf32>
    %c15 = arith.constant 15 : index
    %c0_60 = arith.constant 0 : index
    %c0_61 = arith.constant 0 : index
    %105 = vector.load %arg5[%c15, %c0_60, %c0_61] : memref<27x8x8xf32, #tpu.memory_space<vmem>>, vector<1x8x8xf32>
    %106 = vector.shape_cast %105 : vector<1x8x8xf32> to vector<8x8xf32>
    %cst_62 = arith.constant dense<0.000000e+00> : vector<128x8xf32>
    %107 = tpu.matmul %104, %106, %cst_62 {dimension_numbers = #tpu.dot_dimension_numbers<[1], [0], [0], [1], [0, 0, 1, 1], [], []>} : vector<128x8xf32>, vector<8x8xf32>, vector<128x8xf32> -> vector<128x8xf32>
    %108 = arith.addf %101, %107 : vector<128x8xf32>
    %109 = vector.extract_strided_slice %102 {offsets = [0, 1, 0], sizes = [8, 16, 8], strides = [1, 1, 1]} : vector<8x18x8xf32> to vector<8x16x8xf32>
    %110 = vector.shape_cast %109 : vector<8x16x8xf32> to vector<128x8xf32>
    %c16 = arith.constant 16 : index
    %c0_63 = arith.constant 0 : index
    %c0_64 = arith.constant 0 : index
    %111 = vector.load %arg5[%c16, %c0_63, %c0_64] : memref<27x8x8xf32, #tpu.memory_space<vmem>>, vector<1x8x8xf32>
    %112 = vector.shape_cast %111 : vector<1x8x8xf32> to vector<8x8xf32>
    %cst_65 = arith.constant dense<0.000000e+00> : vector<128x8xf32>
    %113 = tpu.matmul %110, %112, %cst_65 {dimension_numbers = #tpu.dot_dimension_numbers<[1], [0], [0], [1], [0, 0, 1, 1], [], []>} : vector<128x8xf32>, vector<8x8xf32>, vector<128x8xf32> -> vector<128x8xf32>
    %114 = arith.addf %108, %113 : vector<128x8xf32>
    %115 = vector.extract_strided_slice %102 {offsets = [0, 2, 0], sizes = [8, 16, 8], strides = [1, 1, 1]} : vector<8x18x8xf32> to vector<8x16x8xf32>
    %116 = vector.shape_cast %115 : vector<8x16x8xf32> to vector<128x8xf32>
    %c17 = arith.constant 17 : index
    %c0_66 = arith.constant 0 : index
    %c0_67 = arith.constant 0 : index
    %117 = vector.load %arg5[%c17, %c0_66, %c0_67] : memref<27x8x8xf32, #tpu.memory_space<vmem>>, vector<1x8x8xf32>
    %118 = vector.shape_cast %117 : vector<1x8x8xf32> to vector<8x8xf32>
    %cst_68 = arith.constant dense<0.000000e+00> : vector<128x8xf32>
    %119 = tpu.matmul %116, %118, %cst_68 {dimension_numbers = #tpu.dot_dimension_numbers<[1], [0], [0], [1], [0, 0, 1, 1], [], []>} : vector<128x8xf32>, vector<8x8xf32>, vector<128x8xf32> -> vector<128x8xf32>
    %120 = arith.addf %114, %119 : vector<128x8xf32>
    %121 = vector.extract_strided_slice %5 {offsets = [0, 0, 0], sizes = [8, 18, 8], strides = [1, 1, 1]} : vector<10x18x8xf32> to vector<8x18x8xf32>
    %122 = vector.extract_strided_slice %121 {offsets = [0, 0, 0], sizes = [8, 16, 8], strides = [1, 1, 1]} : vector<8x18x8xf32> to vector<8x16x8xf32>
    %123 = vector.shape_cast %122 : vector<8x16x8xf32> to vector<128x8xf32>
    %c18 = arith.constant 18 : index
    %c0_69 = arith.constant 0 : index
    %c0_70 = arith.constant 0 : index
    %124 = vector.load %arg5[%c18, %c0_69, %c0_70] : memref<27x8x8xf32, #tpu.memory_space<vmem>>, vector<1x8x8xf32>
    %125 = vector.shape_cast %124 : vector<1x8x8xf32> to vector<8x8xf32>
    %cst_71 = arith.constant dense<0.000000e+00> : vector<128x8xf32>
    %126 = tpu.matmul %123, %125, %cst_71 {dimension_numbers = #tpu.dot_dimension_numbers<[1], [0], [0], [1], [0, 0, 1, 1], [], []>} : vector<128x8xf32>, vector<8x8xf32>, vector<128x8xf32> -> vector<128x8xf32>
    %127 = arith.addf %120, %126 : vector<128x8xf32>
    %128 = vector.extract_strided_slice %121 {offsets = [0, 1, 0], sizes = [8, 16, 8], strides = [1, 1, 1]} : vector<8x18x8xf32> to vector<8x16x8xf32>
    %129 = vector.shape_cast %128 : vector<8x16x8xf32> to vector<128x8xf32>
    %c19 = arith.constant 19 : index
    %c0_72 = arith.constant 0 : index
    %c0_73 = arith.constant 0 : index
    %130 = vector.load %arg5[%c19, %c0_72, %c0_73] : memref<27x8x8xf32, #tpu.memory_space<vmem>>, vector<1x8x8xf32>
    %131 = vector.shape_cast %130 : vector<1x8x8xf32> to vector<8x8xf32>
    %cst_74 = arith.constant dense<0.000000e+00> : vector<128x8xf32>
    %132 = tpu.matmul %129, %131, %cst_74 {dimension_numbers = #tpu.dot_dimension_numbers<[1], [0], [0], [1], [0, 0, 1, 1], [], []>} : vector<128x8xf32>, vector<8x8xf32>, vector<128x8xf32> -> vector<128x8xf32>
    %133 = arith.addf %127, %132 : vector<128x8xf32>
    %134 = vector.extract_strided_slice %121 {offsets = [0, 2, 0], sizes = [8, 16, 8], strides = [1, 1, 1]} : vector<8x18x8xf32> to vector<8x16x8xf32>
    %135 = vector.shape_cast %134 : vector<8x16x8xf32> to vector<128x8xf32>
    %c20 = arith.constant 20 : index
    %c0_75 = arith.constant 0 : index
    %c0_76 = arith.constant 0 : index
    %136 = vector.load %arg5[%c20, %c0_75, %c0_76] : memref<27x8x8xf32, #tpu.memory_space<vmem>>, vector<1x8x8xf32>
    %137 = vector.shape_cast %136 : vector<1x8x8xf32> to vector<8x8xf32>
    %cst_77 = arith.constant dense<0.000000e+00> : vector<128x8xf32>
    %138 = tpu.matmul %135, %137, %cst_77 {dimension_numbers = #tpu.dot_dimension_numbers<[1], [0], [0], [1], [0, 0, 1, 1], [], []>} : vector<128x8xf32>, vector<8x8xf32>, vector<128x8xf32> -> vector<128x8xf32>
    %139 = arith.addf %133, %138 : vector<128x8xf32>
    %140 = vector.extract_strided_slice %5 {offsets = [1, 0, 0], sizes = [8, 18, 8], strides = [1, 1, 1]} : vector<10x18x8xf32> to vector<8x18x8xf32>
    %141 = vector.extract_strided_slice %140 {offsets = [0, 0, 0], sizes = [8, 16, 8], strides = [1, 1, 1]} : vector<8x18x8xf32> to vector<8x16x8xf32>
    %142 = vector.shape_cast %141 : vector<8x16x8xf32> to vector<128x8xf32>
    %c21 = arith.constant 21 : index
    %c0_78 = arith.constant 0 : index
    %c0_79 = arith.constant 0 : index
    %143 = vector.load %arg5[%c21, %c0_78, %c0_79] : memref<27x8x8xf32, #tpu.memory_space<vmem>>, vector<1x8x8xf32>
    %144 = vector.shape_cast %143 : vector<1x8x8xf32> to vector<8x8xf32>
    %cst_80 = arith.constant dense<0.000000e+00> : vector<128x8xf32>
    %145 = tpu.matmul %142, %144, %cst_80 {dimension_numbers = #tpu.dot_dimension_numbers<[1], [0], [0], [1], [0, 0, 1, 1], [], []>} : vector<128x8xf32>, vector<8x8xf32>, vector<128x8xf32> -> vector<128x8xf32>
    %146 = arith.addf %139, %145 : vector<128x8xf32>
    %147 = vector.extract_strided_slice %140 {offsets = [0, 1, 0], sizes = [8, 16, 8], strides = [1, 1, 1]} : vector<8x18x8xf32> to vector<8x16x8xf32>
    %148 = vector.shape_cast %147 : vector<8x16x8xf32> to vector<128x8xf32>
    %c22 = arith.constant 22 : index
    %c0_81 = arith.constant 0 : index
    %c0_82 = arith.constant 0 : index
    %149 = vector.load %arg5[%c22, %c0_81, %c0_82] : memref<27x8x8xf32, #tpu.memory_space<vmem>>, vector<1x8x8xf32>
    %150 = vector.shape_cast %149 : vector<1x8x8xf32> to vector<8x8xf32>
    %cst_83 = arith.constant dense<0.000000e+00> : vector<128x8xf32>
    %151 = tpu.matmul %148, %150, %cst_83 {dimension_numbers = #tpu.dot_dimension_numbers<[1], [0], [0], [1], [0, 0, 1, 1], [], []>} : vector<128x8xf32>, vector<8x8xf32>, vector<128x8xf32> -> vector<128x8xf32>
    %152 = arith.addf %146, %151 : vector<128x8xf32>
    %153 = vector.extract_strided_slice %140 {offsets = [0, 2, 0], sizes = [8, 16, 8], strides = [1, 1, 1]} : vector<8x18x8xf32> to vector<8x16x8xf32>
    %154 = vector.shape_cast %153 : vector<8x16x8xf32> to vector<128x8xf32>
    %c23 = arith.constant 23 : index
    %c0_84 = arith.constant 0 : index
    %c0_85 = arith.constant 0 : index
    %155 = vector.load %arg5[%c23, %c0_84, %c0_85] : memref<27x8x8xf32, #tpu.memory_space<vmem>>, vector<1x8x8xf32>
    %156 = vector.shape_cast %155 : vector<1x8x8xf32> to vector<8x8xf32>
    %cst_86 = arith.constant dense<0.000000e+00> : vector<128x8xf32>
    %157 = tpu.matmul %154, %156, %cst_86 {dimension_numbers = #tpu.dot_dimension_numbers<[1], [0], [0], [1], [0, 0, 1, 1], [], []>} : vector<128x8xf32>, vector<8x8xf32>, vector<128x8xf32> -> vector<128x8xf32>
    %158 = arith.addf %152, %157 : vector<128x8xf32>
    %159 = vector.extract_strided_slice %5 {offsets = [2, 0, 0], sizes = [8, 18, 8], strides = [1, 1, 1]} : vector<10x18x8xf32> to vector<8x18x8xf32>
    %160 = vector.extract_strided_slice %159 {offsets = [0, 0, 0], sizes = [8, 16, 8], strides = [1, 1, 1]} : vector<8x18x8xf32> to vector<8x16x8xf32>
    %161 = vector.shape_cast %160 : vector<8x16x8xf32> to vector<128x8xf32>
    %c24 = arith.constant 24 : index
    %c0_87 = arith.constant 0 : index
    %c0_88 = arith.constant 0 : index
    %162 = vector.load %arg5[%c24, %c0_87, %c0_88] : memref<27x8x8xf32, #tpu.memory_space<vmem>>, vector<1x8x8xf32>
    %163 = vector.shape_cast %162 : vector<1x8x8xf32> to vector<8x8xf32>
    %cst_89 = arith.constant dense<0.000000e+00> : vector<128x8xf32>
    %164 = tpu.matmul %161, %163, %cst_89 {dimension_numbers = #tpu.dot_dimension_numbers<[1], [0], [0], [1], [0, 0, 1, 1], [], []>} : vector<128x8xf32>, vector<8x8xf32>, vector<128x8xf32> -> vector<128x8xf32>
    %165 = arith.addf %158, %164 : vector<128x8xf32>
    %166 = vector.extract_strided_slice %159 {offsets = [0, 1, 0], sizes = [8, 16, 8], strides = [1, 1, 1]} : vector<8x18x8xf32> to vector<8x16x8xf32>
    %167 = vector.shape_cast %166 : vector<8x16x8xf32> to vector<128x8xf32>
    %c25 = arith.constant 25 : index
    %c0_90 = arith.constant 0 : index
    %c0_91 = arith.constant 0 : index
    %168 = vector.load %arg5[%c25, %c0_90, %c0_91] : memref<27x8x8xf32, #tpu.memory_space<vmem>>, vector<1x8x8xf32>
    %169 = vector.shape_cast %168 : vector<1x8x8xf32> to vector<8x8xf32>
    %cst_92 = arith.constant dense<0.000000e+00> : vector<128x8xf32>
    %170 = tpu.matmul %167, %169, %cst_92 {dimension_numbers = #tpu.dot_dimension_numbers<[1], [0], [0], [1], [0, 0, 1, 1], [], []>} : vector<128x8xf32>, vector<8x8xf32>, vector<128x8xf32> -> vector<128x8xf32>
    %171 = arith.addf %165, %170 : vector<128x8xf32>
    %172 = vector.extract_strided_slice %159 {offsets = [0, 2, 0], sizes = [8, 16, 8], strides = [1, 1, 1]} : vector<8x18x8xf32> to vector<8x16x8xf32>
    %173 = vector.shape_cast %172 : vector<8x16x8xf32> to vector<128x8xf32>
    %c26 = arith.constant 26 : index
    %c0_93 = arith.constant 0 : index
    %c0_94 = arith.constant 0 : index
    %174 = vector.load %arg5[%c26, %c0_93, %c0_94] : memref<27x8x8xf32, #tpu.memory_space<vmem>>, vector<1x8x8xf32>
    %175 = vector.shape_cast %174 : vector<1x8x8xf32> to vector<8x8xf32>
    %cst_95 = arith.constant dense<0.000000e+00> : vector<128x8xf32>
    %176 = tpu.matmul %173, %175, %cst_95 {dimension_numbers = #tpu.dot_dimension_numbers<[1], [0], [0], [1], [0, 0, 1, 1], [], []>} : vector<128x8xf32>, vector<8x8xf32>, vector<128x8xf32> -> vector<128x8xf32>
    %177 = arith.addf %171, %176 : vector<128x8xf32>
    %c0_96 = arith.constant 0 : index
    %c0_97 = arith.constant 0 : index
    %178 = vector.load %arg6[%c0_96, %c0_97] : memref<1x8xf32, #tpu.memory_space<vmem>>, vector<1x8xf32>
    %179 = vector.shape_cast %178 : vector<1x8xf32> to vector<8xf32>
    %180 = vector.shape_cast %179 : vector<8xf32> to vector<1x8xf32>
    %181 = vector.broadcast %180 : vector<1x8xf32> to vector<128x8xf32>
    %182 = arith.addf %177, %181 : vector<128x8xf32>
    %183 = vector.shape_cast %182 : vector<128x8xf32> to vector<1x1x8x16x8xf32>
    %c0_98 = arith.constant 0 : index
    %c0_99 = arith.constant 0 : index
    %c0_100 = arith.constant 0 : index
    %c0_101 = arith.constant 0 : index
    %c0_102 = arith.constant 0 : index
    %184 = vector.load %arg7[%c0_98, %c0_99, %c0_100, %c0_101, %c0_102] : memref<1x1x8x16x8xf32, #tpu.memory_space<vmem>>, vector<1x1x8x16x8xf32>
    tpu.vector_store %arg7[%c0_98, %c0_99, %c0_100, %c0_101, %c0_102], %183 {strides = array<i32>} : memref<1x1x8x16x8xf32, #tpu.memory_space<vmem>>, vector<1x1x8x16x8xf32>,
    %c0_i32 = arith.constant 0 : i32
    %185 = arith.cmpi eq, %arg1, %c0_i32 : i32
    %186 = arith.extui %185 : i1 to i32
    %c0_i32_103 = arith.constant 0 : i32
    %187 = arith.cmpi ne, %186, %c0_i32_103 : i32
    scf.if %187 {
      %cst_112 = arith.constant 0.000000e+00 : f32
      %198 = vector.broadcast %cst_112 : f32 to vector<1x2x8xf32>
      %c0_113 = arith.constant 0 : index
      %c0_114 = arith.constant 0 : index
      %c0_115 = arith.constant 0 : index
      %199 = vector.load %arg8[%c0_113, %c0_114, %c0_115] : memref<1x2x8xf32, #tpu.memory_space<vmem>>, vector<1x2x8xf32>
      tpu.vector_store %arg8[%c0_113, %c0_114, %c0_115], %198 {strides = array<i32>} : memref<1x2x8xf32, #tpu.memory_space<vmem>>, vector<1x2x8xf32>,
    } else {
    }
    %cst_104 = arith.constant dense<0.000000e+00> : vector<8xf32>
    %188 = vector.multi_reduction <add>, %182, %cst_104 [0] : vector<128x8xf32> to vector<8xf32>
    %189 = vector.shape_cast %188 : vector<8xf32> to vector<1x8xf32>
    %190 = arith.mulf %182, %182 : vector<128x8xf32>
    %cst_105 = arith.constant dense<0.000000e+00> : vector<8xf32>
    %191 = vector.multi_reduction <add>, %190, %cst_105 [0] : vector<128x8xf32> to vector<8xf32>
    %192 = vector.shape_cast %191 : vector<8xf32> to vector<1x8xf32>
    %c0_106 = arith.constant 0 : index
    %c0_107 = arith.constant 0 : index
    %c0_108 = arith.constant 0 : index
    %193 = vector.load %arg8[%c0_106, %c0_107, %c0_108] : memref<1x2x8xf32, #tpu.memory_space<vmem>>, vector<1x2x8xf32>
    %194 = tpu.concatenate %189, %192 in 0 : vector<1x8xf32>, vector<1x8xf32> -> vector<2x8xf32>
    %195 = vector.shape_cast %194 : vector<2x8xf32> to vector<1x2x8xf32>
    %196 = arith.addf %193, %195 : vector<1x2x8xf32>
    %c0_109 = arith.constant 0 : index
    %c0_110 = arith.constant 0 : index
    %c0_111 = arith.constant 0 : index
    %197 = vector.load %arg8[%c0_109, %c0_110, %c0_111] : memref<1x2x8xf32, #tpu.memory_space<vmem>>, vector<1x2x8xf32>
    tpu.vector_store %arg8[%c0_109, %c0_110, %c0_111], %196 {strides = array<i32>} : memref<1x2x8xf32, #tpu.memory_space<vmem>>, vector<1x2x8xf32>,
    return
  }
  func.func @transform_0(%arg0: i32, %arg1: i32) -> (i32, i32, i32, i32, i32) {
    %c0_i32 = arith.constant 0 : i32
    %c0_i32_0 = arith.constant 0 : i32
    %c0_i32_1 = arith.constant 0 : i32
    %c0_i32_2 = arith.constant 0 : i32
    return %arg0, %arg1, %c0_i32, %c0_i32_0, %c0_i32_1 : i32, i32, i32, i32, i32
  }
  func.func @transform_1(%arg0: i32, %arg1: i32) -> (i32, i32, i32, i32, i32) {
    %c1_i32 = arith.constant 1 : i32
    %0 = arith.addi %arg1, %c1_i32 : i32
    %c0_i32 = arith.constant 0 : i32
    %c0_i32_0 = arith.constant 0 : i32
    %c0_i32_1 = arith.constant 0 : i32
    %c0_i32_2 = arith.constant 0 : i32
    return %arg0, %0, %c0_i32, %c0_i32_0, %c0_i32_1 : i32, i32, i32, i32, i32
  }
  func.func @transform_2(%arg0: i32, %arg1: i32) -> (i32, i32, i32, i32, i32) {
    %c2_i32 = arith.constant 2 : i32
    %0 = arith.addi %arg1, %c2_i32 : i32
    %c0_i32 = arith.constant 0 : i32
    %c0_i32_0 = arith.constant 0 : i32
    %c0_i32_1 = arith.constant 0 : i32
    %c0_i32_2 = arith.constant 0 : i32
    return %arg0, %0, %c0_i32, %c0_i32_0, %c0_i32_1 : i32, i32, i32, i32, i32
  }
  func.func @transform_3(%arg0: i32, %arg1: i32) -> (i32, i32, i32) {
    %c0_i32 = arith.constant 0 : i32
    %c0_i32_0 = arith.constant 0 : i32
    %c0_i32_1 = arith.constant 0 : i32
    %c0_i32_2 = arith.constant 0 : i32
    return %c0_i32, %c0_i32_0, %c0_i32_1 : i32, i32, i32
  }
  func.func @transform_4(%arg0: i32, %arg1: i32) -> (i32, i32) {
    %c0_i32 = arith.constant 0 : i32
    %c0_i32_0 = arith.constant 0 : i32
    %c0_i32_1 = arith.constant 0 : i32
    return %c0_i32, %c0_i32_0 : i32, i32
  }
  func.func @transform_5(%arg0: i32, %arg1: i32) -> (i32, i32, i32, i32, i32) {
    %c0_i32 = arith.constant 0 : i32
    %c0_i32_0 = arith.constant 0 : i32
    %c0_i32_1 = arith.constant 0 : i32
    %c0_i32_2 = arith.constant 0 : i32
    return %arg0, %arg1, %c0_i32, %c0_i32_0, %c0_i32_1 : i32, i32, i32, i32, i32
  }
  func.func @transform_6(%arg0: i32, %arg1: i32) -> (i32, i32, i32) {
    %c0_i32 = arith.constant 0 : i32
    %c0_i32_0 = arith.constant 0 : i32
    %c0_i32_1 = arith.constant 0 : i32
    return %arg0, %c0_i32, %c0_i32_0 : i32, i32, i32
  }
}

module attributes {stable_mosaic.version = 11 : i64} {
  func.func @kernel(%arg0: i32, %arg1: i32, %arg2: memref<1x1x8x16x8xf32, #tpu.memory_space<vmem>>, %arg3: memref<1x1x8xf32, #tpu.memory_space<vmem>>, %arg4: memref<1x1x8xf32, #tpu.memory_space<vmem>>, %arg5: memref<1x1x10x18x8xf32, #tpu.memory_space<vmem>>) attributes {dimension_semantics = [#tpu.dimension_semantics<parallel>, #tpu.dimension_semantics<parallel>], iteration_bounds = array<i64: 2, 6>, scalar_prefetch = 0 : i64, scratch_operands = 0 : i64, tpu.core_type = #tpu.core_type<tc>, window_params = [{transform_indices = @transform_0, window_bounds = array<i64: 1, 1, 8, 16, 8>}, {transform_indices = @transform_1, window_bounds = array<i64: 1, 1, 8>}, {transform_indices = @transform_2, window_bounds = array<i64: 1, 1, 8>}, {transform_indices = @transform_3, window_bounds = array<i64: 1, 1, 10, 18, 8>}]} {
    %cst = arith.constant 0.000000e+00 : f32
    %0 = vector.broadcast %cst : f32 to vector<1x1x10x18x8xf32>
    %c0 = arith.constant 0 : index
    %c0_0 = arith.constant 0 : index
    %c0_1 = arith.constant 0 : index
    %c0_2 = arith.constant 0 : index
    %c0_3 = arith.constant 0 : index
    %1 = vector.load %arg5[%c0, %c0_0, %c0_1, %c0_2, %c0_3] : memref<1x1x10x18x8xf32, #tpu.memory_space<vmem>>, vector<1x1x10x18x8xf32>
    tpu.vector_store %arg5[%c0, %c0_0, %c0_1, %c0_2, %c0_3], %0 {strides = array<i32>} : memref<1x1x10x18x8xf32, #tpu.memory_space<vmem>>, vector<1x1x10x18x8xf32>,
    %c1_i32 = arith.constant 1 : i32
    %2 = arith.cmpi sge, %arg1, %c1_i32 : i32
    %c4_i32 = arith.constant 4 : i32
    %3 = arith.cmpi sle, %arg1, %c4_i32 : i32
    %4 = arith.andi %2, %3 : i1
    %5 = arith.extui %4 : i1 to i32
    %c0_i32 = arith.constant 0 : i32
    %6 = arith.cmpi ne, %5, %c0_i32 : i32
    scf.if %6 {
      %c0_4 = arith.constant 0 : index
      %c0_5 = arith.constant 0 : index
      %c0_6 = arith.constant 0 : index
      %c0_7 = arith.constant 0 : index
      %c0_8 = arith.constant 0 : index
      %7 = vector.load %arg2[%c0_4, %c0_5, %c0_6, %c0_7, %c0_8] : memref<1x1x8x16x8xf32, #tpu.memory_space<vmem>>, vector<1x1x8x16x8xf32>
      %8 = vector.shape_cast %7 : vector<1x1x8x16x8xf32> to vector<8x16x8xf32>
      %c0_9 = arith.constant 0 : index
      %c0_10 = arith.constant 0 : index
      %c0_11 = arith.constant 0 : index
      %9 = vector.load %arg3[%c0_9, %c0_10, %c0_11] : memref<1x1x8xf32, #tpu.memory_space<vmem>>, vector<1x1x8xf32>
      %10 = vector.shape_cast %9 : vector<1x1x8xf32> to vector<8xf32>
      %11 = vector.shape_cast %10 : vector<8xf32> to vector<1x1x8xf32>
      %12 = vector.broadcast %11 : vector<1x1x8xf32> to vector<8x16x8xf32>
      %13 = arith.mulf %8, %12 : vector<8x16x8xf32>
      %c0_12 = arith.constant 0 : index
      %c0_13 = arith.constant 0 : index
      %c0_14 = arith.constant 0 : index
      %14 = vector.load %arg4[%c0_12, %c0_13, %c0_14] : memref<1x1x8xf32, #tpu.memory_space<vmem>>, vector<1x1x8xf32>
      %15 = vector.shape_cast %14 : vector<1x1x8xf32> to vector<8xf32>
      %16 = vector.shape_cast %15 : vector<8xf32> to vector<1x1x8xf32>
      %17 = vector.broadcast %16 : vector<1x1x8xf32> to vector<8x16x8xf32>
      %18 = arith.addf %13, %17 : vector<8x16x8xf32>
      %cst_15 = arith.constant 0.000000e+00 : f32
      %19 = vector.broadcast %cst_15 : f32 to vector<8x16x8xf32>
      %20 = arith.cmpf oge, %18, %19 : vector<8x16x8xf32>
      %cst_16 = arith.constant 0.00999999977 : f32
      %21 = vector.broadcast %cst_16 : f32 to vector<8x16x8xf32>
      %22 = arith.mulf %21, %18 : vector<8x16x8xf32>
      %23 = arith.select %20, %18, %22 : vector<8x16x8xi1>, vector<8x16x8xf32>
      %c0_17 = arith.constant 0 : index
      %c0_18 = arith.constant 0 : index
      %c1 = arith.constant 1 : index
      %c1_19 = arith.constant 1 : index
      %c0_20 = arith.constant 0 : index
      %24 = vector.load %arg5[%c0_17, %c0_18, %c1, %c1_19, %c0_20] : memref<1x1x10x18x8xf32, #tpu.memory_space<vmem>>, vector<1x1x8x16x8xf32>
      %25 = vector.shape_cast %24 : vector<1x1x8x16x8xf32> to vector<8x16x8xf32>
      %26 = vector.shape_cast %23 : vector<8x16x8xf32> to vector<1x1x8x16x8xf32>
      tpu.vector_store %arg5[%c0_17, %c0_18, %c1, %c1_19, %c0_20], %26 {strides = array<i32>} : memref<1x1x10x18x8xf32, #tpu.memory_space<vmem>>, vector<1x1x8x16x8xf32>,
    } else {
    }
    return
  }
  func.func @transform_0(%arg0: i32, %arg1: i32) -> (i32, i32, i32, i32, i32) {
    %c1_i32 = arith.constant 1 : i32
    %0 = arith.subi %arg1, %c1_i32 : i32
    %c0_i32 = arith.constant 0 : i32
    %1 = arith.maxsi %0, %c0_i32 : i32
    %c3_i32 = arith.constant 3 : i32
    %2 = arith.minsi %1, %c3_i32 : i32
    %c0_i32_0 = arith.constant 0 : i32
    %c0_i32_1 = arith.constant 0 : i32
    %c0_i32_2 = arith.constant 0 : i32
    %c0_i32_3 = arith.constant 0 : i32
    return %arg0, %2, %c0_i32_0, %c0_i32_1, %c0_i32_2 : i32, i32, i32, i32, i32
  }
  func.func @transform_1(%arg0: i32, %arg1: i32) -> (i32, i32, i32) {
    %c0_i32 = arith.constant 0 : i32
    %c0_i32_0 = arith.constant 0 : i32
    %c0_i32_1 = arith.constant 0 : i32
    return %arg0, %c0_i32, %c0_i32_0 : i32, i32, i32
  }
  func.func @transform_2(%arg0: i32, %arg1: i32) -> (i32, i32, i32) {
    %c0_i32 = arith.constant 0 : i32
    %c0_i32_0 = arith.constant 0 : i32
    %c0_i32_1 = arith.constant 0 : i32
    return %arg0, %c0_i32, %c0_i32_0 : i32, i32, i32
  }
  func.func @transform_3(%arg0: i32, %arg1: i32) -> (i32, i32, i32, i32, i32) {
    %c0_i32 = arith.constant 0 : i32
    %c0_i32_0 = arith.constant 0 : i32
    %c0_i32_1 = arith.constant 0 : i32
    %c0_i32_2 = arith.constant 0 : i32
    return %arg0, %arg1, %c0_i32, %c0_i32_0, %c0_i32_1 : i32, i32, i32, i32, i32
  }
}

module attributes {stable_mosaic.version = 11 : i64} {
  func.func @kernel(%arg0: i32, %arg1: i32, %arg2: memref<1x1x8x16x8xf32, #tpu.memory_space<vmem>>, %arg3: memref<1x1x8x16x8xf32, #tpu.memory_space<vmem>>, %arg4: memref<1x1x8xf32, #tpu.memory_space<vmem>>, %arg5: memref<1x1x8xf32, #tpu.memory_space<vmem>>, %arg6: memref<1x1x8x16x8xf32, #tpu.memory_space<vmem>>) attributes {dimension_semantics = [#tpu.dimension_semantics<parallel>, #tpu.dimension_semantics<parallel>], iteration_bounds = array<i64: 2, 4>, scalar_prefetch = 0 : i64, scratch_operands = 0 : i64, tpu.core_type = #tpu.core_type<tc>, window_params = [{transform_indices = @transform_0, window_bounds = array<i64: 1, 1, 8, 16, 8>}, {transform_indices = @transform_1, window_bounds = array<i64: 1, 1, 8, 16, 8>}, {transform_indices = @transform_2, window_bounds = array<i64: 1, 1, 8>}, {transform_indices = @transform_3, window_bounds = array<i64: 1, 1, 8>}, {transform_indices = @transform_4, window_bounds = array<i64: 1, 1, 8, 16, 8>}]} {
    %c0 = arith.constant 0 : index
    %c0_0 = arith.constant 0 : index
    %c0_1 = arith.constant 0 : index
    %c0_2 = arith.constant 0 : index
    %c0_3 = arith.constant 0 : index
    %0 = vector.load %arg2[%c0, %c0_0, %c0_1, %c0_2, %c0_3] : memref<1x1x8x16x8xf32, #tpu.memory_space<vmem>>, vector<1x1x8x16x8xf32>
    %1 = vector.shape_cast %0 : vector<1x1x8x16x8xf32> to vector<8x16x8xf32>
    %c0_4 = arith.constant 0 : index
    %c0_5 = arith.constant 0 : index
    %c0_6 = arith.constant 0 : index
    %2 = vector.load %arg4[%c0_4, %c0_5, %c0_6] : memref<1x1x8xf32, #tpu.memory_space<vmem>>, vector<1x1x8xf32>
    %3 = vector.shape_cast %2 : vector<1x1x8xf32> to vector<8xf32>
    %4 = vector.shape_cast %3 : vector<8xf32> to vector<1x1x8xf32>
    %5 = vector.broadcast %4 : vector<1x1x8xf32> to vector<8x16x8xf32>
    %6 = arith.mulf %1, %5 : vector<8x16x8xf32>
    %c0_7 = arith.constant 0 : index
    %c0_8 = arith.constant 0 : index
    %c0_9 = arith.constant 0 : index
    %7 = vector.load %arg5[%c0_7, %c0_8, %c0_9] : memref<1x1x8xf32, #tpu.memory_space<vmem>>, vector<1x1x8xf32>
    %8 = vector.shape_cast %7 : vector<1x1x8xf32> to vector<8xf32>
    %9 = vector.shape_cast %8 : vector<8xf32> to vector<1x1x8xf32>
    %10 = vector.broadcast %9 : vector<1x1x8xf32> to vector<8x16x8xf32>
    %11 = arith.addf %6, %10 : vector<8x16x8xf32>
    %c0_10 = arith.constant 0 : index
    %c0_11 = arith.constant 0 : index
    %c0_12 = arith.constant 0 : index
    %c0_13 = arith.constant 0 : index
    %c0_14 = arith.constant 0 : index
    %12 = vector.load %arg3[%c0_10, %c0_11, %c0_12, %c0_13, %c0_14] : memref<1x1x8x16x8xf32, #tpu.memory_space<vmem>>, vector<1x1x8x16x8xf32>
    %13 = vector.shape_cast %12 : vector<1x1x8x16x8xf32> to vector<8x16x8xf32>
    %14 = arith.addf %11, %13 : vector<8x16x8xf32>
    %cst = arith.constant 0.000000e+00 : f32
    %15 = vector.broadcast %cst : f32 to vector<8x16x8xf32>
    %16 = arith.cmpf oge, %14, %15 : vector<8x16x8xf32>
    %cst_15 = arith.constant 0.00999999977 : f32
    %17 = vector.broadcast %cst_15 : f32 to vector<8x16x8xf32>
    %18 = arith.mulf %17, %14 : vector<8x16x8xf32>
    %19 = arith.select %16, %14, %18 : vector<8x16x8xi1>, vector<8x16x8xf32>
    %c0_16 = arith.constant 0 : index
    %c0_17 = arith.constant 0 : index
    %c0_18 = arith.constant 0 : index
    %c0_19 = arith.constant 0 : index
    %c0_20 = arith.constant 0 : index
    %20 = vector.load %arg6[%c0_16, %c0_17, %c0_18, %c0_19, %c0_20] : memref<1x1x8x16x8xf32, #tpu.memory_space<vmem>>, vector<1x1x8x16x8xf32>
    %21 = vector.shape_cast %20 : vector<1x1x8x16x8xf32> to vector<8x16x8xf32>
    %22 = vector.shape_cast %19 : vector<8x16x8xf32> to vector<1x1x8x16x8xf32>
    tpu.vector_store %arg6[%c0_16, %c0_17, %c0_18, %c0_19, %c0_20], %22 {strides = array<i32>} : memref<1x1x8x16x8xf32, #tpu.memory_space<vmem>>, vector<1x1x8x16x8xf32>,
    return
  }
  func.func @transform_0(%arg0: i32, %arg1: i32) -> (i32, i32, i32, i32, i32) {
    %c0_i32 = arith.constant 0 : i32
    %c0_i32_0 = arith.constant 0 : i32
    %c0_i32_1 = arith.constant 0 : i32
    %c0_i32_2 = arith.constant 0 : i32
    return %arg0, %arg1, %c0_i32, %c0_i32_0, %c0_i32_1 : i32, i32, i32, i32, i32
  }
  func.func @transform_1(%arg0: i32, %arg1: i32) -> (i32, i32, i32, i32, i32) {
    %c0_i32 = arith.constant 0 : i32
    %c0_i32_0 = arith.constant 0 : i32
    %c0_i32_1 = arith.constant 0 : i32
    %c0_i32_2 = arith.constant 0 : i32
    return %arg0, %arg1, %c0_i32, %c0_i32_0, %c0_i32_1 : i32, i32, i32, i32, i32
  }
  func.func @transform_2(%arg0: i32, %arg1: i32) -> (i32, i32, i32) {
    %c0_i32 = arith.constant 0 : i32
    %c0_i32_0 = arith.constant 0 : i32
    %c0_i32_1 = arith.constant 0 : i32
    return %arg0, %c0_i32, %c0_i32_0 : i32, i32, i32
  }
  func.func @transform_3(%arg0: i32, %arg1: i32) -> (i32, i32, i32) {
    %c0_i32 = arith.constant 0 : i32
    %c0_i32_0 = arith.constant 0 : i32
    %c0_i32_1 = arith.constant 0 : i32
    return %arg0, %c0_i32, %c0_i32_0 : i32, i32, i32
  }
  func.func @transform_4(%arg0: i32, %arg1: i32) -> (i32, i32, i32, i32, i32) {
    %c0_i32 = arith.constant 0 : i32
    %c0_i32_0 = arith.constant 0 : i32
    %c0_i32_1 = arith.constant 0 : i32
    %c0_i32_2 = arith.constant 0 : i32
    return %arg0, %arg1, %c0_i32, %c0_i32_0, %c0_i32_1 : i32, i32, i32, i32, i32
  }
}

</mosaic_0001>

<llo_original>
// kernel: basic_res_block_forward.5
$region0: #{basic_res_block_forward.5}
  #allocation0 [shape = 'u32[]', space=smem, size = 0x4, offset = 0x4, fixed_abs, tag = 'smem constant byte address 0x4 - core index']
  #allocation1 [shape = 'u32[144,128]{1,0:T(1,128)}', space=vmem, size = 0x12000, scoped, tag = 'internal scratch']
  %s0 = inlined_call_operand.vmem [shape: f32[2,4,8,16,8], index: 0, kind: input, shape index: {}]
  %s1 = inlined_call_operand.vmem [shape: f32[2,1,8], index: 1, kind: input, shape index: {}]
  %s2 = inlined_call_operand.vmem [shape: f32[2,1,8], index: 2, kind: input, shape index: {}]
  %s3 = inlined_call_operand.vmem [shape: f32[2,6,10,18,8], index: 3, kind: output, shape index: {}]
  %s4 = sld [smem:[#allocation0]]
  $region49: #{basic_res_block_forward.5} parent=0
    _
  %s6 = ssub.s32 1, %s4
  %s7 = scalar_select 0, %s6, %s4
  loop: start=0, step=1, limit=14
  $region2: #{basic_res_block_forward.5} parent=0 // loop_pre_header
    _
  $region3: #{basic_res_block_forward.5} parent=0 // loop_header
    %s9 = sphi 0, %s13
    %p10 = scmp.ge.s32.totalorder %s9, 14
    %s16 = sphi 0, %s28
    %s17 = sphi 0, %s24
    %s18 = sphi 0, %s16
    %s19 = sphi 0, %s17
    %s20 = sphi 0, %s18
    %s21 = sphi 0, %s19
    %s43 = sphi 0, %s45
    %s46 = sphi 0, %s43
    %s47 = sphi 0, %s46
    %s63 = sphi 0, %s47
    %s69 = sphi 0, %s71
    %s72 = sphi 0, %s69
    %s73 = sphi 0, %s72
    %s89 = sphi 0, %s73
    %s95 = sphi 0, %s97
    %s98 = sphi 0, %s95
    %s99 = sphi 0, %s98
    %s115 = sphi 0, %s99
    %s123 = sphi 0, %s125
    %s126 = sphi 0, %s123
    %s127 = sphi 0, %s126
    %s143 = sphi 0, %s127
  $region4: #{basic_res_block_forward.5} parent=0 // loop_header_branch
    %12 = sbr.rel (%p10) target = $region8
  $region5: #{basic_res_block_forward.5} parent=0 // loop_body
    %s14 = ssub.s32 %s9, 1
    %s15 = ssub.s32 %s9, 2
    %s22 = sadd.s32 1, %s17
    %p23 = scmp.ge.s32.totalorder %s22, 6
    %s24 = scalar_select %p23, 0, %s22
    %s25 = sadd.s32 1, %s16
    %s26 = scalar_select %p23, %s25, %s16
    %p27 = scmp.ge.s32.totalorder %s26, 2
    %s28 = scalar_select %p27, 0, %s26
    %s29 = ssub.s32 %s17, 1
    %p30 = scmp.gt.s32.totalorder %s29, 0
    %s31 = scalar_select %p30, %s29, 0
    %p32 = scmp.lt.s32.totalorder %s31, 3
    %s33 = scalar_select %p32, %s31, 3
    %s34 = ssub.s32 %s24, 1
    %p35 = scmp.gt.s32.totalorder %s34, 0
    %s36 = scalar_select %p35, %s34, 0
    %p37 = scmp.lt.s32.totalorder %s36, 3
    %s38 = scalar_select %p37, %s36, 3
    %s39 = ssub.s32 %s16, %s28
    %s40 = ssub.s32 %s33, %s38
    %s41 = sor.u32 %s39, %s40
    %p42 = scmp.eq.s32.totalorder %s41, 0
    %s44 = sadd.s32 %s43, 1
    %s45 = scalar_select %p42, %s43, %s44
    %p48 = pneg %p42
    %p49 = scmp.eq.s32.totalorder %s9, 11
    %p50 = por %p48, %p49
    %p51 = scmp.ne.s32.totalorder %s43, %s46
    %p52 = scmp.eq.s32.totalorder %s9, 0
    %p53 = por %p51, %p52
    %p54 = scmp.ne.s32.totalorder %s43, %s46
    %p55 = scmp.eq.s32.totalorder %s14, 11
    %p56 = por %p54, %p55
    %p57 = scmp.ne.s32.totalorder %s46, %s47
    %p58 = scmp.eq.s32.totalorder %s14, 0
    %p59 = por %p57, %p58
    %p60 = scmp.ne.s32.totalorder %s46, %s47
    %p61 = scmp.eq.s32.totalorder %s15, 11
    %p62 = por %p60, %p61
    %p64 = scmp.ne.s32.totalorder %s47, %s63
    %p65 = scmp.eq.s32.totalorder %s15, 0
    %p66 = por %p64, %p65
    %s67 = ssub.s32 %s16, %s28
    %p68 = scmp.eq.s32.totalorder %s67, 0
    %s70 = sadd.s32 %s69, 1
    %s71 = scalar_select %p68, %s69, %s70
    %p74 = pneg %p68
    %p75 = scmp.eq.s32.totalorder %s9, 11
    %p76 = por %p74, %p75
    %p77 = scmp.ne.s32.totalorder %s69, %s72
    %p78 = scmp.eq.s32.totalorder %s9, 0
    %p79 = por %p77, %p78
    %p80 = scmp.ne.s32.totalorder %s69, %s72
    %p81 = scmp.eq.s32.totalorder %s14, 11
    %p82 = por %p80, %p81
    %p83 = scmp.ne.s32.totalorder %s72, %s73
    %p84 = scmp.eq.s32.totalorder %s14, 0
    %p85 = por %p83, %p84
    %p86 = scmp.ne.s32.totalorder %s72, %s73
    %p87 = scmp.eq.s32.totalorder %s15, 11
    %p88 = por %p86, %p87
    %p90 = scmp.ne.s32.totalorder %s73, %s89
    %p91 = scmp.eq.s32.totalorder %s15, 0
    %p92 = por %p90, %p91
    %s93 = ssub.s32 %s16, %s28
    %p94 = scmp.eq.s32.totalorder %s93, 0
    %s96 = sadd.s32 %s95, 1
    %s97 = scalar_select %p94, %s95, %s96
    %p100 = pneg %p94
    %p101 = scmp.eq.s32.totalorder %s9, 11
    %p102 = por %p100, %p101
    %p103 = scmp.ne.s32.totalorder %s95, %s98
    %p104 = scmp.eq.s32.totalorder %s9, 0
    %p105 = por %p103, %p104
    %p106 = scmp.ne.s32.totalorder %s95, %s98
    %p107 = scmp.eq.s32.totalorder %s14, 11
    %p108 = por %p106, %p107
    %p109 = scmp.ne.s32.totalorder %s98, %s99
    %p110 = scmp.eq.s32.totalorder %s14, 0
    %p111 = por %p109, %p110
    %p112 = scmp.ne.s32.totalorder %s98, %s99
    %p113 = scmp.eq.s32.totalorder %s15, 11
    %p114 = por %p112, %p113
    %p116 = scmp.ne.s32.totalorder %s99, %s115
    %p117 = scmp.eq.s32.totalorder %s15, 0
    %p118 = por %p116, %p117
    %s119 = ssub.s32 %s16, %s28
    %s120 = ssub.s32 %s17, %s24
    %s121 = sor.u32 %s119, %s120
    %p122 = scmp.eq.s32.totalorder %s121, 0
    %s124 = sadd.s32 %s123, 1
    %s125 = scalar_select %p122, %s123, %s124
    %p128 = pneg %p122
    %p129 = scmp.eq.s32.totalorder %s9, 11
    %p130 = por %p128, %p129
    %p131 = scmp.ne.s32.totalorder %s123, %s126
    %p132 = scmp.eq.s32.totalorder %s9, 0
    %p133 = por %p131, %p132
    %p134 = scmp.ne.s32.totalorder %s123, %s126
    %p135 = scmp.eq.s32.totalorder %s14, 11
    %p136 = por %p134, %p135
    %p137 = scmp.ne.s32.totalorder %s126, %s127
    %p138 = scmp.eq.s32.totalorder %s14, 0
    %p139 = por %p137, %p138
    %p140 = scmp.ne.s32.totalorder %s126, %s127
    %p141 = scmp.eq.s32.totalorder %s15, 11
    %p142 = por %p140, %p141
    %p144 = scmp.ne.s32.totalorder %s127, %s143
    %p145 = scmp.eq.s32.totalorder %s15, 0
    %p146 = por %p144, %p145
    %p147 = scmp.le.s32.totalorder 1, %s9
    %p148 = scmp.lt.s32.totalorder %s9, 13
    %p149 = pnand %p147, %p148
    %p150 = pneg %p149
    // Predicated region
    $region9: #{basic_res_block_forward.5} parent=5 // pred_check
      _
    $region10: #{basic_res_block_forward.5} parent=5 // pred_check_branch
      %152 = sbr.rel (%p149) target = $region12
    $region11: #{basic_res_block_forward.5} parent=5 // pred_region
      %s153 = ssub.s32 %s9, 1
    $region12: #{basic_res_block_forward.5} parent=5 // pred_fallthru
      _
    %p154 = scmp.lt.s32.totalorder %s9, 12
    // Predicated region
    $region13: #{basic_res_block_forward.5} parent=5 // pred_check
      %p155 = pneg %p154
    $region14: #{basic_res_block_forward.5} parent=5 // pred_check_branch
      %157 = sbr.rel (%p155) target = $region16
    $region15: #{basic_res_block_forward.5} parent=5 // pred_region
      // Predicated region
      $region17: #{basic_res_block_forward.5} parent=15 // pred_check
        %p158 = pneg %p53
      $region18: #{basic_res_block_forward.5} parent=15 // pred_check_branch
        %160 = sbr.rel (%p158) target = $region20
      $region19: #{basic_res_block_forward.5} parent=15 // pred_region
        %s161 = ssub.s32 %s17, 1
        %p162 = scmp.gt.s32.totalorder %s161, 0
        %s163 = scalar_select %p162, %s161, 0
        %p164 = scmp.lt.s32.totalorder %s163, 3
        %s165 = scalar_select %p164, %s163, 3
        %p166 = scmp.lt.s32.totalorder %s16, 1
        %s167 = scalar_select %p166, %s16, 1
        %p168 = scmp.lt.s32.totalorder %s165, 3
        %s169 = scalar_select %p168, %s165, 3
        %s170 = smul.addr %s169, 16
        %s171 = smul.addr %s167, 64
        %s172 = sadd.s32 %s170, %s171
        %s173 = smul.addr %s172, 8
        %s174 = scalar_lea.vmem %s0, %s173
        %s175 = ssub.s32 %s17, 1
        %p176 = scmp.gt.s32.totalorder %s175, 0
        %s177 = scalar_select %p176, %s175, 0
        %p178 = scmp.lt.s32.totalorder %s177, 3
        %s179 = scalar_select %p178, %s177, 3
      $region20: #{basic_res_block_forward.5} parent=15 // pred_fallthru
        _
      // Predicated region
      $region21: #{basic_res_block_forward.5} parent=15 // pred_check
        %p180 = pneg %p79
      $region22: #{basic_res_block_forward.5} parent=15 // pred_check_branch
        %182 = sbr.rel (%p180) target = $region24
      $region23: #{basic_res_block_forward.5} parent=15 // pred_region
        %p183 = scmp.lt.s32.totalorder %s16, 1
        %s184 = scalar_select %p183, %s16, 1
        %s185 = scalar_lea.vmem %s1, %s184
      $region24: #{basic_res_block_forward.5} parent=15 // pred_fallthru
        _
      // Predicated region
      $region25: #{basic_res_block_forward.5} parent=15 // pred_check
        %p186 = pneg %p105
      $region26: #{basic_res_block_forward.5} parent=15 // pred_check_branch
        %188 = sbr.rel (%p186) target = $region28
      $region27: #{basic_res_block_forward.5} parent=15 // pred_region
        %p189 = scmp.lt.s32.totalorder %s16, 1
        %s190 = scalar_select %p189, %s16, 1
        %s191 = scalar_lea.vmem %s2, %s190
      $region28: #{basic_res_block_forward.5} parent=15 // pred_fallthru
        _
    $region16: #{basic_res_block_forward.5} parent=5 // pred_fallthru
      _
    %p192 = scmp.le.s32.totalorder 1, %s9
    %p193 = scmp.lt.s32.totalorder %s9, 13
    %p194 = pnand %p192, %p193
    %p195 = pneg %p194
    // Predicated region
    $region29: #{basic_res_block_forward.5} parent=5 // pred_check
      _
    $region30: #{basic_res_block_forward.5} parent=5 // pred_check_branch
      %197 = sbr.rel (%p194) target = $region32
    $region31: #{basic_res_block_forward.5} parent=5 // pred_region
      %s198 = ssub.s32 %s9, 1
      %s199 = ssub.s32 %s19, 1
      %p200 = scmp.gt.s32.totalorder %s199, 0
      %s201 = scalar_select %p200, %s199, 0
      %p202 = scmp.lt.s32.totalorder %s201, 3
      %s203 = scalar_select %p202, %s201, 3
      %p204 = scmp.lt.s32.totalorder %s18, 1
      %s205 = scalar_select %p204, %s18, 1
      %p206 = scmp.lt.s32.totalorder %s203, 3
      %s207 = scalar_select %p206, %s203, 3
      %s208 = smul.addr %s207, 16
      %s209 = smul.addr %s205, 64
      %s210 = sadd.s32 %s208, %s209
      %s211 = smul.addr %s210, 8
      %s212 = scalar_lea.vmem %s0, %s211
      %p213 = pneg %p59
      %p214 = pneg %p56
      %p215 = scmp.lt.s32.totalorder %s18, 1
      %s216 = scalar_select %p215, %s18, 1
      %s217 = scalar_lea.vmem %s1, %s216
      %p218 = pneg %p85
      %p219 = pneg %p82
      %p220 = scmp.lt.s32.totalorder %s18, 1
      %s221 = scalar_select %p220, %s18, 1
      %s222 = scalar_lea.vmem %s2, %s221
      %p223 = pneg %p111
      %p224 = pneg %p108
      %p225 = pneg %p139
      %p226 = pneg %p136
      %p227 = scmp.lt.s32.totalorder %s18, 1
      %s228 = scalar_select %p227, %s18, 1
      %p229 = scmp.lt.s32.totalorder %s19, 5
      %s230 = scalar_select %p229, %s19, 5
      %s231 = smul.addr %s230, 30
      %s232 = smul.addr %s228, 180
      %s233 = sadd.s32 %s231, %s232
      %s234 = smul.addr %s233, 8
      %s235 = scalar_lea.vmem %s3, %s234
      %s236 = ssub.s32 %s19, 1
      %p237 = scmp.gt.s32.totalorder %s236, 0
      %s238 = scalar_select %p237, %s236, 0
      %p239 = scmp.lt.s32.totalorder %s238, 3
      %s240 = scalar_select %p239, %s238, 3
      %p241 = scmp.lt.s32.totalorder %s18, 1
      %s242 = scalar_select %p241, %s18, 1
      %p243 = scmp.lt.s32.totalorder %s240, 3
      %s244 = scalar_select %p243, %s240, 3
      %s245 = smul.addr %s244, 16
      %s246 = smul.addr %s242, 64
      %s247 = sadd.s32 %s245, %s246
      %s248 = smul.addr %s247, 8
      %s249 = scalar_lea.vmem %s0, %s248
      %s250 = ssub.s32 %s19, 1
      %p251 = scmp.gt.s32.totalorder %s250, 0
      %s252 = scalar_select %p251, %s250, 0
      %p253 = scmp.lt.s32.totalorder %s252, 3
      %s254 = scalar_select %p253, %s252, 3
      %p255 = scmp.lt.s32.totalorder %s18, 1
      %s256 = scalar_select %p255, %s18, 1
      %s257 = scalar_lea.vmem %s1, %s256
      %p258 = scmp.lt.s32.totalorder %s18, 1
      %s259 = scalar_select %p258, %s18, 1
      %s260 = scalar_lea.vmem %s2, %s259
      %p261 = scmp.lt.s32.totalorder %s18, 1
      %s262 = scalar_select %p261, %s18, 1
      %p263 = scmp.lt.s32.totalorder %s19, 5
      %s264 = scalar_select %p263, %s19, 5
      %s265 = smul.addr %s264, 30
      %s266 = smul.addr %s262, 180
      %s267 = sadd.s32 %s265, %s266
      %s268 = smul.addr %s267, 8
      %s269 = scalar_lea.vmem %s3, %s268
      %vm270 = vcmask 64512
      %271 = vst.msk [vmem:[%s269] sm:$0xff] %vm270, 0.0
      %272 = vst.msk [vmem:[%s269 + $0x8] sm:$0xff] %vm270, 0.0
      %vm273 = vcmask 58368
      %274 = vst.msk [vmem:[%s269 + $0x10] sm:$0x3] %vm273, 0.0
      %275 = vst.msk [vmem:[%s269 + $0x18] sm:$0xff] %vm270, 0.0
      %276 = vst.msk [vmem:[%s269 + $0x20] sm:$0xff] %vm270, 0.0
      %277 = vst.msk [vmem:[%s269 + $0x28] sm:$0x3] %vm273, 0.0
      %278 = vst.msk [vmem:[%s269 + $0x30] sm:$0xff] %vm270, 0.0
      %279 = vst.msk [vmem:[%s269 + $0x38] sm:$0xff] %vm270, 0.0
      %280 = vst.msk [vmem:[%s269 + $0x40] sm:$0x3] %vm273, 0.0
      %281 = vst.msk [vmem:[%s269 + $0x48] sm:$0xff] %vm270, 0.0
      %282 = vst.msk [vmem:[%s269 + $0x50] sm:$0xff] %vm270, 0.0
      %283 = vst.msk [vmem:[%s269 + $0x58] sm:$0x3] %vm273, 0.0
      %284 = vst.msk [vmem:[%s269 + $0x60] sm:$0xff] %vm270, 0.0
      %285 = vst.msk [vmem:[%s269 + $0x68] sm:$0xff] %vm270, 0.0
      %286 = vst.msk [vmem:[%s269 + $0x70] sm:$0x3] %vm273, 0.0
      %287 = vst.msk [vmem:[%s269 + $0x78] sm:$0xff] %vm270, 0.0
      %288 = vst.msk [vmem:[%s269 + $0x80] sm:$0xff] %vm270, 0.0
      %289 = vst.msk [vmem:[%s269 + $0x88] sm:$0x3] %vm273, 0.0
      %290 = vst.msk [vmem:[%s269 + $0x90] sm:$0xff] %vm270, 0.0
      %291 = vst.msk [vmem:[%s269 + $0x98] sm:$0xff] %vm270, 0.0
      %292 = vst.msk [vmem:[%s269 + $0xa0] sm:$0x3] %vm273, 0.0
      %293 = vst.msk [vmem:[%s269 + $0xa8] sm:$0xff] %vm270, 0.0
      %294 = vst.msk [vmem:[%s269 + $0xb0] sm:$0xff] %vm270, 0.0
      %295 = vst.msk [vmem:[%s269 + $0xb8] sm:$0x3] %vm273, 0.0
      %296 = vst.msk [vmem:[%s269 + $0xc0] sm:$0xff] %vm270, 0.0
      %297 = vst.msk [vmem:[%s269 + $0xc8] sm:$0xff] %vm270, 0.0
      %298 = vst.msk [vmem:[%s269 + $0xd0] sm:$0x3] %vm273, 0.0
      %299 = vst.msk [vmem:[%s269 + $0xd8] sm:$0xff] %vm270, 0.0
      %300 = vst.msk [vmem:[%s269 + $0xe0] sm:$0xff] %vm270, 0.0
      %301 = vst.msk [vmem:[%s269 + $0xe8] sm:$0x3] %vm273, 0.0
      %p302 = scmp.ge.s32.totalorder %s19, 1
      %p303 = scmp.le.s32.totalorder %s19, 4
      %p304 = pnand %p302, %p303
      %p305 = pneg %p304
      // Predicated region
      $region33: #{basic_res_block_forward.5} parent=31 // pred_check
        _
      $region34: #{basic_res_block_forward.5} parent=31 // pred_check_branch
        %307 = sbr.rel (%p304) target = $region36
      $region35: #{basic_res_block_forward.5} parent=31 // pred_region
        %v308 = vld [vmem:[%s249] sm:$0xff]
        %v309 = vld [vmem:[%s249 + $0x8] sm:$0xff]
        %v310 = vld [vmem:[%s249 + $0x10] sm:$0xff]
        %v311 = vld [vmem:[%s249 + $0x18] sm:$0xff]
        %v312 = vld [vmem:[%s249 + $0x20] sm:$0xff]
        %v313 = vld [vmem:[%s249 + $0x28] sm:$0xff]
        %v314 = vld [vmem:[%s249 + $0x30] sm:$0xff]
        %v315 = vld [vmem:[%s249 + $0x38] sm:$0xff]
        %v316 = vld [vmem:[%s249 + $0x40] sm:$0xff]
        %v317 = vld [vmem:[%s249 + $0x48] sm:$0xff]
        %v318 = vld [vmem:[%s249 + $0x50] sm:$0xff]
        %v319 = vld [vmem:[%s249 + $0x58] sm:$0xff]
        %v320 = vld [vmem:[%s249 + $0x60] sm:$0xff]
        %v321 = vld [vmem:[%s249 + $0x68] sm:$0xff]
        %v322 = vld [vmem:[%s249 + $0x70] sm:$0xff]
        %v323 = vld [vmem:[%s249 + $0x78] sm:$0xff]
        %v324 = vld [vmem:[%s257] sm:$0x1]
        %v326 = vlaneseq
        %v327 = vshrl.u32 %v326, 7
        %v328 = vsub.s32 0, %v327
        %v329 = vrot.slane %v324, %v328
        %v331 = vmul.f32 %v308, %v329
        %v332 = vmul.f32 %v309, %v329
        %v333 = vmul.f32 %v310, %v329
        %v334 = vmul.f32 %v311, %v329
        %v335 = vmul.f32 %v312, %v329
        %v336 = vmul.f32 %v313, %v329
        %v337 = vmul.f32 %v314, %v329
        %v338 = vmul.f32 %v315, %v329
        %v339 = vmul.f32 %v316, %v329
        %v340 = vmul.f32 %v317, %v329
        %v341 = vmul.f32 %v318, %v329
        %v342 = vmul.f32 %v319, %v329
        %v343 = vmul.f32 %v320, %v329
        %v344 = vmul.f32 %v321, %v329
        %v345 = vmul.f32 %v322, %v329
        %v346 = vmul.f32 %v323, %v329
        %v347 = vld [vmem:[%s260] sm:$0x1]
        %v349 = vlaneseq
        %v350 = vshrl.u32 %v349, 7
        %v351 = vsub.s32 0, %v350
        %v352 = vrot.slane %v347, %v351
        %v354 = vadd.f32 %v331, %v352
        %v355 = vadd.f32 %v332, %v352
        %v356 = vadd.f32 %v333, %v352
        %v357 = vadd.f32 %v334, %v352
        %v358 = vadd.f32 %v335, %v352
        %v359 = vadd.f32 %v336, %v352
        %v360 = vadd.f32 %v337, %v352
        %v361 = vadd.f32 %v338, %v352
        %v362 = vadd.f32 %v339, %v352
        %v363 = vadd.f32 %v340, %v352
        %v364 = vadd.f32 %v341, %v352
        %v365 = vadd.f32 %v342, %v352
        %v366 = vadd.f32 %v343, %v352
        %v367 = vadd.f32 %v344, %v352
        %v368 = vadd.f32 %v345, %v352
        %v369 = vadd.f32 %v346, %v352
        %vm370 = vcmp.ge.f32.partialorder %v354, 0.0
        %vm371 = vcmp.ge.f32.partialorder %v355, 0.0
        %vm372 = vcmp.ge.f32.partialorder %v356, 0.0
        %vm373 = vcmp.ge.f32.partialorder %v357, 0.0
        %vm374 = vcmp.ge.f32.partialorder %v358, 0.0
        %vm375 = vcmp.ge.f32.partialorder %v359, 0.0
        %vm376 = vcmp.ge.f32.partialorder %v360, 0.0
        %vm377 = vcmp.ge.f32.partialorder %v361, 0.0
        %vm378 = vcmp.ge.f32.partialorder %v362, 0.0
        %vm379 = vcmp.ge.f32.partialorder %v363, 0.0
        %vm380 = vcmp.ge.f32.partialorder %v364, 0.0
        %vm381 = vcmp.ge.f32.partialorder %v365, 0.0
        %vm382 = vcmp.ge.f32.partialorder %v366, 0.0
        %vm383 = vcmp.ge.f32.partialorder %v367, 0.0
        %vm384 = vcmp.ge.f32.partialorder %v368, 0.0
        %vm385 = vcmp.ge.f32.partialorder %v369, 0.0
        %v386 = vmul.f32 %v354, 0.01
        %v387 = vmul.f32 %v355, 0.01
        %v388 = vmul.f32 %v356, 0.01
        %v389 = vmul.f32 %v357, 0.01
        %v390 = vmul.f32 %v358, 0.01
        %v391 = vmul.f32 %v359, 0.01
        %v392 = vmul.f32 %v360, 0.01
        %v393 = vmul.f32 %v361, 0.01
        %v394 = vmul.f32 %v362, 0.01
        %v395 = vmul.f32 %v363, 0.01
        %v396 = vmul.f32 %v364, 0.01
        %v397 = vmul.f32 %v365, 0.01
        %v398 = vmul.f32 %v366, 0.01
        %v399 = vmul.f32 %v367, 0.01
        %v400 = vmul.f32 %v368, 0.01
        %v401 = vmul.f32 %v369, 0.01
        %v402 = vsel %vm370, %v354, %v386
        %v403 = vsel %vm371, %v355, %v387
        %v404 = vsel %vm372, %v356, %v388
        %v405 = vsel %vm373, %v357, %v389
        %v406 = vsel %vm374, %v358, %v390
        %v407 = vsel %vm375, %v359, %v391
        %v408 = vsel %vm376, %v360, %v392
        %v409 = vsel %vm377, %v361, %v393
        %v410 = vsel %vm378, %v362, %v394
        %v411 = vsel %vm379, %v363, %v395
        %v412 = vsel %vm380, %v364, %v396
        %v413 = vsel %vm381, %v365, %v397
        %v414 = vsel %vm382, %v366, %v398
        %v415 = vsel %vm383, %v367, %v399
        %v416 = vsel %vm384, %v368, %v400
        %v417 = vsel %vm385, %v369, %v401
        %s418 = scalar_lea.vmem %s269, 24
        %419 = vst.msk [vmem:[%s418 + $0x1] sm:$0xff] %vm270, %v402
        %420 = vst.msk [vmem:[%s418 + $0x9] sm:$0xff] %vm270, %v403
        %421 = vst.msk [vmem:[%s418 + $0x19] sm:$0xff] %vm270, %v404
        %422 = vst.msk [vmem:[%s418 + $0x21] sm:$0xff] %vm270, %v405
        %423 = vst.msk [vmem:[%s418 + $0x31] sm:$0xff] %vm270, %v406
        %424 = vst.msk [vmem:[%s418 + $0x39] sm:$0xff] %vm270, %v407
        %425 = vst.msk [vmem:[%s418 + $0x49] sm:$0xff] %vm270, %v408
        %426 = vst.msk [vmem:[%s418 + $0x51] sm:$0xff] %vm270, %v409
        %427 = vst.msk [vmem:[%s418 + $0x61] sm:$0xff] %vm270, %v410
        %428 = vst.msk [vmem:[%s418 + $0x69] sm:$0xff] %vm270, %v411
        %429 = vst.msk [vmem:[%s418 + $0x79] sm:$0xff] %vm270, %v412
        %430 = vst.msk [vmem:[%s418 + $0x81] sm:$0xff] %vm270, %v413
        %431 = vst.msk [vmem:[%s418 + $0x91] sm:$0xff] %vm270, %v414
        %432 = vst.msk [vmem:[%s418 + $0x99] sm:$0xff] %vm270, %v415
        %433 = vst.msk [vmem:[%s418 + $0xa9] sm:$0xff] %vm270, %v416
        %434 = vst.msk [vmem:[%s418 + $0xb1] sm:$0xff] %vm270, %v417
      $region36: #{basic_res_block_forward.5} parent=31 // pred_fallthru
        _
      %p435 = scmp.lt.s32.totalorder %s18, 1
      %s436 = scalar_select %p435, %s18, 1
      %p437 = scmp.lt.s32.totalorder %s19, 5
      %s438 = scalar_select %p437, %s19, 5
      %s439 = smul.addr %s438, 30
      %s440 = smul.addr %s436, 180
      %s441 = sadd.s32 %s439, %s440
      %s442 = smul.addr %s441, 8
      %s443 = scalar_lea.vmem %s3, %s442
      // Predicated region
      $region37: #{basic_res_block_forward.5} parent=31 // pred_check
        %p444 = pneg %p136
      $region38: #{basic_res_block_forward.5} parent=31 // pred_check_branch
        %446 = sbr.rel (%p444) target = $region40
      $region39: #{basic_res_block_forward.5} parent=31 // pred_region
        _
      $region40: #{basic_res_block_forward.5} parent=31 // pred_fallthru
        _
    $region32: #{basic_res_block_forward.5} parent=5 // pred_fallthru
      _
    %p447 = scmp.le.s32.totalorder 2, %s9
    // Predicated region
    $region41: #{basic_res_block_forward.5} parent=5 // pred_check
      %p448 = pneg %p447
    $region42: #{basic_res_block_forward.5} parent=5 // pred_check_branch
      %450 = sbr.rel (%p448) target = $region44
    $region43: #{basic_res_block_forward.5} parent=5 // pred_region
      %s451 = ssub.s32 %s9, 2
      // Predicated region
      $region45: #{basic_res_block_forward.5} parent=43 // pred_check
        %p452 = pneg %p142
      $region46: #{basic_res_block_forward.5} parent=43 // pred_check_branch
        %454 = sbr.rel (%p452) target = $region48
      $region47: #{basic_res_block_forward.5} parent=43 // pred_region
        %p455 = scmp.lt.s32.totalorder %s20, 1
        %s456 = scalar_select %p455, %s20, 1
        %p457 = scmp.lt.s32.totalorder %s21, 5
        %s458 = scalar_select %p457, %s21, 5
        %s459 = smul.addr %s458, 30
        %s460 = smul.addr %s456, 180
        %s461 = sadd.s32 %s459, %s460
        %s462 = smul.addr %s461, 8
        %s463 = scalar_lea.vmem %s3, %s462
      $region48: #{basic_res_block_forward.5} parent=43 // pred_fallthru
        _
    $region44: #{basic_res_block_forward.5} parent=5 // pred_fallthru
      _
  $region6: #{basic_res_block_forward.5} parent=0 // loop_footer
    %s13 = sadd.s32 1, %s9
  $region7: #{basic_res_block_forward.5} parent=0 // loop_footer_branch
    %8 = sbr.rel target = $region3
  $region8: #{basic_res_block_forward.5} parent=0 // loop_exit
    _

// kernel: basic_res_block_forward.7
$region0: #{basic_res_block_forward.7}
  #allocation0 [shape = 'u32[]', space=smem, size = 0x4, offset = 0x4, fixed_abs, tag = 'smem constant byte address 0x4 - core index']
  #allocation1 [shape = 'u32[144,128]{1,0:T(1,128)}', space=vmem, size = 0x12000, scoped, tag = 'internal scratch']
  %s0 = inlined_call_operand.vmem [shape: f32[2,4,8,16,8], index: 0, kind: input, shape index: {}]
  %s1 = inlined_call_operand.vmem [shape: f32[2,4,8,16,8], index: 1, kind: input, shape index: {}]
  %s2 = inlined_call_operand.vmem [shape: f32[2,1,8], index: 2, kind: input, shape index: {}]
  %s3 = inlined_call_operand.vmem [shape: f32[2,1,8], index: 3, kind: input, shape index: {}]
  %s4 = inlined_call_operand.vmem [shape: f32[2,4,8,16,8], index: 4, kind: output, shape index: {}]
  %s5 = sld [smem:[#allocation0]]
  $region49: #{basic_res_block_forward.7} parent=0
    _
  %s7 = ssub.s32 1, %s5
  %s8 = scalar_select 0, %s7, %s5
  loop: start=0, step=1, limit=10
  $region2: #{basic_res_block_forward.7} parent=0 // loop_pre_header
    _
  $region3: #{basic_res_block_forward.7} parent=0 // loop_header
    %s10 = sphi 0, %s14
    %p11 = scmp.ge.s32.totalorder %s10, 10
    %s17 = sphi 0, %s29
    %s18 = sphi 0, %s25
    %s19 = sphi 0, %s17
    %s20 = sphi 0, %s18
    %s21 = sphi 0, %s19
    %s22 = sphi 0, %s20
    %s34 = sphi 0, %s36
    %s37 = sphi 0, %s34
    %s38 = sphi 0, %s37
    %s54 = sphi 0, %s38
    %s62 = sphi 0, %s64
    %s65 = sphi 0, %s62
    %s66 = sphi 0, %s65
    %s82 = sphi 0, %s66
    %s88 = sphi 0, %s90
    %s91 = sphi 0, %s88
    %s92 = sphi 0, %s91
    %s108 = sphi 0, %s92
    %s114 = sphi 0, %s116
    %s117 = sphi 0, %s114
    %s118 = sphi 0, %s117
    %s134 = sphi 0, %s118
    %s142 = sphi 0, %s144
    %s145 = sphi 0, %s142
    %s146 = sphi 0, %s145
    %s162 = sphi 0, %s146
  $region4: #{basic_res_block_forward.7} parent=0 // loop_header_branch
    %13 = sbr.rel (%p11) target = $region8
  $region5: #{basic_res_block_forward.7} parent=0 // loop_body
    %s15 = ssub.s32 %s10, 1
    %s16 = ssub.s32 %s10, 2
    %s23 = sadd.s32 1, %s18
    %p24 = scmp.ge.s32.totalorder %s23, 4
    %s25 = scalar_select %p24, 0, %s23
    %s26 = sadd.s32 1, %s17
    %s27 = scalar_select %p24, %s26, %s17
    %p28 = scmp.ge.s32.totalorder %s27, 2
    %s29 = scalar_select %p28, 0, %s27
    %s30 = ssub.s32 %s17, %s29
    %s31 = ssub.s32 %s18, %s25
    %s32 = sor.u32 %s30, %s31
    %p33 = scmp.eq.s32.totalorder %s32, 0
    %s35 = sadd.s32 %s34, 1
    %s36 = scalar_select %p33, %s34, %s35
    %p39 = pneg %p33
    %p40 = scmp.eq.s32.totalorder %s10, 7
    %p41 = por %p39, %p40
    %p42 = scmp.ne.s32.totalorder %s34, %s37
    %p43 = scmp.eq.s32.totalorder %s10, 0
    %p44 = por %p42, %p43
    %p45 = scmp.ne.s32.totalorder %s34, %s37
    %p46 = scmp.eq.s32.totalorder %s15, 7
    %p47 = por %p45, %p46
    %p48 = scmp.ne.s32.totalorder %s37, %s38
    %p49 = scmp.eq.s32.totalorder %s15, 0
    %p50 = por %p48, %p49
    %p51 = scmp.ne.s32.totalorder %s37, %s38
    %p52 = scmp.eq.s32.totalorder %s16, 7
    %p53 = por %p51, %p52
    %p55 = scmp.ne.s32.totalorder %s38, %s54
    %p56 = scmp.eq.s32.totalorder %s16, 0
    %p57 = por %p55, %p56
    %s58 = ssub.s32 %s17, %s29
    %s59 = ssub.s32 %s18, %s25
    %s60 = sor.u32 %s58, %s59
    %p61 = scmp.eq.s32.totalorder %s60, 0
    %s63 = sadd.s32 %s62, 1
    %s64 = scalar_select %p61, %s62, %s63
    %p67 = pneg %p61
    %p68 = scmp.eq.s32.totalorder %s10, 7
    %p69 = por %p67, %p68
    %p70 = scmp.ne.s32.totalorder %s62, %s65
    %p71 = scmp.eq.s32.totalorder %s10, 0
    %p72 = por %p70, %p71
    %p73 = scmp.ne.s32.totalorder %s62, %s65
    %p74 = scmp.eq.s32.totalorder %s15, 7
    %p75 = por %p73, %p74
    %p76 = scmp.ne.s32.totalorder %s65, %s66
    %p77 = scmp.eq.s32.totalorder %s15, 0
    %p78 = por %p76, %p77
    %p79 = scmp.ne.s32.totalorder %s65, %s66
    %p80 = scmp.eq.s32.totalorder %s16, 7
    %p81 = por %p79, %p80
    %p83 = scmp.ne.s32.totalorder %s66, %s82
    %p84 = scmp.eq.s32.totalorder %s16, 0
    %p85 = por %p83, %p84
    %s86 = ssub.s32 %s17, %s29
    %p87 = scmp.eq.s32.totalorder %s86, 0
    %s89 = sadd.s32 %s88, 1
    %s90 = scalar_select %p87, %s88, %s89
    %p93 = pneg %p87
    %p94 = scmp.eq.s32.totalorder %s10, 7
    %p95 = por %p93, %p94
    %p96 = scmp.ne.s32.totalorder %s88, %s91
    %p97 = scmp.eq.s32.totalorder %s10, 0
    %p98 = por %p96, %p97
    %p99 = scmp.ne.s32.totalorder %s88, %s91
    %p100 = scmp.eq.s32.totalorder %s15, 7
    %p101 = por %p99, %p100
    %p102 = scmp.ne.s32.totalorder %s91, %s92
    %p103 = scmp.eq.s32.totalorder %s15, 0
    %p104 = por %p102, %p103
    %p105 = scmp.ne.s32.totalorder %s91, %s92
    %p106 = scmp.eq.s32.totalorder %s16, 7
    %p107 = por %p105, %p106
    %p109 = scmp.ne.s32.totalorder %s92, %s108
    %p110 = scmp.eq.s32.totalorder %s16, 0
    %p111 = por %p109, %p110
    %s112 = ssub.s32 %s17, %s29
    %p113 = scmp.eq.s32.totalorder %s112, 0
    %s115 = sadd.s32 %s114, 1
    %s116 = scalar_select %p113, %s114, %s115
    %p119 = pneg %p113
    %p120 = scmp.eq.s32.totalorder %s10, 7
    %p121 = por %p119, %p120
    %p122 = scmp.ne.s32.totalorder %s114, %s117
    %p123 = scmp.eq.s32.totalorder %s10, 0
    %p124 = por %p122, %p123
    %p125 = scmp.ne.s32.totalorder %s114, %s117
    %p126 = scmp.eq.s32.totalorder %s15, 7
    %p127 = por %p125, %p126
    %p128 = scmp.ne.s32.totalorder %s117, %s118
    %p129 = scmp.eq.s32.totalorder %s15, 0
    %p130 = por %p128, %p129
    %p131 = scmp.ne.s32.totalorder %s117, %s118
    %p132 = scmp.eq.s32.totalorder %s16, 7
    %p133 = por %p131, %p132
    %p135 = scmp.ne.s32.totalorder %s118, %s134
    %p136 = scmp.eq.s32.totalorder %s16, 0
    %p137 = por %p135, %p136
    %s138 = ssub.s32 %s17, %s29
    %s139 = ssub.s32 %s18, %s25
    %s140 = sor.u32 %s138, %s139
    %p141 = scmp.eq.s32.totalorder %s140, 0
    %s143 = sadd.s32 %s142, 1
    %s144 = scalar_select %p141, %s142, %s143
    %p147 = pneg %p141
    %p148 = scmp.eq.s32.totalorder %s10, 7
    %p149 = por %p147, %p148
    %p150 = scmp.ne.s32.totalorder %s142, %s145
    %p151 = scmp.eq.s32.totalorder %s10, 0
    %p152 = por %p150, %p151
    %p153 = scmp.ne.s32.totalorder %s142, %s145
    %p154 = scmp.eq.s32.totalorder %s15, 7
    %p155 = por %p153, %p154
    %p156 = scmp.ne.s32.totalorder %s145, %s146
    %p157 = scmp.eq.s32.totalorder %s15, 0
    %p158 = por %p156, %p157
    %p159 = scmp.ne.s32.totalorder %s145, %s146
    %p160 = scmp.eq.s32.totalorder %s16, 7
    %p161 = por %p159, %p160
    %p163 = scmp.ne.s32.totalorder %s146, %s162
    %p164 = scmp.eq.s32.totalorder %s16, 0
    %p165 = por %p163, %p164
    %p166 = scmp.le.s32.totalorder 1, %s10
    %p167 = scmp.lt.s32.totalorder %s10, 9
    %p168 = pnand %p166, %p167
    %p169 = pneg %p168
    // Predicated region
    $region9: #{basic_res_block_forward.7} parent=5 // pred_check
      _
    $region10: #{basic_res_block_forward.7} parent=5 // pred_check_branch
      %171 = sbr.rel (%p168) target = $region12
    $region11: #{basic_res_block_forward.7} parent=5 // pred_region
      %s172 = ssub.s32 %s10, 1
    $region12: #{basic_res_block_forward.7} parent=5 // pred_fallthru
      _
    %p173 = scmp.lt.s32.totalorder %s10, 8
    // Predicated region
    $region13: #{basic_res_block_forward.7} parent=5 // pred_check
      %p174 = pneg %p173
    $region14: #{basic_res_block_forward.7} parent=5 // pred_check_branch
      %176 = sbr.rel (%p174) target = $region16
    $region15: #{basic_res_block_forward.7} parent=5 // pred_region
      // Predicated region
      $region17: #{basic_res_block_forward.7} parent=15 // pred_check
        %p177 = pneg %p44
      $region18: #{basic_res_block_forward.7} parent=15 // pred_check_branch
        %179 = sbr.rel (%p177) target = $region20
      $region19: #{basic_res_block_forward.7} parent=15 // pred_region
        %p180 = scmp.lt.s32.totalorder %s17, 1
        %s181 = scalar_select %p180, %s17, 1
        %p182 = scmp.lt.s32.totalorder %s18, 3
        %s183 = scalar_select %p182, %s18, 3
        %s184 = smul.addr %s183, 16
        %s185 = smul.addr %s181, 64
        %s186 = sadd.s32 %s184, %s185
        %s187 = smul.addr %s186, 8
        %s188 = scalar_lea.vmem %s0, %s187
      $region20: #{basic_res_block_forward.7} parent=15 // pred_fallthru
        _
      // Predicated region
      $region21: #{basic_res_block_forward.7} parent=15 // pred_check
        %p189 = pneg %p72
      $region22: #{basic_res_block_forward.7} parent=15 // pred_check_branch
        %191 = sbr.rel (%p189) target = $region24
      $region23: #{basic_res_block_forward.7} parent=15 // pred_region
        %p192 = scmp.lt.s32.totalorder %s17, 1
        %s193 = scalar_select %p192, %s17, 1
        %p194 = scmp.lt.s32.totalorder %s18, 3
        %s195 = scalar_select %p194, %s18, 3
        %s196 = smul.addr %s195, 16
        %s197 = smul.addr %s193, 64
        %s198 = sadd.s32 %s196, %s197
        %s199 = smul.addr %s198, 8
        %s200 = scalar_lea.vmem %s1, %s199
      $region24: #{basic_res_block_forward.7} parent=15 // pred_fallthru
        _
      // Predicated region
      $region25: #{basic_res_block_forward.7} parent=15 // pred_check
        %p201 = pneg %p98
      $region26: #{basic_res_block_forward.7} parent=15 // pred_check_branch
        %203 = sbr.rel (%p201) target = $region28
      $region27: #{basic_res_block_forward.7} parent=15 // pred_region
        %p204 = scmp.lt.s32.totalorder %s17, 1
        %s205 = scalar_select %p204, %s17, 1
        %s206 = scalar_lea.vmem %s2, %s205
      $region28: #{basic_res_block_forward.7} parent=15 // pred_fallthru
        _
      // Predicated region
      $region29: #{basic_res_block_forward.7} parent=15 // pred_check
        %p207 = pneg %p124
      $region30: #{basic_res_block_forward.7} parent=15 // pred_check_branch
        %209 = sbr.rel (%p207) target = $region32
      $region31: #{basic_res_block_forward.7} parent=15 // pred_region
        %p210 = scmp.lt.s32.totalorder %s17, 1
        %s211 = scalar_select %p210, %s17, 1
        %s212 = scalar_lea.vmem %s3, %s211
      $region32: #{basic_res_block_forward.7} parent=15 // pred_fallthru
        _
    $region16: #{basic_res_block_forward.7} parent=5 // pred_fallthru
      _
    %p213 = scmp.le.s32.totalorder 1, %s10
    %p214 = scmp.lt.s32.totalorder %s10, 9
    %p215 = pnand %p213, %p214
    %p216 = pneg %p215
    // Predicated region
    $region33: #{basic_res_block_forward.7} parent=5 // pred_check
      _
    $region34: #{basic_res_block_forward.7} parent=5 // pred_check_branch
      %218 = sbr.rel (%p215) target = $region36
    $region35: #{basic_res_block_forward.7} parent=5 // pred_region
      %s219 = ssub.s32 %s10, 1
      %p220 = scmp.lt.s32.totalorder %s19, 1
      %s221 = scalar_select %p220, %s19, 1
      %p222 = scmp.lt.s32.totalorder %s20, 3
      %s223 = scalar_select %p222, %s20, 3
      %s224 = smul.addr %s223, 16
      %s225 = smul.addr %s221, 64
      %s226 = sadd.s32 %s224, %s225
      %s227 = smul.addr %s226, 8
      %s228 = scalar_lea.vmem %s0, %s227
      %p229 = pneg %p50
      %p230 = pneg %p47
      %p231 = scmp.lt.s32.totalorder %s19, 1
      %s232 = scalar_select %p231, %s19, 1
      %p233 = scmp.lt.s32.totalorder %s20, 3
      %s234 = scalar_select %p233, %s20, 3
      %s235 = smul.addr %s234, 16
      %s236 = smul.addr %s232, 64
      %s237 = sadd.s32 %s235, %s236
      %s238 = smul.addr %s237, 8
      %s239 = scalar_lea.vmem %s1, %s238
      %p240 = pneg %p78
      %p241 = pneg %p75
      %p242 = scmp.lt.s32.totalorder %s19, 1
      %s243 = scalar_select %p242, %s19, 1
      %s244 = scalar_lea.vmem %s2, %s243
      %p245 = pneg %p104
      %p246 = pneg %p101
      %p247 = scmp.lt.s32.totalorder %s19, 1
      %s248 = scalar_select %p247, %s19, 1
      %s249 = scalar_lea.vmem %s3, %s248
      %p250 = pneg %p130
      %p251 = pneg %p127
      %p252 = pneg %p158
      %p253 = pneg %p155
      %p254 = scmp.lt.s32.totalorder %s19, 1
      %s255 = scalar_select %p254, %s19, 1
      %p256 = scmp.lt.s32.totalorder %s20, 3
      %s257 = scalar_select %p256, %s20, 3
      %s258 = smul.addr %s257, 16
      %s259 = smul.addr %s255, 64
      %s260 = sadd.s32 %s258, %s259
      %s261 = smul.addr %s260, 8
      %s262 = scalar_lea.vmem %s4, %s261
      %p263 = scmp.lt.s32.totalorder %s19, 1
      %s264 = scalar_select %p263, %s19, 1
      %p265 = scmp.lt.s32.totalorder %s20, 3
      %s266 = scalar_select %p265, %s20, 3
      %s267 = smul.addr %s266, 16
      %s268 = smul.addr %s264, 64
      %s269 = sadd.s32 %s267, %s268
      %s270 = smul.addr %s269, 8
      %s271 = scalar_lea.vmem %s0, %s270
      %p272 = scmp.lt.s32.totalorder %s19, 1
      %s273 = scalar_select %p272, %s19, 1
      %p274 = scmp.lt.s32.totalorder %s20, 3
      %s275 = scalar_select %p274, %s20, 3
      %s276 = smul.addr %s275, 16
      %s277 = smul.addr %s273, 64
      %s278 = sadd.s32 %s276, %s277
      %s279 = smul.addr %s278, 8
      %s280 = scalar_lea.vmem %s1, %s279
      %p281 = scmp.lt.s32.totalorder %s19, 1
      %s282 = scalar_select %p281, %s19, 1
      %s283 = scalar_lea.vmem %s2, %s282
      %p284 = scmp.lt.s32.totalorder %s19, 1
      %s285 = scalar_select %p284, %s19, 1
      %s286 = scalar_lea.vmem %s3, %s285
      %p287 = scmp.lt.s32.totalorder %s19, 1
      %s288 = scalar_select %p287, %s19, 1
      %p289 = scmp.lt.s32.totalorder %s20, 3
      %s290 = scalar_select %p289, %s20, 3
      %s291 = smul.addr %s290, 16
      %s292 = smul.addr %s288, 64
      %s293 = sadd.s32 %s291, %s292
      %s294 = smul.addr %s293, 8
      %s295 = scalar_lea.vmem %s4, %s294
      %v296 = vld [vmem:[%s271] sm:$0xff]
      %v297 = vld [vmem:[%s271 + $0x8] sm:$0xff]
      %v298 = vld [vmem:[%s271 + $0x10] sm:$0xff]
      %v299 = vld [vmem:[%s271 + $0x18] sm:$0xff]
      %v300 = vld [vmem:[%s271 + $0x20] sm:$0xff]
      %v301 = vld [vmem:[%s271 + $0x28] sm:$0xff]
      %v302 = vld [vmem:[%s271 + $0x30] sm:$0xff]
      %v303 = vld [vmem:[%s271 + $0x38] sm:$0xff]
      %v304 = vld [vmem:[%s271 + $0x40] sm:$0xff]
      %v305 = vld [vmem:[%s271 + $0x48] sm:$0xff]
      %v306 = vld [vmem:[%s271 + $0x50] sm:$0xff]
      %v307 = vld [vmem:[%s271 + $0x58] sm:$0xff]
      %v308 = vld [vmem:[%s271 + $0x60] sm:$0xff]
      %v309 = vld [vmem:[%s271 + $0x68] sm:$0xff]
      %v310 = vld [vmem:[%s271 + $0x70] sm:$0xff]
      %v311 = vld [vmem:[%s271 + $0x78] sm:$0xff]
      %v312 = vld [vmem:[%s283] sm:$0x1]
      %v314 = vlaneseq
      %v315 = vshrl.u32 %v314, 7
      %v316 = vsub.s32 0, %v315
      %v317 = vrot.slane %v312, %v316
      %v319 = vmul.f32 %v296, %v317
      %v320 = vmul.f32 %v297, %v317
      %v321 = vmul.f32 %v298, %v317
      %v322 = vmul.f32 %v299, %v317
      %v323 = vmul.f32 %v300, %v317
      %v324 = vmul.f32 %v301, %v317
      %v325 = vmul.f32 %v302, %v317
      %v326 = vmul.f32 %v303, %v317
      %v327 = vmul.f32 %v304, %v317
      %v328 = vmul.f32 %v305, %v317
      %v329 = vmul.f32 %v306, %v317
      %v330 = vmul.f32 %v307, %v317
      %v331 = vmul.f32 %v308, %v317
      %v332 = vmul.f32 %v309, %v317
      %v333 = vmul.f32 %v310, %v317
      %v334 = vmul.f32 %v311, %v317
      %v335 = vld [vmem:[%s286] sm:$0x1]
      %v337 = vlaneseq
      %v338 = vshrl.u32 %v337, 7
      %v339 = vsub.s32 0, %v338
      %v340 = vrot.slane %v335, %v339
      %v342 = vadd.f32 %v319, %v340
      %v343 = vadd.f32 %v320, %v340
      %v344 = vadd.f32 %v321, %v340
      %v345 = vadd.f32 %v322, %v340
      %v346 = vadd.f32 %v323, %v340
      %v347 = vadd.f32 %v324, %v340
      %v348 = vadd.f32 %v325, %v340
      %v349 = vadd.f32 %v326, %v340
      %v350 = vadd.f32 %v327, %v340
      %v351 = vadd.f32 %v328, %v340
      %v352 = vadd.f32 %v329, %v340
      %v353 = vadd.f32 %v330, %v340
      %v354 = vadd.f32 %v331, %v340
      %v355 = vadd.f32 %v332, %v340
      %v356 = vadd.f32 %v333, %v340
      %v357 = vadd.f32 %v334, %v340
      %v358 = vld [vmem:[%s280] sm:$0xff]
      %v359 = vld [vmem:[%s280 + $0x8] sm:$0xff]
      %v360 = vld [vmem:[%s280 + $0x10] sm:$0xff]
      %v361 = vld [vmem:[%s280 + $0x18] sm:$0xff]
      %v362 = vld [vmem:[%s280 + $0x20] sm:$0xff]
      %v363 = vld [vmem:[%s280 + $0x28] sm:$0xff]
      %v364 = vld [vmem:[%s280 + $0x30] sm:$0xff]
      %v365 = vld [vmem:[%s280 + $0x38] sm:$0xff]
      %v366 = vld [vmem:[%s280 + $0x40] sm:$0xff]
      %v367 = vld [vmem:[%s280 + $0x48] sm:$0xff]
      %v368 = vld [vmem:[%s280 + $0x50] sm:$0xff]
      %v369 = vld [vmem:[%s280 + $0x58] sm:$0xff]
      %v370 = vld [vmem:[%s280 + $0x60] sm:$0xff]
      %v371 = vld [vmem:[%s280 + $0x68] sm:$0xff]
      %v372 = vld [vmem:[%s280 + $0x70] sm:$0xff]
      %v373 = vld [vmem:[%s280 + $0x78] sm:$0xff]
      %v374 = vadd.f32 %v342, %v358
      %v375 = vadd.f32 %v343, %v359
      %v376 = vadd.f32 %v344, %v360
      %v377 = vadd.f32 %v345, %v361
      %v378 = vadd.f32 %v346, %v362
      %v379 = vadd.f32 %v347, %v363
      %v380 = vadd.f32 %v348, %v364
      %v381 = vadd.f32 %v349, %v365
      %v382 = vadd.f32 %v350, %v366
      %v383 = vadd.f32 %v351, %v367
      %v384 = vadd.f32 %v352, %v368
      %v385 = vadd.f32 %v353, %v369
      %v386 = vadd.f32 %v354, %v370
      %v387 = vadd.f32 %v355, %v371
      %v388 = vadd.f32 %v356, %v372
      %v389 = vadd.f32 %v357, %v373
      %vm390 = vcmp.ge.f32.partialorder %v374, 0.0
      %vm391 = vcmp.ge.f32.partialorder %v375, 0.0
      %vm392 = vcmp.ge.f32.partialorder %v376, 0.0
      %vm393 = vcmp.ge.f32.partialorder %v377, 0.0
      %vm394 = vcmp.ge.f32.partialorder %v378, 0.0
      %vm395 = vcmp.ge.f32.partialorder %v379, 0.0
      %vm396 = vcmp.ge.f32.partialorder %v380, 0.0
      %vm397 = vcmp.ge.f32.partialorder %v381, 0.0
      %vm398 = vcmp.ge.f32.partialorder %v382, 0.0
      %vm399 = vcmp.ge.f32.partialorder %v383, 0.0
      %vm400 = vcmp.ge.f32.partialorder %v384, 0.0
      %vm401 = vcmp.ge.f32.partialorder %v385, 0.0
      %vm402 = vcmp.ge.f32.partialorder %v386, 0.0
      %vm403 = vcmp.ge.f32.partialorder %v387, 0.0
      %vm404 = vcmp.ge.f32.partialorder %v388, 0.0
      %vm405 = vcmp.ge.f32.partialorder %v389, 0.0
      %v406 = vmul.f32 %v374, 0.01
      %v407 = vmul.f32 %v375, 0.01
      %v408 = vmul.f32 %v376, 0.01
      %v409 = vmul.f32 %v377, 0.01
      %v410 = vmul.f32 %v378, 0.01
      %v411 = vmul.f32 %v379, 0.01
      %v412 = vmul.f32 %v380, 0.01
      %v413 = vmul.f32 %v381, 0.01
      %v414 = vmul.f32 %v382, 0.01
      %v415 = vmul.f32 %v383, 0.01
      %v416 = vmul.f32 %v384, 0.01
      %v417 = vmul.f32 %v385, 0.01
      %v418 = vmul.f32 %v386, 0.01
      %v419 = vmul.f32 %v387, 0.01
      %v420 = vmul.f32 %v388, 0.01
      %v421 = vmul.f32 %v389, 0.01
      %v422 = vsel %vm390, %v374, %v406
      %v423 = vsel %vm391, %v375, %v407
      %v424 = vsel %vm392, %v376, %v408
      %v425 = vsel %vm393, %v377, %v409
      %v426 = vsel %vm394, %v378, %v410
      %v427 = vsel %vm395, %v379, %v411
      %v428 = vsel %vm396, %v380, %v412
      %v429 = vsel %vm397, %v381, %v413
      %v430 = vsel %vm398, %v382, %v414
      %v431 = vsel %vm399, %v383, %v415
      %v432 = vsel %vm400, %v384, %v416
      %v433 = vsel %vm401, %v385, %v417
      %v434 = vsel %vm402, %v386, %v418
      %v435 = vsel %vm403, %v387, %v419
      %v436 = vsel %vm404, %v388, %v420
      %v437 = vsel %vm405, %v389, %v421
      %vm438 = vcmask 64512
      %439 = vst.msk [vmem:[%s295] sm:$0xff] %vm438, %v422
      %440 = vst.msk [vmem:[%s295 + $0x8] sm:$0xff] %vm438, %v423
      %441 = vst.msk [vmem:[%s295 + $0x10] sm:$0xff] %vm438, %v424
      %442 = vst.msk [vmem:[%s295 + $0x18] sm:$0xff] %vm438, %v425
      %443 = vst.msk [vmem:[%s295 + $0x20] sm:$0xff] %vm438, %v426
      %444 = vst.msk [vmem:[%s295 + $0x28] sm:$0xff] %vm438, %v427
      %445 = vst.msk [vmem:[%s295 + $0x30] sm:$0xff] %vm438, %v428
      %446 = vst.msk [vmem:[%s295 + $0x38] sm:$0xff] %vm438, %v429
      %447 = vst.msk [vmem:[%s295 + $0x40] sm:$0xff] %vm438, %v430
      %448 = vst.msk [vmem:[%s295 + $0x48] sm:$0xff] %vm438, %v431
      %449 = vst.msk [vmem:[%s295 + $0x50] sm:$0xff] %vm438, %v432
      %450 = vst.msk [vmem:[%s295 + $0x58] sm:$0xff] %vm438, %v433
      %451 = vst.msk [vmem:[%s295 + $0x60] sm:$0xff] %vm438, %v434
      %452 = vst.msk [vmem:[%s295 + $0x68] sm:$0xff] %vm438, %v435
      %453 = vst.msk [vmem:[%s295 + $0x70] sm:$0xff] %vm438, %v436
      %454 = vst.msk [vmem:[%s295 + $0x78] sm:$0xff] %vm438, %v437
      %p455 = scmp.lt.s32.totalorder %s19, 1
      %s456 = scalar_select %p455, %s19, 1
      %p457 = scmp.lt.s32.totalorder %s20, 3
      %s458 = scalar_select %p457, %s20, 3
      %s459 = smul.addr %s458, 16
      %s460 = smul.addr %s456, 64
      %s461 = sadd.s32 %s459, %s460
      %s462 = smul.addr %s461, 8
      %s463 = scalar_lea.vmem %s4, %s462
      // Predicated region
      $region37: #{basic_res_block_forward.7} parent=35 // pred_check
        %p464 = pneg %p155
      $region38: #{basic_res_block_forward.7} parent=35 // pred_check_branch
        %466 = sbr.rel (%p464) target = $region40
      $region39: #{basic_res_block_forward.7} parent=35 // pred_region
        _
      $region40: #{basic_res_block_forward.7} parent=35 // pred_fallthru
        _
    $region36: #{basic_res_block_forward.7} parent=5 // pred_fallthru
      _
    %p467 = scmp.le.s32.totalorder 2, %s10
    // Predicated region
    $region41: #{basic_res_block_forward.7} parent=5 // pred_check
      %p468 = pneg %p467
    $region42: #{basic_res_block_forward.7} parent=5 // pred_check_branch
      %470 = sbr.rel (%p468) target = $region44
    $region43: #{basic_res_block_forward.7} parent=5 // pred_region
      %s471 = ssub.s32 %s10, 2
      // Predicated region
      $region45: #{basic_res_block_forward.7} parent=43 // pred_check
        %p472 = pneg %p161
      $region46: #{basic_res_block_forward.7} parent=43 // pred_check_branch
        %474 = sbr.rel (%p472) target = $region48
      $region47: #{basic_res_block_forward.7} parent=43 // pred_region
        %p475 = scmp.lt.s32.totalorder %s21, 1
        %s476 = scalar_select %p475, %s21, 1
        %p477 = scmp.lt.s32.totalorder %s22, 3
        %s478 = scalar_select %p477, %s22, 3
        %s479 = smul.addr %s478, 16
        %s480 = smul.addr %s476, 64
        %s481 = sadd.s32 %s479, %s480
        %s482 = smul.addr %s481, 8
        %s483 = scalar_lea.vmem %s4, %s482
      $region48: #{basic_res_block_forward.7} parent=43 // pred_fallthru
        _
    $region44: #{basic_res_block_forward.7} parent=5 // pred_fallthru
      _
  $region6: #{basic_res_block_forward.7} parent=0 // loop_footer
    %s14 = sadd.s32 1, %s10
  $region7: #{basic_res_block_forward.7} parent=0 // loop_footer_branch
    %9 = sbr.rel target = $region3
  $region8: #{basic_res_block_forward.7} parent=0 // loop_exit
    _

// kernel: basic_res_block_forward.4
$region0: #{basic_res_block_forward.4}
  #allocation0 [shape = 'u32[]', space=smem, size = 0x4, offset = 0x4, fixed_abs, tag = 'smem constant byte address 0x4 - core index']
  #allocation1 [shape = 'u32[144,128]{1,0:T(1,128)}', space=vmem, size = 0x12000, scoped, tag = 'internal scratch']
  %s0 = inlined_call_operand.vmem [shape: f32[2,6,10,18,8], index: 0, kind: input, shape index: {}, may-alias: {0,1,2}]
  %s1 = inlined_call_operand.vmem [shape: f32[2,6,10,18,8], index: 1, kind: input, shape index: {}, may-alias: {0,1,2}]
  %s2 = inlined_call_operand.vmem [shape: f32[2,6,10,18,8], index: 2, kind: input, shape index: {}, may-alias: {0,1,2}]
  %s3 = inlined_call_operand.vmem [shape: f32[27,8,8], index: 3, kind: input, shape index: {}]
  %s4 = inlined_call_operand.vmem [shape: f32[1,8], index: 4, kind: input, shape index: {}]
  %s5 = inlined_call_operand.vmem [shape: f32[2,4,8,16,8], index: 5, kind: output, shape index: {0}]
  %s6 = inlined_call_operand.vmem [shape: f32[2,2,8], index: 6, kind: output, shape index: {1}]
  %7 = xla_tuple %s5, %s6
  %s8 = sld [smem:[#allocation0]]
  $region65: #{basic_res_block_forward.4} parent=0
    _
  %s10 = ssub.s32 1, %s8
  %s11 = scalar_select 0, %s10, %s8
  loop: start=0, step=1, limit=10
  $region2: #{basic_res_block_forward.4} parent=0 // loop_pre_header
    _
  $region3: #{basic_res_block_forward.4} parent=0 // loop_header
    %s13 = sphi 0, %s17
    %p14 = scmp.ge.s32.totalorder %s13, 10
    %s20 = sphi 0, %s32
    %s21 = sphi 0, %s28
    %s22 = sphi 0, %s20
    %s23 = sphi 0, %s21
    %s24 = sphi 0, %s22
    %s25 = sphi 0, %s23
    %s37 = sphi 0, %s39
    %s40 = sphi 0, %s37
    %s41 = sphi 0, %s40
    %s57 = sphi 0, %s41
    %s67 = sphi 0, %s69
    %s70 = sphi 0, %s67
    %s71 = sphi 0, %s70
    %s87 = sphi 0, %s71
    %s97 = sphi 0, %s99
    %s100 = sphi 0, %s97
    %s101 = sphi 0, %s100
    %s117 = sphi 0, %s101
    %s121 = sphi 0, %s121
    %s123 = sphi 0, %s121
    %s124 = sphi 0, %s123
    %s138 = sphi 0, %s124
    %s142 = sphi 0, %s142
    %s144 = sphi 0, %s142
    %s145 = sphi 0, %s144
    %s159 = sphi 0, %s145
    %s167 = sphi 0, %s169
    %s170 = sphi 0, %s167
    %s171 = sphi 0, %s170
    %s187 = sphi 0, %s171
    %s193 = sphi 0, %s195
    %s196 = sphi 0, %s193
    %s197 = sphi 0, %s196
    %s213 = sphi 0, %s197
  $region4: #{basic_res_block_forward.4} parent=0 // loop_header_branch
    %16 = sbr.rel (%p14) target = $region8
  $region5: #{basic_res_block_forward.4} parent=0 // loop_body
    %s18 = ssub.s32 %s13, 1
    %s19 = ssub.s32 %s13, 2
    %s26 = sadd.s32 1, %s21
    %p27 = scmp.ge.s32.totalorder %s26, 4
    %s28 = scalar_select %p27, 0, %s26
    %s29 = sadd.s32 1, %s20
    %s30 = scalar_select %p27, %s29, %s20
    %p31 = scmp.ge.s32.totalorder %s30, 2
    %s32 = scalar_select %p31, 0, %s30
    %s33 = ssub.s32 %s20, %s32
    %s34 = ssub.s32 %s21, %s28
    %s35 = sor.u32 %s33, %s34
    %p36 = scmp.eq.s32.totalorder %s35, 0
    %s38 = sadd.s32 %s37, 1
    %s39 = scalar_select %p36, %s37, %s38
    %p42 = pneg %p36
    %p43 = scmp.eq.s32.totalorder %s13, 7
    %p44 = por %p42, %p43
    %p45 = scmp.ne.s32.totalorder %s37, %s40
    %p46 = scmp.eq.s32.totalorder %s13, 0
    %p47 = por %p45, %p46
    %p48 = scmp.ne.s32.totalorder %s37, %s40
    %p49 = scmp.eq.s32.totalorder %s18, 7
    %p50 = por %p48, %p49
    %p51 = scmp.ne.s32.totalorder %s40, %s41
    %p52 = scmp.eq.s32.totalorder %s18, 0
    %p53 = por %p51, %p52
    %p54 = scmp.ne.s32.totalorder %s40, %s41
    %p55 = scmp.eq.s32.totalorder %s19, 7
    %p56 = por %p54, %p55
    %p58 = scmp.ne.s32.totalorder %s41, %s57
    %p59 = scmp.eq.s32.totalorder %s19, 0
    %p60 = por %p58, %p59
    %s61 = sadd.s32 %s21, 1
    %s62 = sadd.s32 %s28, 1
    %s63 = ssub.s32 %s20, %s32
    %s64 = ssub.s32 %s61, %s62
    %s65 = sor.u32 %s63, %s64
    %p66 = scmp.eq.s32.totalorder %s65, 0
    %s68 = sadd.s32 %s67, 1
    %s69 = scalar_select %p66, %s67, %s68
    %p72 = pneg %p66
    %p73 = scmp.eq.s32.totalorder %s13, 7
    %p74 = por %p72, %p73
    %p75 = scmp.ne.s32.totalorder %s67, %s70
    %p76 = scmp.eq.s32.totalorder %s13, 0
    %p77 = por %p75, %p76
    %p78 = scmp.ne.s32.totalorder %s67, %s70
    %p79 = scmp.eq.s32.totalorder %s18, 7
    %p80 = por %p78, %p79
    %p81 = scmp.ne.s32.totalorder %s70, %s71
    %p82 = scmp.eq.s32.totalorder %s18, 0
    %p83 = por %p81, %p82
    %p84 = scmp.ne.s32.totalorder %s70, %s71
    %p85 = scmp.eq.s32.totalorder %s19, 7
    %p86 = por %p84, %p85
    %p88 = scmp.ne.s32.totalorder %s71, %s87
    %p89 = scmp.eq.s32.totalorder %s19, 0
    %p90 = por %p88, %p89
    %s91 = sadd.s32 %s21, 2
    %s92 = sadd.s32 %s28, 2
    %s93 = ssub.s32 %s20, %s32
    %s94 = ssub.s32 %s91, %s92
    %s95 = sor.u32 %s93, %s94
    %p96 = scmp.eq.s32.totalorder %s95, 0
    %s98 = sadd.s32 %s97, 1
    %s99 = scalar_select %p96, %s97, %s98
    %p102 = pneg %p96
    %p103 = scmp.eq.s32.totalorder %s13, 7
    %p104 = por %p102, %p103
    %p105 = scmp.ne.s32.totalorder %s97, %s100
    %p106 = scmp.eq.s32.totalorder %s13, 0
    %p107 = por %p105, %p106
    %p108 = scmp.ne.s32.totalorder %s97, %s100
    %p109 = scmp.eq.s32.totalorder %s18, 7
    %p110 = por %p108, %p109
    %p111 = scmp.ne.s32.totalorder %s100, %s101
    %p112 = scmp.eq.s32.totalorder %s18, 0
    %p113 = por %p111, %p112
    %p114 = scmp.ne.s32.totalorder %s100, %s101
    %p115 = scmp.eq.s32.totalorder %s19, 7
    %p116 = por %p114, %p115
    %p118 = scmp.ne.s32.totalorder %s101, %s117
    %p119 = scmp.eq.s32.totalorder %s19, 0
    %p120 = por %p118, %p119
    %s122 = sadd.s32 %s121, 1
    %p125 = scmp.eq.s32.totalorder %s13, 7
    %p126 = scmp.ne.s32.totalorder %s121, %s123
    %p127 = scmp.eq.s32.totalorder %s13, 0
    %p128 = por %p126, %p127
    %p129 = scmp.ne.s32.totalorder %s121, %s123
    %p130 = scmp.eq.s32.totalorder %s18, 7
    %p131 = por %p129, %p130
    %p132 = scmp.ne.s32.totalorder %s123, %s124
    %p133 = scmp.eq.s32.totalorder %s18, 0
    %p134 = por %p132, %p133
    %p135 = scmp.ne.s32.totalorder %s123, %s124
    %p136 = scmp.eq.s32.totalorder %s19, 7
    %p137 = por %p135, %p136
    %p139 = scmp.ne.s32.totalorder %s124, %s138
    %p140 = scmp.eq.s32.totalorder %s19, 0
    %p141 = por %p139, %p140
    %s143 = sadd.s32 %s142, 1
    %p146 = scmp.eq.s32.totalorder %s13, 7
    %p147 = scmp.ne.s32.totalorder %s142, %s144
    %p148 = scmp.eq.s32.totalorder %s13, 0
    %p149 = por %p147, %p148
    %p150 = scmp.ne.s32.totalorder %s142, %s144
    %p151 = scmp.eq.s32.totalorder %s18, 7
    %p152 = por %p150, %p151
    %p153 = scmp.ne.s32.totalorder %s144, %s145
    %p154 = scmp.eq.s32.totalorder %s18, 0
    %p155 = por %p153, %p154
    %p156 = scmp.ne.s32.totalorder %s144, %s145
    %p157 = scmp.eq.s32.totalorder %s19, 7
    %p158 = por %p156, %p157
    %p160 = scmp.ne.s32.totalorder %s145, %s159
    %p161 = scmp.eq.s32.totalorder %s19, 0
    %p162 = por %p160, %p161
    %s163 = ssub.s32 %s20, %s32
    %s164 = ssub.s32 %s21, %s28
    %s165 = sor.u32 %s163, %s164
    %p166 = scmp.eq.s32.totalorder %s165, 0
    %s168 = sadd.s32 %s167, 1
    %s169 = scalar_select %p166, %s167, %s168
    %p172 = pneg %p166
    %p173 = scmp.eq.s32.totalorder %s13, 7
    %p174 = por %p172, %p173
    %p175 = scmp.ne.s32.totalorder %s167, %s170
    %p176 = scmp.eq.s32.totalorder %s13, 0
    %p177 = por %p175, %p176
    %p178 = scmp.ne.s32.totalorder %s167, %s170
    %p179 = scmp.eq.s32.totalorder %s18, 7
    %p180 = por %p178, %p179
    %p181 = scmp.ne.s32.totalorder %s170, %s171
    %p182 = scmp.eq.s32.totalorder %s18, 0
    %p183 = por %p181, %p182
    %p184 = scmp.ne.s32.totalorder %s170, %s171
    %p185 = scmp.eq.s32.totalorder %s19, 7
    %p186 = por %p184, %p185
    %p188 = scmp.ne.s32.totalorder %s171, %s187
    %p189 = scmp.eq.s32.totalorder %s19, 0
    %p190 = por %p188, %p189
    %s191 = ssub.s32 %s20, %s32
    %p192 = scmp.eq.s32.totalorder %s191, 0
    %s194 = sadd.s32 %s193, 1
    %s195 = scalar_select %p192, %s193, %s194
    %p198 = pneg %p192
    %p199 = scmp.eq.s32.totalorder %s13, 7
    %p200 = por %p198, %p199
    %p201 = scmp.ne.s32.totalorder %s193, %s196
    %p202 = scmp.eq.s32.totalorder %s13, 0
    %p203 = por %p201, %p202
    %p204 = scmp.ne.s32.totalorder %s193, %s196
    %p205 = scmp.eq.s32.totalorder %s18, 7
    %p206 = por %p204, %p205
    %p207 = scmp.ne.s32.totalorder %s196, %s197
    %p208 = scmp.eq.s32.totalorder %s18, 0
    %p209 = por %p207, %p208
    %p210 = scmp.ne.s32.totalorder %s196, %s197
    %p211 = scmp.eq.s32.totalorder %s19, 7
    %p212 = por %p210, %p211
    %p214 = scmp.ne.s32.totalorder %s197, %s213
    %p215 = scmp.eq.s32.totalorder %s19, 0
    %p216 = por %p214, %p215
    %p217 = scmp.le.s32.totalorder 1, %s13
    %p218 = scmp.lt.s32.totalorder %s13, 9
    %p219 = pnand %p217, %p218
    %p220 = pneg %p219
    // Predicated region
    $region9: #{basic_res_block_forward.4} parent=5 // pred_check
      _
    $region10: #{basic_res_block_forward.4} parent=5 // pred_check_branch
      %222 = sbr.rel (%p219) target = $region12
    $region11: #{basic_res_block_forward.4} parent=5 // pred_region
      %s223 = ssub.s32 %s13, 1
      // Predicated region
      $region13: #{basic_res_block_forward.4} parent=11 // pred_check
        %p224 = pneg %p134
      $region14: #{basic_res_block_forward.4} parent=11 // pred_check_branch
        %226 = sbr.rel (%p224) target = $region16
      $region15: #{basic_res_block_forward.4} parent=11 // pred_region
        _
      $region16: #{basic_res_block_forward.4} parent=11 // pred_fallthru
        _
      // Predicated region
      $region17: #{basic_res_block_forward.4} parent=11 // pred_check
        %p227 = pneg %p155
      $region18: #{basic_res_block_forward.4} parent=11 // pred_check_branch
        %229 = sbr.rel (%p227) target = $region20
      $region19: #{basic_res_block_forward.4} parent=11 // pred_region
        _
      $region20: #{basic_res_block_forward.4} parent=11 // pred_fallthru
        _
    $region12: #{basic_res_block_forward.4} parent=5 // pred_fallthru
      _
    %p230 = scmp.lt.s32.totalorder %s13, 8
    // Predicated region
    $region21: #{basic_res_block_forward.4} parent=5 // pred_check
      %p231 = pneg %p230
    $region22: #{basic_res_block_forward.4} parent=5 // pred_check_branch
      %233 = sbr.rel (%p231) target = $region24
    $region23: #{basic_res_block_forward.4} parent=5 // pred_region
      // Predicated region
      $region25: #{basic_res_block_forward.4} parent=23 // pred_check
        %p234 = pneg %p47
      $region26: #{basic_res_block_forward.4} parent=23 // pred_check_branch
        %236 = sbr.rel (%p234) target = $region28
      $region27: #{basic_res_block_forward.4} parent=23 // pred_region
        %p237 = scmp.lt.s32.totalorder %s20, 1
        %s238 = scalar_select %p237, %s20, 1
        %p239 = scmp.lt.s32.totalorder %s21, 5
        %s240 = scalar_select %p239, %s21, 5
        %s241 = smul.addr %s240, 30
        %s242 = smul.addr %s238, 180
        %s243 = sadd.s32 %s241, %s242
        %s244 = smul.addr %s243, 8
        %s245 = scalar_lea.vmem %s0, %s244
      $region28: #{basic_res_block_forward.4} parent=23 // pred_fallthru
        _
      // Predicated region
      $region29: #{basic_res_block_forward.4} parent=23 // pred_check
        %p246 = pneg %p77
      $region30: #{basic_res_block_forward.4} parent=23 // pred_check_branch
        %248 = sbr.rel (%p246) target = $region32
      $region31: #{basic_res_block_forward.4} parent=23 // pred_region
        %s249 = sadd.s32 %s21, 1
        %p250 = scmp.lt.s32.totalorder %s20, 1
        %s251 = scalar_select %p250, %s20, 1
        %p252 = scmp.lt.s32.totalorder %s249, 5
        %s253 = scalar_select %p252, %s249, 5
        %s254 = smul.addr %s253, 30
        %s255 = smul.addr %s251, 180
        %s256 = sadd.s32 %s254, %s255
        %s257 = smul.addr %s256, 8
        %s258 = scalar_lea.vmem %s1, %s257
        %s259 = sadd.s32 %s21, 1
      $region32: #{basic_res_block_forward.4} parent=23 // pred_fallthru
        _
      // Predicated region
      $region33: #{basic_res_block_forward.4} parent=23 // pred_check
        %p260 = pneg %p107
      $region34: #{basic_res_block_forward.4} parent=23 // pred_check_branch
        %262 = sbr.rel (%p260) target = $region36
      $region35: #{basic_res_block_forward.4} parent=23 // pred_region
        %s263 = sadd.s32 %s21, 2
        %p264 = scmp.lt.s32.totalorder %s20, 1
        %s265 = scalar_select %p264, %s20, 1
        %p266 = scmp.lt.s32.totalorder %s263, 5
        %s267 = scalar_select %p266, %s263, 5
        %s268 = smul.addr %s267, 30
        %s269 = smul.addr %s265, 180
        %s270 = sadd.s32 %s268, %s269
        %s271 = smul.addr %s270, 8
        %s272 = scalar_lea.vmem %s2, %s271
        %s273 = sadd.s32 %s21, 2
      $region36: #{basic_res_block_forward.4} parent=23 // pred_fallthru
        _
    $region24: #{basic_res_block_forward.4} parent=5 // pred_fallthru
      _
    %p274 = scmp.le.s32.totalorder 1, %s13
    %p275 = scmp.lt.s32.totalorder %s13, 9
    %p276 = pnand %p274, %p275
    %p277 = pneg %p276
    // Predicated region
    $region37: #{basic_res_block_forward.4} parent=5 // pred_check
      _
    $region38: #{basic_res_block_forward.4} parent=5 // pred_check_branch
      %279 = sbr.rel (%p276) target = $region40
    $region39: #{basic_res_block_forward.4} parent=5 // pred_region
      %s280 = ssub.s32 %s13, 1
      %p281 = scmp.lt.s32.totalorder %s22, 1
      %s282 = scalar_select %p281, %s22, 1
      %p283 = scmp.lt.s32.totalorder %s23, 5
      %s284 = scalar_select %p283, %s23, 5
      %s285 = smul.addr %s284, 30
      %s286 = smul.addr %s282, 180
      %s287 = sadd.s32 %s285, %s286
      %s288 = smul.addr %s287, 8
      %s289 = scalar_lea.vmem %s0, %s288
      %p290 = pneg %p53
      %p291 = pneg %p50
      %s292 = sadd.s32 %s23, 1
      %p293 = scmp.lt.s32.totalorder %s22, 1
      %s294 = scalar_select %p293, %s22, 1
      %p295 = scmp.lt.s32.totalorder %s292, 5
      %s296 = scalar_select %p295, %s292, 5
      %s297 = smul.addr %s296, 30
      %s298 = smul.addr %s294, 180
      %s299 = sadd.s32 %s297, %s298
      %s300 = smul.addr %s299, 8
      %s301 = scalar_lea.vmem %s1, %s300
      %p302 = pneg %p83
      %p303 = pneg %p80
      %s304 = sadd.s32 %s23, 2
      %p305 = scmp.lt.s32.totalorder %s22, 1
      %s306 = scalar_select %p305, %s22, 1
      %p307 = scmp.lt.s32.totalorder %s304, 5
      %s308 = scalar_select %p307, %s304, 5
      %s309 = smul.addr %s308, 30
      %s310 = smul.addr %s306, 180
      %s311 = sadd.s32 %s309, %s310
      %s312 = smul.addr %s311, 8
      %s313 = scalar_lea.vmem %s2, %s312
      %p314 = pneg %p113
      %p315 = pneg %p110
      %p316 = pneg %p134
      %p317 = pneg %p131
      %p318 = pneg %p155
      %p319 = pneg %p152
      %p320 = pneg %p183
      %p321 = pneg %p180
      %p322 = scmp.lt.s32.totalorder %s22, 1
      %s323 = scalar_select %p322, %s22, 1
      %p324 = scmp.lt.s32.totalorder %s23, 3
      %s325 = scalar_select %p324, %s23, 3
      %s326 = smul.addr %s325, 16
      %s327 = smul.addr %s323, 64
      %s328 = sadd.s32 %s326, %s327
      %s329 = smul.addr %s328, 8
      %s330 = scalar_lea.vmem %s5, %s329
      %p331 = pneg %p209
      %p332 = pneg %p206
      %p333 = scmp.lt.s32.totalorder %s22, 1
      %s334 = scalar_select %p333, %s22, 1
      %s335 = smul.addr %s334, 2
      %s336 = scalar_lea.vmem %s6, %s335
      %p337 = scmp.lt.s32.totalorder %s22, 1
      %s338 = scalar_select %p337, %s22, 1
      %p339 = scmp.lt.s32.totalorder %s23, 5
      %s340 = scalar_select %p339, %s23, 5
      %s341 = smul.addr %s340, 30
      %s342 = smul.addr %s338, 180
      %s343 = sadd.s32 %s341, %s342
      %s344 = smul.addr %s343, 8
      %s345 = scalar_lea.vmem %s0, %s344
      %s346 = sadd.s32 %s23, 1
      %p347 = scmp.lt.s32.totalorder %s22, 1
      %s348 = scalar_select %p347, %s22, 1
      %p349 = scmp.lt.s32.totalorder %s346, 5
      %s350 = scalar_select %p349, %s346, 5
      %s351 = smul.addr %s350, 30
      %s352 = smul.addr %s348, 180
      %s353 = sadd.s32 %s351, %s352
      %s354 = smul.addr %s353, 8
      %s355 = scalar_lea.vmem %s1, %s354
      %s356 = sadd.s32 %s23, 1
      %s357 = sadd.s32 %s23, 2
      %p358 = scmp.lt.s32.totalorder %s22, 1
      %s359 = scalar_select %p358, %s22, 1
      %p360 = scmp.lt.s32.totalorder %s357, 5
      %s361 = scalar_select %p360, %s357, 5
      %s362 = smul.addr %s361, 30
      %s363 = smul.addr %s359, 180
      %s364 = sadd.s32 %s362, %s363
      %s365 = smul.addr %s364, 8
      %s366 = scalar_lea.vmem %s2, %s365
      %s367 = sadd.s32 %s23, 2
      %p368 = scmp.lt.s32.totalorder %s22, 1
      %s369 = scalar_select %p368, %s22, 1
      %p370 = scmp.lt.s32.totalorder %s23, 3
      %s371 = scalar_select %p370, %s23, 3
      %s372 = smul.addr %s371, 16
      %s373 = smul.addr %s369, 64
      %s374 = sadd.s32 %s372, %s373
      %s375 = smul.addr %s374, 8
      %s376 = scalar_lea.vmem %s5, %s375
      %p377 = scmp.lt.s32.totalorder %s22, 1
      %s378 = scalar_select %p377, %s22, 1
      %s379 = smul.addr %s378, 2
      %s380 = scalar_lea.vmem %s6, %s379
      %v381 = vld [vmem:[%s345] sm:$0xff]
      %v382 = vld [vmem:[%s345 + $0x8] sm:$0xff]
      %v383 = vld [vmem:[%s345 + $0x10] sm:$0x3]
      %v384 = vld [vmem:[%s345 + $0x18] sm:$0xff]
      %v385 = vld [vmem:[%s345 + $0x20] sm:$0xff]
      %v386 = vld [vmem:[%s345 + $0x28] sm:$0x3]
      %v387 = vld [vmem:[%s345 + $0x30] sm:$0xff]
      %v388 = vld [vmem:[%s345 + $0x38] sm:$0xff]
      %v389 = vld [vmem:[%s345 + $0x40] sm:$0x3]
      %v390 = vld [vmem:[%s345 + $0x48] sm:$0xff]
      %v391 = vld [vmem:[%s345 + $0x50] sm:$0xff]
      %v392 = vld [vmem:[%s345 + $0x58] sm:$0x3]
      %v393 = vld [vmem:[%s345 + $0x60] sm:$0xff]
      %v394 = vld [vmem:[%s345 + $0x68] sm:$0xff]
      %v395 = vld [vmem:[%s345 + $0x70] sm:$0x3]
      %v396 = vld [vmem:[%s345 + $0x78] sm:$0xff]
      %v397 = vld [vmem:[%s345 + $0x80] sm:$0xff]
      %v398 = vld [vmem:[%s345 + $0x88] sm:$0x3]
      %v399 = vld [vmem:[%s345 + $0x90] sm:$0xff]
      %v400 = vld [vmem:[%s345 + $0x98] sm:$0xff]
      %v401 = vld [vmem:[%s345 + $0xa0] sm:$0x3]
      %v402 = vld [vmem:[%s345 + $0xa8] sm:$0xff]
      %v403 = vld [vmem:[%s345 + $0xb0] sm:$0xff]
      %v404 = vld [vmem:[%s345 + $0xb8] sm:$0x3]
      %v405 = vld [vmem:[%s345 + $0xc0] sm:$0xff]
      %v406 = vld [vmem:[%s345 + $0xc8] sm:$0xff]
      %v407 = vld [vmem:[%s345 + $0xd0] sm:$0x3]
      %v408 = vld [vmem:[%s345 + $0xd8] sm:$0xff]
      %v409 = vld [vmem:[%s345 + $0xe0] sm:$0xff]
      %v410 = vld [vmem:[%s345 + $0xe8] sm:$0x3]
      %v411 = vld [vmem:[%s355] sm:$0xff]
      %v412 = vld [vmem:[%s355 + $0x8] sm:$0xff]
      %v413 = vld [vmem:[%s355 + $0x10] sm:$0x3]
      %v414 = vld [vmem:[%s355 + $0x18] sm:$0xff]
      %v415 = vld [vmem:[%s355 + $0x20] sm:$0xff]
      %v416 = vld [vmem:[%s355 + $0x28] sm:$0x3]
      %v417 = vld [vmem:[%s355 + $0x30] sm:$0xff]
      %v418 = vld [vmem:[%s355 + $0x38] sm:$0xff]
      %v419 = vld [vmem:[%s355 + $0x40] sm:$0x3]
      %v420 = vld [vmem:[%s355 + $0x48] sm:$0xff]
      %v421 = vld [vmem:[%s355 + $0x50] sm:$0xff]
      %v422 = vld [vmem:[%s355 + $0x58] sm:$0x3]
      %v423 = vld [vmem:[%s355 + $0x60] sm:$0xff]
      %v424 = vld [vmem:[%s355 + $0x68] sm:$0xff]
      %v425 = vld [vmem:[%s355 + $0x70] sm:$0x3]
      %v426 = vld [vmem:[%s355 + $0x78] sm:$0xff]
      %v427 = vld [vmem:[%s355 + $0x80] sm:$0xff]
      %v428 = vld [vmem:[%s355 + $0x88] sm:$0x3]
      %v429 = vld [vmem:[%s355 + $0x90] sm:$0xff]
      %v430 = vld [vmem:[%s355 + $0x98] sm:$0xff]
      %v431 = vld [vmem:[%s355 + $0xa0] sm:$0x3]
      %v432 = vld [vmem:[%s355 + $0xa8] sm:$0xff]
      %v433 = vld [vmem:[%s355 + $0xb0] sm:$0xff]
      %v434 = vld [vmem:[%s355 + $0xb8] sm:$0x3]
      %v435 = vld [vmem:[%s355 + $0xc0] sm:$0xff]
      %v436 = vld [vmem:[%s355 + $0xc8] sm:$0xff]
      %v437 = vld [vmem:[%s355 + $0xd0] sm:$0x3]
      %v438 = vld [vmem:[%s355 + $0xd8] sm:$0xff]
      %v439 = vld [vmem:[%s355 + $0xe0] sm:$0xff]
      %v440 = vld [vmem:[%s355 + $0xe8] sm:$0x3]
      %v441 = vld [vmem:[%s366] sm:$0xff]
      %v442 = vld [vmem:[%s366 + $0x8] sm:$0xff]
      %v443 = vld [vmem:[%s366 + $0x10] sm:$0x3]
      %v444 = vld [vmem:[%s366 + $0x18] sm:$0xff]
      %v445 = vld [vmem:[%s366 + $0x20] sm:$0xff]
      %v446 = vld [vmem:[%s366 + $0x28] sm:$0x3]
      %v447 = vld [vmem:[%s366 + $0x30] sm:$0xff]
      %v448 = vld [vmem:[%s366 + $0x38] sm:$0xff]
      %v449 = vld [vmem:[%s366 + $0x40] sm:$0x3]
      %v450 = vld [vmem:[%s366 + $0x48] sm:$0xff]
      %v451 = vld [vmem:[%s366 + $0x50] sm:$0xff]
      %v452 = vld [vmem:[%s366 + $0x58] sm:$0x3]
      %v453 = vld [vmem:[%s366 + $0x60] sm:$0xff]
      %v454 = vld [vmem:[%s366 + $0x68] sm:$0xff]
      %v455 = vld [vmem:[%s366 + $0x70] sm:$0x3]
      %v456 = vld [vmem:[%s366 + $0x78] sm:$0xff]
      %v457 = vld [vmem:[%s366 + $0x80] sm:$0xff]
      %v458 = vld [vmem:[%s366 + $0x88] sm:$0x3]
      %v459 = vld [vmem:[%s366 + $0x90] sm:$0xff]
      %v460 = vld [vmem:[%s366 + $0x98] sm:$0xff]
      %v461 = vld [vmem:[%s366 + $0xa0] sm:$0x3]
      %v462 = vld [vmem:[%s366 + $0xa8] sm:$0xff]
      %v463 = vld [vmem:[%s366 + $0xb0] sm:$0xff]
      %v464 = vld [vmem:[%s366 + $0xb8] sm:$0x3]
      %v465 = vld [vmem:[%s366 + $0xc0] sm:$0xff]
      %v466 = vld [vmem:[%s366 + $0xc8] sm:$0xff]
      %v467 = vld [vmem:[%s366 + $0xd0] sm:$0x3]
      %v468 = vld [vmem:[%s366 + $0xd8] sm:$0xff]
      %v469 = vld [vmem:[%s366 + $0xe0] sm:$0xff]
      %v470 = vld [vmem:[%s366 + $0xe8] sm:$0x3]
      %v471 = vld [vmem:[%s3] sm:$0xff]
      %vm496 = vcmask 1046528
      %v497 = vrot.slane %v381, 1
      %v498 = vrot.slane %v382, 1
      %v499 = vsel %vm496, %v497, %v498
      %v500 = vrot.slane %v383, 1
      %v501 = vsel %vm496, %v498, %v500
      %v502 = vrot.slane %v384, 1
      %v503 = vrot.slane %v385, 1
      %v504 = vsel %vm496, %v502, %v503
      %v505 = vrot.slane %v386, 1
      %v506 = vsel %vm496, %v503, %v505
      %v507 = vrot.slane %v387, 1
      %v508 = vrot.slane %v388, 1
      %v509 = vsel %vm496, %v507, %v508
      %v510 = vrot.slane %v389, 1
      %v511 = vsel %vm496, %v508, %v510
      %v512 = vrot.slane %v390, 1
      %v513 = vrot.slane %v391, 1
      %v514 = vsel %vm496, %v512, %v513
      %v515 = vrot.slane %v392, 1
      %v516 = vsel %vm496, %v513, %v515
      %v517 = vrot.slane %v393, 1
      %v518 = vrot.slane %v394, 1
      %v519 = vsel %vm496, %v517, %v518
      %v520 = vrot.slane %v395, 1
      %v521 = vsel %vm496, %v518, %v520
      %v522 = vrot.slane %v396, 1
      %v523 = vrot.slane %v397, 1
      %v524 = vsel %vm496, %v522, %v523
      %v525 = vrot.slane %v398, 1
      %v526 = vsel %vm496, %v523, %v525
      %v527 = vrot.slane %v399, 1
      %v528 = vrot.slane %v400, 1
      %v529 = vsel %vm496, %v527, %v528
      %v530 = vrot.slane %v401, 1
      %v531 = vsel %vm496, %v528, %v530
      %v532 = vrot.slane %v402, 1
      %v533 = vrot.slane %v403, 1
      %v534 = vsel %vm496, %v532, %v533
      %v535 = vrot.slane %v404, 1
      %v536 = vsel %vm496, %v533, %v535
      %s537 = scalar_lea.vmem %s3, 8
      %v538 = vld [vmem:[%s537] sm:$0xff]
      %vm539 = vcmask 64512
      %v540 = vsel %vm539, %v499, 0
      %v542 = vsel %vm539, %v501, 0
      %v544 = vsel %vm539, %v504, 0
      %v546 = vsel %vm539, %v506, 0
      %v548 = vsel %vm539, %v509, 0
      %v550 = vsel %vm539, %v511, 0
      %v552 = vsel %vm539, %v514, 0
      %v554 = vsel %vm539, %v516, 0
      %v556 = vsel %vm539, %v519, 0
      %v558 = vsel %vm539, %v521, 0
      %v560 = vsel %vm539, %v524, 0
      %v562 = vsel %vm539, %v526, 0
      %v564 = vsel %vm539, %v529, 0
      %v566 = vsel %vm539, %v531, 0
      %v568 = vsel %vm539, %v534, 0
      %v570 = vsel %vm539, %v536, 0
      %572 = vmatprep.subr.mxu0 0.0
      %573 = vmatpush1.msra.mxu0 %v538
      %574 = vmatprep.subr.mxu0 0.0
      %575 = vmatpush1.msra.mxu0 0.0
      %576 = vmatprep.subr.mxu0 0.0
      %577 = vmatpush1.msra.mxu0 0.0
      %578 = vmatprep.subr.mxu0 0.0
      %579 = vmatpush1.msra.mxu0 0.0
      %580 = vmatprep.subr.mxu0 0.0
      %581 = vmatpush1.msra.mxu0 0.0
      %582 = vmatprep.subr.mxu0 0.0
      %583 = vmatpush1.msra.mxu0 0.0
      %584 = vmatprep.subr.mxu0 0.0
      %585 = vmatpush1.msra.mxu0 0.0
      %586 = vmatprep.subr.mxu0 0.0
      %587 = vmatpush1.msra.mxu0 0.0
      %588 = vmatprep.subr.mxu0 0.0
      %589 = vmatpush1.msra.mxu0 0.0
      %590 = vmatprep.subr.mxu0 0.0
      %591 = vmatpush1.msra.mxu0 0.0
      %592 = vmatprep.subr.mxu0 0.0
      %593 = vmatpush1.msra.mxu0 0.0
      %594 = vmatprep.subr.mxu0 0.0
      %595 = vmatpush1.msra.mxu0 0.0
      %596 = vmatprep.subr.mxu0 0.0
      %597 = vmatpush1.msra.mxu0 0.0
      %598 = vmatprep.subr.mxu0 0.0
      %599 = vmatpush1.msra.mxu0 0.0
      %600 = vmatprep.subr.mxu0 0.0
      %601 = vmatpush1.msra.mxu0 0.0
      %602 = vmatprep.subr.mxu0 0.0
      %603 = vmatpush1.msra.mxu0 0.0
      %604 = vmatprep.subr.mxu0 0.0
      %605 = vmatpush1.msra.mxu0 0.0
      %606 = vmatprep.subr.mxu0 0.0
      %607 = vmatpush1.msra.mxu0 0.0
      %608 = vmatprep.subr.mxu0 0.0
      %609 = vmatpush1.msra.mxu0 0.0
      %610 = vmatprep.subr.mxu0 0.0
      %611 = vmatpush1.msra.mxu0 0.0
      %612 = vmatprep.subr.mxu0 0.0
      %613 = vmatpush1.msra.mxu0 0.0
      %614 = vmatprep.subr.mxu0 0.0
      %615 = vmatpush1.msra.mxu0 0.0
      %616 = vmatprep.subr.mxu0 0.0
      %617 = vmatpush1.msra.mxu0 0.0
      %618 = vmatprep.subr.mxu0 0.0
      %619 = vmatpush1.msra.mxu0 0.0
      %620 = vmatprep.subr.mxu0 0.0
      %621 = vmatpush1.msra.mxu0 0.0
      %622 = vmatprep.subr.mxu0 0.0
      %623 = vmatpush1.msra.mxu0 0.0
      %624 = vmatprep.subr.mxu0 0.0
      %625 = vmatpush1.msra.mxu0 0.0
      %626 = vmatprep.subr.mxu0 0.0
      %627 = vmatpush1.msra.mxu0 0.0
      %628 = vmatprep.subr.mxu0 0.0
      %629 = vmatpush1.msra.mxu0 0.0
      %630 = vmatprep.subr.mxu0 0.0
      %631 = vmatpush1.msra.mxu0 0.0
      %632 = vmatprep.subr.mxu0 0.0
      %633 = vmatpush1.msra.mxu0 0.0
      %634 = vmatprep.subr.mxu0 0.0
      %635 = vmatpush1.msra.mxu0 0.0
      %636 = vmatprep.mubr.f32.mxu0 0.0
      %637 = vmatmul.mubr.f32.gmra.mrb[0].mxu0 %v540
      %v638 = vpop.f32.mrb[0].mxu0
      %v639 = vadd.f32 0.0, %v638
      %v640 = vpop.f32.mrb[0].mxu0
      %641 = vmatprep.mubr.f32.mxu0 0.0
      %642 = vmatmul.mubr.f32.gmra.mrb[0].mxu0 %v542
      %v643 = vpop.f32.mrb[0].mxu0
      %v644 = vadd.f32 0.0, %v643
      %v645 = vpop.f32.mrb[0].mxu0
      %646 = vmatprep.mubr.f32.mxu0 0.0
      %647 = vmatmul.mubr.f32.gmra.mrb[0].mxu0 %v544
      %v648 = vpop.f32.mrb[0].mxu0
      %v649 = vadd.f32 0.0, %v648
      %v650 = vpop.f32.mrb[0].mxu0
      %651 = vmatprep.mubr.f32.mxu0 0.0
      %652 = vmatmul.mubr.f32.gmra.mrb[0].mxu0 %v546
      %v653 = vpop.f32.mrb[0].mxu0
      %v654 = vadd.f32 0.0, %v653
      %v655 = vpop.f32.mrb[0].mxu0
      %656 = vmatprep.mubr.f32.mxu0 0.0
      %657 = vmatmul.mubr.f32.gmra.mrb[0].mxu0 %v548
      %v658 = vpop.f32.mrb[0].mxu0
      %v659 = vadd.f32 0.0, %v658
      %v660 = vpop.f32.mrb[0].mxu0
      %661 = vmatprep.mubr.f32.mxu0 0.0
      %662 = vmatmul.mubr.f32.gmra.mrb[0].mxu0 %v550
      %v663 = vpop.f32.mrb[0].mxu0
      %v664 = vadd.f32 0.0, %v663
      %v665 = vpop.f32.mrb[0].mxu0
      %666 = vmatprep.mubr.f32.mxu0 0.0
      %667 = vmatmul.mubr.f32.gmra.mrb[0].mxu0 %v552
      %v668 = vpop.f32.mrb[0].mxu0
      %v669 = vadd.f32 0.0, %v668
      %v670 = vpop.f32.mrb[0].mxu0
      %671 = vmatprep.mubr.f32.mxu0 0.0
      %672 = vmatmul.mubr.f32.gmra.mrb[0].mxu0 %v554
      %v673 = vpop.f32.mrb[0].mxu0
      %v674 = vadd.f32 0.0, %v673
      %v675 = vpop.f32.mrb[0].mxu0
      %676 = vmatprep.mubr.f32.mxu0 0.0
      %677 = vmatmul.mubr.f32.gmra.mrb[0].mxu0 %v556
      %v678 = vpop.f32.mrb[0].mxu0
      %v679 = vadd.f32 0.0, %v678
      %v680 = vpop.f32.mrb[0].mxu0
      %681 = vmatprep.mubr.f32.mxu0 0.0
      %682 = vmatmul.mubr.f32.gmra.mrb[0].mxu0 %v558
      %v683 = vpop.f32.mrb[0].mxu0
      %v684 = vadd.f32 0.0, %v683
      %v685 = vpop.f32.mrb[0].mxu0
      %686 = vmatprep.mubr.f32.mxu0 0.0
      %687 = vmatmul.mubr.f32.gmra.mrb[0].mxu0 %v560
      %v688 = vpop.f32.mrb[0].mxu0
      %v689 = vadd.f32 0.0, %v688
      %v690 = vpop.f32.mrb[0].mxu0
      %691 = vmatprep.mubr.f32.mxu0 0.0
      %692 = vmatmul.mubr.f32.gmra.mrb[0].mxu0 %v562
      %v693 = vpop.f32.mrb[0].mxu0
      %v694 = vadd.f32 0.0, %v693
      %v695 = vpop.f32.mrb[0].mxu0
      %696 = vmatprep.mubr.f32.mxu0 0.0
      %697 = vmatmul.mubr.f32.gmra.mrb[0].mxu0 %v564
      %v698 = vpop.f32.mrb[0].mxu0
      %v699 = vadd.f32 0.0, %v698
      %v700 = vpop.f32.mrb[0].mxu0
      %701 = vmatprep.mubr.f32.mxu0 0.0
      %702 = vmatmul.mubr.f32.gmra.mrb[0].mxu0 %v566
      %v703 = vpop.f32.mrb[0].mxu0
      %v704 = vadd.f32 0.0, %v703
      %v705 = vpop.f32.mrb[0].mxu0
      %706 = vmatprep.mubr.f32.mxu0 0.0
      %707 = vmatmul.mubr.f32.gmra.mrb[0].mxu0 %v568
      %v708 = vpop.f32.mrb[0].mxu0
      %v709 = vadd.f32 0.0, %v708
      %v710 = vpop.f32.mrb[0].mxu0
      %711 = vmatprep.mubr.f32.mxu0 0.0
      %712 = vmatmul.mubr.f32.gmra.mrb[0].mxu0 %v570
      %v713 = vpop.f32.mrb[0].mxu0
      %v714 = vadd.f32 0.0, %v713
      %v715 = vpop.f32.mrb[0].mxu0
      %716 = vdwg.mxu0
      %v717 = vsel %vm539, %v381, 0
      %v719 = vsel %vm539, %v382, 0
      %v721 = vsel %vm539, %v384, 0
      %v723 = vsel %vm539, %v385, 0
      %v725 = vsel %vm539, %v387, 0
      %v727 = vsel %vm539, %v388, 0
      %v729 = vsel %vm539, %v390, 0
      %v731 = vsel %vm539, %v391, 0
      %v733 = vsel %vm539, %v393, 0
      %v735 = vsel %vm539, %v394, 0
      %v737 = vsel %vm539, %v396, 0
      %v739 = vsel %vm539, %v397, 0
      %v741 = vsel %vm539, %v399, 0
      %v743 = vsel %vm539, %v400, 0
      %v745 = vsel %vm539, %v402, 0
      %v747 = vsel %vm539, %v403, 0
      %749 = vmatprep.subr.mxu0 0.0
      %750 = vmatpush1.msra.mxu0 %v471
      %751 = vmatprep.subr.mxu0 0.0
      %752 = vmatpush1.msra.mxu0 0.0
      %753 = vmatprep.subr.mxu0 0.0
      %754 = vmatpush1.msra.mxu0 0.0
      %755 = vmatprep.subr.mxu0 0.0
      %756 = vmatpush1.msra.mxu0 0.0
      %757 = vmatprep.subr.mxu0 0.0
      %758 = vmatpush1.msra.mxu0 0.0
      %759 = vmatprep.subr.mxu0 0.0
      %760 = vmatpush1.msra.mxu0 0.0
      %761 = vmatprep.subr.mxu0 0.0
      %762 = vmatpush1.msra.mxu0 0.0
      %763 = vmatprep.subr.mxu0 0.0
      %764 = vmatpush1.msra.mxu0 0.0
      %765 = vmatprep.subr.mxu0 0.0
      %766 = vmatpush1.msra.mxu0 0.0
      %767 = vmatprep.subr.mxu0 0.0
      %768 = vmatpush1.msra.mxu0 0.0
      %769 = vmatprep.subr.mxu0 0.0
      %770 = vmatpush1.msra.mxu0 0.0
      %771 = vmatprep.subr.mxu0 0.0
      %772 = vmatpush1.msra.mxu0 0.0
      %773 = vmatprep.subr.mxu0 0.0
      %774 = vmatpush1.msra.mxu0 0.0
      %775 = vmatprep.subr.mxu0 0.0
      %776 = vmatpush1.msra.mxu0 0.0
      %777 = vmatprep.subr.mxu0 0.0
      %778 = vmatpush1.msra.mxu0 0.0
      %779 = vmatprep.subr.mxu0 0.0
      %780 = vmatpush1.msra.mxu0 0.0
      %781 = vmatprep.subr.mxu0 0.0
      %782 = vmatpush1.msra.mxu0 0.0
      %783 = vmatprep.subr.mxu0 0.0
      %784 = vmatpush1.msra.mxu0 0.0
      %785 = vmatprep.subr.mxu0 0.0
      %786 = vmatpush1.msra.mxu0 0.0
      %787 = vmatprep.subr.mxu0 0.0
      %788 = vmatpush1.msra.mxu0 0.0
      %789 = vmatprep.subr.mxu0 0.0
      %790 = vmatpush1.msra.mxu0 0.0
      %791 = vmatprep.subr.mxu0 0.0
      %792 = vmatpush1.msra.mxu0 0.0
      %793 = vmatprep.subr.mxu0 0.0
      %794 = vmatpush1.msra.mxu0 0.0
      %795 = vmatprep.subr.mxu0 0.0
      %796 = vmatpush1.msra.mxu0 0.0
      %797 = vmatprep.subr.mxu0 0.0
      %798 = vmatpush1.msra.mxu0 0.0
      %799 = vmatprep.subr.mxu0 0.0
      %800 = vmatpush1.msra.mxu0 0.0
      %801 = vmatprep.subr.mxu0 0.0
      %802 = vmatpush1.msra.mxu0 0.0
      %803 = vmatprep.subr.mxu0 0.0
      %804 = vmatpush1.msra.mxu0 0.0
      %805 = vmatprep.subr.mxu0 0.0
      %806 = vmatpush1.msra.mxu0 0.0
      %807 = vmatprep.subr.mxu0 0.0
      %808 = vmatpush1.msra.mxu0 0.0
      %809 = vmatprep.subr.mxu0 0.0
      %810 = vmatpush1.msra.mxu0 0.0
      %811 = vmatprep.subr.mxu0 0.0
      %812 = vmatpush1.msra.mxu0 0.0
      %813 = vmatprep.mubr.f32.mxu0 0.0
      %814 = vmatmul.mubr.f32.gmra.mrb[0].mxu0 %v717
      %v815 = vpop.f32.mrb[0].mxu0
      %v816 = vadd.f32 %v639, %v815
      %v817 = vpop.f32.mrb[0].mxu0
      %818 = vmatprep.mubr.f32.mxu0 0.0
      %819 = vmatmul.mubr.f32.gmra.mrb[0].mxu0 %v719
      %v820 = vpop.f32.mrb[0].mxu0
      %v821 = vadd.f32 %v644, %v820
      %v822 = vpop.f32.mrb[0].mxu0
      %823 = vmatprep.mubr.f32.mxu0 0.0
      %824 = vmatmul.mubr.f32.gmra.mrb[0].mxu0 %v721
      %v825 = vpop.f32.mrb[0].mxu0
      %v826 = vadd.f32 %v649, %v825
      %v827 = vpop.f32.mrb[0].mxu0
      %828 = vmatprep.mubr.f32.mxu0 0.0
      %829 = vmatmul.mubr.f32.gmra.mrb[0].mxu0 %v723
      %v830 = vpop.f32.mrb[0].mxu0
      %v831 = vadd.f32 %v654, %v830
      %v832 = vpop.f32.mrb[0].mxu0
      %833 = vmatprep.mubr.f32.mxu0 0.0
      %834 = vmatmul.mubr.f32.gmra.mrb[0].mxu0 %v725
      %v835 = vpop.f32.mrb[0].mxu0
      %v836 = vadd.f32 %v659, %v835
      %v837 = vpop.f32.mrb[0].mxu0
      %838 = vmatprep.mubr.f32.mxu0 0.0
      %839 = vmatmul.mubr.f32.gmra.mrb[0].mxu0 %v727
      %v840 = vpop.f32.mrb[0].mxu0
      %v841 = vadd.f32 %v664, %v840
      %v842 = vpop.f32.mrb[0].mxu0
      %843 = vmatprep.mubr.f32.mxu0 0.0
      %844 = vmatmul.mubr.f32.gmra.mrb[0].mxu0 %v729
      %v845 = vpop.f32.mrb[0].mxu0
      %v846 = vadd.f32 %v669, %v845
      %v847 = vpop.f32.mrb[0].mxu0
      %848 = vmatprep.mubr.f32.mxu0 0.0
      %849 = vmatmul.mubr.f32.gmra.mrb[0].mxu0 %v731
      %v850 = vpop.f32.mrb[0].mxu0
      %v851 = vadd.f32 %v674, %v850
      %v852 = vpop.f32.mrb[0].mxu0
      %853 = vmatprep.mubr.f32.mxu0 0.0
      %854 = vmatmul.mubr.f32.gmra.mrb[0].mxu0 %v733
      %v855 = vpop.f32.mrb[0].mxu0
      %v856 = vadd.f32 %v679, %v855
      %v857 = vpop.f32.mrb[0].mxu0
      %858 = vmatprep.mubr.f32.mxu0 0.0
      %859 = vmatmul.mubr.f32.gmra.mrb[0].mxu0 %v735
      %v860 = vpop.f32.mrb[0].mxu0
      %v861 = vadd.f32 %v684, %v860
      %v862 = vpop.f32.mrb[0].mxu0
      %863 = vmatprep.mubr.f32.mxu0 0.0
      %864 = vmatmul.mubr.f32.gmra.mrb[0].mxu0 %v737
      %v865 = vpop.f32.mrb[0].mxu0
      %v866 = vadd.f32 %v689, %v865
      %v867 = vpop.f32.mrb[0].mxu0
      %868 = vmatprep.mubr.f32.mxu0 0.0
      %869 = vmatmul.mubr.f32.gmra.mrb[0].mxu0 %v739
      %v870 = vpop.f32.mrb[0].mxu0
      %v871 = vadd.f32 %v694, %v870
      %v872 = vpop.f32.mrb[0].mxu0
      %873 = vmatprep.mubr.f32.mxu0 0.0
      %874 = vmatmul.mubr.f32.gmra.mrb[0].mxu0 %v741
      %v875 = vpop.f32.mrb[0].mxu0
      %v876 = vadd.f32 %v699, %v875
      %v877 = vpop.f32.mrb[0].mxu0
      %878 = vmatprep.mubr.f32.mxu0 0.0
      %879 = vmatmul.mubr.f32.gmra.mrb[0].mxu0 %v743
      %v880 = vpop.f32.mrb[0].mxu0
      %v881 = vadd.f32 %v704, %v880
      %v882 = vpop.f32.mrb[0].mxu0
      %883 = vmatprep.mubr.f32.mxu0 0.0
      %884 = vmatmul.mubr.f32.gmra.mrb[0].mxu0 %v745
      %v885 = vpop.f32.mrb[0].mxu0
      %v886 = vadd.f32 %v709, %v885
      %v887 = vpop.f32.mrb[0].mxu0
      %888 = vmatprep.mubr.f32.mxu0 0.0
      %889 = vmatmul.mubr.f32.gmra.mrb[0].mxu0 %v747
      %v890 = vpop.f32.mrb[0].mxu0
      %v891 = vadd.f32 %v714, %v890
      %v892 = vpop.f32.mrb[0].mxu0
      %893 = vdwg.mxu0
      %vm894 = vcmask 1045504
      %v895 = vrot.slane %v381, 2
      %v896 = vrot.slane %v382, 2
      %v897 = vsel %vm894, %v895, %v896
      %v898 = vrot.slane %v383, 2
      %v899 = vsel %vm894, %v896, %v898
      %v900 = vrot.slane %v384, 2
      %v901 = vrot.slane %v385, 2
      %v902 = vsel %vm894, %v900, %v901
      %v903 = vrot.slane %v386, 2
      %v904 = vsel %vm894, %v901, %v903
      %v905 = vrot.slane %v387, 2
      %v906 = vrot.slane %v388, 2
      %v907 = vsel %vm894, %v905, %v906
      %v908 = vrot.slane %v389, 2
      %v909 = vsel %vm894, %v906, %v908
      %v910 = vrot.slane %v390, 2
      %v911 = vrot.slane %v391, 2
      %v912 = vsel %vm894, %v910, %v911
      %v913 = vrot.slane %v392, 2
      %v914 = vsel %vm894, %v911, %v913
      %v915 = vrot.slane %v393, 2
      %v916 = vrot.slane %v394, 2
      %v917 = vsel %vm894, %v915, %v916
      %v918 = vrot.slane %v395, 2
      %v919 = vsel %vm894, %v916, %v918
      %v920 = vrot.slane %v396, 2
      %v921 = vrot.slane %v397, 2
      %v922 = vsel %vm894, %v920, %v921
      %v923 = vrot.slane %v398, 2
      %v924 = vsel %vm894, %v921, %v923
      %v925 = vrot.slane %v399, 2
      %v926 = vrot.slane %v400, 2
      %v927 = vsel %vm894, %v925, %v926
      %v928 = vrot.slane %v401, 2
      %v929 = vsel %vm894, %v926, %v928
      %v930 = vrot.slane %v402, 2
      %v931 = vrot.slane %v403, 2
      %v932 = vsel %vm894, %v930, %v931
      %v933 = vrot.slane %v404, 2
      %v934 = vsel %vm894, %v931, %v933
      %s935 = scalar_lea.vmem %s3, 16
      %v936 = vld [vmem:[%s935] sm:$0xff]
      %v937 = vsel %vm539, %v897, 0
      %v939 = vsel %vm539, %v899, 0
      %v941 = vsel %vm539, %v902, 0
      %v943 = vsel %vm539, %v904, 0
      %v945 = vsel %vm539, %v907, 0
      %v947 = vsel %vm539, %v909, 0
      %v949 = vsel %vm539, %v912, 0
      %v951 = vsel %vm539, %v914, 0
      %v953 = vsel %vm539, %v917, 0
      %v955 = vsel %vm539, %v919, 0
      %v957 = vsel %vm539, %v922, 0
      %v959 = vsel %vm539, %v924, 0
      %v961 = vsel %vm539, %v927, 0
      %v963 = vsel %vm539, %v929, 0
      %v965 = vsel %vm539, %v932, 0
      %v967 = vsel %vm539, %v934, 0
      %969 = vmatprep.subr.mxu0 0.0
      %970 = vmatpush1.msra.mxu0 %v936
      %971 = vmatprep.subr.mxu0 0.0
      %972 = vmatpush1.msra.mxu0 0.0
      %973 = vmatprep.subr.mxu0 0.0
      %974 = vmatpush1.msra.mxu0 0.0
      %975 = vmatprep.subr.mxu0 0.0
      %976 = vmatpush1.msra.mxu0 0.0
      %977 = vmatprep.subr.mxu0 0.0
      %978 = vmatpush1.msra.mxu0 0.0
      %979 = vmatprep.subr.mxu0 0.0
      %980 = vmatpush1.msra.mxu0 0.0
      %981 = vmatprep.subr.mxu0 0.0
      %982 = vmatpush1.msra.mxu0 0.0
      %983 = vmatprep.subr.mxu0 0.0
      %984 = vmatpush1.msra.mxu0 0.0
      %985 = vmatprep.subr.mxu0 0.0
      %986 = vmatpush1.msra.mxu0 0.0
      %987 = vmatprep.subr.mxu0 0.0
      %988 = vmatpush1.msra.mxu0 0.0
      %989 = vmatprep.subr.mxu0 0.0
      %990 = vmatpush1.msra.mxu0 0.0
      %991 = vmatprep.subr.mxu0 0.0
      %992 = vmatpush1.msra.mxu0 0.0
      %993 = vmatprep.subr.mxu0 0.0
      %994 = vmatpush1.msra.mxu0 0.0
      %995 = vmatprep.subr.mxu0 0.0
      %996 = vmatpush1.msra.mxu0 0.0
      %997 = vmatprep.subr.mxu0 0.0
      %998 = vmatpush1.msra.mxu0 0.0
      %999 = vmatprep.subr.mxu0 0.0
      %1000 = vmatpush1.msra.mxu0 0.0
      %1001 = vmatprep.subr.mxu0 0.0
      %1002 = vmatpush1.msra.mxu0 0.0
      %1003 = vmatprep.subr.mxu0 0.0
      %1004 = vmatpush1.msra.mxu0 0.0
      %1005 = vmatprep.subr.mxu0 0.0
      %1006 = vmatpush1.msra.mxu0 0.0
      %1007 = vmatprep.subr.mxu0 0.0
      %1008 = vmatpush1.msra.mxu0 0.0
      %1009 = vmatprep.subr.mxu0 0.0
      %1010 = vmatpush1.msra.mxu0 0.0
      %1011 = vmatprep.subr.mxu0 0.0
      %1012 = vmatpush1.msra.mxu0 0.0
      %1013 = vmatprep.subr.mxu0 0.0
      %1014 = vmatpush1.msra.mxu0 0.0
      %1015 = vmatprep.subr.mxu0 0.0
      %1016 = vmatpush1.msra.mxu0 0.0
      %1017 = vmatprep.subr.mxu0 0.0
      %1018 = vmatpush1.msra.mxu0 0.0
      %1019 = vmatprep.subr.mxu0 0.0
      %1020 = vmatpush1.msra.mxu0 0.0
      %1021 = vmatprep.subr.mxu0 0.0
      %1022 = vmatpush1.msra.mxu0 0.0
      %1023 = vmatprep.subr.mxu0 0.0
      %1024 = vmatpush1.msra.mxu0 0.0
      %1025 = vmatprep.subr.mxu0 0.0
      %1026 = vmatpush1.msra.mxu0 0.0
      %1027 = vmatprep.subr.mxu0 0.0
      %1028 = vmatpush1.msra.mxu0 0.0
      %1029 = vmatprep.subr.mxu0 0.0
      %1030 = vmatpush1.msra.mxu0 0.0
      %1031 = vmatprep.subr.mxu0 0.0
      %1032 = vmatpush1.msra.mxu0 0.0
      %1033 = vmatprep.mubr.f32.mxu0 0.0
      %1034 = vmatmul.mubr.f32.gmra.mrb[0].mxu0 %v937
      %v1035 = vpop.f32.mrb[0].mxu0
      %v1036 = vadd.f32 0.0, %v1035
      %v1037 = vpop.f32.mrb[0].mxu0
      %1038 = vmatprep.mubr.f32.mxu0 0.0
      %1039 = vmatmul.mubr.f32.gmra.mrb[0].mxu0 %v939
      %v1040 = vpop.f32.mrb[0].mxu0
      %v1041 = vadd.f32 0.0, %v1040
      %v1042 = vpop.f32.mrb[0].mxu0
      %1043 = vmatprep.mubr.f32.mxu0 0.0
      %1044 = vmatmul.mubr.f32.gmra.mrb[0].mxu0 %v941
      %v1045 = vpop.f32.mrb[0].mxu0
      %v1046 = vadd.f32 0.0, %v1045
      %v1047 = vpop.f32.mrb[0].mxu0
      %1048 = vmatprep.mubr.f32.mxu0 0.0
      %1049 = vmatmul.mubr.f32.gmra.mrb[0].mxu0 %v943
      %v1050 = vpop.f32.mrb[0].mxu0
      %v1051 = vadd.f32 0.0, %v1050
      %v1052 = vpop.f32.mrb[0].mxu0
      %1053 = vmatprep.mubr.f32.mxu0 0.0
      %1054 = vmatmul.mubr.f32.gmra.mrb[0].mxu0 %v945
      %v1055 = vpop.f32.mrb[0].mxu0
      %v1056 = vadd.f32 0.0, %v1055
      %v1057 = vpop.f32.mrb[0].mxu0
      %1058 = vmatprep.mubr.f32.mxu0 0.0
      %1059 = vmatmul.mubr.f32.gmra.mrb[0].mxu0 %v947
      %v1060 = vpop.f32.mrb[0].mxu0
      %v1061 = vadd.f32 0.0, %v1060
      %v1062 = vpop.f32.mrb[0].mxu0
      %1063 = vmatprep.mubr.f32.mxu0 0.0
      %1064 = vmatmul.mubr.f32.gmra.mrb[0].mxu0 %v949
      %v1065 = vpop.f32.mrb[0].mxu0
      %v1066 = vadd.f32 0.0, %v1065
      %v1067 = vpop.f32.mrb[0].mxu0
      %1068 = vmatprep.mubr.f32.mxu0 0.0
      %1069 = vmatmul.mubr.f32.gmra.mrb[0].mxu0 %v951
      %v1070 = vpop.f32.mrb[0].mxu0
      %v1071 = vadd.f32 0.0, %v1070
      %v1072 = vpop.f32.mrb[0].mxu0
      %1073 = vmatprep.mubr.f32.mxu0 0.0
      %1074 = vmatmul.mubr.f32.gmra.mrb[0].mxu0 %v953
      %v1075 = vpop.f32.mrb[0].mxu0
      %v1076 = vadd.f32 0.0, %v1075
      %v1077 = vpop.f32.mrb[0].mxu0
      %1078 = vmatprep.mubr.f32.mxu0 0.0
      %1079 = vmatmul.mubr.f32.gmra.mrb[0].mxu0 %v955
      %v1080 = vpop.f32.mrb[0].mxu0
      %v1081 = vadd.f32 0.0, %v1080
      %v1082 = vpop.f32.mrb[0].mxu0
      %1083 = vmatprep.mubr.f32.mxu0 0.0
      %1084 = vmatmul.mubr.f32.gmra.mrb[0].mxu0 %v957
      %v1085 = vpop.f32.mrb[0].mxu0
      %v1086 = vadd.f32 0.0, %v1085
      %v1087 = vpop.f32.mrb[0].mxu0
      %1088 = vmatprep.mubr.f32.mxu0 0.0
      %1089 = vmatmul.mubr.f32.gmra.mrb[0].mxu0 %v959
      %v1090 = vpop.f32.mrb[0].mxu0
      %v1091 = vadd.f32 0.0, %v1090
      %v1092 = vpop.f32.mrb[0].mxu0
      %1093 = vmatprep.mubr.f32.mxu0 0.0
      %1094 = vmatmul.mubr.f32.gmra.mrb[0].mxu0 %v961
      %v1095 = vpop.f32.mrb[0].mxu0
      %v1096 = vadd.f32 0.0, %v1095
      %v1097 = vpop.f32.mrb[0].mxu0
      %1098 = vmatprep.mubr.f32.mxu0 0.0
      %1099 = vmatmul.mubr.f32.gmra.mrb[0].mxu0 %v963
      %v1100 = vpop.f32.mrb[0].mxu0
      %v1101 = vadd.f32 0.0, %v1100
      %v1102 = vpop.f32.mrb[0].mxu0
      %1103 = vmatprep.mubr.f32.mxu0 0.0
      %1104 = vmatmul.mubr.f32.gmra.mrb[0].mxu0 %v965
      %v1105 = vpop.f32.mrb[0].mxu0
      %v1106 = vadd.f32 0.0, %v1105
      %v1107 = vpop.f32.mrb[0].mxu0
      %1108 = vmatprep.mubr.f32.mxu0 0.0
      %1109 = vmatmul.mubr.f32.gmra.mrb[0].mxu0 %v967
      %v1110 = vpop.f32.mrb[0].mxu0
      %v1111 = vadd.f32 0.0, %v1110
      %v1112 = vpop.f32.mrb[0].mxu0
      %1113 = vdwg.mxu0
      %v1114 = vadd.f32 %v816, %v1036
      %v1115 = vadd.f32 %v821, %v1041
      %v1116 = vadd.f32 %v826, %v1046
      %v1117 = vadd.f32 %v831, %v1051
      %v1118 = vadd.f32 %v836, %v1056
      %v1119 = vadd.f32 %v841, %v1061
      %v1120 = vadd.f32 %v846, %v1066
      %v1121 = vadd.f32 %v851, %v1071
      %v1122 = vadd.f32 %v856, %v1076
      %v1123 = vadd.f32 %v861, %v1081
      %v1124 = vadd.f32 %v866, %v1086
      %v1125 = vadd.f32 %v871, %v1091
      %v1126 = vadd.f32 %v876, %v1096
      %v1127 = vadd.f32 %v881, %v1101
      %v1128 = vadd.f32 %v886, %v1106
      %v1129 = vadd.f32 %v891, %v1111
      %s1130 = scalar_lea.vmem %s3, 24
      %v1131 = vld [vmem:[%s1130] sm:$0xff]
      %v1133 = vsel %vm539, %v405, 0
      %v1136 = vsel %vm539, %v406, 0
      %1138 = vmatprep.subr.mxu0 0.0
      %1139 = vmatpush1.msra.mxu0 %v1131
      %1140 = vmatprep.subr.mxu0 0.0
      %1141 = vmatpush1.msra.mxu0 0.0
      %1142 = vmatprep.subr.mxu0 0.0
      %1143 = vmatpush1.msra.mxu0 0.0
      %1144 = vmatprep.subr.mxu0 0.0
      %1145 = vmatpush1.msra.mxu0 0.0
      %1146 = vmatprep.subr.mxu0 0.0
      %1147 = vmatpush1.msra.mxu0 0.0
      %1148 = vmatprep.subr.mxu0 0.0
      %1149 = vmatpush1.msra.mxu0 0.0
      %1150 = vmatprep.subr.mxu0 0.0
      %1151 = vmatpush1.msra.mxu0 0.0
      %1152 = vmatprep.subr.mxu0 0.0
      %1153 = vmatpush1.msra.mxu0 0.0
      %1154 = vmatprep.subr.mxu0 0.0
      %1155 = vmatpush1.msra.mxu0 0.0
      %1156 = vmatprep.subr.mxu0 0.0
      %1157 = vmatpush1.msra.mxu0 0.0
      %1158 = vmatprep.subr.mxu0 0.0
      %1159 = vmatpush1.msra.mxu0 0.0
      %1160 = vmatprep.subr.mxu0 0.0
      %1161 = vmatpush1.msra.mxu0 0.0
      %1162 = vmatprep.subr.mxu0 0.0
      %1163 = vmatpush1.msra.mxu0 0.0
      %1164 = vmatprep.subr.mxu0 0.0
      %1165 = vmatpush1.msra.mxu0 0.0
      %1166 = vmatprep.subr.mxu0 0.0
      %1167 = vmatpush1.msra.mxu0 0.0
      %1168 = vmatprep.subr.mxu0 0.0
      %1169 = vmatpush1.msra.mxu0 0.0
      %1170 = vmatprep.subr.mxu0 0.0
      %1171 = vmatpush1.msra.mxu0 0.0
      %1172 = vmatprep.subr.mxu0 0.0
      %1173 = vmatpush1.msra.mxu0 0.0
      %1174 = vmatprep.subr.mxu0 0.0
      %1175 = vmatpush1.msra.mxu0 0.0
      %1176 = vmatprep.subr.mxu0 0.0
      %1177 = vmatpush1.msra.mxu0 0.0
      %1178 = vmatprep.subr.mxu0 0.0
      %1179 = vmatpush1.msra.mxu0 0.0
      %1180 = vmatprep.subr.mxu0 0.0
      %1181 = vmatpush1.msra.mxu0 0.0
      %1182 = vmatprep.subr.mxu0 0.0
      %1183 = vmatpush1.msra.mxu0 0.0
      %1184 = vmatprep.subr.mxu0 0.0
      %1185 = vmatpush1.msra.mxu0 0.0
      %1186 = vmatprep.subr.mxu0 0.0
      %1187 = vmatpush1.msra.mxu0 0.0
      %1188 = vmatprep.subr.mxu0 0.0
      %1189 = vmatpush1.msra.mxu0 0.0
      %1190 = vmatprep.subr.mxu0 0.0
      %1191 = vmatpush1.msra.mxu0 0.0
      %1192 = vmatprep.subr.mxu0 0.0
      %1193 = vmatpush1.msra.mxu0 0.0
      %1194 = vmatprep.subr.mxu0 0.0
      %1195 = vmatpush1.msra.mxu0 0.0
      %1196 = vmatprep.subr.mxu0 0.0
      %1197 = vmatpush1.msra.mxu0 0.0
      %1198 = vmatprep.subr.mxu0 0.0
      %1199 = vmatpush1.msra.mxu0 0.0
      %1200 = vmatprep.subr.mxu0 0.0
      %1201 = vmatpush1.msra.mxu0 0.0
      %1202 = vmatprep.mubr.f32.mxu0 0.0
      %1203 = vmatmul.mubr.f32.gmra.mrb[0].mxu0 %v721
      %v1204 = vpop.f32.mrb[0].mxu0
      %v1205 = vadd.f32 0.0, %v1204
      %v1206 = vpop.f32.mrb[0].mxu0
      %1207 = vmatprep.mubr.f32.mxu0 0.0
      %1208 = vmatmul.mubr.f32.gmra.mrb[0].mxu0 %v723
      %v1209 = vpop.f32.mrb[0].mxu0
      %v1210 = vadd.f32 0.0, %v1209
      %v1211 = vpop.f32.mrb[0].mxu0
      %1212 = vmatprep.mubr.f32.mxu0 0.0
      %1213 = vmatmul.mubr.f32.gmra.mrb[0].mxu0 %v725
      %v1214 = vpop.f32.mrb[0].mxu0
      %v1215 = vadd.f32 0.0, %v1214
      %v1216 = vpop.f32.mrb[0].mxu0
      %1217 = vmatprep.mubr.f32.mxu0 0.0
      %1218 = vmatmul.mubr.f32.gmra.mrb[0].mxu0 %v727
      %v1219 = vpop.f32.mrb[0].mxu0
      %v1220 = vadd.f32 0.0, %v1219
      %v1221 = vpop.f32.mrb[0].mxu0
      %1222 = vmatprep.mubr.f32.mxu0 0.0
      %1223 = vmatmul.mubr.f32.gmra.mrb[0].mxu0 %v729
      %v1224 = vpop.f32.mrb[0].mxu0
      %v1225 = vadd.f32 0.0, %v1224
      %v1226 = vpop.f32.mrb[0].mxu0
      %1227 = vmatprep.mubr.f32.mxu0 0.0
      %1228 = vmatmul.mubr.f32.gmra.mrb[0].mxu0 %v731
      %v1229 = vpop.f32.mrb[0].mxu0
      %v1230 = vadd.f32 0.0, %v1229
      %v1231 = vpop.f32.mrb[0].mxu0
      %1232 = vmatprep.mubr.f32.mxu0 0.0
      %1233 = vmatmul.mubr.f32.gmra.mrb[0].mxu0 %v733
      %v1234 = vpop.f32.mrb[0].mxu0
      %v1235 = vadd.f32 0.0, %v1234
      %v1236 = vpop.f32.mrb[0].mxu0
      %1237 = vmatprep.mubr.f32.mxu0 0.0
      %1238 = vmatmul.mubr.f32.gmra.mrb[0].mxu0 %v735
      %v1239 = vpop.f32.mrb[0].mxu0
      %v1240 = vadd.f32 0.0, %v1239
      %v1241 = vpop.f32.mrb[0].mxu0
      %1242 = vmatprep.mubr.f32.mxu0 0.0
      %1243 = vmatmul.mubr.f32.gmra.mrb[0].mxu0 %v737
      %v1244 = vpop.f32.mrb[0].mxu0
      %v1245 = vadd.f32 0.0, %v1244
      %v1246 = vpop.f32.mrb[0].mxu0
      %1247 = vmatprep.mubr.f32.mxu0 0.0
      %1248 = vmatmul.mubr.f32.gmra.mrb[0].mxu0 %v739
      %v1249 = vpop.f32.mrb[0].mxu0
      %v1250 = vadd.f32 0.0, %v1249
      %v1251 = vpop.f32.mrb[0].mxu0
      %1252 = vmatprep.mubr.f32.mxu0 0.0
      %1253 = vmatmul.mubr.f32.gmra.mrb[0].mxu0 %v741
      %v1254 = vpop.f32.mrb[0].mxu0
      %v1255 = vadd.f32 0.0, %v1254
      %v1256 = vpop.f32.mrb[0].mxu0
      %1257 = vmatprep.mubr.f32.mxu0 0.0
      %1258 = vmatmul.mubr.f32.gmra.mrb[0].mxu0 %v743
      %v1259 = vpop.f32.mrb[0].mxu0
      %v1260 = vadd.f32 0.0, %v1259
      %v1261 = vpop.f32.mrb[0].mxu0
      %1262 = vmatprep.mubr.f32.mxu0 0.0
      %1263 = vmatmul.mubr.f32.gmra.mrb[0].mxu0 %v745
      %v1264 = vpop.f32.mrb[0].mxu0
      %v1265 = vadd.f32 0.0, %v1264
      %v1266 = vpop.f32.mrb[0].mxu0
      %1267 = vmatprep.mubr.f32.mxu0 0.0
      %1268 = vmatmul.mubr.f32.gmra.mrb[0].mxu0 %v747
      %v1269 = vpop.f32.mrb[0].mxu0
      %v1270 = vadd.f32 0.0, %v1269
      %v1271 = vpop.f32.mrb[0].mxu0
      %1272 = vmatprep.mubr.f32.mxu0 0.0
      %1273 = vmatmul.mubr.f32.gmra.mrb[0].mxu0 %v1133
      %v1274 = vpop.f32.mrb[0].mxu0
      %v1275 = vadd.f32 0.0, %v1274
      %v1276 = vpop.f32.mrb[0].mxu0
      %1277 = vmatprep.mubr.f32.mxu0 0.0
      %1278 = vmatmul.mubr.f32.gmra.mrb[0].mxu0 %v1136
      %v1279 = vpop.f32.mrb[0].mxu0
      %v1280 = vadd.f32 0.0, %v1279
      %v1281 = vpop.f32.mrb[0].mxu0
      %1282 = vdwg.mxu0
      %v1283 = vadd.f32 %v1114, %v1205
      %v1284 = vadd.f32 %v1115, %v1210
      %v1285 = vadd.f32 %v1116, %v1215
      %v1286 = vadd.f32 %v1117, %v1220
      %v1287 = vadd.f32 %v1118, %v1225
      %v1288 = vadd.f32 %v1119, %v1230
      %v1289 = vadd.f32 %v1120, %v1235
      %v1290 = vadd.f32 %v1121, %v1240
      %v1291 = vadd.f32 %v1122, %v1245
      %v1292 = vadd.f32 %v1123, %v1250
      %v1293 = vadd.f32 %v1124, %v1255
      %v1294 = vadd.f32 %v1125, %v1260
      %v1295 = vadd.f32 %v1126, %v1265
      %v1296 = vadd.f32 %v1127, %v1270
      %v1297 = vadd.f32 %v1128, %v1275
      %v1298 = vadd.f32 %v1129, %v1280
      %v1300 = vrot.slane %v405, 1
      %v1301 = vrot.slane %v406, 1
      %v1302 = vsel %vm496, %v1300, %v1301
      %v1303 = vrot.slane %v407, 1
      %v1304 = vsel %vm496, %v1301, %v1303
      %s1305 = scalar_lea.vmem %s3, 32
      %v1306 = vld [vmem:[%s1305] sm:$0xff]
      %v1307 = vsel %vm539, %v1302, 0
      %v1309 = vsel %vm539, %v1304, 0
      %1311 = vmatprep.subr.mxu0 0.0
      %1312 = vmatpush1.msra.mxu0 %v1306
      %1313 = vmatprep.subr.mxu0 0.0
      %1314 = vmatpush1.msra.mxu0 0.0
      %1315 = vmatprep.subr.mxu0 0.0
      %1316 = vmatpush1.msra.mxu0 0.0
      %1317 = vmatprep.subr.mxu0 0.0
      %1318 = vmatpush1.msra.mxu0 0.0
      %1319 = vmatprep.subr.mxu0 0.0
      %1320 = vmatpush1.msra.mxu0 0.0
      %1321 = vmatprep.subr.mxu0 0.0
      %1322 = vmatpush1.msra.mxu0 0.0
      %1323 = vmatprep.subr.mxu0 0.0
      %1324 = vmatpush1.msra.mxu0 0.0
      %1325 = vmatprep.subr.mxu0 0.0
      %1326 = vmatpush1.msra.mxu0 0.0
      %1327 = vmatprep.subr.mxu0 0.0
      %1328 = vmatpush1.msra.mxu0 0.0
      %1329 = vmatprep.subr.mxu0 0.0
      %1330 = vmatpush1.msra.mxu0 0.0
      %1331 = vmatprep.subr.mxu0 0.0
      %1332 = vmatpush1.msra.mxu0 0.0
      %1333 = vmatprep.subr.mxu0 0.0
      %1334 = vmatpush1.msra.mxu0 0.0
      %1335 = vmatprep.subr.mxu0 0.0
      %1336 = vmatpush1.msra.mxu0 0.0
      %1337 = vmatprep.subr.mxu0 0.0
      %1338 = vmatpush1.msra.mxu0 0.0
      %1339 = vmatprep.subr.mxu0 0.0
      %1340 = vmatpush1.msra.mxu0 0.0
      %1341 = vmatprep.subr.mxu0 0.0
      %1342 = vmatpush1.msra.mxu0 0.0
      %1343 = vmatprep.subr.mxu0 0.0
      %1344 = vmatpush1.msra.mxu0 0.0
      %1345 = vmatprep.subr.mxu0 0.0
      %1346 = vmatpush1.msra.mxu0 0.0
      %1347 = vmatprep.subr.mxu0 0.0
      %1348 = vmatpush1.msra.mxu0 0.0
      %1349 = vmatprep.subr.mxu0 0.0
      %1350 = vmatpush1.msra.mxu0 0.0
      %1351 = vmatprep.subr.mxu0 0.0
      %1352 = vmatpush1.msra.mxu0 0.0
      %1353 = vmatprep.subr.mxu0 0.0
      %1354 = vmatpush1.msra.mxu0 0.0
      %1355 = vmatprep.subr.mxu0 0.0
      %1356 = vmatpush1.msra.mxu0 0.0
      %1357 = vmatprep.subr.mxu0 0.0
      %1358 = vmatpush1.msra.mxu0 0.0
      %1359 = vmatprep.subr.mxu0 0.0
      %1360 = vmatpush1.msra.mxu0 0.0
      %1361 = vmatprep.subr.mxu0 0.0
      %1362 = vmatpush1.msra.mxu0 0.0
      %1363 = vmatprep.subr.mxu0 0.0
      %1364 = vmatpush1.msra.mxu0 0.0
      %1365 = vmatprep.subr.mxu0 0.0
      %1366 = vmatpush1.msra.mxu0 0.0
      %1367 = vmatprep.subr.mxu0 0.0
      %1368 = vmatpush1.msra.mxu0 0.0
      %1369 = vmatprep.subr.mxu0 0.0
      %1370 = vmatpush1.msra.mxu0 0.0
      %1371 = vmatprep.subr.mxu0 0.0
      %1372 = vmatpush1.msra.mxu0 0.0
      %1373 = vmatprep.subr.mxu0 0.0
      %1374 = vmatpush1.msra.mxu0 0.0
      %1375 = vmatprep.mubr.f32.mxu0 0.0
      %1376 = vmatmul.mubr.f32.gmra.mrb[0].mxu0 %v544
      %v1377 = vpop.f32.mrb[0].mxu0
      %v1378 = vadd.f32 0.0, %v1377
      %v1379 = vpop.f32.mrb[0].mxu0
      %1380 = vmatprep.mubr.f32.mxu0 0.0
      %1381 = vmatmul.mubr.f32.gmra.mrb[0].mxu0 %v546
      %v1382 = vpop.f32.mrb[0].mxu0
      %v1383 = vadd.f32 0.0, %v1382
      %v1384 = vpop.f32.mrb[0].mxu0
      %1385 = vmatprep.mubr.f32.mxu0 0.0
      %1386 = vmatmul.mubr.f32.gmra.mrb[0].mxu0 %v548
      %v1387 = vpop.f32.mrb[0].mxu0
      %v1388 = vadd.f32 0.0, %v1387
      %v1389 = vpop.f32.mrb[0].mxu0
      %1390 = vmatprep.mubr.f32.mxu0 0.0
      %1391 = vmatmul.mubr.f32.gmra.mrb[0].mxu0 %v550
      %v1392 = vpop.f32.mrb[0].mxu0
      %v1393 = vadd.f32 0.0, %v1392
      %v1394 = vpop.f32.mrb[0].mxu0
      %1395 = vmatprep.mubr.f32.mxu0 0.0
      %1396 = vmatmul.mubr.f32.gmra.mrb[0].mxu0 %v552
      %v1397 = vpop.f32.mrb[0].mxu0
      %v1398 = vadd.f32 0.0, %v1397
      %v1399 = vpop.f32.mrb[0].mxu0
      %1400 = vmatprep.mubr.f32.mxu0 0.0
      %1401 = vmatmul.mubr.f32.gmra.mrb[0].mxu0 %v554
      %v1402 = vpop.f32.mrb[0].mxu0
      %v1403 = vadd.f32 0.0, %v1402
      %v1404 = vpop.f32.mrb[0].mxu0
      %1405 = vmatprep.mubr.f32.mxu0 0.0
      %1406 = vmatmul.mubr.f32.gmra.mrb[0].mxu0 %v556
      %v1407 = vpop.f32.mrb[0].mxu0
      %v1408 = vadd.f32 0.0, %v1407
      %v1409 = vpop.f32.mrb[0].mxu0
      %1410 = vmatprep.mubr.f32.mxu0 0.0
      %1411 = vmatmul.mubr.f32.gmra.mrb[0].mxu0 %v558
      %v1412 = vpop.f32.mrb[0].mxu0
      %v1413 = vadd.f32 0.0, %v1412
      %v1414 = vpop.f32.mrb[0].mxu0
      %1415 = vmatprep.mubr.f32.mxu0 0.0
      %1416 = vmatmul.mubr.f32.gmra.mrb[0].mxu0 %v560
      %v1417 = vpop.f32.mrb[0].mxu0
      %v1418 = vadd.f32 0.0, %v1417
      %v1419 = vpop.f32.mrb[0].mxu0
      %1420 = vmatprep.mubr.f32.mxu0 0.0
      %1421 = vmatmul.mubr.f32.gmra.mrb[0].mxu0 %v562
      %v1422 = vpop.f32.mrb[0].mxu0
      %v1423 = vadd.f32 0.0, %v1422
      %v1424 = vpop.f32.mrb[0].mxu0
      %1425 = vmatprep.mubr.f32.mxu0 0.0
      %1426 = vmatmul.mubr.f32.gmra.mrb[0].mxu0 %v564
      %v1427 = vpop.f32.mrb[0].mxu0
      %v1428 = vadd.f32 0.0, %v1427
      %v1429 = vpop.f32.mrb[0].mxu0
      %1430 = vmatprep.mubr.f32.mxu0 0.0
      %1431 = vmatmul.mubr.f32.gmra.mrb[0].mxu0 %v566
      %v1432 = vpop.f32.mrb[0].mxu0
      %v1433 = vadd.f32 0.0, %v1432
      %v1434 = vpop.f32.mrb[0].mxu0
      %1435 = vmatprep.mubr.f32.mxu0 0.0
      %1436 = vmatmul.mubr.f32.gmra.mrb[0].mxu0 %v568
      %v1437 = vpop.f32.mrb[0].mxu0
      %v1438 = vadd.f32 0.0, %v1437
      %v1439 = vpop.f32.mrb[0].mxu0
      %1440 = vmatprep.mubr.f32.mxu0 0.0
      %1441 = vmatmul.mubr.f32.gmra.mrb[0].mxu0 %v570
      %v1442 = vpop.f32.mrb[0].mxu0
      %v1443 = vadd.f32 0.0, %v1442
      %v1444 = vpop.f32.mrb[0].mxu0
      %1445 = vmatprep.mubr.f32.mxu0 0.0
      %1446 = vmatmul.mubr.f32.gmra.mrb[0].mxu0 %v1307
      %v1447 = vpop.f32.mrb[0].mxu0
      %v1448 = vadd.f32 0.0, %v1447
      %v1449 = vpop.f32.mrb[0].mxu0
      %1450 = vmatprep.mubr.f32.mxu0 0.0
      %1451 = vmatmul.mubr.f32.gmra.mrb[0].mxu0 %v1309
      %v1452 = vpop.f32.mrb[0].mxu0
      %v1453 = vadd.f32 0.0, %v1452
      %v1454 = vpop.f32.mrb[0].mxu0
      %1455 = vdwg.mxu0
      %v1456 = vadd.f32 %v1283, %v1378
      %v1457 = vadd.f32 %v1284, %v1383
      %v1458 = vadd.f32 %v1285, %v1388
      %v1459 = vadd.f32 %v1286, %v1393
      %v1460 = vadd.f32 %v1287, %v1398
      %v1461 = vadd.f32 %v1288, %v1403
      %v1462 = vadd.f32 %v1289, %v1408
      %v1463 = vadd.f32 %v1290, %v1413
      %v1464 = vadd.f32 %v1291, %v1418
      %v1465 = vadd.f32 %v1292, %v1423
      %v1466 = vadd.f32 %v1293, %v1428
      %v1467 = vadd.f32 %v1294, %v1433
      %v1468 = vadd.f32 %v1295, %v1438
      %v1469 = vadd.f32 %v1296, %v1443
      %v1470 = vadd.f32 %v1297, %v1448
      %v1471 = vadd.f32 %v1298, %v1453
      %v1472 = vrot.slane %v405, 2
      %v1473 = vrot.slane %v406, 2
      %v1474 = vsel %vm894, %v1472, %v1473
      %v1475 = vrot.slane %v407, 2
      %v1476 = vsel %vm894, %v1473, %v1475
      %s1477 = scalar_lea.vmem %s3, 40
      %v1478 = vld [vmem:[%s1477] sm:$0xff]
      %v1479 = vsel %vm539, %v1474, 0
      %v1481 = vsel %vm539, %v1476, 0
      %1483 = vmatprep.subr.mxu0 0.0
      %1484 = vmatpush1.msra.mxu0 %v1478
      %1485 = vmatprep.subr.mxu0 0.0
      %1486 = vmatpush1.msra.mxu0 0.0
      %1487 = vmatprep.subr.mxu0 0.0
      %1488 = vmatpush1.msra.mxu0 0.0
      %1489 = vmatprep.subr.mxu0 0.0
      %1490 = vmatpush1.msra.mxu0 0.0
      %1491 = vmatprep.subr.mxu0 0.0
      %1492 = vmatpush1.msra.mxu0 0.0
      %1493 = vmatprep.subr.mxu0 0.0
      %1494 = vmatpush1.msra.mxu0 0.0
      %1495 = vmatprep.subr.mxu0 0.0
      %1496 = vmatpush1.msra.mxu0 0.0
      %1497 = vmatprep.subr.mxu0 0.0
      %1498 = vmatpush1.msra.mxu0 0.0
      %1499 = vmatprep.subr.mxu0 0.0
      %1500 = vmatpush1.msra.mxu0 0.0
      %1501 = vmatprep.subr.mxu0 0.0
      %1502 = vmatpush1.msra.mxu0 0.0
      %1503 = vmatprep.subr.mxu0 0.0
      %1504 = vmatpush1.msra.mxu0 0.0
      %1505 = vmatprep.subr.mxu0 0.0
      %1506 = vmatpush1.msra.mxu0 0.0
      %1507 = vmatprep.subr.mxu0 0.0
      %1508 = vmatpush1.msra.mxu0 0.0
      %1509 = vmatprep.subr.mxu0 0.0
      %1510 = vmatpush1.msra.mxu0 0.0
      %1511 = vmatprep.subr.mxu0 0.0
      %1512 = vmatpush1.msra.mxu0 0.0
      %1513 = vmatprep.subr.mxu0 0.0
      %1514 = vmatpush1.msra.mxu0 0.0
      %1515 = vmatprep.subr.mxu0 0.0
      %1516 = vmatpush1.msra.mxu0 0.0
      %1517 = vmatprep.subr.mxu0 0.0
      %1518 = vmatpush1.msra.mxu0 0.0
      %1519 = vmatprep.subr.mxu0 0.0
      %1520 = vmatpush1.msra.mxu0 0.0
      %1521 = vmatprep.subr.mxu0 0.0
      %1522 = vmatpush1.msra.mxu0 0.0
      %1523 = vmatprep.subr.mxu0 0.0
      %1524 = vmatpush1.msra.mxu0 0.0
      %1525 = vmatprep.subr.mxu0 0.0
      %1526 = vmatpush1.msra.mxu0 0.0
      %1527 = vmatprep.subr.mxu0 0.0
      %1528 = vmatpush1.msra.mxu0 0.0
      %1529 = vmatprep.subr.mxu0 0.0
      %1530 = vmatpush1.msra.mxu0 0.0
      %1531 = vmatprep.subr.mxu0 0.0
      %1532 = vmatpush1.msra.mxu0 0.0
      %1533 = vmatprep.subr.mxu0 0.0
      %1534 = vmatpush1.msra.mxu0 0.0
      %1535 = vmatprep.subr.mxu0 0.0
      %1536 = vmatpush1.msra.mxu0 0.0
      %1537 = vmatprep.subr.mxu0 0.0
      %1538 = vmatpush1.msra.mxu0 0.0
      %1539 = vmatprep.subr.mxu0 0.0
      %1540 = vmatpush1.msra.mxu0 0.0
      %1541 = vmatprep.subr.mxu0 0.0
      %1542 = vmatpush1.msra.mxu0 0.0
      %1543 = vmatprep.subr.mxu0 0.0
      %1544 = vmatpush1.msra.mxu0 0.0
      %1545 = vmatprep.subr.mxu0 0.0
      %1546 = vmatpush1.msra.mxu0 0.0
      %1547 = vmatprep.mubr.f32.mxu0 0.0
      %1548 = vmatmul.mubr.f32.gmra.mrb[0].mxu0 %v941
      %v1549 = vpop.f32.mrb[0].mxu0
      %v1550 = vadd.f32 0.0, %v1549
      %v1551 = vpop.f32.mrb[0].mxu0
      %1552 = vmatprep.mubr.f32.mxu0 0.0
      %1553 = vmatmul.mubr.f32.gmra.mrb[0].mxu0 %v943
      %v1554 = vpop.f32.mrb[0].mxu0
      %v1555 = vadd.f32 0.0, %v1554
      %v1556 = vpop.f32.mrb[0].mxu0
      %1557 = vmatprep.mubr.f32.mxu0 0.0
      %1558 = vmatmul.mubr.f32.gmra.mrb[0].mxu0 %v945
      %v1559 = vpop.f32.mrb[0].mxu0
      %v1560 = vadd.f32 0.0, %v1559
      %v1561 = vpop.f32.mrb[0].mxu0
      %1562 = vmatprep.mubr.f32.mxu0 0.0
      %1563 = vmatmul.mubr.f32.gmra.mrb[0].mxu0 %v947
      %v1564 = vpop.f32.mrb[0].mxu0
      %v1565 = vadd.f32 0.0, %v1564
      %v1566 = vpop.f32.mrb[0].mxu0
      %1567 = vmatprep.mubr.f32.mxu0 0.0
      %1568 = vmatmul.mubr.f32.gmra.mrb[0].mxu0 %v949
      %v1569 = vpop.f32.mrb[0].mxu0
      %v1570 = vadd.f32 0.0, %v1569
      %v1571 = vpop.f32.mrb[0].mxu0
      %1572 = vmatprep.mubr.f32.mxu0 0.0
      %1573 = vmatmul.mubr.f32.gmra.mrb[0].mxu0 %v951
      %v1574 = vpop.f32.mrb[0].mxu0
      %v1575 = vadd.f32 0.0, %v1574
      %v1576 = vpop.f32.mrb[0].mxu0
      %1577 = vmatprep.mubr.f32.mxu0 0.0
      %1578 = vmatmul.mubr.f32.gmra.mrb[0].mxu0 %v953
      %v1579 = vpop.f32.mrb[0].mxu0
      %v1580 = vadd.f32 0.0, %v1579
      %v1581 = vpop.f32.mrb[0].mxu0
      %1582 = vmatprep.mubr.f32.mxu0 0.0
      %1583 = vmatmul.mubr.f32.gmra.mrb[0].mxu0 %v955
      %v1584 = vpop.f32.mrb[0].mxu0
      %v1585 = vadd.f32 0.0, %v1584
      %v1586 = vpop.f32.mrb[0].mxu0
      %1587 = vmatprep.mubr.f32.mxu0 0.0
      %1588 = vmatmul.mubr.f32.gmra.mrb[0].mxu0 %v957
      %v1589 = vpop.f32.mrb[0].mxu0
      %v1590 = vadd.f32 0.0, %v1589
      %v1591 = vpop.f32.mrb[0].mxu0
      %1592 = vmatprep.mubr.f32.mxu0 0.0
      %1593 = vmatmul.mubr.f32.gmra.mrb[0].mxu0 %v959
      %v1594 = vpop.f32.mrb[0].mxu0
      %v1595 = vadd.f32 0.0, %v1594
      %v1596 = vpop.f32.mrb[0].mxu0
      %1597 = vmatprep.mubr.f32.mxu0 0.0
      %1598 = vmatmul.mubr.f32.gmra.mrb[0].mxu0 %v961
      %v1599 = vpop.f32.mrb[0].mxu0
      %v1600 = vadd.f32 0.0, %v1599
      %v1601 = vpop.f32.mrb[0].mxu0
      %1602 = vmatprep.mubr.f32.mxu0 0.0
      %1603 = vmatmul.mubr.f32.gmra.mrb[0].mxu0 %v963
      %v1604 = vpop.f32.mrb[0].mxu0
      %v1605 = vadd.f32 0.0, %v1604
      %v1606 = vpop.f32.mrb[0].mxu0
      %1607 = vmatprep.mubr.f32.mxu0 0.0
      %1608 = vmatmul.mubr.f32.gmra.mrb[0].mxu0 %v965
      %v1609 = vpop.f32.mrb[0].mxu0
      %v1610 = vadd.f32 0.0, %v1609
      %v1611 = vpop.f32.mrb[0].mxu0
      %1612 = vmatprep.mubr.f32.mxu0 0.0
      %1613 = vmatmul.mubr.f32.gmra.mrb[0].mxu0 %v967
      %v1614 = vpop.f32.mrb[0].mxu0
      %v1615 = vadd.f32 0.0, %v1614
      %v1616 = vpop.f32.mrb[0].mxu0
      %1617 = vmatprep.mubr.f32.mxu0 0.0
      %1618 = vmatmul.mubr.f32.gmra.mrb[0].mxu0 %v1479
      %v1619 = vpop.f32.mrb[0].mxu0
      %v1620 = vadd.f32 0.0, %v1619
      %v1621 = vpop.f32.mrb[0].mxu0
      %1622 = vmatprep.mubr.f32.mxu0 0.0
      %1623 = vmatmul.mubr.f32.gmra.mrb[0].mxu0 %v1481
      %v1624 = vpop.f32.mrb[0].mxu0
      %v1625 = vadd.f32 0.0, %v1624
      %v1626 = vpop.f32.mrb[0].mxu0
      %1627 = vdwg.mxu0
      %v1628 = vadd.f32 %v1456, %v1550
      %v1629 = vadd.f32 %v1457, %v1555
      %v1630 = vadd.f32 %v1458, %v1560
      %v1631 = vadd.f32 %v1459, %v1565
      %v1632 = vadd.f32 %v1460, %v1570
      %v1633 = vadd.f32 %v1461, %v1575
      %v1634 = vadd.f32 %v1462, %v1580
      %v1635 = vadd.f32 %v1463, %v1585
      %v1636 = vadd.f32 %v1464, %v1590
      %v1637 = vadd.f32 %v1465, %v1595
      %v1638 = vadd.f32 %v1466, %v1600
      %v1639 = vadd.f32 %v1467, %v1605
      %v1640 = vadd.f32 %v1468, %v1610
      %v1641 = vadd.f32 %v1469, %v1615
      %v1642 = vadd.f32 %v1470, %v1620
      %v1643 = vadd.f32 %v1471, %v1625
      %s1644 = scalar_lea.vmem %s3, 48
      %v1645 = vld [vmem:[%s1644] sm:$0xff]
      %v1647 = vsel %vm539, %v408, 0
      %v1650 = vsel %vm539, %v409, 0
      %1652 = vmatprep.subr.mxu0 0.0
      %1653 = vmatpush1.msra.mxu0 %v1645
      %1654 = vmatprep.subr.mxu0 0.0
      %1655 = vmatpush1.msra.mxu0 0.0
      %1656 = vmatprep.subr.mxu0 0.0
      %1657 = vmatpush1.msra.mxu0 0.0
      %1658 = vmatprep.subr.mxu0 0.0
      %1659 = vmatpush1.msra.mxu0 0.0
      %1660 = vmatprep.subr.mxu0 0.0
      %1661 = vmatpush1.msra.mxu0 0.0
      %1662 = vmatprep.subr.mxu0 0.0
      %1663 = vmatpush1.msra.mxu0 0.0
      %1664 = vmatprep.subr.mxu0 0.0
      %1665 = vmatpush1.msra.mxu0 0.0
      %1666 = vmatprep.subr.mxu0 0.0
      %1667 = vmatpush1.msra.mxu0 0.0
      %1668 = vmatprep.subr.mxu0 0.0
      %1669 = vmatpush1.msra.mxu0 0.0
      %1670 = vmatprep.subr.mxu0 0.0
      %1671 = vmatpush1.msra.mxu0 0.0
      %1672 = vmatprep.subr.mxu0 0.0
      %1673 = vmatpush1.msra.mxu0 0.0
      %1674 = vmatprep.subr.mxu0 0.0
      %1675 = vmatpush1.msra.mxu0 0.0
      %1676 = vmatprep.subr.mxu0 0.0
      %1677 = vmatpush1.msra.mxu0 0.0
      %1678 = vmatprep.subr.mxu0 0.0
      %1679 = vmatpush1.msra.mxu0 0.0
      %1680 = vmatprep.subr.mxu0 0.0
      %1681 = vmatpush1.msra.mxu0 0.0
      %1682 = vmatprep.subr.mxu0 0.0
      %1683 = vmatpush1.msra.mxu0 0.0
      %1684 = vmatprep.subr.mxu0 0.0
      %1685 = vmatpush1.msra.mxu0 0.0
      %1686 = vmatprep.subr.mxu0 0.0
      %1687 = vmatpush1.msra.mxu0 0.0
      %1688 = vmatprep.subr.mxu0 0.0
      %1689 = vmatpush1.msra.mxu0 0.0
      %1690 = vmatprep.subr.mxu0 0.0
      %1691 = vmatpush1.msra.mxu0 0.0
      %1692 = vmatprep.subr.mxu0 0.0
      %1693 = vmatpush1.msra.mxu0 0.0
      %1694 = vmatprep.subr.mxu0 0.0
      %1695 = vmatpush1.msra.mxu0 0.0
      %1696 = vmatprep.subr.mxu0 0.0
      %1697 = vmatpush1.msra.mxu0 0.0
      %1698 = vmatprep.subr.mxu0 0.0
      %1699 = vmatpush1.msra.mxu0 0.0
      %1700 = vmatprep.subr.mxu0 0.0
      %1701 = vmatpush1.msra.mxu0 0.0
      %1702 = vmatprep.subr.mxu0 0.0
      %1703 = vmatpush1.msra.mxu0 0.0
      %1704 = vmatprep.subr.mxu0 0.0
      %1705 = vmatpush1.msra.mxu0 0.0
      %1706 = vmatprep.subr.mxu0 0.0
      %1707 = vmatpush1.msra.mxu0 0.0
      %1708 = vmatprep.subr.mxu0 0.0
      %1709 = vmatpush1.msra.mxu0 0.0
      %1710 = vmatprep.subr.mxu0 0.0
      %1711 = vmatpush1.msra.mxu0 0.0
      %1712 = vmatprep.subr.mxu0 0.0
      %1713 = vmatpush1.msra.mxu0 0.0
      %1714 = vmatprep.subr.mxu0 0.0
      %1715 = vmatpush1.msra.mxu0 0.0
      %1716 = vmatprep.mubr.f32.mxu0 0.0
      %1717 = vmatmul.mubr.f32.gmra.mrb[0].mxu0 %v725
      %v1718 = vpop.f32.mrb[0].mxu0
      %v1719 = vadd.f32 0.0, %v1718
      %v1720 = vpop.f32.mrb[0].mxu0
      %1721 = vmatprep.mubr.f32.mxu0 0.0
      %1722 = vmatmul.mubr.f32.gmra.mrb[0].mxu0 %v727
      %v1723 = vpop.f32.mrb[0].mxu0
      %v1724 = vadd.f32 0.0, %v1723
      %v1725 = vpop.f32.mrb[0].mxu0
      %1726 = vmatprep.mubr.f32.mxu0 0.0
      %1727 = vmatmul.mubr.f32.gmra.mrb[0].mxu0 %v729
      %v1728 = vpop.f32.mrb[0].mxu0
      %v1729 = vadd.f32 0.0, %v1728
      %v1730 = vpop.f32.mrb[0].mxu0
      %1731 = vmatprep.mubr.f32.mxu0 0.0
      %1732 = vmatmul.mubr.f32.gmra.mrb[0].mxu0 %v731
      %v1733 = vpop.f32.mrb[0].mxu0
      %v1734 = vadd.f32 0.0, %v1733
      %v1735 = vpop.f32.mrb[0].mxu0
      %1736 = vmatprep.mubr.f32.mxu0 0.0
      %1737 = vmatmul.mubr.f32.gmra.mrb[0].mxu0 %v733
      %v1738 = vpop.f32.mrb[0].mxu0
      %v1739 = vadd.f32 0.0, %v1738
      %v1740 = vpop.f32.mrb[0].mxu0
      %1741 = vmatprep.mubr.f32.mxu0 0.0
      %1742 = vmatmul.mubr.f32.gmra.mrb[0].mxu0 %v735
      %v1743 = vpop.f32.mrb[0].mxu0
      %v1744 = vadd.f32 0.0, %v1743
      %v1745 = vpop.f32.mrb[0].mxu0
      %1746 = vmatprep.mubr.f32.mxu0 0.0
      %1747 = vmatmul.mubr.f32.gmra.mrb[0].mxu0 %v737
      %v1748 = vpop.f32.mrb[0].mxu0
      %v1749 = vadd.f32 0.0, %v1748
      %v1750 = vpop.f32.mrb[0].mxu0
      %1751 = vmatprep.mubr.f32.mxu0 0.0
      %1752 = vmatmul.mubr.f32.gmra.mrb[0].mxu0 %v739
      %v1753 = vpop.f32.mrb[0].mxu0
      %v1754 = vadd.f32 0.0, %v1753
      %v1755 = vpop.f32.mrb[0].mxu0
      %1756 = vmatprep.mubr.f32.mxu0 0.0
      %1757 = vmatmul.mubr.f32.gmra.mrb[0].mxu0 %v741
      %v1758 = vpop.f32.mrb[0].mxu0
      %v1759 = vadd.f32 0.0, %v1758
      %v1760 = vpop.f32.mrb[0].mxu0
      %1761 = vmatprep.mubr.f32.mxu0 0.0
      %1762 = vmatmul.mubr.f32.gmra.mrb[0].mxu0 %v743
      %v1763 = vpop.f32.mrb[0].mxu0
      %v1764 = vadd.f32 0.0, %v1763
      %v1765 = vpop.f32.mrb[0].mxu0
      %1766 = vmatprep.mubr.f32.mxu0 0.0
      %1767 = vmatmul.mubr.f32.gmra.mrb[0].mxu0 %v745
      %v1768 = vpop.f32.mrb[0].mxu0
      %v1769 = vadd.f32 0.0, %v1768
      %v1770 = vpop.f32.mrb[0].mxu0
      %1771 = vmatprep.mubr.f32.mxu0 0.0
      %1772 = vmatmul.mubr.f32.gmra.mrb[0].mxu0 %v747
      %v1773 = vpop.f32.mrb[0].mxu0
      %v1774 = vadd.f32 0.0, %v1773
      %v1775 = vpop.f32.mrb[0].mxu0
      %1776 = vmatprep.mubr.f32.mxu0 0.0
      %1777 = vmatmul.mubr.f32.gmra.mrb[0].mxu0 %v1133
      %v1778 = vpop.f32.mrb[0].mxu0
      %v1779 = vadd.f32 0.0, %v1778
      %v1780 = vpop.f32.mrb[0].mxu0
      %1781 = vmatprep.mubr.f32.mxu0 0.0
      %1782 = vmatmul.mubr.f32.gmra.mrb[0].mxu0 %v1136
      %v1783 = vpop.f32.mrb[0].mxu0
      %v1784 = vadd.f32 0.0, %v1783
      %v1785 = vpop.f32.mrb[0].mxu0
      %1786 = vmatprep.mubr.f32.mxu0 0.0
      %1787 = vmatmul.mubr.f32.gmra.mrb[0].mxu0 %v1647
      %v1788 = vpop.f32.mrb[0].mxu0
      %v1789 = vadd.f32 0.0, %v1788
      %v1790 = vpop.f32.mrb[0].mxu0
      %1791 = vmatprep.mubr.f32.mxu0 0.0
      %1792 = vmatmul.mubr.f32.gmra.mrb[0].mxu0 %v1650
      %v1793 = vpop.f32.mrb[0].mxu0
      %v1794 = vadd.f32 0.0, %v1793
      %v1795 = vpop.f32.mrb[0].mxu0
      %1796 = vdwg.mxu0
      %v1797 = vadd.f32 %v1628, %v1719
      %v1798 = vadd.f32 %v1629, %v1724
      %v1799 = vadd.f32 %v1630, %v1729
      %v1800 = vadd.f32 %v1631, %v1734
      %v1801 = vadd.f32 %v1632, %v1739
      %v1802 = vadd.f32 %v1633, %v1744
      %v1803 = vadd.f32 %v1634, %v1749
      %v1804 = vadd.f32 %v1635, %v1754
      %v1805 = vadd.f32 %v1636, %v1759
      %v1806 = vadd.f32 %v1637, %v1764
      %v1807 = vadd.f32 %v1638, %v1769
      %v1808 = vadd.f32 %v1639, %v1774
      %v1809 = vadd.f32 %v1640, %v1779
      %v1810 = vadd.f32 %v1641, %v1784
      %v1811 = vadd.f32 %v1642, %v1789
      %v1812 = vadd.f32 %v1643, %v1794
      %v1814 = vrot.slane %v408, 1
      %v1815 = vrot.slane %v409, 1
      %v1816 = vsel %vm496, %v1814, %v1815
      %v1817 = vrot.slane %v410, 1
      %v1818 = vsel %vm496, %v1815, %v1817
      %s1819 = scalar_lea.vmem %s3, 56
      %v1820 = vld [vmem:[%s1819] sm:$0xff]
      %v1821 = vsel %vm539, %v1816, 0
      %v1823 = vsel %vm539, %v1818, 0
      %1825 = vmatprep.subr.mxu0 0.0
      %1826 = vmatpush1.msra.mxu0 %v1820
      %1827 = vmatprep.subr.mxu0 0.0
      %1828 = vmatpush1.msra.mxu0 0.0
      %1829 = vmatprep.subr.mxu0 0.0
      %1830 = vmatpush1.msra.mxu0 0.0
      %1831 = vmatprep.subr.mxu0 0.0
      %1832 = vmatpush1.msra.mxu0 0.0
      %1833 = vmatprep.subr.mxu0 0.0
      %1834 = vmatpush1.msra.mxu0 0.0
      %1835 = vmatprep.subr.mxu0 0.0
      %1836 = vmatpush1.msra.mxu0 0.0
      %1837 = vmatprep.subr.mxu0 0.0
      %1838 = vmatpush1.msra.mxu0 0.0
      %1839 = vmatprep.subr.mxu0 0.0
      %1840 = vmatpush1.msra.mxu0 0.0
      %1841 = vmatprep.subr.mxu0 0.0
      %1842 = vmatpush1.msra.mxu0 0.0
      %1843 = vmatprep.subr.mxu0 0.0
      %1844 = vmatpush1.msra.mxu0 0.0
      %1845 = vmatprep.subr.mxu0 0.0
      %1846 = vmatpush1.msra.mxu0 0.0
      %1847 = vmatprep.subr.mxu0 0.0
      %1848 = vmatpush1.msra.mxu0 0.0
      %1849 = vmatprep.subr.mxu0 0.0
      %1850 = vmatpush1.msra.mxu0 0.0
      %1851 = vmatprep.subr.mxu0 0.0
      %1852 = vmatpush1.msra.mxu0 0.0
      %1853 = vmatprep.subr.mxu0 0.0
      %1854 = vmatpush1.msra.mxu0 0.0
      %1855 = vmatprep.subr.mxu0 0.0
      %1856 = vmatpush1.msra.mxu0 0.0
      %1857 = vmatprep.subr.mxu0 0.0
      %1858 = vmatpush1.msra.mxu0 0.0
      %1859 = vmatprep.subr.mxu0 0.0
      %1860 = vmatpush1.msra.mxu0 0.0
      %1861 = vmatprep.subr.mxu0 0.0
      %1862 = vmatpush1.msra.mxu0 0.0
      %1863 = vmatprep.subr.mxu0 0.0
      %1864 = vmatpush1.msra.mxu0 0.0
      %1865 = vmatprep.subr.mxu0 0.0
      %1866 = vmatpush1.msra.mxu0 0.0
      %1867 = vmatprep.subr.mxu0 0.0
      %1868 = vmatpush1.msra.mxu0 0.0
      %1869 = vmatprep.subr.mxu0 0.0
      %1870 = vmatpush1.msra.mxu0 0.0
      %1871 = vmatprep.subr.mxu0 0.0
      %1872 = vmatpush1.msra.mxu0 0.0
      %1873 = vmatprep.subr.mxu0 0.0
      %1874 = vmatpush1.msra.mxu0 0.0
      %1875 = vmatprep.subr.mxu0 0.0
      %1876 = vmatpush1.msra.mxu0 0.0
      %1877 = vmatprep.subr.mxu0 0.0
      %1878 = vmatpush1.msra.mxu0 0.0
      %1879 = vmatprep.subr.mxu0 0.0
      %1880 = vmatpush1.msra.mxu0 0.0
      %1881 = vmatprep.subr.mxu0 0.0
      %1882 = vmatpush1.msra.mxu0 0.0
      %1883 = vmatprep.subr.mxu0 0.0
      %1884 = vmatpush1.msra.mxu0 0.0
      %1885 = vmatprep.subr.mxu0 0.0
      %1886 = vmatpush1.msra.mxu0 0.0
      %1887 = vmatprep.subr.mxu0 0.0
      %1888 = vmatpush1.msra.mxu0 0.0
      %1889 = vmatprep.mubr.f32.mxu0 0.0
      %1890 = vmatmul.mubr.f32.gmra.mrb[0].mxu0 %v548
      %v1891 = vpop.f32.mrb[0].mxu0
      %v1892 = vadd.f32 0.0, %v1891
      %v1893 = vpop.f32.mrb[0].mxu0
      %1894 = vmatprep.mubr.f32.mxu0 0.0
      %1895 = vmatmul.mubr.f32.gmra.mrb[0].mxu0 %v550
      %v1896 = vpop.f32.mrb[0].mxu0
      %v1897 = vadd.f32 0.0, %v1896
      %v1898 = vpop.f32.mrb[0].mxu0
      %1899 = vmatprep.mubr.f32.mxu0 0.0
      %1900 = vmatmul.mubr.f32.gmra.mrb[0].mxu0 %v552
      %v1901 = vpop.f32.mrb[0].mxu0
      %v1902 = vadd.f32 0.0, %v1901
      %v1903 = vpop.f32.mrb[0].mxu0
      %1904 = vmatprep.mubr.f32.mxu0 0.0
      %1905 = vmatmul.mubr.f32.gmra.mrb[0].mxu0 %v554
      %v1906 = vpop.f32.mrb[0].mxu0
      %v1907 = vadd.f32 0.0, %v1906
      %v1908 = vpop.f32.mrb[0].mxu0
      %1909 = vmatprep.mubr.f32.mxu0 0.0
      %1910 = vmatmul.mubr.f32.gmra.mrb[0].mxu0 %v556
      %v1911 = vpop.f32.mrb[0].mxu0
      %v1912 = vadd.f32 0.0, %v1911
      %v1913 = vpop.f32.mrb[0].mxu0
      %1914 = vmatprep.mubr.f32.mxu0 0.0
      %1915 = vmatmul.mubr.f32.gmra.mrb[0].mxu0 %v558
      %v1916 = vpop.f32.mrb[0].mxu0
      %v1917 = vadd.f32 0.0, %v1916
      %v1918 = vpop.f32.mrb[0].mxu0
      %1919 = vmatprep.mubr.f32.mxu0 0.0
      %1920 = vmatmul.mubr.f32.gmra.mrb[0].mxu0 %v560
      %v1921 = vpop.f32.mrb[0].mxu0
      %v1922 = vadd.f32 0.0, %v1921
      %v1923 = vpop.f32.mrb[0].mxu0
      %1924 = vmatprep.mubr.f32.mxu0 0.0
      %1925 = vmatmul.mubr.f32.gmra.mrb[0].mxu0 %v562
      %v1926 = vpop.f32.mrb[0].mxu0
      %v1927 = vadd.f32 0.0, %v1926
      %v1928 = vpop.f32.mrb[0].mxu0
      %1929 = vmatprep.mubr.f32.mxu0 0.0
      %1930 = vmatmul.mubr.f32.gmra.mrb[0].mxu0 %v564
      %v1931 = vpop.f32.mrb[0].mxu0
      %v1932 = vadd.f32 0.0, %v1931
      %v1933 = vpop.f32.mrb[0].mxu0
      %1934 = vmatprep.mubr.f32.mxu0 0.0
      %1935 = vmatmul.mubr.f32.gmra.mrb[0].mxu0 %v566
      %v1936 = vpop.f32.mrb[0].mxu0
      %v1937 = vadd.f32 0.0, %v1936
      %v1938 = vpop.f32.mrb[0].mxu0
      %1939 = vmatprep.mubr.f32.mxu0 0.0
      %1940 = vmatmul.mubr.f32.gmra.mrb[0].mxu0 %v568
      %v1941 = vpop.f32.mrb[0].mxu0
      %v1942 = vadd.f32 0.0, %v1941
      %v1943 = vpop.f32.mrb[0].mxu0
      %1944 = vmatprep.mubr.f32.mxu0 0.0
      %1945 = vmatmul.mubr.f32.gmra.mrb[0].mxu0 %v570
      %v1946 = vpop.f32.mrb[0].mxu0
      %v1947 = vadd.f32 0.0, %v1946
      %v1948 = vpop.f32.mrb[0].mxu0
      %1949 = vmatprep.mubr.f32.mxu0 0.0
      %1950 = vmatmul.mubr.f32.gmra.mrb[0].mxu0 %v1307
      %v1951 = vpop.f32.mrb[0].mxu0
      %v1952 = vadd.f32 0.0, %v1951
      %v1953 = vpop.f32.mrb[0].mxu0
      %1954 = vmatprep.mubr.f32.mxu0 0.0
      %1955 = vmatmul.mubr.f32.gmra.mrb[0].mxu0 %v1309
      %v1956 = vpop.f32.mrb[0].mxu0
      %v1957 = vadd.f32 0.0, %v1956
      %v1958 = vpop.f32.mrb[0].mxu0
      %1959 = vmatprep.mubr.f32.mxu0 0.0
      %1960 = vmatmul.mubr.f32.gmra.mrb[0].mxu0 %v1821
      %v1961 = vpop.f32.mrb[0].mxu0
      %v1962 = vadd.f32 0.0, %v1961
      %v1963 = vpop.f32.mrb[0].mxu0
      %1964 = vmatprep.mubr.f32.mxu0 0.0
      %1965 = vmatmul.mubr.f32.gmra.mrb[0].mxu0 %v1823
      %v1966 = vpop.f32.mrb[0].mxu0
      %v1967 = vadd.f32 0.0, %v1966
      %v1968 = vpop.f32.mrb[0].mxu0
      %1969 = vdwg.mxu0
      %v1970 = vadd.f32 %v1797, %v1892
      %v1971 = vadd.f32 %v1798, %v1897
      %v1972 = vadd.f32 %v1799, %v1902
      %v1973 = vadd.f32 %v1800, %v1907
      %v1974 = vadd.f32 %v1801, %v1912
      %v1975 = vadd.f32 %v1802, %v1917
      %v1976 = vadd.f32 %v1803, %v1922
      %v1977 = vadd.f32 %v1804, %v1927
      %v1978 = vadd.f32 %v1805, %v1932
      %v1979 = vadd.f32 %v1806, %v1937
      %v1980 = vadd.f32 %v1807, %v1942
      %v1981 = vadd.f32 %v1808, %v1947
      %v1982 = vadd.f32 %v1809, %v1952
      %v1983 = vadd.f32 %v1810, %v1957
      %v1984 = vadd.f32 %v1811, %v1962
      %v1985 = vadd.f32 %v1812, %v1967
      %v1986 = vrot.slane %v408, 2
      %v1987 = vrot.slane %v409, 2
      %v1988 = vsel %vm894, %v1986, %v1987
      %v1989 = vrot.slane %v410, 2
      %v1990 = vsel %vm894, %v1987, %v1989
      %s1991 = scalar_lea.vmem %s3, 64
      %v1992 = vld [vmem:[%s1991] sm:$0xff]
      %v1993 = vsel %vm539, %v1988, 0
      %v1995 = vsel %vm539, %v1990, 0
      %1997 = vmatprep.subr.mxu0 0.0
      %1998 = vmatpush1.msra.mxu0 %v1992
      %1999 = vmatprep.subr.mxu0 0.0
      %2000 = vmatpush1.msra.mxu0 0.0
      %2001 = vmatprep.subr.mxu0 0.0
      %2002 = vmatpush1.msra.mxu0 0.0
      %2003 = vmatprep.subr.mxu0 0.0
      %2004 = vmatpush1.msra.mxu0 0.0
      %2005 = vmatprep.subr.mxu0 0.0
      %2006 = vmatpush1.msra.mxu0 0.0
      %2007 = vmatprep.subr.mxu0 0.0
      %2008 = vmatpush1.msra.mxu0 0.0
      %2009 = vmatprep.subr.mxu0 0.0
      %2010 = vmatpush1.msra.mxu0 0.0
      %2011 = vmatprep.subr.mxu0 0.0
      %2012 = vmatpush1.msra.mxu0 0.0
      %2013 = vmatprep.subr.mxu0 0.0
      %2014 = vmatpush1.msra.mxu0 0.0
      %2015 = vmatprep.subr.mxu0 0.0
      %2016 = vmatpush1.msra.mxu0 0.0
      %2017 = vmatprep.subr.mxu0 0.0
      %2018 = vmatpush1.msra.mxu0 0.0
      %2019 = vmatprep.subr.mxu0 0.0
      %2020 = vmatpush1.msra.mxu0 0.0
      %2021 = vmatprep.subr.mxu0 0.0
      %2022 = vmatpush1.msra.mxu0 0.0
      %2023 = vmatprep.subr.mxu0 0.0
      %2024 = vmatpush1.msra.mxu0 0.0
      %2025 = vmatprep.subr.mxu0 0.0
      %2026 = vmatpush1.msra.mxu0 0.0
      %2027 = vmatprep.subr.mxu0 0.0
      %2028 = vmatpush1.msra.mxu0 0.0
      %2029 = vmatprep.subr.mxu0 0.0
      %2030 = vmatpush1.msra.mxu0 0.0
      %2031 = vmatprep.subr.mxu0 0.0
      %2032 = vmatpush1.msra.mxu0 0.0
      %2033 = vmatprep.subr.mxu0 0.0
      %2034 = vmatpush1.msra.mxu0 0.0
      %2035 = vmatprep.subr.mxu0 0.0
      %2036 = vmatpush1.msra.mxu0 0.0
      %2037 = vmatprep.subr.mxu0 0.0
      %2038 = vmatpush1.msra.mxu0 0.0
      %2039 = vmatprep.subr.mxu0 0.0
      %2040 = vmatpush1.msra.mxu0 0.0
      %2041 = vmatprep.subr.mxu0 0.0
      %2042 = vmatpush1.msra.mxu0 0.0
      %2043 = vmatprep.subr.mxu0 0.0
      %2044 = vmatpush1.msra.mxu0 0.0
      %2045 = vmatprep.subr.mxu0 0.0
      %2046 = vmatpush1.msra.mxu0 0.0
      %2047 = vmatprep.subr.mxu0 0.0
      %2048 = vmatpush1.msra.mxu0 0.0
      %2049 = vmatprep.subr.mxu0 0.0
      %2050 = vmatpush1.msra.mxu0 0.0
      %2051 = vmatprep.subr.mxu0 0.0
      %2052 = vmatpush1.msra.mxu0 0.0
      %2053 = vmatprep.subr.mxu0 0.0
      %2054 = vmatpush1.msra.mxu0 0.0
      %2055 = vmatprep.subr.mxu0 0.0
      %2056 = vmatpush1.msra.mxu0 0.0
      %2057 = vmatprep.subr.mxu0 0.0
      %2058 = vmatpush1.msra.mxu0 0.0
      %2059 = vmatprep.subr.mxu0 0.0
      %2060 = vmatpush1.msra.mxu0 0.0
      %2061 = vmatprep.mubr.f32.mxu0 0.0
      %2062 = vmatmul.mubr.f32.gmra.mrb[0].mxu0 %v945
      %v2063 = vpop.f32.mrb[0].mxu0
      %v2064 = vadd.f32 0.0, %v2063
      %v2065 = vpop.f32.mrb[0].mxu0
      %2066 = vmatprep.mubr.f32.mxu0 0.0
      %2067 = vmatmul.mubr.f32.gmra.mrb[0].mxu0 %v947
      %v2068 = vpop.f32.mrb[0].mxu0
      %v2069 = vadd.f32 0.0, %v2068
      %v2070 = vpop.f32.mrb[0].mxu0
      %2071 = vmatprep.mubr.f32.mxu0 0.0
      %2072 = vmatmul.mubr.f32.gmra.mrb[0].mxu0 %v949
      %v2073 = vpop.f32.mrb[0].mxu0
      %v2074 = vadd.f32 0.0, %v2073
      %v2075 = vpop.f32.mrb[0].mxu0
      %2076 = vmatprep.mubr.f32.mxu0 0.0
      %2077 = vmatmul.mubr.f32.gmra.mrb[0].mxu0 %v951
      %v2078 = vpop.f32.mrb[0].mxu0
      %v2079 = vadd.f32 0.0, %v2078
      %v2080 = vpop.f32.mrb[0].mxu0
      %2081 = vmatprep.mubr.f32.mxu0 0.0
      %2082 = vmatmul.mubr.f32.gmra.mrb[0].mxu0 %v953
      %v2083 = vpop.f32.mrb[0].mxu0
      %v2084 = vadd.f32 0.0, %v2083
      %v2085 = vpop.f32.mrb[0].mxu0
      %2086 = vmatprep.mubr.f32.mxu0 0.0
      %2087 = vmatmul.mubr.f32.gmra.mrb[0].mxu0 %v955
      %v2088 = vpop.f32.mrb[0].mxu0
      %v2089 = vadd.f32 0.0, %v2088
      %v2090 = vpop.f32.mrb[0].mxu0
      %2091 = vmatprep.mubr.f32.mxu0 0.0
      %2092 = vmatmul.mubr.f32.gmra.mrb[0].mxu0 %v957
      %v2093 = vpop.f32.mrb[0].mxu0
      %v2094 = vadd.f32 0.0, %v2093
      %v2095 = vpop.f32.mrb[0].mxu0
      %2096 = vmatprep.mubr.f32.mxu0 0.0
      %2097 = vmatmul.mubr.f32.gmra.mrb[0].mxu0 %v959
      %v2098 = vpop.f32.mrb[0].mxu0
      %v2099 = vadd.f32 0.0, %v2098
      %v2100 = vpop.f32.mrb[0].mxu0
      %2101 = vmatprep.mubr.f32.mxu0 0.0
      %2102 = vmatmul.mubr.f32.gmra.mrb[0].mxu0 %v961
      %v2103 = vpop.f32.mrb[0].mxu0
      %v2104 = vadd.f32 0.0, %v2103
      %v2105 = vpop.f32.mrb[0].mxu0
      %2106 = vmatprep.mubr.f32.mxu0 0.0
      %2107 = vmatmul.mubr.f32.gmra.mrb[0].mxu0 %v963
      %v2108 = vpop.f32.mrb[0].mxu0
      %v2109 = vadd.f32 0.0, %v2108
      %v2110 = vpop.f32.mrb[0].mxu0
      %2111 = vmatprep.mubr.f32.mxu0 0.0
      %2112 = vmatmul.mubr.f32.gmra.mrb[0].mxu0 %v965
      %v2113 = vpop.f32.mrb[0].mxu0
      %v2114 = vadd.f32 0.0, %v2113
      %v2115 = vpop.f32.mrb[0].mxu0
      %2116 = vmatprep.mubr.f32.mxu0 0.0
      %2117 = vmatmul.mubr.f32.gmra.mrb[0].mxu0 %v967
      %v2118 = vpop.f32.mrb[0].mxu0
      %v2119 = vadd.f32 0.0, %v2118
      %v2120 = vpop.f32.mrb[0].mxu0
      %2121 = vmatprep.mubr.f32.mxu0 0.0
      %2122 = vmatmul.mubr.f32.gmra.mrb[0].mxu0 %v1479
      %v2123 = vpop.f32.mrb[0].mxu0
      %v2124 = vadd.f32 0.0, %v2123
      %v2125 = vpop.f32.mrb[0].mxu0
      %2126 = vmatprep.mubr.f32.mxu0 0.0
      %2127 = vmatmul.mubr.f32.gmra.mrb[0].mxu0 %v1481
      %v2128 = vpop.f32.mrb[0].mxu0
      %v2129 = vadd.f32 0.0, %v2128
      %v2130 = vpop.f32.mrb[0].mxu0
      %2131 = vmatprep.mubr.f32.mxu0 0.0
      %2132 = vmatmul.mubr.f32.gmra.mrb[0].mxu0 %v1993
      %v2133 = vpop.f32.mrb[0].mxu0
      %v2134 = vadd.f32 0.0, %v2133
      %v2135 = vpop.f32.mrb[0].mxu0
      %2136 = vmatprep.mubr.f32.mxu0 0.0
      %2137 = vmatmul.mubr.f32.gmra.mrb[0].mxu0 %v1995
      %v2138 = vpop.f32.mrb[0].mxu0
      %v2139 = vadd.f32 0.0, %v2138
      %v2140 = vpop.f32.mrb[0].mxu0
      %2141 = vdwg.mxu0
      %v2142 = vadd.f32 %v1970, %v2064
      %v2143 = vadd.f32 %v1971, %v2069
      %v2144 = vadd.f32 %v1972, %v2074
      %v2145 = vadd.f32 %v1973, %v2079
      %v2146 = vadd.f32 %v1974, %v2084
      %v2147 = vadd.f32 %v1975, %v2089
      %v2148 = vadd.f32 %v1976, %v2094
      %v2149 = vadd.f32 %v1977, %v2099
      %v2150 = vadd.f32 %v1978, %v2104
      %v2151 = vadd.f32 %v1979, %v2109
      %v2152 = vadd.f32 %v1980, %v2114
      %v2153 = vadd.f32 %v1981, %v2119
      %v2154 = vadd.f32 %v1982, %v2124
      %v2155 = vadd.f32 %v1983, %v2129
      %v2156 = vadd.f32 %v1984, %v2134
      %v2157 = vadd.f32 %v1985, %v2139
      %s2158 = scalar_lea.vmem %s3, 72
      %v2159 = vld [vmem:[%s2158] sm:$0xff]
      %v2161 = vsel %vm539, %v411, 0
      %v2164 = vsel %vm539, %v412, 0
      %v2167 = vsel %vm539, %v414, 0
      %v2170 = vsel %vm539, %v415, 0
      %v2173 = vsel %vm539, %v417, 0
      %v2176 = vsel %vm539, %v418, 0
      %v2179 = vsel %vm539, %v420, 0
      %v2182 = vsel %vm539, %v421, 0
      %v2185 = vsel %vm539, %v423, 0
      %v2188 = vsel %vm539, %v424, 0
      %v2191 = vsel %vm539, %v426, 0
      %v2194 = vsel %vm539, %v427, 0
      %v2197 = vsel %vm539, %v429, 0
      %v2200 = vsel %vm539, %v430, 0
      %v2203 = vsel %vm539, %v432, 0
      %v2206 = vsel %vm539, %v433, 0
      %2208 = vmatprep.subr.mxu0 0.0
      %2209 = vmatpush1.msra.mxu0 %v2159
      %2210 = vmatprep.subr.mxu0 0.0
      %2211 = vmatpush1.msra.mxu0 0.0
      %2212 = vmatprep.subr.mxu0 0.0
      %2213 = vmatpush1.msra.mxu0 0.0
      %2214 = vmatprep.subr.mxu0 0.0
      %2215 = vmatpush1.msra.mxu0 0.0
      %2216 = vmatprep.subr.mxu0 0.0
      %2217 = vmatpush1.msra.mxu0 0.0
      %2218 = vmatprep.subr.mxu0 0.0
      %2219 = vmatpush1.msra.mxu0 0.0
      %2220 = vmatprep.subr.mxu0 0.0
      %2221 = vmatpush1.msra.mxu0 0.0
      %2222 = vmatprep.subr.mxu0 0.0
      %2223 = vmatpush1.msra.mxu0 0.0
      %2224 = vmatprep.subr.mxu0 0.0
      %2225 = vmatpush1.msra.mxu0 0.0
      %2226 = vmatprep.subr.mxu0 0.0
      %2227 = vmatpush1.msra.mxu0 0.0
      %2228 = vmatprep.subr.mxu0 0.0
      %2229 = vmatpush1.msra.mxu0 0.0
      %2230 = vmatprep.subr.mxu0 0.0
      %2231 = vmatpush1.msra.mxu0 0.0
      %2232 = vmatprep.subr.mxu0 0.0
      %2233 = vmatpush1.msra.mxu0 0.0
      %2234 = vmatprep.subr.mxu0 0.0
      %2235 = vmatpush1.msra.mxu0 0.0
      %2236 = vmatprep.subr.mxu0 0.0
      %2237 = vmatpush1.msra.mxu0 0.0
      %2238 = vmatprep.subr.mxu0 0.0
      %2239 = vmatpush1.msra.mxu0 0.0
      %2240 = vmatprep.subr.mxu0 0.0
      %2241 = vmatpush1.msra.mxu0 0.0
      %2242 = vmatprep.subr.mxu0 0.0
      %2243 = vmatpush1.msra.mxu0 0.0
      %2244 = vmatprep.subr.mxu0 0.0
      %2245 = vmatpush1.msra.mxu0 0.0
      %2246 = vmatprep.subr.mxu0 0.0
      %2247 = vmatpush1.msra.mxu0 0.0
      %2248 = vmatprep.subr.mxu0 0.0
      %2249 = vmatpush1.msra.mxu0 0.0
      %2250 = vmatprep.subr.mxu0 0.0
      %2251 = vmatpush1.msra.mxu0 0.0
      %2252 = vmatprep.subr.mxu0 0.0
      %2253 = vmatpush1.msra.mxu0 0.0
      %2254 = vmatprep.subr.mxu0 0.0
      %2255 = vmatpush1.msra.mxu0 0.0
      %2256 = vmatprep.subr.mxu0 0.0
      %2257 = vmatpush1.msra.mxu0 0.0
      %2258 = vmatprep.subr.mxu0 0.0
      %2259 = vmatpush1.msra.mxu0 0.0
      %2260 = vmatprep.subr.mxu0 0.0
      %2261 = vmatpush1.msra.mxu0 0.0
      %2262 = vmatprep.subr.mxu0 0.0
      %2263 = vmatpush1.msra.mxu0 0.0
      %2264 = vmatprep.subr.mxu0 0.0
      %2265 = vmatpush1.msra.mxu0 0.0
      %2266 = vmatprep.subr.mxu0 0.0
      %2267 = vmatpush1.msra.mxu0 0.0
      %2268 = vmatprep.subr.mxu0 0.0
      %2269 = vmatpush1.msra.mxu0 0.0
      %2270 = vmatprep.subr.mxu0 0.0
      %2271 = vmatpush1.msra.mxu0 0.0
      %2272 = vmatprep.mubr.f32.mxu0 0.0
      %2273 = vmatmul.mubr.f32.gmra.mrb[0].mxu0 %v2161
      %v2274 = vpop.f32.mrb[0].mxu0
      %v2275 = vadd.f32 0.0, %v2274
      %v2276 = vpop.f32.mrb[0].mxu0
      %2277 = vmatprep.mubr.f32.mxu0 0.0
      %2278 = vmatmul.mubr.f32.gmra.mrb[0].mxu0 %v2164
      %v2279 = vpop.f32.mrb[0].mxu0
      %v2280 = vadd.f32 0.0, %v2279
      %v2281 = vpop.f32.mrb[0].mxu0
      %2282 = vmatprep.mubr.f32.mxu0 0.0
      %2283 = vmatmul.mubr.f32.gmra.mrb[0].mxu0 %v2167
      %v2284 = vpop.f32.mrb[0].mxu0
      %v2285 = vadd.f32 0.0, %v2284
      %v2286 = vpop.f32.mrb[0].mxu0
      %2287 = vmatprep.mubr.f32.mxu0 0.0
      %2288 = vmatmul.mubr.f32.gmra.mrb[0].mxu0 %v2170
      %v2289 = vpop.f32.mrb[0].mxu0
      %v2290 = vadd.f32 0.0, %v2289
      %v2291 = vpop.f32.mrb[0].mxu0
      %2292 = vmatprep.mubr.f32.mxu0 0.0
      %2293 = vmatmul.mubr.f32.gmra.mrb[0].mxu0 %v2173
      %v2294 = vpop.f32.mrb[0].mxu0
      %v2295 = vadd.f32 0.0, %v2294
      %v2296 = vpop.f32.mrb[0].mxu0
      %2297 = vmatprep.mubr.f32.mxu0 0.0
      %2298 = vmatmul.mubr.f32.gmra.mrb[0].mxu0 %v2176
      %v2299 = vpop.f32.mrb[0].mxu0
      %v2300 = vadd.f32 0.0, %v2299
      %v2301 = vpop.f32.mrb[0].mxu0
      %2302 = vmatprep.mubr.f32.mxu0 0.0
      %2303 = vmatmul.mubr.f32.gmra.mrb[0].mxu0 %v2179
      %v2304 = vpop.f32.mrb[0].mxu0
      %v2305 = vadd.f32 0.0, %v2304
      %v2306 = vpop.f32.mrb[0].mxu0
      %2307 = vmatprep.mubr.f32.mxu0 0.0
      %2308 = vmatmul.mubr.f32.gmra.mrb[0].mxu0 %v2182
      %v2309 = vpop.f32.mrb[0].mxu0
      %v2310 = vadd.f32 0.0, %v2309
      %v2311 = vpop.f32.mrb[0].mxu0
      %2312 = vmatprep.mubr.f32.mxu0 0.0
      %2313 = vmatmul.mubr.f32.gmra.mrb[0].mxu0 %v2185
      %v2314 = vpop.f32.mrb[0].mxu0
      %v2315 = vadd.f32 0.0, %v2314
      %v2316 = vpop.f32.mrb[0].mxu0
      %2317 = vmatprep.mubr.f32.mxu0 0.0
      %2318 = vmatmul.mubr.f32.gmra.mrb[0].mxu0 %v2188
      %v2319 = vpop.f32.mrb[0].mxu0
      %v2320 = vadd.f32 0.0, %v2319
      %v2321 = vpop.f32.mrb[0].mxu0
      %2322 = vmatprep.mubr.f32.mxu0 0.0
      %2323 = vmatmul.mubr.f32.gmra.mrb[0].mxu0 %v2191
      %v2324 = vpop.f32.mrb[0].mxu0
      %v2325 = vadd.f32 0.0, %v2324
      %v2326 = vpop.f32.mrb[0].mxu0
      %2327 = vmatprep.mubr.f32.mxu0 0.0
      %2328 = vmatmul.mubr.f32.gmra.mrb[0].mxu0 %v2194
      %v2329 = vpop.f32.mrb[0].mxu0
      %v2330 = vadd.f32 0.0, %v2329
      %v2331 = vpop.f32.mrb[0].mxu0
      %2332 = vmatprep.mubr.f32.mxu0 0.0
      %2333 = vmatmul.mubr.f32.gmra.mrb[0].mxu0 %v2197
      %v2334 = vpop.f32.mrb[0].mxu0
      %v2335 = vadd.f32 0.0, %v2334
      %v2336 = vpop.f32.mrb[0].mxu0
      %2337 = vmatprep.mubr.f32.mxu0 0.0
      %2338 = vmatmul.mubr.f32.gmra.mrb[0].mxu0 %v2200
      %v2339 = vpop.f32.mrb[0].mxu0
      %v2340 = vadd.f32 0.0, %v2339
      %v2341 = vpop.f32.mrb[0].mxu0
      %2342 = vmatprep.mubr.f32.mxu0 0.0
      %2343 = vmatmul.mubr.f32.gmra.mrb[0].mxu0 %v2203
      %v2344 = vpop.f32.mrb[0].mxu0
      %v2345 = vadd.f32 0.0, %v2344
      %v2346 = vpop.f32.mrb[0].mxu0
      %2347 = vmatprep.mubr.f32.mxu0 0.0
      %2348 = vmatmul.mubr.f32.gmra.mrb[0].mxu0 %v2206
      %v2349 = vpop.f32.mrb[0].mxu0
      %v2350 = vadd.f32 0.0, %v2349
      %v2351 = vpop.f32.mrb[0].mxu0
      %2352 = vdwg.mxu0
      %v2353 = vadd.f32 %v2142, %v2275
      %v2354 = vadd.f32 %v2143, %v2280
      %v2355 = vadd.f32 %v2144, %v2285
      %v2356 = vadd.f32 %v2145, %v2290
      %v2357 = vadd.f32 %v2146, %v2295
      %v2358 = vadd.f32 %v2147, %v2300
      %v2359 = vadd.f32 %v2148, %v2305
      %v2360 = vadd.f32 %v2149, %v2310
      %v2361 = vadd.f32 %v2150, %v2315
      %v2362 = vadd.f32 %v2151, %v2320
      %v2363 = vadd.f32 %v2152, %v2325
      %v2364 = vadd.f32 %v2153, %v2330
      %v2365 = vadd.f32 %v2154, %v2335
      %v2366 = vadd.f32 %v2155, %v2340
      %v2367 = vadd.f32 %v2156, %v2345
      %v2368 = vadd.f32 %v2157, %v2350
      %v2377 = vrot.slane %v411, 1
      %v2378 = vrot.slane %v412, 1
      %v2379 = vsel %vm496, %v2377, %v2378
      %v2380 = vrot.slane %v413, 1
      %v2381 = vsel %vm496, %v2378, %v2380
      %v2382 = vrot.slane %v414, 1
      %v2383 = vrot.slane %v415, 1
      %v2384 = vsel %vm496, %v2382, %v2383
      %v2385 = vrot.slane %v416, 1
      %v2386 = vsel %vm496, %v2383, %v2385
      %v2387 = vrot.slane %v417, 1
      %v2388 = vrot.slane %v418, 1
      %v2389 = vsel %vm496, %v2387, %v2388
      %v2390 = vrot.slane %v419, 1
      %v2391 = vsel %vm496, %v2388, %v2390
      %v2392 = vrot.slane %v420, 1
      %v2393 = vrot.slane %v421, 1
      %v2394 = vsel %vm496, %v2392, %v2393
      %v2395 = vrot.slane %v422, 1
      %v2396 = vsel %vm496, %v2393, %v2395
      %v2397 = vrot.slane %v423, 1
      %v2398 = vrot.slane %v424, 1
      %v2399 = vsel %vm496, %v2397, %v2398
      %v2400 = vrot.slane %v425, 1
      %v2401 = vsel %vm496, %v2398, %v2400
      %v2402 = vrot.slane %v426, 1
      %v2403 = vrot.slane %v427, 1
      %v2404 = vsel %vm496, %v2402, %v2403
      %v2405 = vrot.slane %v428, 1
      %v2406 = vsel %vm496, %v2403, %v2405
      %v2407 = vrot.slane %v429, 1
      %v2408 = vrot.slane %v430, 1
      %v2409 = vsel %vm496, %v2407, %v2408
      %v2410 = vrot.slane %v431, 1
      %v2411 = vsel %vm496, %v2408, %v2410
      %v2412 = vrot.slane %v432, 1
      %v2413 = vrot.slane %v433, 1
      %v2414 = vsel %vm496, %v2412, %v2413
      %v2415 = vrot.slane %v434, 1
      %v2416 = vsel %vm496, %v2413, %v2415
      %s2417 = scalar_lea.vmem %s3, 80
      %v2418 = vld [vmem:[%s2417] sm:$0xff]
      %v2419 = vsel %vm539, %v2379, 0
      %v2421 = vsel %vm539, %v2381, 0
      %v2423 = vsel %vm539, %v2384, 0
      %v2425 = vsel %vm539, %v2386, 0
      %v2427 = vsel %vm539, %v2389, 0
      %v2429 = vsel %vm539, %v2391, 0
      %v2431 = vsel %vm539, %v2394, 0
      %v2433 = vsel %vm539, %v2396, 0
      %v2435 = vsel %vm539, %v2399, 0
      %v2437 = vsel %vm539, %v2401, 0
      %v2439 = vsel %vm539, %v2404, 0
      %v2441 = vsel %vm539, %v2406, 0
      %v2443 = vsel %vm539, %v2409, 0
      %v2445 = vsel %vm539, %v2411, 0
      %v2447 = vsel %vm539, %v2414, 0
      %v2449 = vsel %vm539, %v2416, 0
      %2451 = vmatprep.subr.mxu0 0.0
      %2452 = vmatpush1.msra.mxu0 %v2418
      %2453 = vmatprep.subr.mxu0 0.0
      %2454 = vmatpush1.msra.mxu0 0.0
      %2455 = vmatprep.subr.mxu0 0.0
      %2456 = vmatpush1.msra.mxu0 0.0
      %2457 = vmatprep.subr.mxu0 0.0
      %2458 = vmatpush1.msra.mxu0 0.0
      %2459 = vmatprep.subr.mxu0 0.0
      %2460 = vmatpush1.msra.mxu0 0.0
      %2461 = vmatprep.subr.mxu0 0.0
      %2462 = vmatpush1.msra.mxu0 0.0
      %2463 = vmatprep.subr.mxu0 0.0
      %2464 = vmatpush1.msra.mxu0 0.0
      %2465 = vmatprep.subr.mxu0 0.0
      %2466 = vmatpush1.msra.mxu0 0.0
      %2467 = vmatprep.subr.mxu0 0.0
      %2468 = vmatpush1.msra.mxu0 0.0
      %2469 = vmatprep.subr.mxu0 0.0
      %2470 = vmatpush1.msra.mxu0 0.0
      %2471 = vmatprep.subr.mxu0 0.0
      %2472 = vmatpush1.msra.mxu0 0.0
      %2473 = vmatprep.subr.mxu0 0.0
      %2474 = vmatpush1.msra.mxu0 0.0
      %2475 = vmatprep.subr.mxu0 0.0
      %2476 = vmatpush1.msra.mxu0 0.0
      %2477 = vmatprep.subr.mxu0 0.0
      %2478 = vmatpush1.msra.mxu0 0.0
      %2479 = vmatprep.subr.mxu0 0.0
      %2480 = vmatpush1.msra.mxu0 0.0
      %2481 = vmatprep.subr.mxu0 0.0
      %2482 = vmatpush1.msra.mxu0 0.0
      %2483 = vmatprep.subr.mxu0 0.0
      %2484 = vmatpush1.msra.mxu0 0.0
      %2485 = vmatprep.subr.mxu0 0.0
      %2486 = vmatpush1.msra.mxu0 0.0
      %2487 = vmatprep.subr.mxu0 0.0
      %2488 = vmatpush1.msra.mxu0 0.0
      %2489 = vmatprep.subr.mxu0 0.0
      %2490 = vmatpush1.msra.mxu0 0.0
      %2491 = vmatprep.subr.mxu0 0.0
      %2492 = vmatpush1.msra.mxu0 0.0
      %2493 = vmatprep.subr.mxu0 0.0
      %2494 = vmatpush1.msra.mxu0 0.0
      %2495 = vmatprep.subr.mxu0 0.0
      %2496 = vmatpush1.msra.mxu0 0.0
      %2497 = vmatprep.subr.mxu0 0.0
      %2498 = vmatpush1.msra.mxu0 0.0
      %2499 = vmatprep.subr.mxu0 0.0
      %2500 = vmatpush1.msra.mxu0 0.0
      %2501 = vmatprep.subr.mxu0 0.0
      %2502 = vmatpush1.msra.mxu0 0.0
      %2503 = vmatprep.subr.mxu0 0.0
      %2504 = vmatpush1.msra.mxu0 0.0
      %2505 = vmatprep.subr.mxu0 0.0
      %2506 = vmatpush1.msra.mxu0 0.0
      %2507 = vmatprep.subr.mxu0 0.0
      %2508 = vmatpush1.msra.mxu0 0.0
      %2509 = vmatprep.subr.mxu0 0.0
      %2510 = vmatpush1.msra.mxu0 0.0
      %2511 = vmatprep.subr.mxu0 0.0
      %2512 = vmatpush1.msra.mxu0 0.0
      %2513 = vmatprep.subr.mxu0 0.0
      %2514 = vmatpush1.msra.mxu0 0.0
      %2515 = vmatprep.mubr.f32.mxu0 0.0
      %2516 = vmatmul.mubr.f32.gmra.mrb[0].mxu0 %v2419
      %v2517 = vpop.f32.mrb[0].mxu0
      %v2518 = vadd.f32 0.0, %v2517
      %v2519 = vpop.f32.mrb[0].mxu0
      %2520 = vmatprep.mubr.f32.mxu0 0.0
      %2521 = vmatmul.mubr.f32.gmra.mrb[0].mxu0 %v2421
      %v2522 = vpop.f32.mrb[0].mxu0
      %v2523 = vadd.f32 0.0, %v2522
      %v2524 = vpop.f32.mrb[0].mxu0
      %2525 = vmatprep.mubr.f32.mxu0 0.0
      %2526 = vmatmul.mubr.f32.gmra.mrb[0].mxu0 %v2423
      %v2527 = vpop.f32.mrb[0].mxu0
      %v2528 = vadd.f32 0.0, %v2527
      %v2529 = vpop.f32.mrb[0].mxu0
      %2530 = vmatprep.mubr.f32.mxu0 0.0
      %2531 = vmatmul.mubr.f32.gmra.mrb[0].mxu0 %v2425
      %v2532 = vpop.f32.mrb[0].mxu0
      %v2533 = vadd.f32 0.0, %v2532
      %v2534 = vpop.f32.mrb[0].mxu0
      %2535 = vmatprep.mubr.f32.mxu0 0.0
      %2536 = vmatmul.mubr.f32.gmra.mrb[0].mxu0 %v2427
      %v2537 = vpop.f32.mrb[0].mxu0
      %v2538 = vadd.f32 0.0, %v2537
      %v2539 = vpop.f32.mrb[0].mxu0
      %2540 = vmatprep.mubr.f32.mxu0 0.0
      %2541 = vmatmul.mubr.f32.gmra.mrb[0].mxu0 %v2429
      %v2542 = vpop.f32.mrb[0].mxu0
      %v2543 = vadd.f32 0.0, %v2542
      %v2544 = vpop.f32.mrb[0].mxu0
      %2545 = vmatprep.mubr.f32.mxu0 0.0
      %2546 = vmatmul.mubr.f32.gmra.mrb[0].mxu0 %v2431
      %v2547 = vpop.f32.mrb[0].mxu0
      %v2548 = vadd.f32 0.0, %v2547
      %v2549 = vpop.f32.mrb[0].mxu0
      %2550 = vmatprep.mubr.f32.mxu0 0.0
      %2551 = vmatmul.mubr.f32.gmra.mrb[0].mxu0 %v2433
      %v2552 = vpop.f32.mrb[0].mxu0
      %v2553 = vadd.f32 0.0, %v2552
      %v2554 = vpop.f32.mrb[0].mxu0
      %2555 = vmatprep.mubr.f32.mxu0 0.0
      %2556 = vmatmul.mubr.f32.gmra.mrb[0].mxu0 %v2435
      %v2557 = vpop.f32.mrb[0].mxu0
      %v2558 = vadd.f32 0.0, %v2557
      %v2559 = vpop.f32.mrb[0].mxu0
      %2560 = vmatprep.mubr.f32.mxu0 0.0
      %2561 = vmatmul.mubr.f32.gmra.mrb[0].mxu0 %v2437
      %v2562 = vpop.f32.mrb[0].mxu0
      %v2563 = vadd.f32 0.0, %v2562
      %v2564 = vpop.f32.mrb[0].mxu0
      %2565 = vmatprep.mubr.f32.mxu0 0.0
      %2566 = vmatmul.mubr.f32.gmra.mrb[0].mxu0 %v2439
      %v2567 = vpop.f32.mrb[0].mxu0
      %v2568 = vadd.f32 0.0, %v2567
      %v2569 = vpop.f32.mrb[0].mxu0
      %2570 = vmatprep.mubr.f32.mxu0 0.0
      %2571 = vmatmul.mubr.f32.gmra.mrb[0].mxu0 %v2441
      %v2572 = vpop.f32.mrb[0].mxu0
      %v2573 = vadd.f32 0.0, %v2572
      %v2574 = vpop.f32.mrb[0].mxu0
      %2575 = vmatprep.mubr.f32.mxu0 0.0
      %2576 = vmatmul.mubr.f32.gmra.mrb[0].mxu0 %v2443
      %v2577 = vpop.f32.mrb[0].mxu0
      %v2578 = vadd.f32 0.0, %v2577
      %v2579 = vpop.f32.mrb[0].mxu0
      %2580 = vmatprep.mubr.f32.mxu0 0.0
      %2581 = vmatmul.mubr.f32.gmra.mrb[0].mxu0 %v2445
      %v2582 = vpop.f32.mrb[0].mxu0
      %v2583 = vadd.f32 0.0, %v2582
      %v2584 = vpop.f32.mrb[0].mxu0
      %2585 = vmatprep.mubr.f32.mxu0 0.0
      %2586 = vmatmul.mubr.f32.gmra.mrb[0].mxu0 %v2447
      %v2587 = vpop.f32.mrb[0].mxu0
      %v2588 = vadd.f32 0.0, %v2587
      %v2589 = vpop.f32.mrb[0].mxu0
      %2590 = vmatprep.mubr.f32.mxu0 0.0
      %2591 = vmatmul.mubr.f32.gmra.mrb[0].mxu0 %v2449
      %v2592 = vpop.f32.mrb[0].mxu0
      %v2593 = vadd.f32 0.0, %v2592
      %v2594 = vpop.f32.mrb[0].mxu0
      %2595 = vdwg.mxu0
      %v2596 = vadd.f32 %v2353, %v2518
      %v2597 = vadd.f32 %v2354, %v2523
      %v2598 = vadd.f32 %v2355, %v2528
      %v2599 = vadd.f32 %v2356, %v2533
      %v2600 = vadd.f32 %v2357, %v2538
      %v2601 = vadd.f32 %v2358, %v2543
      %v2602 = vadd.f32 %v2359, %v2548
      %v2603 = vadd.f32 %v2360, %v2553
      %v2604 = vadd.f32 %v2361, %v2558
      %v2605 = vadd.f32 %v2362, %v2563
      %v2606 = vadd.f32 %v2363, %v2568
      %v2607 = vadd.f32 %v2364, %v2573
      %v2608 = vadd.f32 %v2365, %v2578
      %v2609 = vadd.f32 %v2366, %v2583
      %v2610 = vadd.f32 %v2367, %v2588
      %v2611 = vadd.f32 %v2368, %v2593
      %v2612 = vrot.slane %v411, 2
      %v2613 = vrot.slane %v412, 2
      %v2614 = vsel %vm894, %v2612, %v2613
      %v2615 = vrot.slane %v413, 2
      %v2616 = vsel %vm894, %v2613, %v2615
      %v2617 = vrot.slane %v414, 2
      %v2618 = vrot.slane %v415, 2
      %v2619 = vsel %vm894, %v2617, %v2618
      %v2620 = vrot.slane %v416, 2
      %v2621 = vsel %vm894, %v2618, %v2620
      %v2622 = vrot.slane %v417, 2
      %v2623 = vrot.slane %v418, 2
      %v2624 = vsel %vm894, %v2622, %v2623
      %v2625 = vrot.slane %v419, 2
      %v2626 = vsel %vm894, %v2623, %v2625
      %v2627 = vrot.slane %v420, 2
      %v2628 = vrot.slane %v421, 2
      %v2629 = vsel %vm894, %v2627, %v2628
      %v2630 = vrot.slane %v422, 2
      %v2631 = vsel %vm894, %v2628, %v2630
      %v2632 = vrot.slane %v423, 2
      %v2633 = vrot.slane %v424, 2
      %v2634 = vsel %vm894, %v2632, %v2633
      %v2635 = vrot.slane %v425, 2
      %v2636 = vsel %vm894, %v2633, %v2635
      %v2637 = vrot.slane %v426, 2
      %v2638 = vrot.slane %v427, 2
      %v2639 = vsel %vm894, %v2637, %v2638
      %v2640 = vrot.slane %v428, 2
      %v2641 = vsel %vm894, %v2638, %v2640
      %v2642 = vrot.slane %v429, 2
      %v2643 = vrot.slane %v430, 2
      %v2644 = vsel %vm894, %v2642, %v2643
      %v2645 = vrot.slane %v431, 2
      %v2646 = vsel %vm894, %v2643, %v2645
      %v2647 = vrot.slane %v432, 2
      %v2648 = vrot.slane %v433, 2
      %v2649 = vsel %vm894, %v2647, %v2648
      %v2650 = vrot.slane %v434, 2
      %v2651 = vsel %vm894, %v2648, %v2650
      %s2652 = scalar_lea.vmem %s3, 88
      %v2653 = vld [vmem:[%s2652] sm:$0xff]
      %v2654 = vsel %vm539, %v2614, 0
      %v2656 = vsel %vm539, %v2616, 0
      %v2658 = vsel %vm539, %v2619, 0
      %v2660 = vsel %vm539, %v2621, 0
      %v2662 = vsel %vm539, %v2624, 0
      %v2664 = vsel %vm539, %v2626, 0
      %v2666 = vsel %vm539, %v2629, 0
      %v2668 = vsel %vm539, %v2631, 0
      %v2670 = vsel %vm539, %v2634, 0
      %v2672 = vsel %vm539, %v2636, 0
      %v2674 = vsel %vm539, %v2639, 0
      %v2676 = vsel %vm539, %v2641, 0
      %v2678 = vsel %vm539, %v2644, 0
      %v2680 = vsel %vm539, %v2646, 0
      %v2682 = vsel %vm539, %v2649, 0
      %v2684 = vsel %vm539, %v2651, 0
      %2686 = vmatprep.subr.mxu0 0.0
      %2687 = vmatpush1.msra.mxu0 %v2653
      %2688 = vmatprep.subr.mxu0 0.0
      %2689 = vmatpush1.msra.mxu0 0.0
      %2690 = vmatprep.subr.mxu0 0.0
      %2691 = vmatpush1.msra.mxu0 0.0
      %2692 = vmatprep.subr.mxu0 0.0
      %2693 = vmatpush1.msra.mxu0 0.0
      %2694 = vmatprep.subr.mxu0 0.0
      %2695 = vmatpush1.msra.mxu0 0.0
      %2696 = vmatprep.subr.mxu0 0.0
      %2697 = vmatpush1.msra.mxu0 0.0
      %2698 = vmatprep.subr.mxu0 0.0
      %2699 = vmatpush1.msra.mxu0 0.0
      %2700 = vmatprep.subr.mxu0 0.0
      %2701 = vmatpush1.msra.mxu0 0.0
      %2702 = vmatprep.subr.mxu0 0.0
      %2703 = vmatpush1.msra.mxu0 0.0
      %2704 = vmatprep.subr.mxu0 0.0
      %2705 = vmatpush1.msra.mxu0 0.0
      %2706 = vmatprep.subr.mxu0 0.0
      %2707 = vmatpush1.msra.mxu0 0.0
      %2708 = vmatprep.subr.mxu0 0.0
      %2709 = vmatpush1.msra.mxu0 0.0
      %2710 = vmatprep.subr.mxu0 0.0
      %2711 = vmatpush1.msra.mxu0 0.0
      %2712 = vmatprep.subr.mxu0 0.0
      %2713 = vmatpush1.msra.mxu0 0.0
      %2714 = vmatprep.subr.mxu0 0.0
      %2715 = vmatpush1.msra.mxu0 0.0
      %2716 = vmatprep.subr.mxu0 0.0
      %2717 = vmatpush1.msra.mxu0 0.0
      %2718 = vmatprep.subr.mxu0 0.0
      %2719 = vmatpush1.msra.mxu0 0.0
      %2720 = vmatprep.subr.mxu0 0.0
      %2721 = vmatpush1.msra.mxu0 0.0
      %2722 = vmatprep.subr.mxu0 0.0
      %2723 = vmatpush1.msra.mxu0 0.0
      %2724 = vmatprep.subr.mxu0 0.0
      %2725 = vmatpush1.msra.mxu0 0.0
      %2726 = vmatprep.subr.mxu0 0.0
      %2727 = vmatpush1.msra.mxu0 0.0
      %2728 = vmatprep.subr.mxu0 0.0
      %2729 = vmatpush1.msra.mxu0 0.0
      %2730 = vmatprep.subr.mxu0 0.0
      %2731 = vmatpush1.msra.mxu0 0.0
      %2732 = vmatprep.subr.mxu0 0.0
      %2733 = vmatpush1.msra.mxu0 0.0
      %2734 = vmatprep.subr.mxu0 0.0
      %2735 = vmatpush1.msra.mxu0 0.0
      %2736 = vmatprep.subr.mxu0 0.0
      %2737 = vmatpush1.msra.mxu0 0.0
      %2738 = vmatprep.subr.mxu0 0.0
      %2739 = vmatpush1.msra.mxu0 0.0
      %2740 = vmatprep.subr.mxu0 0.0
      %2741 = vmatpush1.msra.mxu0 0.0
      %2742 = vmatprep.subr.mxu0 0.0
      %2743 = vmatpush1.msra.mxu0 0.0
      %2744 = vmatprep.subr.mxu0 0.0
      %2745 = vmatpush1.msra.mxu0 0.0
      %2746 = vmatprep.subr.mxu0 0.0
      %2747 = vmatpush1.msra.mxu0 0.0
      %2748 = vmatprep.subr.mxu0 0.0
      %2749 = vmatpush1.msra.mxu0 0.0
      %2750 = vmatprep.mubr.f32.mxu0 0.0
      %2751 = vmatmul.mubr.f32.gmra.mrb[0].mxu0 %v2654
      %v2752 = vpop.f32.mrb[0].mxu0
      %v2753 = vadd.f32 0.0, %v2752
      %v2754 = vpop.f32.mrb[0].mxu0
      %2755 = vmatprep.mubr.f32.mxu0 0.0
      %2756 = vmatmul.mubr.f32.gmra.mrb[0].mxu0 %v2656
      %v2757 = vpop.f32.mrb[0].mxu0
      %v2758 = vadd.f32 0.0, %v2757
      %v2759 = vpop.f32.mrb[0].mxu0
      %2760 = vmatprep.mubr.f32.mxu0 0.0
      %2761 = vmatmul.mubr.f32.gmra.mrb[0].mxu0 %v2658
      %v2762 = vpop.f32.mrb[0].mxu0
      %v2763 = vadd.f32 0.0, %v2762
      %v2764 = vpop.f32.mrb[0].mxu0
      %2765 = vmatprep.mubr.f32.mxu0 0.0
      %2766 = vmatmul.mubr.f32.gmra.mrb[0].mxu0 %v2660
      %v2767 = vpop.f32.mrb[0].mxu0
      %v2768 = vadd.f32 0.0, %v2767
      %v2769 = vpop.f32.mrb[0].mxu0
      %2770 = vmatprep.mubr.f32.mxu0 0.0
      %2771 = vmatmul.mubr.f32.gmra.mrb[0].mxu0 %v2662
      %v2772 = vpop.f32.mrb[0].mxu0
      %v2773 = vadd.f32 0.0, %v2772
      %v2774 = vpop.f32.mrb[0].mxu0
      %2775 = vmatprep.mubr.f32.mxu0 0.0
      %2776 = vmatmul.mubr.f32.gmra.mrb[0].mxu0 %v2664
      %v2777 = vpop.f32.mrb[0].mxu0
      %v2778 = vadd.f32 0.0, %v2777
      %v2779 = vpop.f32.mrb[0].mxu0
      %2780 = vmatprep.mubr.f32.mxu0 0.0
      %2781 = vmatmul.mubr.f32.gmra.mrb[0].mxu0 %v2666
      %v2782 = vpop.f32.mrb[0].mxu0
      %v2783 = vadd.f32 0.0, %v2782
      %v2784 = vpop.f32.mrb[0].mxu0
      %2785 = vmatprep.mubr.f32.mxu0 0.0
      %2786 = vmatmul.mubr.f32.gmra.mrb[0].mxu0 %v2668
      %v2787 = vpop.f32.mrb[0].mxu0
      %v2788 = vadd.f32 0.0, %v2787
      %v2789 = vpop.f32.mrb[0].mxu0
      %2790 = vmatprep.mubr.f32.mxu0 0.0
      %2791 = vmatmul.mubr.f32.gmra.mrb[0].mxu0 %v2670
      %v2792 = vpop.f32.mrb[0].mxu0
      %v2793 = vadd.f32 0.0, %v2792
      %v2794 = vpop.f32.mrb[0].mxu0
      %2795 = vmatprep.mubr.f32.mxu0 0.0
      %2796 = vmatmul.mubr.f32.gmra.mrb[0].mxu0 %v2672
      %v2797 = vpop.f32.mrb[0].mxu0
      %v2798 = vadd.f32 0.0, %v2797
      %v2799 = vpop.f32.mrb[0].mxu0
      %2800 = vmatprep.mubr.f32.mxu0 0.0
      %2801 = vmatmul.mubr.f32.gmra.mrb[0].mxu0 %v2674
      %v2802 = vpop.f32.mrb[0].mxu0
      %v2803 = vadd.f32 0.0, %v2802
      %v2804 = vpop.f32.mrb[0].mxu0
      %2805 = vmatprep.mubr.f32.mxu0 0.0
      %2806 = vmatmul.mubr.f32.gmra.mrb[0].mxu0 %v2676
      %v2807 = vpop.f32.mrb[0].mxu0
      %v2808 = vadd.f32 0.0, %v2807
      %v2809 = vpop.f32.mrb[0].mxu0
      %2810 = vmatprep.mubr.f32.mxu0 0.0
      %2811 = vmatmul.mubr.f32.gmra.mrb[0].mxu0 %v2678
      %v2812 = vpop.f32.mrb[0].mxu0
      %v2813 = vadd.f32 0.0, %v2812
      %v2814 = vpop.f32.mrb[0].mxu0
      %2815 = vmatprep.mubr.f32.mxu0 0.0
      %2816 = vmatmul.mubr.f32.gmra.mrb[0].mxu0 %v2680
      %v2817 = vpop.f32.mrb[0].mxu0
      %v2818 = vadd.f32 0.0, %v2817
      %v2819 = vpop.f32.mrb[0].mxu0
      %2820 = vmatprep.mubr.f32.mxu0 0.0
      %2821 = vmatmul.mubr.f32.gmra.mrb[0].mxu0 %v2682
      %v2822 = vpop.f32.mrb[0].mxu0
      %v2823 = vadd.f32 0.0, %v2822
      %v2824 = vpop.f32.mrb[0].mxu0
      %2825 = vmatprep.mubr.f32.mxu0 0.0
      %2826 = vmatmul.mubr.f32.gmra.mrb[0].mxu0 %v2684
      %v2827 = vpop.f32.mrb[0].mxu0
      %v2828 = vadd.f32 0.0, %v2827
      %v2829 = vpop.f32.mrb[0].mxu0
      %2830 = vdwg.mxu0
      %v2831 = vadd.f32 %v2596, %v2753
      %v2832 = vadd.f32 %v2597, %v2758
      %v2833 = vadd.f32 %v2598, %v2763
      %v2834 = vadd.f32 %v2599, %v2768
      %v2835 = vadd.f32 %v2600, %v2773
      %v2836 = vadd.f32 %v2601, %v2778
      %v2837 = vadd.f32 %v2602, %v2783
      %v2838 = vadd.f32 %v2603, %v2788
      %v2839 = vadd.f32 %v2604, %v2793
      %v2840 = vadd.f32 %v2605, %v2798
      %v2841 = vadd.f32 %v2606, %v2803
      %v2842 = vadd.f32 %v2607, %v2808
      %v2843 = vadd.f32 %v2608, %v2813
      %v2844 = vadd.f32 %v2609, %v2818
      %v2845 = vadd.f32 %v2610, %v2823
      %v2846 = vadd.f32 %v2611, %v2828
      %s2847 = scalar_lea.vmem %s3, 96
      %v2848 = vld [vmem:[%s2847] sm:$0xff]
      %v2850 = vsel %vm539, %v435, 0
      %v2853 = vsel %vm539, %v436, 0
      %2855 = vmatprep.subr.mxu0 0.0
      %2856 = vmatpush1.msra.mxu0 %v2848
      %2857 = vmatprep.subr.mxu0 0.0
      %2858 = vmatpush1.msra.mxu0 0.0
      %2859 = vmatprep.subr.mxu0 0.0
      %2860 = vmatpush1.msra.mxu0 0.0
      %2861 = vmatprep.subr.mxu0 0.0
      %2862 = vmatpush1.msra.mxu0 0.0
      %2863 = vmatprep.subr.mxu0 0.0
      %2864 = vmatpush1.msra.mxu0 0.0
      %2865 = vmatprep.subr.mxu0 0.0
      %2866 = vmatpush1.msra.mxu0 0.0
      %2867 = vmatprep.subr.mxu0 0.0
      %2868 = vmatpush1.msra.mxu0 0.0
      %2869 = vmatprep.subr.mxu0 0.0
      %2870 = vmatpush1.msra.mxu0 0.0
      %2871 = vmatprep.subr.mxu0 0.0
      %2872 = vmatpush1.msra.mxu0 0.0
      %2873 = vmatprep.subr.mxu0 0.0
      %2874 = vmatpush1.msra.mxu0 0.0
      %2875 = vmatprep.subr.mxu0 0.0
      %2876 = vmatpush1.msra.mxu0 0.0
      %2877 = vmatprep.subr.mxu0 0.0
      %2878 = vmatpush1.msra.mxu0 0.0
      %2879 = vmatprep.subr.mxu0 0.0
      %2880 = vmatpush1.msra.mxu0 0.0
      %2881 = vmatprep.subr.mxu0 0.0
      %2882 = vmatpush1.msra.mxu0 0.0
      %2883 = vmatprep.subr.mxu0 0.0
      %2884 = vmatpush1.msra.mxu0 0.0
      %2885 = vmatprep.subr.mxu0 0.0
      %2886 = vmatpush1.msra.mxu0 0.0
      %2887 = vmatprep.subr.mxu0 0.0
      %2888 = vmatpush1.msra.mxu0 0.0
      %2889 = vmatprep.subr.mxu0 0.0
      %2890 = vmatpush1.msra.mxu0 0.0
      %2891 = vmatprep.subr.mxu0 0.0
      %2892 = vmatpush1.msra.mxu0 0.0
      %2893 = vmatprep.subr.mxu0 0.0
      %2894 = vmatpush1.msra.mxu0 0.0
      %2895 = vmatprep.subr.mxu0 0.0
      %2896 = vmatpush1.msra.mxu0 0.0
      %2897 = vmatprep.subr.mxu0 0.0
      %2898 = vmatpush1.msra.mxu0 0.0
      %2899 = vmatprep.subr.mxu0 0.0
      %2900 = vmatpush1.msra.mxu0 0.0
      %2901 = vmatprep.subr.mxu0 0.0
      %2902 = vmatpush1.msra.mxu0 0.0
      %2903 = vmatprep.subr.mxu0 0.0
      %2904 = vmatpush1.msra.mxu0 0.0
      %2905 = vmatprep.subr.mxu0 0.0
      %2906 = vmatpush1.msra.mxu0 0.0
      %2907 = vmatprep.subr.mxu0 0.0
      %2908 = vmatpush1.msra.mxu0 0.0
      %2909 = vmatprep.subr.mxu0 0.0
      %2910 = vmatpush1.msra.mxu0 0.0
      %2911 = vmatprep.subr.mxu0 0.0
      %2912 = vmatpush1.msra.mxu0 0.0
      %2913 = vmatprep.subr.mxu0 0.0
      %2914 = vmatpush1.msra.mxu0 0.0
      %2915 = vmatprep.subr.mxu0 0.0
      %2916 = vmatpush1.msra.mxu0 0.0
      %2917 = vmatprep.subr.mxu0 0.0
      %2918 = vmatpush1.msra.mxu0 0.0
      %2919 = vmatprep.mubr.f32.mxu0 0.0
      %2920 = vmatmul.mubr.f32.gmra.mrb[0].mxu0 %v2167
      %v2921 = vpop.f32.mrb[0].mxu0
      %v2922 = vadd.f32 0.0, %v2921
      %v2923 = vpop.f32.mrb[0].mxu0
      %2924 = vmatprep.mubr.f32.mxu0 0.0
      %2925 = vmatmul.mubr.f32.gmra.mrb[0].mxu0 %v2170
      %v2926 = vpop.f32.mrb[0].mxu0
      %v2927 = vadd.f32 0.0, %v2926
      %v2928 = vpop.f32.mrb[0].mxu0
      %2929 = vmatprep.mubr.f32.mxu0 0.0
      %2930 = vmatmul.mubr.f32.gmra.mrb[0].mxu0 %v2173
      %v2931 = vpop.f32.mrb[0].mxu0
      %v2932 = vadd.f32 0.0, %v2931
      %v2933 = vpop.f32.mrb[0].mxu0
      %2934 = vmatprep.mubr.f32.mxu0 0.0
      %2935 = vmatmul.mubr.f32.gmra.mrb[0].mxu0 %v2176
      %v2936 = vpop.f32.mrb[0].mxu0
      %v2937 = vadd.f32 0.0, %v2936
      %v2938 = vpop.f32.mrb[0].mxu0
      %2939 = vmatprep.mubr.f32.mxu0 0.0
      %2940 = vmatmul.mubr.f32.gmra.mrb[0].mxu0 %v2179
      %v2941 = vpop.f32.mrb[0].mxu0
      %v2942 = vadd.f32 0.0, %v2941
      %v2943 = vpop.f32.mrb[0].mxu0
      %2944 = vmatprep.mubr.f32.mxu0 0.0
      %2945 = vmatmul.mubr.f32.gmra.mrb[0].mxu0 %v2182
      %v2946 = vpop.f32.mrb[0].mxu0
      %v2947 = vadd.f32 0.0, %v2946
      %v2948 = vpop.f32.mrb[0].mxu0
      %2949 = vmatprep.mubr.f32.mxu0 0.0
      %2950 = vmatmul.mubr.f32.gmra.mrb[0].mxu0 %v2185
      %v2951 = vpop.f32.mrb[0].mxu0
      %v2952 = vadd.f32 0.0, %v2951
      %v2953 = vpop.f32.mrb[0].mxu0
      %2954 = vmatprep.mubr.f32.mxu0 0.0
      %2955 = vmatmul.mubr.f32.gmra.mrb[0].mxu0 %v2188
      %v2956 = vpop.f32.mrb[0].mxu0
      %v2957 = vadd.f32 0.0, %v2956
      %v2958 = vpop.f32.mrb[0].mxu0
      %2959 = vmatprep.mubr.f32.mxu0 0.0
      %2960 = vmatmul.mubr.f32.gmra.mrb[0].mxu0 %v2191
      %v2961 = vpop.f32.mrb[0].mxu0
      %v2962 = vadd.f32 0.0, %v2961
      %v2963 = vpop.f32.mrb[0].mxu0
      %2964 = vmatprep.mubr.f32.mxu0 0.0
      %2965 = vmatmul.mubr.f32.gmra.mrb[0].mxu0 %v2194
      %v2966 = vpop.f32.mrb[0].mxu0
      %v2967 = vadd.f32 0.0, %v2966
      %v2968 = vpop.f32.mrb[0].mxu0
      %2969 = vmatprep.mubr.f32.mxu0 0.0
      %2970 = vmatmul.mubr.f32.gmra.mrb[0].mxu0 %v2197
      %v2971 = vpop.f32.mrb[0].mxu0
      %v2972 = vadd.f32 0.0, %v2971
      %v2973 = vpop.f32.mrb[0].mxu0
      %2974 = vmatprep.mubr.f32.mxu0 0.0
      %2975 = vmatmul.mubr.f32.gmra.mrb[0].mxu0 %v2200
      %v2976 = vpop.f32.mrb[0].mxu0
      %v2977 = vadd.f32 0.0, %v2976
      %v2978 = vpop.f32.mrb[0].mxu0
      %2979 = vmatprep.mubr.f32.mxu0 0.0
      %2980 = vmatmul.mubr.f32.gmra.mrb[0].mxu0 %v2203
      %v2981 = vpop.f32.mrb[0].mxu0
      %v2982 = vadd.f32 0.0, %v2981
      %v2983 = vpop.f32.mrb[0].mxu0
      %2984 = vmatprep.mubr.f32.mxu0 0.0
      %2985 = vmatmul.mubr.f32.gmra.mrb[0].mxu0 %v2206
      %v2986 = vpop.f32.mrb[0].mxu0
      %v2987 = vadd.f32 0.0, %v2986
      %v2988 = vpop.f32.mrb[0].mxu0
      %2989 = vmatprep.mubr.f32.mxu0 0.0
      %2990 = vmatmul.mubr.f32.gmra.mrb[0].mxu0 %v2850
      %v2991 = vpop.f32.mrb[0].mxu0
      %v2992 = vadd.f32 0.0, %v2991
      %v2993 = vpop.f32.mrb[0].mxu0
      %2994 = vmatprep.mubr.f32.mxu0 0.0
      %2995 = vmatmul.mubr.f32.gmra.mrb[0].mxu0 %v2853
      %v2996 = vpop.f32.mrb[0].mxu0
      %v2997 = vadd.f32 0.0, %v2996
      %v2998 = vpop.f32.mrb[0].mxu0
      %2999 = vdwg.mxu0
      %v3000 = vadd.f32 %v2831, %v2922
      %v3001 = vadd.f32 %v2832, %v2927
      %v3002 = vadd.f32 %v2833, %v2932
      %v3003 = vadd.f32 %v2834, %v2937
      %v3004 = vadd.f32 %v2835, %v2942
      %v3005 = vadd.f32 %v2836, %v2947
      %v3006 = vadd.f32 %v2837, %v2952
      %v3007 = vadd.f32 %v2838, %v2957
      %v3008 = vadd.f32 %v2839, %v2962
      %v3009 = vadd.f32 %v2840, %v2967
      %v3010 = vadd.f32 %v2841, %v2972
      %v3011 = vadd.f32 %v2842, %v2977
      %v3012 = vadd.f32 %v2843, %v2982
      %v3013 = vadd.f32 %v2844, %v2987
      %v3014 = vadd.f32 %v2845, %v2992
      %v3015 = vadd.f32 %v2846, %v2997
      %v3017 = vrot.slane %v435, 1
      %v3018 = vrot.slane %v436, 1
      %v3019 = vsel %vm496, %v3017, %v3018
      %v3020 = vrot.slane %v437, 1
      %v3021 = vsel %vm496, %v3018, %v3020
      %s3022 = scalar_lea.vmem %s3, 104
      %v3023 = vld [vmem:[%s3022] sm:$0xff]
      %v3024 = vsel %vm539, %v3019, 0
      %v3026 = vsel %vm539, %v3021, 0
      %3028 = vmatprep.subr.mxu0 0.0
      %3029 = vmatpush1.msra.mxu0 %v3023
      %3030 = vmatprep.subr.mxu0 0.0
      %3031 = vmatpush1.msra.mxu0 0.0
      %3032 = vmatprep.subr.mxu0 0.0
      %3033 = vmatpush1.msra.mxu0 0.0
      %3034 = vmatprep.subr.mxu0 0.0
      %3035 = vmatpush1.msra.mxu0 0.0
      %3036 = vmatprep.subr.mxu0 0.0
      %3037 = vmatpush1.msra.mxu0 0.0
      %3038 = vmatprep.subr.mxu0 0.0
      %3039 = vmatpush1.msra.mxu0 0.0
      %3040 = vmatprep.subr.mxu0 0.0
      %3041 = vmatpush1.msra.mxu0 0.0
      %3042 = vmatprep.subr.mxu0 0.0
      %3043 = vmatpush1.msra.mxu0 0.0
      %3044 = vmatprep.subr.mxu0 0.0
      %3045 = vmatpush1.msra.mxu0 0.0
      %3046 = vmatprep.subr.mxu0 0.0
      %3047 = vmatpush1.msra.mxu0 0.0
      %3048 = vmatprep.subr.mxu0 0.0
      %3049 = vmatpush1.msra.mxu0 0.0
      %3050 = vmatprep.subr.mxu0 0.0
      %3051 = vmatpush1.msra.mxu0 0.0
      %3052 = vmatprep.subr.mxu0 0.0
      %3053 = vmatpush1.msra.mxu0 0.0
      %3054 = vmatprep.subr.mxu0 0.0
      %3055 = vmatpush1.msra.mxu0 0.0
      %3056 = vmatprep.subr.mxu0 0.0
      %3057 = vmatpush1.msra.mxu0 0.0
      %3058 = vmatprep.subr.mxu0 0.0
      %3059 = vmatpush1.msra.mxu0 0.0
      %3060 = vmatprep.subr.mxu0 0.0
      %3061 = vmatpush1.msra.mxu0 0.0
      %3062 = vmatprep.subr.mxu0 0.0
      %3063 = vmatpush1.msra.mxu0 0.0
      %3064 = vmatprep.subr.mxu0 0.0
      %3065 = vmatpush1.msra.mxu0 0.0
      %3066 = vmatprep.subr.mxu0 0.0
      %3067 = vmatpush1.msra.mxu0 0.0
      %3068 = vmatprep.subr.mxu0 0.0
      %3069 = vmatpush1.msra.mxu0 0.0
      %3070 = vmatprep.subr.mxu0 0.0
      %3071 = vmatpush1.msra.mxu0 0.0
      %3072 = vmatprep.subr.mxu0 0.0
      %3073 = vmatpush1.msra.mxu0 0.0
      %3074 = vmatprep.subr.mxu0 0.0
      %3075 = vmatpush1.msra.mxu0 0.0
      %3076 = vmatprep.subr.mxu0 0.0
      %3077 = vmatpush1.msra.mxu0 0.0
      %3078 = vmatprep.subr.mxu0 0.0
      %3079 = vmatpush1.msra.mxu0 0.0
      %3080 = vmatprep.subr.mxu0 0.0
      %3081 = vmatpush1.msra.mxu0 0.0
      %3082 = vmatprep.subr.mxu0 0.0
      %3083 = vmatpush1.msra.mxu0 0.0
      %3084 = vmatprep.subr.mxu0 0.0
      %3085 = vmatpush1.msra.mxu0 0.0
      %3086 = vmatprep.subr.mxu0 0.0
      %3087 = vmatpush1.msra.mxu0 0.0
      %3088 = vmatprep.subr.mxu0 0.0
      %3089 = vmatpush1.msra.mxu0 0.0
      %3090 = vmatprep.subr.mxu0 0.0
      %3091 = vmatpush1.msra.mxu0 0.0
      %3092 = vmatprep.mubr.f32.mxu0 0.0
      %3093 = vmatmul.mubr.f32.gmra.mrb[0].mxu0 %v2423
      %v3094 = vpop.f32.mrb[0].mxu0
      %v3095 = vadd.f32 0.0, %v3094
      %v3096 = vpop.f32.mrb[0].mxu0
      %3097 = vmatprep.mubr.f32.mxu0 0.0
      %3098 = vmatmul.mubr.f32.gmra.mrb[0].mxu0 %v2425
      %v3099 = vpop.f32.mrb[0].mxu0
      %v3100 = vadd.f32 0.0, %v3099
      %v3101 = vpop.f32.mrb[0].mxu0
      %3102 = vmatprep.mubr.f32.mxu0 0.0
      %3103 = vmatmul.mubr.f32.gmra.mrb[0].mxu0 %v2427
      %v3104 = vpop.f32.mrb[0].mxu0
      %v3105 = vadd.f32 0.0, %v3104
      %v3106 = vpop.f32.mrb[0].mxu0
      %3107 = vmatprep.mubr.f32.mxu0 0.0
      %3108 = vmatmul.mubr.f32.gmra.mrb[0].mxu0 %v2429
      %v3109 = vpop.f32.mrb[0].mxu0
      %v3110 = vadd.f32 0.0, %v3109
      %v3111 = vpop.f32.mrb[0].mxu0
      %3112 = vmatprep.mubr.f32.mxu0 0.0
      %3113 = vmatmul.mubr.f32.gmra.mrb[0].mxu0 %v2431
      %v3114 = vpop.f32.mrb[0].mxu0
      %v3115 = vadd.f32 0.0, %v3114
      %v3116 = vpop.f32.mrb[0].mxu0
      %3117 = vmatprep.mubr.f32.mxu0 0.0
      %3118 = vmatmul.mubr.f32.gmra.mrb[0].mxu0 %v2433
      %v3119 = vpop.f32.mrb[0].mxu0
      %v3120 = vadd.f32 0.0, %v3119
      %v3121 = vpop.f32.mrb[0].mxu0
      %3122 = vmatprep.mubr.f32.mxu0 0.0
      %3123 = vmatmul.mubr.f32.gmra.mrb[0].mxu0 %v2435
      %v3124 = vpop.f32.mrb[0].mxu0
      %v3125 = vadd.f32 0.0, %v3124
      %v3126 = vpop.f32.mrb[0].mxu0
      %3127 = vmatprep.mubr.f32.mxu0 0.0
      %3128 = vmatmul.mubr.f32.gmra.mrb[0].mxu0 %v2437
      %v3129 = vpop.f32.mrb[0].mxu0
      %v3130 = vadd.f32 0.0, %v3129
      %v3131 = vpop.f32.mrb[0].mxu0
      %3132 = vmatprep.mubr.f32.mxu0 0.0
      %3133 = vmatmul.mubr.f32.gmra.mrb[0].mxu0 %v2439
      %v3134 = vpop.f32.mrb[0].mxu0
      %v3135 = vadd.f32 0.0, %v3134
      %v3136 = vpop.f32.mrb[0].mxu0
      %3137 = vmatprep.mubr.f32.mxu0 0.0
      %3138 = vmatmul.mubr.f32.gmra.mrb[0].mxu0 %v2441
      %v3139 = vpop.f32.mrb[0].mxu0
      %v3140 = vadd.f32 0.0, %v3139
      %v3141 = vpop.f32.mrb[0].mxu0
      %3142 = vmatprep.mubr.f32.mxu0 0.0
      %3143 = vmatmul.mubr.f32.gmra.mrb[0].mxu0 %v2443
      %v3144 = vpop.f32.mrb[0].mxu0
      %v3145 = vadd.f32 0.0, %v3144
      %v3146 = vpop.f32.mrb[0].mxu0
      %3147 = vmatprep.mubr.f32.mxu0 0.0
      %3148 = vmatmul.mubr.f32.gmra.mrb[0].mxu0 %v2445
      %v3149 = vpop.f32.mrb[0].mxu0
      %v3150 = vadd.f32 0.0, %v3149
      %v3151 = vpop.f32.mrb[0].mxu0
      %3152 = vmatprep.mubr.f32.mxu0 0.0
      %3153 = vmatmul.mubr.f32.gmra.mrb[0].mxu0 %v2447
      %v3154 = vpop.f32.mrb[0].mxu0
      %v3155 = vadd.f32 0.0, %v3154
      %v3156 = vpop.f32.mrb[0].mxu0
      %3157 = vmatprep.mubr.f32.mxu0 0.0
      %3158 = vmatmul.mubr.f32.gmra.mrb[0].mxu0 %v2449
      %v3159 = vpop.f32.mrb[0].mxu0
      %v3160 = vadd.f32 0.0, %v3159
      %v3161 = vpop.f32.mrb[0].mxu0
      %3162 = vmatprep.mubr.f32.mxu0 0.0
      %3163 = vmatmul.mubr.f32.gmra.mrb[0].mxu0 %v3024
      %v3164 = vpop.f32.mrb[0].mxu0
      %v3165 = vadd.f32 0.0, %v3164
      %v3166 = vpop.f32.mrb[0].mxu0
      %3167 = vmatprep.mubr.f32.mxu0 0.0
      %3168 = vmatmul.mubr.f32.gmra.mrb[0].mxu0 %v3026
      %v3169 = vpop.f32.mrb[0].mxu0
      %v3170 = vadd.f32 0.0, %v3169
      %v3171 = vpop.f32.mrb[0].mxu0
      %3172 = vdwg.mxu0
      %v3173 = vadd.f32 %v3000, %v3095
      %v3174 = vadd.f32 %v3001, %v3100
      %v3175 = vadd.f32 %v3002, %v3105
      %v3176 = vadd.f32 %v3003, %v3110
      %v3177 = vadd.f32 %v3004, %v3115
      %v3178 = vadd.f32 %v3005, %v3120
      %v3179 = vadd.f32 %v3006, %v3125
      %v3180 = vadd.f32 %v3007, %v3130
      %v3181 = vadd.f32 %v3008, %v3135
      %v3182 = vadd.f32 %v3009, %v3140
      %v3183 = vadd.f32 %v3010, %v3145
      %v3184 = vadd.f32 %v3011, %v3150
      %v3185 = vadd.f32 %v3012, %v3155
      %v3186 = vadd.f32 %v3013, %v3160
      %v3187 = vadd.f32 %v3014, %v3165
      %v3188 = vadd.f32 %v3015, %v3170
      %v3189 = vrot.slane %v435, 2
      %v3190 = vrot.slane %v436, 2
      %v3191 = vsel %vm894, %v3189, %v3190
      %v3192 = vrot.slane %v437, 2
      %v3193 = vsel %vm894, %v3190, %v3192
      %s3194 = scalar_lea.vmem %s3, 112
      %v3195 = vld [vmem:[%s3194] sm:$0xff]
      %v3196 = vsel %vm539, %v3191, 0
      %v3198 = vsel %vm539, %v3193, 0
      %3200 = vmatprep.subr.mxu0 0.0
      %3201 = vmatpush1.msra.mxu0 %v3195
      %3202 = vmatprep.subr.mxu0 0.0
      %3203 = vmatpush1.msra.mxu0 0.0
      %3204 = vmatprep.subr.mxu0 0.0
      %3205 = vmatpush1.msra.mxu0 0.0
      %3206 = vmatprep.subr.mxu0 0.0
      %3207 = vmatpush1.msra.mxu0 0.0
      %3208 = vmatprep.subr.mxu0 0.0
      %3209 = vmatpush1.msra.mxu0 0.0
      %3210 = vmatprep.subr.mxu0 0.0
      %3211 = vmatpush1.msra.mxu0 0.0
      %3212 = vmatprep.subr.mxu0 0.0
      %3213 = vmatpush1.msra.mxu0 0.0
      %3214 = vmatprep.subr.mxu0 0.0
      %3215 = vmatpush1.msra.mxu0 0.0
      %3216 = vmatprep.subr.mxu0 0.0
      %3217 = vmatpush1.msra.mxu0 0.0
      %3218 = vmatprep.subr.mxu0 0.0
      %3219 = vmatpush1.msra.mxu0 0.0
      %3220 = vmatprep.subr.mxu0 0.0
      %3221 = vmatpush1.msra.mxu0 0.0
      %3222 = vmatprep.subr.mxu0 0.0
      %3223 = vmatpush1.msra.mxu0 0.0
      %3224 = vmatprep.subr.mxu0 0.0
      %3225 = vmatpush1.msra.mxu0 0.0
      %3226 = vmatprep.subr.mxu0 0.0
      %3227 = vmatpush1.msra.mxu0 0.0
      %3228 = vmatprep.subr.mxu0 0.0
      %3229 = vmatpush1.msra.mxu0 0.0
      %3230 = vmatprep.subr.mxu0 0.0
      %3231 = vmatpush1.msra.mxu0 0.0
      %3232 = vmatprep.subr.mxu0 0.0
      %3233 = vmatpush1.msra.mxu0 0.0
      %3234 = vmatprep.subr.mxu0 0.0
      %3235 = vmatpush1.msra.mxu0 0.0
      %3236 = vmatprep.subr.mxu0 0.0
      %3237 = vmatpush1.msra.mxu0 0.0
      %3238 = vmatprep.subr.mxu0 0.0
      %3239 = vmatpush1.msra.mxu0 0.0
      %3240 = vmatprep.subr.mxu0 0.0
      %3241 = vmatpush1.msra.mxu0 0.0
      %3242 = vmatprep.subr.mxu0 0.0
      %3243 = vmatpush1.msra.mxu0 0.0
      %3244 = vmatprep.subr.mxu0 0.0
      %3245 = vmatpush1.msra.mxu0 0.0
      %3246 = vmatprep.subr.mxu0 0.0
      %3247 = vmatpush1.msra.mxu0 0.0
      %3248 = vmatprep.subr.mxu0 0.0
      %3249 = vmatpush1.msra.mxu0 0.0
      %3250 = vmatprep.subr.mxu0 0.0
      %3251 = vmatpush1.msra.mxu0 0.0
      %3252 = vmatprep.subr.mxu0 0.0
      %3253 = vmatpush1.msra.mxu0 0.0
      %3254 = vmatprep.subr.mxu0 0.0
      %3255 = vmatpush1.msra.mxu0 0.0
      %3256 = vmatprep.subr.mxu0 0.0
      %3257 = vmatpush1.msra.mxu0 0.0
      %3258 = vmatprep.subr.mxu0 0.0
      %3259 = vmatpush1.msra.mxu0 0.0
      %3260 = vmatprep.subr.mxu0 0.0
      %3261 = vmatpush1.msra.mxu0 0.0
      %3262 = vmatprep.subr.mxu0 0.0
      %3263 = vmatpush1.msra.mxu0 0.0
      %3264 = vmatprep.mubr.f32.mxu0 0.0
      %3265 = vmatmul.mubr.f32.gmra.mrb[0].mxu0 %v2658
      %v3266 = vpop.f32.mrb[0].mxu0
      %v3267 = vadd.f32 0.0, %v3266
      %v3268 = vpop.f32.mrb[0].mxu0
      %3269 = vmatprep.mubr.f32.mxu0 0.0
      %3270 = vmatmul.mubr.f32.gmra.mrb[0].mxu0 %v2660
      %v3271 = vpop.f32.mrb[0].mxu0
      %v3272 = vadd.f32 0.0, %v3271
      %v3273 = vpop.f32.mrb[0].mxu0
      %3274 = vmatprep.mubr.f32.mxu0 0.0
      %3275 = vmatmul.mubr.f32.gmra.mrb[0].mxu0 %v2662
      %v3276 = vpop.f32.mrb[0].mxu0
      %v3277 = vadd.f32 0.0, %v3276
      %v3278 = vpop.f32.mrb[0].mxu0
      %3279 = vmatprep.mubr.f32.mxu0 0.0
      %3280 = vmatmul.mubr.f32.gmra.mrb[0].mxu0 %v2664
      %v3281 = vpop.f32.mrb[0].mxu0
      %v3282 = vadd.f32 0.0, %v3281
      %v3283 = vpop.f32.mrb[0].mxu0
      %3284 = vmatprep.mubr.f32.mxu0 0.0
      %3285 = vmatmul.mubr.f32.gmra.mrb[0].mxu0 %v2666
      %v3286 = vpop.f32.mrb[0].mxu0
      %v3287 = vadd.f32 0.0, %v3286
      %v3288 = vpop.f32.mrb[0].mxu0
      %3289 = vmatprep.mubr.f32.mxu0 0.0
      %3290 = vmatmul.mubr.f32.gmra.mrb[0].mxu0 %v2668
      %v3291 = vpop.f32.mrb[0].mxu0
      %v3292 = vadd.f32 0.0, %v3291
      %v3293 = vpop.f32.mrb[0].mxu0
      %3294 = vmatprep.mubr.f32.mxu0 0.0
      %3295 = vmatmul.mubr.f32.gmra.mrb[0].mxu0 %v2670
      %v3296 = vpop.f32.mrb[0].mxu0
      %v3297 = vadd.f32 0.0, %v3296
      %v3298 = vpop.f32.mrb[0].mxu0
      %3299 = vmatprep.mubr.f32.mxu0 0.0
      %3300 = vmatmul.mubr.f32.gmra.mrb[0].mxu0 %v2672
      %v3301 = vpop.f32.mrb[0].mxu0
      %v3302 = vadd.f32 0.0, %v3301
      %v3303 = vpop.f32.mrb[0].mxu0
      %3304 = vmatprep.mubr.f32.mxu0 0.0
      %3305 = vmatmul.mubr.f32.gmra.mrb[0].mxu0 %v2674
      %v3306 = vpop.f32.mrb[0].mxu0
      %v3307 = vadd.f32 0.0, %v3306
      %v3308 = vpop.f32.mrb[0].mxu0
      %3309 = vmatprep.mubr.f32.mxu0 0.0
      %3310 = vmatmul.mubr.f32.gmra.mrb[0].mxu0 %v2676
      %v3311 = vpop.f32.mrb[0].mxu0
      %v3312 = vadd.f32 0.0, %v3311
      %v3313 = vpop.f32.mrb[0].mxu0
      %3314 = vmatprep.mubr.f32.mxu0 0.0
      %3315 = vmatmul.mubr.f32.gmra.mrb[0].mxu0 %v2678
      %v3316 = vpop.f32.mrb[0].mxu0
      %v3317 = vadd.f32 0.0, %v3316
      %v3318 = vpop.f32.mrb[0].mxu0
      %3319 = vmatprep.mubr.f32.mxu0 0.0
      %3320 = vmatmul.mubr.f32.gmra.mrb[0].mxu0 %v2680
      %v3321 = vpop.f32.mrb[0].mxu0
      %v3322 = vadd.f32 0.0, %v3321
      %v3323 = vpop.f32.mrb[0].mxu0
      %3324 = vmatprep.mubr.f32.mxu0 0.0
      %3325 = vmatmul.mubr.f32.gmra.mrb[0].mxu0 %v2682
      %v3326 = vpop.f32.mrb[0].mxu0
      %v3327 = vadd.f32 0.0, %v3326
      %v3328 = vpop.f32.mrb[0].mxu0
      %3329 = vmatprep.mubr.f32.mxu0 0.0
      %3330 = vmatmul.mubr.f32.gmra.mrb[0].mxu0 %v2684
      %v3331 = vpop.f32.mrb[0].mxu0
      %v3332 = vadd.f32 0.0, %v3331
      %v3333 = vpop.f32.mrb[0].mxu0
      %3334 = vmatprep.mubr.f32.mxu0 0.0
      %3335 = vmatmul.mubr.f32.gmra.mrb[0].mxu0 %v3196
      %v3336 = vpop.f32.mrb[0].mxu0
      %v3337 = vadd.f32 0.0, %v3336
      %v3338 = vpop.f32.mrb[0].mxu0
      %3339 = vmatprep.mubr.f32.mxu0 0.0
      %3340 = vmatmul.mubr.f32.gmra.mrb[0].mxu0 %v3198
      %v3341 = vpop.f32.mrb[0].mxu0
      %v3342 = vadd.f32 0.0, %v3341
      %v3343 = vpop.f32.mrb[0].mxu0
      %3344 = vdwg.mxu0
      %v3345 = vadd.f32 %v3173, %v3267
      %v3346 = vadd.f32 %v3174, %v3272
      %v3347 = vadd.f32 %v3175, %v3277
      %v3348 = vadd.f32 %v3176, %v3282
      %v3349 = vadd.f32 %v3177, %v3287
      %v3350 = vadd.f32 %v3178, %v3292
      %v3351 = vadd.f32 %v3179, %v3297
      %v3352 = vadd.f32 %v3180, %v3302
      %v3353 = vadd.f32 %v3181, %v3307
      %v3354 = vadd.f32 %v3182, %v3312
      %v3355 = vadd.f32 %v3183, %v3317
      %v3356 = vadd.f32 %v3184, %v3322
      %v3357 = vadd.f32 %v3185, %v3327
      %v3358 = vadd.f32 %v3186, %v3332
      %v3359 = vadd.f32 %v3187, %v3337
      %v3360 = vadd.f32 %v3188, %v3342
      %s3361 = scalar_lea.vmem %s3, 120
      %v3362 = vld [vmem:[%s3361] sm:$0xff]
      %v3364 = vsel %vm539, %v438, 0
      %v3367 = vsel %vm539, %v439, 0
      %3369 = vmatprep.subr.mxu0 0.0
      %3370 = vmatpush1.msra.mxu0 %v3362
      %3371 = vmatprep.subr.mxu0 0.0
      %3372 = vmatpush1.msra.mxu0 0.0
      %3373 = vmatprep.subr.mxu0 0.0
      %3374 = vmatpush1.msra.mxu0 0.0
      %3375 = vmatprep.subr.mxu0 0.0
      %3376 = vmatpush1.msra.mxu0 0.0
      %3377 = vmatprep.subr.mxu0 0.0
      %3378 = vmatpush1.msra.mxu0 0.0
      %3379 = vmatprep.subr.mxu0 0.0
      %3380 = vmatpush1.msra.mxu0 0.0
      %3381 = vmatprep.subr.mxu0 0.0
      %3382 = vmatpush1.msra.mxu0 0.0
      %3383 = vmatprep.subr.mxu0 0.0
      %3384 = vmatpush1.msra.mxu0 0.0
      %3385 = vmatprep.subr.mxu0 0.0
      %3386 = vmatpush1.msra.mxu0 0.0
      %3387 = vmatprep.subr.mxu0 0.0
      %3388 = vmatpush1.msra.mxu0 0.0
      %3389 = vmatprep.subr.mxu0 0.0
      %3390 = vmatpush1.msra.mxu0 0.0
      %3391 = vmatprep.subr.mxu0 0.0
      %3392 = vmatpush1.msra.mxu0 0.0
      %3393 = vmatprep.subr.mxu0 0.0
      %3394 = vmatpush1.msra.mxu0 0.0
      %3395 = vmatprep.subr.mxu0 0.0
      %3396 = vmatpush1.msra.mxu0 0.0
      %3397 = vmatprep.subr.mxu0 0.0
      %3398 = vmatpush1.msra.mxu0 0.0
      %3399 = vmatprep.subr.mxu0 0.0
      %3400 = vmatpush1.msra.mxu0 0.0
      %3401 = vmatprep.subr.mxu0 0.0
      %3402 = vmatpush1.msra.mxu0 0.0
      %3403 = vmatprep.subr.mxu0 0.0
      %3404 = vmatpush1.msra.mxu0 0.0
      %3405 = vmatprep.subr.mxu0 0.0
      %3406 = vmatpush1.msra.mxu0 0.0
      %3407 = vmatprep.subr.mxu0 0.0
      %3408 = vmatpush1.msra.mxu0 0.0
      %3409 = vmatprep.subr.mxu0 0.0
      %3410 = vmatpush1.msra.mxu0 0.0
      %3411 = vmatprep.subr.mxu0 0.0
      %3412 = vmatpush1.msra.mxu0 0.0
      %3413 = vmatprep.subr.mxu0 0.0
      %3414 = vmatpush1.msra.mxu0 0.0
      %3415 = vmatprep.subr.mxu0 0.0
      %3416 = vmatpush1.msra.mxu0 0.0
      %3417 = vmatprep.subr.mxu0 0.0
      %3418 = vmatpush1.msra.mxu0 0.0
      %3419 = vmatprep.subr.mxu0 0.0
      %3420 = vmatpush1.msra.mxu0 0.0
      %3421 = vmatprep.subr.mxu0 0.0
      %3422 = vmatpush1.msra.mxu0 0.0
      %3423 = vmatprep.subr.mxu0 0.0
      %3424 = vmatpush1.msra.mxu0 0.0
      %3425 = vmatprep.subr.mxu0 0.0
      %3426 = vmatpush1.msra.mxu0 0.0
      %3427 = vmatprep.subr.mxu0 0.0
      %3428 = vmatpush1.msra.mxu0 0.0
      %3429 = vmatprep.subr.mxu0 0.0
      %3430 = vmatpush1.msra.mxu0 0.0
      %3431 = vmatprep.subr.mxu0 0.0
      %3432 = vmatpush1.msra.mxu0 0.0
      %3433 = vmatprep.mubr.f32.mxu0 0.0
      %3434 = vmatmul.mubr.f32.gmra.mrb[0].mxu0 %v2173
      %v3435 = vpop.f32.mrb[0].mxu0
      %v3436 = vadd.f32 0.0, %v3435
      %v3437 = vpop.f32.mrb[0].mxu0
      %3438 = vmatprep.mubr.f32.mxu0 0.0
      %3439 = vmatmul.mubr.f32.gmra.mrb[0].mxu0 %v2176
      %v3440 = vpop.f32.mrb[0].mxu0
      %v3441 = vadd.f32 0.0, %v3440
      %v3442 = vpop.f32.mrb[0].mxu0
      %3443 = vmatprep.mubr.f32.mxu0 0.0
      %3444 = vmatmul.mubr.f32.gmra.mrb[0].mxu0 %v2179
      %v3445 = vpop.f32.mrb[0].mxu0
      %v3446 = vadd.f32 0.0, %v3445
      %v3447 = vpop.f32.mrb[0].mxu0
      %3448 = vmatprep.mubr.f32.mxu0 0.0
      %3449 = vmatmul.mubr.f32.gmra.mrb[0].mxu0 %v2182
      %v3450 = vpop.f32.mrb[0].mxu0
      %v3451 = vadd.f32 0.0, %v3450
      %v3452 = vpop.f32.mrb[0].mxu0
      %3453 = vmatprep.mubr.f32.mxu0 0.0
      %3454 = vmatmul.mubr.f32.gmra.mrb[0].mxu0 %v2185
      %v3455 = vpop.f32.mrb[0].mxu0
      %v3456 = vadd.f32 0.0, %v3455
      %v3457 = vpop.f32.mrb[0].mxu0
      %3458 = vmatprep.mubr.f32.mxu0 0.0
      %3459 = vmatmul.mubr.f32.gmra.mrb[0].mxu0 %v2188
      %v3460 = vpop.f32.mrb[0].mxu0
      %v3461 = vadd.f32 0.0, %v3460
      %v3462 = vpop.f32.mrb[0].mxu0
      %3463 = vmatprep.mubr.f32.mxu0 0.0
      %3464 = vmatmul.mubr.f32.gmra.mrb[0].mxu0 %v2191
      %v3465 = vpop.f32.mrb[0].mxu0
      %v3466 = vadd.f32 0.0, %v3465
      %v3467 = vpop.f32.mrb[0].mxu0
      %3468 = vmatprep.mubr.f32.mxu0 0.0
      %3469 = vmatmul.mubr.f32.gmra.mrb[0].mxu0 %v2194
      %v3470 = vpop.f32.mrb[0].mxu0
      %v3471 = vadd.f32 0.0, %v3470
      %v3472 = vpop.f32.mrb[0].mxu0
      %3473 = vmatprep.mubr.f32.mxu0 0.0
      %3474 = vmatmul.mubr.f32.gmra.mrb[0].mxu0 %v2197
      %v3475 = vpop.f32.mrb[0].mxu0
      %v3476 = vadd.f32 0.0, %v3475
      %v3477 = vpop.f32.mrb[0].mxu0
      %3478 = vmatprep.mubr.f32.mxu0 0.0
      %3479 = vmatmul.mubr.f32.gmra.mrb[0].mxu0 %v2200
      %v3480 = vpop.f32.mrb[0].mxu0
      %v3481 = vadd.f32 0.0, %v3480
      %v3482 = vpop.f32.mrb[0].mxu0
      %3483 = vmatprep.mubr.f32.mxu0 0.0
      %3484 = vmatmul.mubr.f32.gmra.mrb[0].mxu0 %v2203
      %v3485 = vpop.f32.mrb[0].mxu0
      %v3486 = vadd.f32 0.0, %v3485
      %v3487 = vpop.f32.mrb[0].mxu0
      %3488 = vmatprep.mubr.f32.mxu0 0.0
      %3489 = vmatmul.mubr.f32.gmra.mrb[0].mxu0 %v2206
      %v3490 = vpop.f32.mrb[0].mxu0
      %v3491 = vadd.f32 0.0, %v3490
      %v3492 = vpop.f32.mrb[0].mxu0
      %3493 = vmatprep.mubr.f32.mxu0 0.0
      %3494 = vmatmul.mubr.f32.gmra.mrb[0].mxu0 %v2850
      %v3495 = vpop.f32.mrb[0].mxu0
      %v3496 = vadd.f32 0.0, %v3495
      %v3497 = vpop.f32.mrb[0].mxu0
      %3498 = vmatprep.mubr.f32.mxu0 0.0
      %3499 = vmatmul.mubr.f32.gmra.mrb[0].mxu0 %v2853
      %v3500 = vpop.f32.mrb[0].mxu0
      %v3501 = vadd.f32 0.0, %v3500
      %v3502 = vpop.f32.mrb[0].mxu0
      %3503 = vmatprep.mubr.f32.mxu0 0.0
      %3504 = vmatmul.mubr.f32.gmra.mrb[0].mxu0 %v3364
      %v3505 = vpop.f32.mrb[0].mxu0
      %v3506 = vadd.f32 0.0, %v3505
      %v3507 = vpop.f32.mrb[0].mxu0
      %3508 = vmatprep.mubr.f32.mxu0 0.0
      %3509 = vmatmul.mubr.f32.gmra.mrb[0].mxu0 %v3367
      %v3510 = vpop.f32.mrb[0].mxu0
      %v3511 = vadd.f32 0.0, %v3510
      %v3512 = vpop.f32.mrb[0].mxu0
      %3513 = vdwg.mxu0
      %v3514 = vadd.f32 %v3345, %v3436
      %v3515 = vadd.f32 %v3346, %v3441
      %v3516 = vadd.f32 %v3347, %v3446
      %v3517 = vadd.f32 %v3348, %v3451
      %v3518 = vadd.f32 %v3349, %v3456
      %v3519 = vadd.f32 %v3350, %v3461
      %v3520 = vadd.f32 %v3351, %v3466
      %v3521 = vadd.f32 %v3352, %v3471
      %v3522 = vadd.f32 %v3353, %v3476
      %v3523 = vadd.f32 %v3354, %v3481
      %v3524 = vadd.f32 %v3355, %v3486
      %v3525 = vadd.f32 %v3356, %v3491
      %v3526 = vadd.f32 %v3357, %v3496
      %v3527 = vadd.f32 %v3358, %v3501
      %v3528 = vadd.f32 %v3359, %v3506
      %v3529 = vadd.f32 %v3360, %v3511
      %v3531 = vrot.slane %v438, 1
      %v3532 = vrot.slane %v439, 1
      %v3533 = vsel %vm496, %v3531, %v3532
      %v3534 = vrot.slane %v440, 1
      %v3535 = vsel %vm496, %v3532, %v3534
      %s3536 = scalar_lea.vmem %s3, 128
      %v3537 = vld [vmem:[%s3536] sm:$0xff]
      %v3538 = vsel %vm539, %v3533, 0
      %v3540 = vsel %vm539, %v3535, 0
      %3542 = vmatprep.subr.mxu0 0.0
      %3543 = vmatpush1.msra.mxu0 %v3537
      %3544 = vmatprep.subr.mxu0 0.0
      %3545 = vmatpush1.msra.mxu0 0.0
      %3546 = vmatprep.subr.mxu0 0.0
      %3547 = vmatpush1.msra.mxu0 0.0
      %3548 = vmatprep.subr.mxu0 0.0
      %3549 = vmatpush1.msra.mxu0 0.0
      %3550 = vmatprep.subr.mxu0 0.0
      %3551 = vmatpush1.msra.mxu0 0.0
      %3552 = vmatprep.subr.mxu0 0.0
      %3553 = vmatpush1.msra.mxu0 0.0
      %3554 = vmatprep.subr.mxu0 0.0
      %3555 = vmatpush1.msra.mxu0 0.0
      %3556 = vmatprep.subr.mxu0 0.0
      %3557 = vmatpush1.msra.mxu0 0.0
      %3558 = vmatprep.subr.mxu0 0.0
      %3559 = vmatpush1.msra.mxu0 0.0
      %3560 = vmatprep.subr.mxu0 0.0
      %3561 = vmatpush1.msra.mxu0 0.0
      %3562 = vmatprep.subr.mxu0 0.0
      %3563 = vmatpush1.msra.mxu0 0.0
      %3564 = vmatprep.subr.mxu0 0.0
      %3565 = vmatpush1.msra.mxu0 0.0
      %3566 = vmatprep.subr.mxu0 0.0
      %3567 = vmatpush1.msra.mxu0 0.0
      %3568 = vmatprep.subr.mxu0 0.0
      %3569 = vmatpush1.msra.mxu0 0.0
      %3570 = vmatprep.subr.mxu0 0.0
      %3571 = vmatpush1.msra.mxu0 0.0
      %3572 = vmatprep.subr.mxu0 0.0
      %3573 = vmatpush1.msra.mxu0 0.0
      %3574 = vmatprep.subr.mxu0 0.0
      %3575 = vmatpush1.msra.mxu0 0.0
      %3576 = vmatprep.subr.mxu0 0.0
      %3577 = vmatpush1.msra.mxu0 0.0
      %3578 = vmatprep.subr.mxu0 0.0
      %3579 = vmatpush1.msra.mxu0 0.0
      %3580 = vmatprep.subr.mxu0 0.0
      %3581 = vmatpush1.msra.mxu0 0.0
      %3582 = vmatprep.subr.mxu0 0.0
      %3583 = vmatpush1.msra.mxu0 0.0
      %3584 = vmatprep.subr.mxu0 0.0
      %3585 = vmatpush1.msra.mxu0 0.0
      %3586 = vmatprep.subr.mxu0 0.0
      %3587 = vmatpush1.msra.mxu0 0.0
      %3588 = vmatprep.subr.mxu0 0.0
      %3589 = vmatpush1.msra.mxu0 0.0
      %3590 = vmatprep.subr.mxu0 0.0
      %3591 = vmatpush1.msra.mxu0 0.0
      %3592 = vmatprep.subr.mxu0 0.0
      %3593 = vmatpush1.msra.mxu0 0.0
      %3594 = vmatprep.subr.mxu0 0.0
      %3595 = vmatpush1.msra.mxu0 0.0
      %3596 = vmatprep.subr.mxu0 0.0
      %3597 = vmatpush1.msra.mxu0 0.0
      %3598 = vmatprep.subr.mxu0 0.0
      %3599 = vmatpush1.msra.mxu0 0.0
      %3600 = vmatprep.subr.mxu0 0.0
      %3601 = vmatpush1.msra.mxu0 0.0
      %3602 = vmatprep.subr.mxu0 0.0
      %3603 = vmatpush1.msra.mxu0 0.0
      %3604 = vmatprep.subr.mxu0 0.0
      %3605 = vmatpush1.msra.mxu0 0.0
      %3606 = vmatprep.mubr.f32.mxu0 0.0
      %3607 = vmatmul.mubr.f32.gmra.mrb[0].mxu0 %v2427
      %v3608 = vpop.f32.mrb[0].mxu0
      %v3609 = vadd.f32 0.0, %v3608
      %v3610 = vpop.f32.mrb[0].mxu0
      %3611 = vmatprep.mubr.f32.mxu0 0.0
      %3612 = vmatmul.mubr.f32.gmra.mrb[0].mxu0 %v2429
      %v3613 = vpop.f32.mrb[0].mxu0
      %v3614 = vadd.f32 0.0, %v3613
      %v3615 = vpop.f32.mrb[0].mxu0
      %3616 = vmatprep.mubr.f32.mxu0 0.0
      %3617 = vmatmul.mubr.f32.gmra.mrb[0].mxu0 %v2431
      %v3618 = vpop.f32.mrb[0].mxu0
      %v3619 = vadd.f32 0.0, %v3618
      %v3620 = vpop.f32.mrb[0].mxu0
      %3621 = vmatprep.mubr.f32.mxu0 0.0
      %3622 = vmatmul.mubr.f32.gmra.mrb[0].mxu0 %v2433
      %v3623 = vpop.f32.mrb[0].mxu0
      %v3624 = vadd.f32 0.0, %v3623
      %v3625 = vpop.f32.mrb[0].mxu0
      %3626 = vmatprep.mubr.f32.mxu0 0.0
      %3627 = vmatmul.mubr.f32.gmra.mrb[0].mxu0 %v2435
      %v3628 = vpop.f32.mrb[0].mxu0
      %v3629 = vadd.f32 0.0, %v3628
      %v3630 = vpop.f32.mrb[0].mxu0
      %3631 = vmatprep.mubr.f32.mxu0 0.0
      %3632 = vmatmul.mubr.f32.gmra.mrb[0].mxu0 %v2437
      %v3633 = vpop.f32.mrb[0].mxu0
      %v3634 = vadd.f32 0.0, %v3633
      %v3635 = vpop.f32.mrb[0].mxu0
      %3636 = vmatprep.mubr.f32.mxu0 0.0
      %3637 = vmatmul.mubr.f32.gmra.mrb[0].mxu0 %v2439
      %v3638 = vpop.f32.mrb[0].mxu0
      %v3639 = vadd.f32 0.0, %v3638
      %v3640 = vpop.f32.mrb[0].mxu0
      %3641 = vmatprep.mubr.f32.mxu0 0.0
      %3642 = vmatmul.mubr.f32.gmra.mrb[0].mxu0 %v2441
      %v3643 = vpop.f32.mrb[0].mxu0
      %v3644 = vadd.f32 0.0, %v3643
      %v3645 = vpop.f32.mrb[0].mxu0
      %3646 = vmatprep.mubr.f32.mxu0 0.0
      %3647 = vmatmul.mubr.f32.gmra.mrb[0].mxu0 %v2443
      %v3648 = vpop.f32.mrb[0].mxu0
      %v3649 = vadd.f32 0.0, %v3648
      %v3650 = vpop.f32.mrb[0].mxu0
      %3651 = vmatprep.mubr.f32.mxu0 0.0
      %3652 = vmatmul.mubr.f32.gmra.mrb[0].mxu0 %v2445
      %v3653 = vpop.f32.mrb[0].mxu0
      %v3654 = vadd.f32 0.0, %v3653
      %v3655 = vpop.f32.mrb[0].mxu0
      %3656 = vmatprep.mubr.f32.mxu0 0.0
      %3657 = vmatmul.mubr.f32.gmra.mrb[0].mxu0 %v2447
      %v3658 = vpop.f32.mrb[0].mxu0
      %v3659 = vadd.f32 0.0, %v3658
      %v3660 = vpop.f32.mrb[0].mxu0
      %3661 = vmatprep.mubr.f32.mxu0 0.0
      %3662 = vmatmul.mubr.f32.gmra.mrb[0].mxu0 %v2449
      %v3663 = vpop.f32.mrb[0].mxu0
      %v3664 = vadd.f32 0.0, %v3663
      %v3665 = vpop.f32.mrb[0].mxu0
      %3666 = vmatprep.mubr.f32.mxu0 0.0
      %3667 = vmatmul.mubr.f32.gmra.mrb[0].mxu0 %v3024
      %v3668 = vpop.f32.mrb[0].mxu0
      %v3669 = vadd.f32 0.0, %v3668
      %v3670 = vpop.f32.mrb[0].mxu0
      %3671 = vmatprep.mubr.f32.mxu0 0.0
      %3672 = vmatmul.mubr.f32.gmra.mrb[0].mxu0 %v3026
      %v3673 = vpop.f32.mrb[0].mxu0
      %v3674 = vadd.f32 0.0, %v3673
      %v3675 = vpop.f32.mrb[0].mxu0
      %3676 = vmatprep.mubr.f32.mxu0 0.0
      %3677 = vmatmul.mubr.f32.gmra.mrb[0].mxu0 %v3538
      %v3678 = vpop.f32.mrb[0].mxu0
      %v3679 = vadd.f32 0.0, %v3678
      %v3680 = vpop.f32.mrb[0].mxu0
      %3681 = vmatprep.mubr.f32.mxu0 0.0
      %3682 = vmatmul.mubr.f32.gmra.mrb[0].mxu0 %v3540
      %v3683 = vpop.f32.mrb[0].mxu0
      %v3684 = vadd.f32 0.0, %v3683
      %v3685 = vpop.f32.mrb[0].mxu0
      %3686 = vdwg.mxu0
      %v3687 = vadd.f32 %v3514, %v3609
      %v3688 = vadd.f32 %v3515, %v3614
      %v3689 = vadd.f32 %v3516, %v3619
      %v3690 = vadd.f32 %v3517, %v3624
      %v3691 = vadd.f32 %v3518, %v3629
      %v3692 = vadd.f32 %v3519, %v3634
      %v3693 = vadd.f32 %v3520, %v3639
      %v3694 = vadd.f32 %v3521, %v3644
      %v3695 = vadd.f32 %v3522, %v3649
      %v3696 = vadd.f32 %v3523, %v3654
      %v3697 = vadd.f32 %v3524, %v3659
      %v3698 = vadd.f32 %v3525, %v3664
      %v3699 = vadd.f32 %v3526, %v3669
      %v3700 = vadd.f32 %v3527, %v3674
      %v3701 = vadd.f32 %v3528, %v3679
      %v3702 = vadd.f32 %v3529, %v3684
      %v3703 = vrot.slane %v438, 2
      %v3704 = vrot.slane %v439, 2
      %v3705 = vsel %vm894, %v3703, %v3704
      %v3706 = vrot.slane %v440, 2
      %v3707 = vsel %vm894, %v3704, %v3706
      %s3708 = scalar_lea.vmem %s3, 136
      %v3709 = vld [vmem:[%s3708] sm:$0xff]
      %v3710 = vsel %vm539, %v3705, 0
      %v3712 = vsel %vm539, %v3707, 0
      %3714 = vmatprep.subr.mxu0 0.0
      %3715 = vmatpush1.msra.mxu0 %v3709
      %3716 = vmatprep.subr.mxu0 0.0
      %3717 = vmatpush1.msra.mxu0 0.0
      %3718 = vmatprep.subr.mxu0 0.0
      %3719 = vmatpush1.msra.mxu0 0.0
      %3720 = vmatprep.subr.mxu0 0.0
      %3721 = vmatpush1.msra.mxu0 0.0
      %3722 = vmatprep.subr.mxu0 0.0
      %3723 = vmatpush1.msra.mxu0 0.0
      %3724 = vmatprep.subr.mxu0 0.0
      %3725 = vmatpush1.msra.mxu0 0.0
      %3726 = vmatprep.subr.mxu0 0.0
      %3727 = vmatpush1.msra.mxu0 0.0
      %3728 = vmatprep.subr.mxu0 0.0
      %3729 = vmatpush1.msra.mxu0 0.0
      %3730 = vmatprep.subr.mxu0 0.0
      %3731 = vmatpush1.msra.mxu0 0.0
      %3732 = vmatprep.subr.mxu0 0.0
      %3733 = vmatpush1.msra.mxu0 0.0
      %3734 = vmatprep.subr.mxu0 0.0
      %3735 = vmatpush1.msra.mxu0 0.0
      %3736 = vmatprep.subr.mxu0 0.0
      %3737 = vmatpush1.msra.mxu0 0.0
      %3738 = vmatprep.subr.mxu0 0.0
      %3739 = vmatpush1.msra.mxu0 0.0
      %3740 = vmatprep.subr.mxu0 0.0
      %3741 = vmatpush1.msra.mxu0 0.0
      %3742 = vmatprep.subr.mxu0 0.0
      %3743 = vmatpush1.msra.mxu0 0.0
      %3744 = vmatprep.subr.mxu0 0.0
      %3745 = vmatpush1.msra.mxu0 0.0
      %3746 = vmatprep.subr.mxu0 0.0
      %3747 = vmatpush1.msra.mxu0 0.0
      %3748 = vmatprep.subr.mxu0 0.0
      %3749 = vmatpush1.msra.mxu0 0.0
      %3750 = vmatprep.subr.mxu0 0.0
      %3751 = vmatpush1.msra.mxu0 0.0
      %3752 = vmatprep.subr.mxu0 0.0
      %3753 = vmatpush1.msra.mxu0 0.0
      %3754 = vmatprep.subr.mxu0 0.0
      %3755 = vmatpush1.msra.mxu0 0.0
      %3756 = vmatprep.subr.mxu0 0.0
      %3757 = vmatpush1.msra.mxu0 0.0
      %3758 = vmatprep.subr.mxu0 0.0
      %3759 = vmatpush1.msra.mxu0 0.0
      %3760 = vmatprep.subr.mxu0 0.0
      %3761 = vmatpush1.msra.mxu0 0.0
      %3762 = vmatprep.subr.mxu0 0.0
      %3763 = vmatpush1.msra.mxu0 0.0
      %3764 = vmatprep.subr.mxu0 0.0
      %3765 = vmatpush1.msra.mxu0 0.0
      %3766 = vmatprep.subr.mxu0 0.0
      %3767 = vmatpush1.msra.mxu0 0.0
      %3768 = vmatprep.subr.mxu0 0.0
      %3769 = vmatpush1.msra.mxu0 0.0
      %3770 = vmatprep.subr.mxu0 0.0
      %3771 = vmatpush1.msra.mxu0 0.0
      %3772 = vmatprep.subr.mxu0 0.0
      %3773 = vmatpush1.msra.mxu0 0.0
      %3774 = vmatprep.subr.mxu0 0.0
      %3775 = vmatpush1.msra.mxu0 0.0
      %3776 = vmatprep.subr.mxu0 0.0
      %3777 = vmatpush1.msra.mxu0 0.0
      %3778 = vmatprep.mubr.f32.mxu0 0.0
      %3779 = vmatmul.mubr.f32.gmra.mrb[0].mxu0 %v2662
      %v3780 = vpop.f32.mrb[0].mxu0
      %v3781 = vadd.f32 0.0, %v3780
      %v3782 = vpop.f32.mrb[0].mxu0
      %3783 = vmatprep.mubr.f32.mxu0 0.0
      %3784 = vmatmul.mubr.f32.gmra.mrb[0].mxu0 %v2664
      %v3785 = vpop.f32.mrb[0].mxu0
      %v3786 = vadd.f32 0.0, %v3785
      %v3787 = vpop.f32.mrb[0].mxu0
      %3788 = vmatprep.mubr.f32.mxu0 0.0
      %3789 = vmatmul.mubr.f32.gmra.mrb[0].mxu0 %v2666
      %v3790 = vpop.f32.mrb[0].mxu0
      %v3791 = vadd.f32 0.0, %v3790
      %v3792 = vpop.f32.mrb[0].mxu0
      %3793 = vmatprep.mubr.f32.mxu0 0.0
      %3794 = vmatmul.mubr.f32.gmra.mrb[0].mxu0 %v2668
      %v3795 = vpop.f32.mrb[0].mxu0
      %v3796 = vadd.f32 0.0, %v3795
      %v3797 = vpop.f32.mrb[0].mxu0
      %3798 = vmatprep.mubr.f32.mxu0 0.0
      %3799 = vmatmul.mubr.f32.gmra.mrb[0].mxu0 %v2670
      %v3800 = vpop.f32.mrb[0].mxu0
      %v3801 = vadd.f32 0.0, %v3800
      %v3802 = vpop.f32.mrb[0].mxu0
      %3803 = vmatprep.mubr.f32.mxu0 0.0
      %3804 = vmatmul.mubr.f32.gmra.mrb[0].mxu0 %v2672
      %v3805 = vpop.f32.mrb[0].mxu0
      %v3806 = vadd.f32 0.0, %v3805
      %v3807 = vpop.f32.mrb[0].mxu0
      %3808 = vmatprep.mubr.f32.mxu0 0.0
      %3809 = vmatmul.mubr.f32.gmra.mrb[0].mxu0 %v2674
      %v3810 = vpop.f32.mrb[0].mxu0
      %v3811 = vadd.f32 0.0, %v3810
      %v3812 = vpop.f32.mrb[0].mxu0
      %3813 = vmatprep.mubr.f32.mxu0 0.0
      %3814 = vmatmul.mubr.f32.gmra.mrb[0].mxu0 %v2676
      %v3815 = vpop.f32.mrb[0].mxu0
      %v3816 = vadd.f32 0.0, %v3815
      %v3817 = vpop.f32.mrb[0].mxu0
      %3818 = vmatprep.mubr.f32.mxu0 0.0
      %3819 = vmatmul.mubr.f32.gmra.mrb[0].mxu0 %v2678
      %v3820 = vpop.f32.mrb[0].mxu0
      %v3821 = vadd.f32 0.0, %v3820
      %v3822 = vpop.f32.mrb[0].mxu0
      %3823 = vmatprep.mubr.f32.mxu0 0.0
      %3824 = vmatmul.mubr.f32.gmra.mrb[0].mxu0 %v2680
      %v3825 = vpop.f32.mrb[0].mxu0
      %v3826 = vadd.f32 0.0, %v3825
      %v3827 = vpop.f32.mrb[0].mxu0
      %3828 = vmatprep.mubr.f32.mxu0 0.0
      %3829 = vmatmul.mubr.f32.gmra.mrb[0].mxu0 %v2682
      %v3830 = vpop.f32.mrb[0].mxu0
      %v3831 = vadd.f32 0.0, %v3830
      %v3832 = vpop.f32.mrb[0].mxu0
      %3833 = vmatprep.mubr.f32.mxu0 0.0
      %3834 = vmatmul.mubr.f32.gmra.mrb[0].mxu0 %v2684
      %v3835 = vpop.f32.mrb[0].mxu0
      %v3836 = vadd.f32 0.0, %v3835
      %v3837 = vpop.f32.mrb[0].mxu0
      %3838 = vmatprep.mubr.f32.mxu0 0.0
      %3839 = vmatmul.mubr.f32.gmra.mrb[0].mxu0 %v3196
      %v3840 = vpop.f32.mrb[0].mxu0
      %v3841 = vadd.f32 0.0, %v3840
      %v3842 = vpop.f32.mrb[0].mxu0
      %3843 = vmatprep.mubr.f32.mxu0 0.0
      %3844 = vmatmul.mubr.f32.gmra.mrb[0].mxu0 %v3198
      %v3845 = vpop.f32.mrb[0].mxu0
      %v3846 = vadd.f32 0.0, %v3845
      %v3847 = vpop.f32.mrb[0].mxu0
      %3848 = vmatprep.mubr.f32.mxu0 0.0
      %3849 = vmatmul.mubr.f32.gmra.mrb[0].mxu0 %v3710
      %v3850 = vpop.f32.mrb[0].mxu0
      %v3851 = vadd.f32 0.0, %v3850
      %v3852 = vpop.f32.mrb[0].mxu0
      %3853 = vmatprep.mubr.f32.mxu0 0.0
      %3854 = vmatmul.mubr.f32.gmra.mrb[0].mxu0 %v3712
      %v3855 = vpop.f32.mrb[0].mxu0
      %v3856 = vadd.f32 0.0, %v3855
      %v3857 = vpop.f32.mrb[0].mxu0
      %3858 = vdwg.mxu0
      %v3859 = vadd.f32 %v3687, %v3781
      %v3860 = vadd.f32 %v3688, %v3786
      %v3861 = vadd.f32 %v3689, %v3791
      %v3862 = vadd.f32 %v3690, %v3796
      %v3863 = vadd.f32 %v3691, %v3801
      %v3864 = vadd.f32 %v3692, %v3806
      %v3865 = vadd.f32 %v3693, %v3811
      %v3866 = vadd.f32 %v3694, %v3816
      %v3867 = vadd.f32 %v3695, %v3821
      %v3868 = vadd.f32 %v3696, %v3826
      %v3869 = vadd.f32 %v3697, %v3831
      %v3870 = vadd.f32 %v3698, %v3836
      %v3871 = vadd.f32 %v3699, %v3841
      %v3872 = vadd.f32 %v3700, %v3846
      %v3873 = vadd.f32 %v3701, %v3851
      %v3874 = vadd.f32 %v3702, %v3856
      %s3875 = scalar_lea.vmem %s3, 144
      %v3876 = vld [vmem:[%s3875] sm:$0xff]
      %v3878 = vsel %vm539, %v441, 0
      %v3881 = vsel %vm539, %v442, 0
      %v3884 = vsel %vm539, %v444, 0
      %v3887 = vsel %vm539, %v445, 0
      %v3890 = vsel %vm539, %v447, 0
      %v3893 = vsel %vm539, %v448, 0
      %v3896 = vsel %vm539, %v450, 0
      %v3899 = vsel %vm539, %v451, 0
      %v3902 = vsel %vm539, %v453, 0
      %v3905 = vsel %vm539, %v454, 0
      %v3908 = vsel %vm539, %v456, 0
      %v3911 = vsel %vm539, %v457, 0
      %v3914 = vsel %vm539, %v459, 0
      %v3917 = vsel %vm539, %v460, 0
      %v3920 = vsel %vm539, %v462, 0
      %v3923 = vsel %vm539, %v463, 0
      %3925 = vmatprep.subr.mxu0 0.0
      %3926 = vmatpush1.msra.mxu0 %v3876
      %3927 = vmatprep.subr.mxu0 0.0
      %3928 = vmatpush1.msra.mxu0 0.0
      %3929 = vmatprep.subr.mxu0 0.0
      %3930 = vmatpush1.msra.mxu0 0.0
      %3931 = vmatprep.subr.mxu0 0.0
      %3932 = vmatpush1.msra.mxu0 0.0
      %3933 = vmatprep.subr.mxu0 0.0
      %3934 = vmatpush1.msra.mxu0 0.0
      %3935 = vmatprep.subr.mxu0 0.0
      %3936 = vmatpush1.msra.mxu0 0.0
      %3937 = vmatprep.subr.mxu0 0.0
      %3938 = vmatpush1.msra.mxu0 0.0
      %3939 = vmatprep.subr.mxu0 0.0
      %3940 = vmatpush1.msra.mxu0 0.0
      %3941 = vmatprep.subr.mxu0 0.0
      %3942 = vmatpush1.msra.mxu0 0.0
      %3943 = vmatprep.subr.mxu0 0.0
      %3944 = vmatpush1.msra.mxu0 0.0
      %3945 = vmatprep.subr.mxu0 0.0
      %3946 = vmatpush1.msra.mxu0 0.0
      %3947 = vmatprep.subr.mxu0 0.0
      %3948 = vmatpush1.msra.mxu0 0.0
      %3949 = vmatprep.subr.mxu0 0.0
      %3950 = vmatpush1.msra.mxu0 0.0
      %3951 = vmatprep.subr.mxu0 0.0
      %3952 = vmatpush1.msra.mxu0 0.0
      %3953 = vmatprep.subr.mxu0 0.0
      %3954 = vmatpush1.msra.mxu0 0.0
      %3955 = vmatprep.subr.mxu0 0.0
      %3956 = vmatpush1.msra.mxu0 0.0
      %3957 = vmatprep.subr.mxu0 0.0
      %3958 = vmatpush1.msra.mxu0 0.0
      %3959 = vmatprep.subr.mxu0 0.0
      %3960 = vmatpush1.msra.mxu0 0.0
      %3961 = vmatprep.subr.mxu0 0.0
      %3962 = vmatpush1.msra.mxu0 0.0
      %3963 = vmatprep.subr.mxu0 0.0
      %3964 = vmatpush1.msra.mxu0 0.0
      %3965 = vmatprep.subr.mxu0 0.0
      %3966 = vmatpush1.msra.mxu0 0.0
      %3967 = vmatprep.subr.mxu0 0.0
      %3968 = vmatpush1.msra.mxu0 0.0
      %3969 = vmatprep.subr.mxu0 0.0
      %3970 = vmatpush1.msra.mxu0 0.0
      %3971 = vmatprep.subr.mxu0 0.0
      %3972 = vmatpush1.msra.mxu0 0.0
      %3973 = vmatprep.subr.mxu0 0.0
      %3974 = vmatpush1.msra.mxu0 0.0
      %3975 = vmatprep.subr.mxu0 0.0
      %3976 = vmatpush1.msra.mxu0 0.0
      %3977 = vmatprep.subr.mxu0 0.0
      %3978 = vmatpush1.msra.mxu0 0.0
      %3979 = vmatprep.subr.mxu0 0.0
      %3980 = vmatpush1.msra.mxu0 0.0
      %3981 = vmatprep.subr.mxu0 0.0
      %3982 = vmatpush1.msra.mxu0 0.0
      %3983 = vmatprep.subr.mxu0 0.0
      %3984 = vmatpush1.msra.mxu0 0.0
      %3985 = vmatprep.subr.mxu0 0.0
      %3986 = vmatpush1.msra.mxu0 0.0
      %3987 = vmatprep.subr.mxu0 0.0
      %3988 = vmatpush1.msra.mxu0 0.0
      %3989 = vmatprep.mubr.f32.mxu0 0.0
      %3990 = vmatmul.mubr.f32.gmra.mrb[0].mxu0 %v3878
      %v3991 = vpop.f32.mrb[0].mxu0
      %v3992 = vadd.f32 0.0, %v3991
      %v3993 = vpop.f32.mrb[0].mxu0
      %3994 = vmatprep.mubr.f32.mxu0 0.0
      %3995 = vmatmul.mubr.f32.gmra.mrb[0].mxu0 %v3881
      %v3996 = vpop.f32.mrb[0].mxu0
      %v3997 = vadd.f32 0.0, %v3996
      %v3998 = vpop.f32.mrb[0].mxu0
      %3999 = vmatprep.mubr.f32.mxu0 0.0
      %4000 = vmatmul.mubr.f32.gmra.mrb[0].mxu0 %v3884
      %v4001 = vpop.f32.mrb[0].mxu0
      %v4002 = vadd.f32 0.0, %v4001
      %v4003 = vpop.f32.mrb[0].mxu0
      %4004 = vmatprep.mubr.f32.mxu0 0.0
      %4005 = vmatmul.mubr.f32.gmra.mrb[0].mxu0 %v3887
      %v4006 = vpop.f32.mrb[0].mxu0
      %v4007 = vadd.f32 0.0, %v4006
      %v4008 = vpop.f32.mrb[0].mxu0
      %4009 = vmatprep.mubr.f32.mxu0 0.0
      %4010 = vmatmul.mubr.f32.gmra.mrb[0].mxu0 %v3890
      %v4011 = vpop.f32.mrb[0].mxu0
      %v4012 = vadd.f32 0.0, %v4011
      %v4013 = vpop.f32.mrb[0].mxu0
      %4014 = vmatprep.mubr.f32.mxu0 0.0
      %4015 = vmatmul.mubr.f32.gmra.mrb[0].mxu0 %v3893
      %v4016 = vpop.f32.mrb[0].mxu0
      %v4017 = vadd.f32 0.0, %v4016
      %v4018 = vpop.f32.mrb[0].mxu0
      %4019 = vmatprep.mubr.f32.mxu0 0.0
      %4020 = vmatmul.mubr.f32.gmra.mrb[0].mxu0 %v3896
      %v4021 = vpop.f32.mrb[0].mxu0
      %v4022 = vadd.f32 0.0, %v4021
      %v4023 = vpop.f32.mrb[0].mxu0
      %4024 = vmatprep.mubr.f32.mxu0 0.0
      %4025 = vmatmul.mubr.f32.gmra.mrb[0].mxu0 %v3899
      %v4026 = vpop.f32.mrb[0].mxu0
      %v4027 = vadd.f32 0.0, %v4026
      %v4028 = vpop.f32.mrb[0].mxu0
      %4029 = vmatprep.mubr.f32.mxu0 0.0
      %4030 = vmatmul.mubr.f32.gmra.mrb[0].mxu0 %v3902
      %v4031 = vpop.f32.mrb[0].mxu0
      %v4032 = vadd.f32 0.0, %v4031
      %v4033 = vpop.f32.mrb[0].mxu0
      %4034 = vmatprep.mubr.f32.mxu0 0.0
      %4035 = vmatmul.mubr.f32.gmra.mrb[0].mxu0 %v3905
      %v4036 = vpop.f32.mrb[0].mxu0
      %v4037 = vadd.f32 0.0, %v4036
      %v4038 = vpop.f32.mrb[0].mxu0
      %4039 = vmatprep.mubr.f32.mxu0 0.0
      %4040 = vmatmul.mubr.f32.gmra.mrb[0].mxu0 %v3908
      %v4041 = vpop.f32.mrb[0].mxu0
      %v4042 = vadd.f32 0.0, %v4041
      %v4043 = vpop.f32.mrb[0].mxu0
      %4044 = vmatprep.mubr.f32.mxu0 0.0
      %4045 = vmatmul.mubr.f32.gmra.mrb[0].mxu0 %v3911
      %v4046 = vpop.f32.mrb[0].mxu0
      %v4047 = vadd.f32 0.0, %v4046
      %v4048 = vpop.f32.mrb[0].mxu0
      %4049 = vmatprep.mubr.f32.mxu0 0.0
      %4050 = vmatmul.mubr.f32.gmra.mrb[0].mxu0 %v3914
      %v4051 = vpop.f32.mrb[0].mxu0
      %v4052 = vadd.f32 0.0, %v4051
      %v4053 = vpop.f32.mrb[0].mxu0
      %4054 = vmatprep.mubr.f32.mxu0 0.0
      %4055 = vmatmul.mubr.f32.gmra.mrb[0].mxu0 %v3917
      %v4056 = vpop.f32.mrb[0].mxu0
      %v4057 = vadd.f32 0.0, %v4056
      %v4058 = vpop.f32.mrb[0].mxu0
      %4059 = vmatprep.mubr.f32.mxu0 0.0
      %4060 = vmatmul.mubr.f32.gmra.mrb[0].mxu0 %v3920
      %v4061 = vpop.f32.mrb[0].mxu0
      %v4062 = vadd.f32 0.0, %v4061
      %v4063 = vpop.f32.mrb[0].mxu0
      %4064 = vmatprep.mubr.f32.mxu0 0.0
      %4065 = vmatmul.mubr.f32.gmra.mrb[0].mxu0 %v3923
      %v4066 = vpop.f32.mrb[0].mxu0
      %v4067 = vadd.f32 0.0, %v4066
      %v4068 = vpop.f32.mrb[0].mxu0
      %4069 = vdwg.mxu0
      %v4070 = vadd.f32 %v3859, %v3992
      %v4071 = vadd.f32 %v3860, %v3997
      %v4072 = vadd.f32 %v3861, %v4002
      %v4073 = vadd.f32 %v3862, %v4007
      %v4074 = vadd.f32 %v3863, %v4012
      %v4075 = vadd.f32 %v3864, %v4017
      %v4076 = vadd.f32 %v3865, %v4022
      %v4077 = vadd.f32 %v3866, %v4027
      %v4078 = vadd.f32 %v3867, %v4032
      %v4079 = vadd.f32 %v3868, %v4037
      %v4080 = vadd.f32 %v3869, %v4042
      %v4081 = vadd.f32 %v3870, %v4047
      %v4082 = vadd.f32 %v3871, %v4052
      %v4083 = vadd.f32 %v3872, %v4057
      %v4084 = vadd.f32 %v3873, %v4062
      %v4085 = vadd.f32 %v3874, %v4067
      %v4094 = vrot.slane %v441, 1
      %v4095 = vrot.slane %v442, 1
      %v4096 = vsel %vm496, %v4094, %v4095
      %v4097 = vrot.slane %v443, 1
      %v4098 = vsel %vm496, %v4095, %v4097
      %v4099 = vrot.slane %v444, 1
      %v4100 = vrot.slane %v445, 1
      %v4101 = vsel %vm496, %v4099, %v4100
      %v4102 = vrot.slane %v446, 1
      %v4103 = vsel %vm496, %v4100, %v4102
      %v4104 = vrot.slane %v447, 1
      %v4105 = vrot.slane %v448, 1
      %v4106 = vsel %vm496, %v4104, %v4105
      %v4107 = vrot.slane %v449, 1
      %v4108 = vsel %vm496, %v4105, %v4107
      %v4109 = vrot.slane %v450, 1
      %v4110 = vrot.slane %v451, 1
      %v4111 = vsel %vm496, %v4109, %v4110
      %v4112 = vrot.slane %v452, 1
      %v4113 = vsel %vm496, %v4110, %v4112
      %v4114 = vrot.slane %v453, 1
      %v4115 = vrot.slane %v454, 1
      %v4116 = vsel %vm496, %v4114, %v4115
      %v4117 = vrot.slane %v455, 1
      %v4118 = vsel %vm496, %v4115, %v4117
      %v4119 = vrot.slane %v456, 1
      %v4120 = vrot.slane %v457, 1
      %v4121 = vsel %vm496, %v4119, %v4120
      %v4122 = vrot.slane %v458, 1
      %v4123 = vsel %vm496, %v4120, %v4122
      %v4124 = vrot.slane %v459, 1
      %v4125 = vrot.slane %v460, 1
      %v4126 = vsel %vm496, %v4124, %v4125
      %v4127 = vrot.slane %v461, 1
      %v4128 = vsel %vm496, %v4125, %v4127
      %v4129 = vrot.slane %v462, 1
      %v4130 = vrot.slane %v463, 1
      %v4131 = vsel %vm496, %v4129, %v4130
      %v4132 = vrot.slane %v464, 1
      %v4133 = vsel %vm496, %v4130, %v4132
      %s4134 = scalar_lea.vmem %s3, 152
      %v4135 = vld [vmem:[%s4134] sm:$0xff]
      %v4136 = vsel %vm539, %v4096, 0
      %v4138 = vsel %vm539, %v4098, 0
      %v4140 = vsel %vm539, %v4101, 0
      %v4142 = vsel %vm539, %v4103, 0
      %v4144 = vsel %vm539, %v4106, 0
      %v4146 = vsel %vm539, %v4108, 0
      %v4148 = vsel %vm539, %v4111, 0
      %v4150 = vsel %vm539, %v4113, 0
      %v4152 = vsel %vm539, %v4116, 0
      %v4154 = vsel %vm539, %v4118, 0
      %v4156 = vsel %vm539, %v4121, 0
      %v4158 = vsel %vm539, %v4123, 0
      %v4160 = vsel %vm539, %v4126, 0
      %v4162 = vsel %vm539, %v4128, 0
      %v4164 = vsel %vm539, %v4131, 0
      %v4166 = vsel %vm539, %v4133, 0
      %4168 = vmatprep.subr.mxu0 0.0
      %4169 = vmatpush1.msra.mxu0 %v4135
      %4170 = vmatprep.subr.mxu0 0.0
      %4171 = vmatpush1.msra.mxu0 0.0
      %4172 = vmatprep.subr.mxu0 0.0
      %4173 = vmatpush1.msra.mxu0 0.0
      %4174 = vmatprep.subr.mxu0 0.0
      %4175 = vmatpush1.msra.mxu0 0.0
      %4176 = vmatprep.subr.mxu0 0.0
      %4177 = vmatpush1.msra.mxu0 0.0
      %4178 = vmatprep.subr.mxu0 0.0
      %4179 = vmatpush1.msra.mxu0 0.0
      %4180 = vmatprep.subr.mxu0 0.0
      %4181 = vmatpush1.msra.mxu0 0.0
      %4182 = vmatprep.subr.mxu0 0.0
      %4183 = vmatpush1.msra.mxu0 0.0
      %4184 = vmatprep.subr.mxu0 0.0
      %4185 = vmatpush1.msra.mxu0 0.0
      %4186 = vmatprep.subr.mxu0 0.0
      %4187 = vmatpush1.msra.mxu0 0.0
      %4188 = vmatprep.subr.mxu0 0.0
      %4189 = vmatpush1.msra.mxu0 0.0
      %4190 = vmatprep.subr.mxu0 0.0
      %4191 = vmatpush1.msra.mxu0 0.0
      %4192 = vmatprep.subr.mxu0 0.0
      %4193 = vmatpush1.msra.mxu0 0.0
      %4194 = vmatprep.subr.mxu0 0.0
      %4195 = vmatpush1.msra.mxu0 0.0
      %4196 = vmatprep.subr.mxu0 0.0
      %4197 = vmatpush1.msra.mxu0 0.0
      %4198 = vmatprep.subr.mxu0 0.0
      %4199 = vmatpush1.msra.mxu0 0.0
      %4200 = vmatprep.subr.mxu0 0.0
      %4201 = vmatpush1.msra.mxu0 0.0
      %4202 = vmatprep.subr.mxu0 0.0
      %4203 = vmatpush1.msra.mxu0 0.0
      %4204 = vmatprep.subr.mxu0 0.0
      %4205 = vmatpush1.msra.mxu0 0.0
      %4206 = vmatprep.subr.mxu0 0.0
      %4207 = vmatpush1.msra.mxu0 0.0
      %4208 = vmatprep.subr.mxu0 0.0
      %4209 = vmatpush1.msra.mxu0 0.0
      %4210 = vmatprep.subr.mxu0 0.0
      %4211 = vmatpush1.msra.mxu0 0.0
      %4212 = vmatprep.subr.mxu0 0.0
      %4213 = vmatpush1.msra.mxu0 0.0
      %4214 = vmatprep.subr.mxu0 0.0
      %4215 = vmatpush1.msra.mxu0 0.0
      %4216 = vmatprep.subr.mxu0 0.0
      %4217 = vmatpush1.msra.mxu0 0.0
      %4218 = vmatprep.subr.mxu0 0.0
      %4219 = vmatpush1.msra.mxu0 0.0
      %4220 = vmatprep.subr.mxu0 0.0
      %4221 = vmatpush1.msra.mxu0 0.0
      %4222 = vmatprep.subr.mxu0 0.0
      %4223 = vmatpush1.msra.mxu0 0.0
      %4224 = vmatprep.subr.mxu0 0.0
      %4225 = vmatpush1.msra.mxu0 0.0
      %4226 = vmatprep.subr.mxu0 0.0
      %4227 = vmatpush1.msra.mxu0 0.0
      %4228 = vmatprep.subr.mxu0 0.0
      %4229 = vmatpush1.msra.mxu0 0.0
      %4230 = vmatprep.subr.mxu0 0.0
      %4231 = vmatpush1.msra.mxu0 0.0
      %4232 = vmatprep.mubr.f32.mxu0 0.0
      %4233 = vmatmul.mubr.f32.gmra.mrb[0].mxu0 %v4136
      %v4234 = vpop.f32.mrb[0].mxu0
      %v4235 = vadd.f32 0.0, %v4234
      %v4236 = vpop.f32.mrb[0].mxu0
      %4237 = vmatprep.mubr.f32.mxu0 0.0
      %4238 = vmatmul.mubr.f32.gmra.mrb[0].mxu0 %v4138
      %v4239 = vpop.f32.mrb[0].mxu0
      %v4240 = vadd.f32 0.0, %v4239
      %v4241 = vpop.f32.mrb[0].mxu0
      %4242 = vmatprep.mubr.f32.mxu0 0.0
      %4243 = vmatmul.mubr.f32.gmra.mrb[0].mxu0 %v4140
      %v4244 = vpop.f32.mrb[0].mxu0
      %v4245 = vadd.f32 0.0, %v4244
      %v4246 = vpop.f32.mrb[0].mxu0
      %4247 = vmatprep.mubr.f32.mxu0 0.0
      %4248 = vmatmul.mubr.f32.gmra.mrb[0].mxu0 %v4142
      %v4249 = vpop.f32.mrb[0].mxu0
      %v4250 = vadd.f32 0.0, %v4249
      %v4251 = vpop.f32.mrb[0].mxu0
      %4252 = vmatprep.mubr.f32.mxu0 0.0
      %4253 = vmatmul.mubr.f32.gmra.mrb[0].mxu0 %v4144
      %v4254 = vpop.f32.mrb[0].mxu0
      %v4255 = vadd.f32 0.0, %v4254
      %v4256 = vpop.f32.mrb[0].mxu0
      %4257 = vmatprep.mubr.f32.mxu0 0.0
      %4258 = vmatmul.mubr.f32.gmra.mrb[0].mxu0 %v4146
      %v4259 = vpop.f32.mrb[0].mxu0
      %v4260 = vadd.f32 0.0, %v4259
      %v4261 = vpop.f32.mrb[0].mxu0
      %4262 = vmatprep.mubr.f32.mxu0 0.0
      %4263 = vmatmul.mubr.f32.gmra.mrb[0].mxu0 %v4148
      %v4264 = vpop.f32.mrb[0].mxu0
      %v4265 = vadd.f32 0.0, %v4264
      %v4266 = vpop.f32.mrb[0].mxu0
      %4267 = vmatprep.mubr.f32.mxu0 0.0
      %4268 = vmatmul.mubr.f32.gmra.mrb[0].mxu0 %v4150
      %v4269 = vpop.f32.mrb[0].mxu0
      %v4270 = vadd.f32 0.0, %v4269
      %v4271 = vpop.f32.mrb[0].mxu0
      %4272 = vmatprep.mubr.f32.mxu0 0.0
      %4273 = vmatmul.mubr.f32.gmra.mrb[0].mxu0 %v4152
      %v4274 = vpop.f32.mrb[0].mxu0
      %v4275 = vadd.f32 0.0, %v4274
      %v4276 = vpop.f32.mrb[0].mxu0
      %4277 = vmatprep.mubr.f32.mxu0 0.0
      %4278 = vmatmul.mubr.f32.gmra.mrb[0].mxu0 %v4154
      %v4279 = vpop.f32.mrb[0].mxu0
      %v4280 = vadd.f32 0.0, %v4279
      %v4281 = vpop.f32.mrb[0].mxu0
      %4282 = vmatprep.mubr.f32.mxu0 0.0
      %4283 = vmatmul.mubr.f32.gmra.mrb[0].mxu0 %v4156
      %v4284 = vpop.f32.mrb[0].mxu0
      %v4285 = vadd.f32 0.0, %v4284
      %v4286 = vpop.f32.mrb[0].mxu0
      %4287 = vmatprep.mubr.f32.mxu0 0.0
      %4288 = vmatmul.mubr.f32.gmra.mrb[0].mxu0 %v4158
      %v4289 = vpop.f32.mrb[0].mxu0
      %v4290 = vadd.f32 0.0, %v4289
      %v4291 = vpop.f32.mrb[0].mxu0
      %4292 = vmatprep.mubr.f32.mxu0 0.0
      %4293 = vmatmul.mubr.f32.gmra.mrb[0].mxu0 %v4160
      %v4294 = vpop.f32.mrb[0].mxu0
      %v4295 = vadd.f32 0.0, %v4294
      %v4296 = vpop.f32.mrb[0].mxu0
      %4297 = vmatprep.mubr.f32.mxu0 0.0
      %4298 = vmatmul.mubr.f32.gmra.mrb[0].mxu0 %v4162
      %v4299 = vpop.f32.mrb[0].mxu0
      %v4300 = vadd.f32 0.0, %v4299
      %v4301 = vpop.f32.mrb[0].mxu0
      %4302 = vmatprep.mubr.f32.mxu0 0.0
      %4303 = vmatmul.mubr.f32.gmra.mrb[0].mxu0 %v4164
      %v4304 = vpop.f32.mrb[0].mxu0
      %v4305 = vadd.f32 0.0, %v4304
      %v4306 = vpop.f32.mrb[0].mxu0
      %4307 = vmatprep.mubr.f32.mxu0 0.0
      %4308 = vmatmul.mubr.f32.gmra.mrb[0].mxu0 %v4166
      %v4309 = vpop.f32.mrb[0].mxu0
      %v4310 = vadd.f32 0.0, %v4309
      %v4311 = vpop.f32.mrb[0].mxu0
      %4312 = vdwg.mxu0
      %v4313 = vadd.f32 %v4070, %v4235
      %v4314 = vadd.f32 %v4071, %v4240
      %v4315 = vadd.f32 %v4072, %v4245
      %v4316 = vadd.f32 %v4073, %v4250
      %v4317 = vadd.f32 %v4074, %v4255
      %v4318 = vadd.f32 %v4075, %v4260
      %v4319 = vadd.f32 %v4076, %v4265
      %v4320 = vadd.f32 %v4077, %v4270
      %v4321 = vadd.f32 %v4078, %v4275
      %v4322 = vadd.f32 %v4079, %v4280
      %v4323 = vadd.f32 %v4080, %v4285
      %v4324 = vadd.f32 %v4081, %v4290
      %v4325 = vadd.f32 %v4082, %v4295
      %v4326 = vadd.f32 %v4083, %v4300
      %v4327 = vadd.f32 %v4084, %v4305
      %v4328 = vadd.f32 %v4085, %v4310
      %v4329 = vrot.slane %v441, 2
      %v4330 = vrot.slane %v442, 2
      %v4331 = vsel %vm894, %v4329, %v4330
      %v4332 = vrot.slane %v443, 2
      %v4333 = vsel %vm894, %v4330, %v4332
      %v4334 = vrot.slane %v444, 2
      %v4335 = vrot.slane %v445, 2
      %v4336 = vsel %vm894, %v4334, %v4335
      %v4337 = vrot.slane %v446, 2
      %v4338 = vsel %vm894, %v4335, %v4337
      %v4339 = vrot.slane %v447, 2
      %v4340 = vrot.slane %v448, 2
      %v4341 = vsel %vm894, %v4339, %v4340
      %v4342 = vrot.slane %v449, 2
      %v4343 = vsel %vm894, %v4340, %v4342
      %v4344 = vrot.slane %v450, 2
      %v4345 = vrot.slane %v451, 2
      %v4346 = vsel %vm894, %v4344, %v4345
      %v4347 = vrot.slane %v452, 2
      %v4348 = vsel %vm894, %v4345, %v4347
      %v4349 = vrot.slane %v453, 2
      %v4350 = vrot.slane %v454, 2
      %v4351 = vsel %vm894, %v4349, %v4350
      %v4352 = vrot.slane %v455, 2
      %v4353 = vsel %vm894, %v4350, %v4352
      %v4354 = vrot.slane %v456, 2
      %v4355 = vrot.slane %v457, 2
      %v4356 = vsel %vm894, %v4354, %v4355
      %v4357 = vrot.slane %v458, 2
      %v4358 = vsel %vm894, %v4355, %v4357
      %v4359 = vrot.slane %v459, 2
      %v4360 = vrot.slane %v460, 2
      %v4361 = vsel %vm894, %v4359, %v4360
      %v4362 = vrot.slane %v461, 2
      %v4363 = vsel %vm894, %v4360, %v4362
      %v4364 = vrot.slane %v462, 2
      %v4365 = vrot.slane %v463, 2
      %v4366 = vsel %vm894, %v4364, %v4365
      %v4367 = vrot.slane %v464, 2
      %v4368 = vsel %vm894, %v4365, %v4367
      %s4369 = scalar_lea.vmem %s3, 160
      %v4370 = vld [vmem:[%s4369] sm:$0xff]
      %v4371 = vsel %vm539, %v4331, 0
      %v4373 = vsel %vm539, %v4333, 0
      %v4375 = vsel %vm539, %v4336, 0
      %v4377 = vsel %vm539, %v4338, 0
      %v4379 = vsel %vm539, %v4341, 0
      %v4381 = vsel %vm539, %v4343, 0
      %v4383 = vsel %vm539, %v4346, 0
      %v4385 = vsel %vm539, %v4348, 0
      %v4387 = vsel %vm539, %v4351, 0
      %v4389 = vsel %vm539, %v4353, 0
      %v4391 = vsel %vm539, %v4356, 0
      %v4393 = vsel %vm539, %v4358, 0
      %v4395 = vsel %vm539, %v4361, 0
      %v4397 = vsel %vm539, %v4363, 0
      %v4399 = vsel %vm539, %v4366, 0
      %v4401 = vsel %vm539, %v4368, 0
      %4403 = vmatprep.subr.mxu0 0.0
      %4404 = vmatpush1.msra.mxu0 %v4370
      %4405 = vmatprep.subr.mxu0 0.0
      %4406 = vmatpush1.msra.mxu0 0.0
      %4407 = vmatprep.subr.mxu0 0.0
      %4408 = vmatpush1.msra.mxu0 0.0
      %4409 = vmatprep.subr.mxu0 0.0
      %4410 = vmatpush1.msra.mxu0 0.0
      %4411 = vmatprep.subr.mxu0 0.0
      %4412 = vmatpush1.msra.mxu0 0.0
      %4413 = vmatprep.subr.mxu0 0.0
      %4414 = vmatpush1.msra.mxu0 0.0
      %4415 = vmatprep.subr.mxu0 0.0
      %4416 = vmatpush1.msra.mxu0 0.0
      %4417 = vmatprep.subr.mxu0 0.0
      %4418 = vmatpush1.msra.mxu0 0.0
      %4419 = vmatprep.subr.mxu0 0.0
      %4420 = vmatpush1.msra.mxu0 0.0
      %4421 = vmatprep.subr.mxu0 0.0
      %4422 = vmatpush1.msra.mxu0 0.0
      %4423 = vmatprep.subr.mxu0 0.0
      %4424 = vmatpush1.msra.mxu0 0.0
      %4425 = vmatprep.subr.mxu0 0.0
      %4426 = vmatpush1.msra.mxu0 0.0
      %4427 = vmatprep.subr.mxu0 0.0
      %4428 = vmatpush1.msra.mxu0 0.0
      %4429 = vmatprep.subr.mxu0 0.0
      %4430 = vmatpush1.msra.mxu0 0.0
      %4431 = vmatprep.subr.mxu0 0.0
      %4432 = vmatpush1.msra.mxu0 0.0
      %4433 = vmatprep.subr.mxu0 0.0
      %4434 = vmatpush1.msra.mxu0 0.0
      %4435 = vmatprep.subr.mxu0 0.0
      %4436 = vmatpush1.msra.mxu0 0.0
      %4437 = vmatprep.subr.mxu0 0.0
      %4438 = vmatpush1.msra.mxu0 0.0
      %4439 = vmatprep.subr.mxu0 0.0
      %4440 = vmatpush1.msra.mxu0 0.0
      %4441 = vmatprep.subr.mxu0 0.0
      %4442 = vmatpush1.msra.mxu0 0.0
      %4443 = vmatprep.subr.mxu0 0.0
      %4444 = vmatpush1.msra.mxu0 0.0
      %4445 = vmatprep.subr.mxu0 0.0
      %4446 = vmatpush1.msra.mxu0 0.0
      %4447 = vmatprep.subr.mxu0 0.0
      %4448 = vmatpush1.msra.mxu0 0.0
      %4449 = vmatprep.subr.mxu0 0.0
      %4450 = vmatpush1.msra.mxu0 0.0
      %4451 = vmatprep.subr.mxu0 0.0
      %4452 = vmatpush1.msra.mxu0 0.0
      %4453 = vmatprep.subr.mxu0 0.0
      %4454 = vmatpush1.msra.mxu0 0.0
      %4455 = vmatprep.subr.mxu0 0.0
      %4456 = vmatpush1.msra.mxu0 0.0
      %4457 = vmatprep.subr.mxu0 0.0
      %4458 = vmatpush1.msra.mxu0 0.0
      %4459 = vmatprep.subr.mxu0 0.0
      %4460 = vmatpush1.msra.mxu0 0.0
      %4461 = vmatprep.subr.mxu0 0.0
      %4462 = vmatpush1.msra.mxu0 0.0
      %4463 = vmatprep.subr.mxu0 0.0
      %4464 = vmatpush1.msra.mxu0 0.0
      %4465 = vmatprep.subr.mxu0 0.0
      %4466 = vmatpush1.msra.mxu0 0.0
      %4467 = vmatprep.mubr.f32.mxu0 0.0
      %4468 = vmatmul.mubr.f32.gmra.mrb[0].mxu0 %v4371
      %v4469 = vpop.f32.mrb[0].mxu0
      %v4470 = vadd.f32 0.0, %v4469
      %v4471 = vpop.f32.mrb[0].mxu0
      %4472 = vmatprep.mubr.f32.mxu0 0.0
      %4473 = vmatmul.mubr.f32.gmra.mrb[0].mxu0 %v4373
      %v4474 = vpop.f32.mrb[0].mxu0
      %v4475 = vadd.f32 0.0, %v4474
      %v4476 = vpop.f32.mrb[0].mxu0
      %4477 = vmatprep.mubr.f32.mxu0 0.0
      %4478 = vmatmul.mubr.f32.gmra.mrb[0].mxu0 %v4375
      %v4479 = vpop.f32.mrb[0].mxu0
      %v4480 = vadd.f32 0.0, %v4479
      %v4481 = vpop.f32.mrb[0].mxu0
      %4482 = vmatprep.mubr.f32.mxu0 0.0
      %4483 = vmatmul.mubr.f32.gmra.mrb[0].mxu0 %v4377
      %v4484 = vpop.f32.mrb[0].mxu0
      %v4485 = vadd.f32 0.0, %v4484
      %v4486 = vpop.f32.mrb[0].mxu0
      %4487 = vmatprep.mubr.f32.mxu0 0.0
      %4488 = vmatmul.mubr.f32.gmra.mrb[0].mxu0 %v4379
      %v4489 = vpop.f32.mrb[0].mxu0
      %v4490 = vadd.f32 0.0, %v4489
      %v4491 = vpop.f32.mrb[0].mxu0
      %4492 = vmatprep.mubr.f32.mxu0 0.0
      %4493 = vmatmul.mubr.f32.gmra.mrb[0].mxu0 %v4381
      %v4494 = vpop.f32.mrb[0].mxu0
      %v4495 = vadd.f32 0.0, %v4494
      %v4496 = vpop.f32.mrb[0].mxu0
      %4497 = vmatprep.mubr.f32.mxu0 0.0
      %4498 = vmatmul.mubr.f32.gmra.mrb[0].mxu0 %v4383
      %v4499 = vpop.f32.mrb[0].mxu0
      %v4500 = vadd.f32 0.0, %v4499
      %v4501 = vpop.f32.mrb[0].mxu0
      %4502 = vmatprep.mubr.f32.mxu0 0.0
      %4503 = vmatmul.mubr.f32.gmra.mrb[0].mxu0 %v4385
      %v4504 = vpop.f32.mrb[0].mxu0
      %v4505 = vadd.f32 0.0, %v4504
      %v4506 = vpop.f32.mrb[0].mxu0
      %4507 = vmatprep.mubr.f32.mxu0 0.0
      %4508 = vmatmul.mubr.f32.gmra.mrb[0].mxu0 %v4387
      %v4509 = vpop.f32.mrb[0].mxu0
      %v4510 = vadd.f32 0.0, %v4509
      %v4511 = vpop.f32.mrb[0].mxu0
      %4512 = vmatprep.mubr.f32.mxu0 0.0
      %4513 = vmatmul.mubr.f32.gmra.mrb[0].mxu0 %v4389
      %v4514 = vpop.f32.mrb[0].mxu0
      %v4515 = vadd.f32 0.0, %v4514
      %v4516 = vpop.f32.mrb[0].mxu0
      %4517 = vmatprep.mubr.f32.mxu0 0.0
      %4518 = vmatmul.mubr.f32.gmra.mrb[0].mxu0 %v4391
      %v4519 = vpop.f32.mrb[0].mxu0
      %v4520 = vadd.f32 0.0, %v4519
      %v4521 = vpop.f32.mrb[0].mxu0
      %4522 = vmatprep.mubr.f32.mxu0 0.0
      %4523 = vmatmul.mubr.f32.gmra.mrb[0].mxu0 %v4393
      %v4524 = vpop.f32.mrb[0].mxu0
      %v4525 = vadd.f32 0.0, %v4524
      %v4526 = vpop.f32.mrb[0].mxu0
      %4527 = vmatprep.mubr.f32.mxu0 0.0
      %4528 = vmatmul.mubr.f32.gmra.mrb[0].mxu0 %v4395
      %v4529 = vpop.f32.mrb[0].mxu0
      %v4530 = vadd.f32 0.0, %v4529
      %v4531 = vpop.f32.mrb[0].mxu0
      %4532 = vmatprep.mubr.f32.mxu0 0.0
      %4533 = vmatmul.mubr.f32.gmra.mrb[0].mxu0 %v4397
      %v4534 = vpop.f32.mrb[0].mxu0
      %v4535 = vadd.f32 0.0, %v4534
      %v4536 = vpop.f32.mrb[0].mxu0
      %4537 = vmatprep.mubr.f32.mxu0 0.0
      %4538 = vmatmul.mubr.f32.gmra.mrb[0].mxu0 %v4399
      %v4539 = vpop.f32.mrb[0].mxu0
      %v4540 = vadd.f32 0.0, %v4539
      %v4541 = vpop.f32.mrb[0].mxu0
      %4542 = vmatprep.mubr.f32.mxu0 0.0
      %4543 = vmatmul.mubr.f32.gmra.mrb[0].mxu0 %v4401
      %v4544 = vpop.f32.mrb[0].mxu0
      %v4545 = vadd.f32 0.0, %v4544
      %v4546 = vpop.f32.mrb[0].mxu0
      %4547 = vdwg.mxu0
      %v4548 = vadd.f32 %v4313, %v4470
      %v4549 = vadd.f32 %v4314, %v4475
      %v4550 = vadd.f32 %v4315, %v4480
      %v4551 = vadd.f32 %v4316, %v4485
      %v4552 = vadd.f32 %v4317, %v4490
      %v4553 = vadd.f32 %v4318, %v4495
      %v4554 = vadd.f32 %v4319, %v4500
      %v4555 = vadd.f32 %v4320, %v4505
      %v4556 = vadd.f32 %v4321, %v4510
      %v4557 = vadd.f32 %v4322, %v4515
      %v4558 = vadd.f32 %v4323, %v4520
      %v4559 = vadd.f32 %v4324, %v4525
      %v4560 = vadd.f32 %v4325, %v4530
      %v4561 = vadd.f32 %v4326, %v4535
      %v4562 = vadd.f32 %v4327, %v4540
      %v4563 = vadd.f32 %v4328, %v4545
      %s4564 = scalar_lea.vmem %s3, 168
      %v4565 = vld [vmem:[%s4564] sm:$0xff]
      %v4567 = vsel %vm539, %v465, 0
      %v4570 = vsel %vm539, %v466, 0
      %4572 = vmatprep.subr.mxu0 0.0
      %4573 = vmatpush1.msra.mxu0 %v4565
      %4574 = vmatprep.subr.mxu0 0.0
      %4575 = vmatpush1.msra.mxu0 0.0
      %4576 = vmatprep.subr.mxu0 0.0
      %4577 = vmatpush1.msra.mxu0 0.0
      %4578 = vmatprep.subr.mxu0 0.0
      %4579 = vmatpush1.msra.mxu0 0.0
      %4580 = vmatprep.subr.mxu0 0.0
      %4581 = vmatpush1.msra.mxu0 0.0
      %4582 = vmatprep.subr.mxu0 0.0
      %4583 = vmatpush1.msra.mxu0 0.0
      %4584 = vmatprep.subr.mxu0 0.0
      %4585 = vmatpush1.msra.mxu0 0.0
      %4586 = vmatprep.subr.mxu0 0.0
      %4587 = vmatpush1.msra.mxu0 0.0
      %4588 = vmatprep.subr.mxu0 0.0
      %4589 = vmatpush1.msra.mxu0 0.0
      %4590 = vmatprep.subr.mxu0 0.0
      %4591 = vmatpush1.msra.mxu0 0.0
      %4592 = vmatprep.subr.mxu0 0.0
      %4593 = vmatpush1.msra.mxu0 0.0
      %4594 = vmatprep.subr.mxu0 0.0
      %4595 = vmatpush1.msra.mxu0 0.0
      %4596 = vmatprep.subr.mxu0 0.0
      %4597 = vmatpush1.msra.mxu0 0.0
      %4598 = vmatprep.subr.mxu0 0.0
      %4599 = vmatpush1.msra.mxu0 0.0
      %4600 = vmatprep.subr.mxu0 0.0
      %4601 = vmatpush1.msra.mxu0 0.0
      %4602 = vmatprep.subr.mxu0 0.0
      %4603 = vmatpush1.msra.mxu0 0.0
      %4604 = vmatprep.subr.mxu0 0.0
      %4605 = vmatpush1.msra.mxu0 0.0
      %4606 = vmatprep.subr.mxu0 0.0
      %4607 = vmatpush1.msra.mxu0 0.0
      %4608 = vmatprep.subr.mxu0 0.0
      %4609 = vmatpush1.msra.mxu0 0.0
      %4610 = vmatprep.subr.mxu0 0.0
      %4611 = vmatpush1.msra.mxu0 0.0
      %4612 = vmatprep.subr.mxu0 0.0
      %4613 = vmatpush1.msra.mxu0 0.0
      %4614 = vmatprep.subr.mxu0 0.0
      %4615 = vmatpush1.msra.mxu0 0.0
      %4616 = vmatprep.subr.mxu0 0.0
      %4617 = vmatpush1.msra.mxu0 0.0
      %4618 = vmatprep.subr.mxu0 0.0
      %4619 = vmatpush1.msra.mxu0 0.0
      %4620 = vmatprep.subr.mxu0 0.0
      %4621 = vmatpush1.msra.mxu0 0.0
      %4622 = vmatprep.subr.mxu0 0.0
      %4623 = vmatpush1.msra.mxu0 0.0
      %4624 = vmatprep.subr.mxu0 0.0
      %4625 = vmatpush1.msra.mxu0 0.0
      %4626 = vmatprep.subr.mxu0 0.0
      %4627 = vmatpush1.msra.mxu0 0.0
      %4628 = vmatprep.subr.mxu0 0.0
      %4629 = vmatpush1.msra.mxu0 0.0
      %4630 = vmatprep.subr.mxu0 0.0
      %4631 = vmatpush1.msra.mxu0 0.0
      %4632 = vmatprep.subr.mxu0 0.0
      %4633 = vmatpush1.msra.mxu0 0.0
      %4634 = vmatprep.subr.mxu0 0.0
      %4635 = vmatpush1.msra.mxu0 0.0
      %4636 = vmatprep.mubr.f32.mxu0 0.0
      %4637 = vmatmul.mubr.f32.gmra.mrb[0].mxu0 %v3884
      %v4638 = vpop.f32.mrb[0].mxu0
      %v4639 = vadd.f32 0.0, %v4638
      %v4640 = vpop.f32.mrb[0].mxu0
      %4641 = vmatprep.mubr.f32.mxu0 0.0
      %4642 = vmatmul.mubr.f32.gmra.mrb[0].mxu0 %v3887
      %v4643 = vpop.f32.mrb[0].mxu0
      %v4644 = vadd.f32 0.0, %v4643
      %v4645 = vpop.f32.mrb[0].mxu0
      %4646 = vmatprep.mubr.f32.mxu0 0.0
      %4647 = vmatmul.mubr.f32.gmra.mrb[0].mxu0 %v3890
      %v4648 = vpop.f32.mrb[0].mxu0
      %v4649 = vadd.f32 0.0, %v4648
      %v4650 = vpop.f32.mrb[0].mxu0
      %4651 = vmatprep.mubr.f32.mxu0 0.0
      %4652 = vmatmul.mubr.f32.gmra.mrb[0].mxu0 %v3893
      %v4653 = vpop.f32.mrb[0].mxu0
      %v4654 = vadd.f32 0.0, %v4653
      %v4655 = vpop.f32.mrb[0].mxu0
      %4656 = vmatprep.mubr.f32.mxu0 0.0
      %4657 = vmatmul.mubr.f32.gmra.mrb[0].mxu0 %v3896
      %v4658 = vpop.f32.mrb[0].mxu0
      %v4659 = vadd.f32 0.0, %v4658
      %v4660 = vpop.f32.mrb[0].mxu0
      %4661 = vmatprep.mubr.f32.mxu0 0.0
      %4662 = vmatmul.mubr.f32.gmra.mrb[0].mxu0 %v3899
      %v4663 = vpop.f32.mrb[0].mxu0
      %v4664 = vadd.f32 0.0, %v4663
      %v4665 = vpop.f32.mrb[0].mxu0
      %4666 = vmatprep.mubr.f32.mxu0 0.0
      %4667 = vmatmul.mubr.f32.gmra.mrb[0].mxu0 %v3902
      %v4668 = vpop.f32.mrb[0].mxu0
      %v4669 = vadd.f32 0.0, %v4668
      %v4670 = vpop.f32.mrb[0].mxu0
      %4671 = vmatprep.mubr.f32.mxu0 0.0
      %4672 = vmatmul.mubr.f32.gmra.mrb[0].mxu0 %v3905
      %v4673 = vpop.f32.mrb[0].mxu0
      %v4674 = vadd.f32 0.0, %v4673
      %v4675 = vpop.f32.mrb[0].mxu0
      %4676 = vmatprep.mubr.f32.mxu0 0.0
      %4677 = vmatmul.mubr.f32.gmra.mrb[0].mxu0 %v3908
      %v4678 = vpop.f32.mrb[0].mxu0
      %v4679 = vadd.f32 0.0, %v4678
      %v4680 = vpop.f32.mrb[0].mxu0
      %4681 = vmatprep.mubr.f32.mxu0 0.0
      %4682 = vmatmul.mubr.f32.gmra.mrb[0].mxu0 %v3911
      %v4683 = vpop.f32.mrb[0].mxu0
      %v4684 = vadd.f32 0.0, %v4683
      %v4685 = vpop.f32.mrb[0].mxu0
      %4686 = vmatprep.mubr.f32.mxu0 0.0
      %4687 = vmatmul.mubr.f32.gmra.mrb[0].mxu0 %v3914
      %v4688 = vpop.f32.mrb[0].mxu0
      %v4689 = vadd.f32 0.0, %v4688
      %v4690 = vpop.f32.mrb[0].mxu0
      %4691 = vmatprep.mubr.f32.mxu0 0.0
      %4692 = vmatmul.mubr.f32.gmra.mrb[0].mxu0 %v3917
      %v4693 = vpop.f32.mrb[0].mxu0
      %v4694 = vadd.f32 0.0, %v4693
      %v4695 = vpop.f32.mrb[0].mxu0
      %4696 = vmatprep.mubr.f32.mxu0 0.0
      %4697 = vmatmul.mubr.f32.gmra.mrb[0].mxu0 %v3920
      %v4698 = vpop.f32.mrb[0].mxu0
      %v4699 = vadd.f32 0.0, %v4698
      %v4700 = vpop.f32.mrb[0].mxu0
      %4701 = vmatprep.mubr.f32.mxu0 0.0
      %4702 = vmatmul.mubr.f32.gmra.mrb[0].mxu0 %v3923
      %v4703 = vpop.f32.mrb[0].mxu0
      %v4704 = vadd.f32 0.0, %v4703
      %v4705 = vpop.f32.mrb[0].mxu0
      %4706 = vmatprep.mubr.f32.mxu0 0.0
      %4707 = vmatmul.mubr.f32.gmra.mrb[0].mxu0 %v4567
      %v4708 = vpop.f32.mrb[0].mxu0
      %v4709 = vadd.f32 0.0, %v4708
      %v4710 = vpop.f32.mrb[0].mxu0
      %4711 = vmatprep.mubr.f32.mxu0 0.0
      %4712 = vmatmul.mubr.f32.gmra.mrb[0].mxu0 %v4570
      %v4713 = vpop.f32.mrb[0].mxu0
      %v4714 = vadd.f32 0.0, %v4713
      %v4715 = vpop.f32.mrb[0].mxu0
      %4716 = vdwg.mxu0
      %v4717 = vadd.f32 %v4548, %v4639
      %v4718 = vadd.f32 %v4549, %v4644
      %v4719 = vadd.f32 %v4550, %v4649
      %v4720 = vadd.f32 %v4551, %v4654
      %v4721 = vadd.f32 %v4552, %v4659
      %v4722 = vadd.f32 %v4553, %v4664
      %v4723 = vadd.f32 %v4554, %v4669
      %v4724 = vadd.f32 %v4555, %v4674
      %v4725 = vadd.f32 %v4556, %v4679
      %v4726 = vadd.f32 %v4557, %v4684
      %v4727 = vadd.f32 %v4558, %v4689
      %v4728 = vadd.f32 %v4559, %v4694
      %v4729 = vadd.f32 %v4560, %v4699
      %v4730 = vadd.f32 %v4561, %v4704
      %v4731 = vadd.f32 %v4562, %v4709
      %v4732 = vadd.f32 %v4563, %v4714
      %v4734 = vrot.slane %v465, 1
      %v4735 = vrot.slane %v466, 1
      %v4736 = vsel %vm496, %v4734, %v4735
      %v4737 = vrot.slane %v467, 1
      %v4738 = vsel %vm496, %v4735, %v4737
      %s4739 = scalar_lea.vmem %s3, 176
      %v4740 = vld [vmem:[%s4739] sm:$0xff]
      %v4741 = vsel %vm539, %v4736, 0
      %v4743 = vsel %vm539, %v4738, 0
      %4745 = vmatprep.subr.mxu0 0.0
      %4746 = vmatpush1.msra.mxu0 %v4740
      %4747 = vmatprep.subr.mxu0 0.0
      %4748 = vmatpush1.msra.mxu0 0.0
      %4749 = vmatprep.subr.mxu0 0.0
      %4750 = vmatpush1.msra.mxu0 0.0
      %4751 = vmatprep.subr.mxu0 0.0
      %4752 = vmatpush1.msra.mxu0 0.0
      %4753 = vmatprep.subr.mxu0 0.0
      %4754 = vmatpush1.msra.mxu0 0.0
      %4755 = vmatprep.subr.mxu0 0.0
      %4756 = vmatpush1.msra.mxu0 0.0
      %4757 = vmatprep.subr.mxu0 0.0
      %4758 = vmatpush1.msra.mxu0 0.0
      %4759 = vmatprep.subr.mxu0 0.0
      %4760 = vmatpush1.msra.mxu0 0.0
      %4761 = vmatprep.subr.mxu0 0.0
      %4762 = vmatpush1.msra.mxu0 0.0
      %4763 = vmatprep.subr.mxu0 0.0
      %4764 = vmatpush1.msra.mxu0 0.0
      %4765 = vmatprep.subr.mxu0 0.0
      %4766 = vmatpush1.msra.mxu0 0.0
      %4767 = vmatprep.subr.mxu0 0.0
      %4768 = vmatpush1.msra.mxu0 0.0
      %4769 = vmatprep.subr.mxu0 0.0
      %4770 = vmatpush1.msra.mxu0 0.0
      %4771 = vmatprep.subr.mxu0 0.0
      %4772 = vmatpush1.msra.mxu0 0.0
      %4773 = vmatprep.subr.mxu0 0.0
      %4774 = vmatpush1.msra.mxu0 0.0
      %4775 = vmatprep.subr.mxu0 0.0
      %4776 = vmatpush1.msra.mxu0 0.0
      %4777 = vmatprep.subr.mxu0 0.0
      %4778 = vmatpush1.msra.mxu0 0.0
      %4779 = vmatprep.subr.mxu0 0.0
      %4780 = vmatpush1.msra.mxu0 0.0
      %4781 = vmatprep.subr.mxu0 0.0
      %4782 = vmatpush1.msra.mxu0 0.0
      %4783 = vmatprep.subr.mxu0 0.0
      %4784 = vmatpush1.msra.mxu0 0.0
      %4785 = vmatprep.subr.mxu0 0.0
      %4786 = vmatpush1.msra.mxu0 0.0
      %4787 = vmatprep.subr.mxu0 0.0
      %4788 = vmatpush1.msra.mxu0 0.0
      %4789 = vmatprep.subr.mxu0 0.0
      %4790 = vmatpush1.msra.mxu0 0.0
      %4791 = vmatprep.subr.mxu0 0.0
      %4792 = vmatpush1.msra.mxu0 0.0
      %4793 = vmatprep.subr.mxu0 0.0
      %4794 = vmatpush1.msra.mxu0 0.0
      %4795 = vmatprep.subr.mxu0 0.0
      %4796 = vmatpush1.msra.mxu0 0.0
      %4797 = vmatprep.subr.mxu0 0.0
      %4798 = vmatpush1.msra.mxu0 0.0
      %4799 = vmatprep.subr.mxu0 0.0
      %4800 = vmatpush1.msra.mxu0 0.0
      %4801 = vmatprep.subr.mxu0 0.0
      %4802 = vmatpush1.msra.mxu0 0.0
      %4803 = vmatprep.subr.mxu0 0.0
      %4804 = vmatpush1.msra.mxu0 0.0
      %4805 = vmatprep.subr.mxu0 0.0
      %4806 = vmatpush1.msra.mxu0 0.0
      %4807 = vmatprep.subr.mxu0 0.0
      %4808 = vmatpush1.msra.mxu0 0.0
      %4809 = vmatprep.mubr.f32.mxu0 0.0
      %4810 = vmatmul.mubr.f32.gmra.mrb[0].mxu0 %v4140
      %v4811 = vpop.f32.mrb[0].mxu0
      %v4812 = vadd.f32 0.0, %v4811
      %v4813 = vpop.f32.mrb[0].mxu0
      %4814 = vmatprep.mubr.f32.mxu0 0.0
      %4815 = vmatmul.mubr.f32.gmra.mrb[0].mxu0 %v4142
      %v4816 = vpop.f32.mrb[0].mxu0
      %v4817 = vadd.f32 0.0, %v4816
      %v4818 = vpop.f32.mrb[0].mxu0
      %4819 = vmatprep.mubr.f32.mxu0 0.0
      %4820 = vmatmul.mubr.f32.gmra.mrb[0].mxu0 %v4144
      %v4821 = vpop.f32.mrb[0].mxu0
      %v4822 = vadd.f32 0.0, %v4821
      %v4823 = vpop.f32.mrb[0].mxu0
      %4824 = vmatprep.mubr.f32.mxu0 0.0
      %4825 = vmatmul.mubr.f32.gmra.mrb[0].mxu0 %v4146
      %v4826 = vpop.f32.mrb[0].mxu0
      %v4827 = vadd.f32 0.0, %v4826
      %v4828 = vpop.f32.mrb[0].mxu0
      %4829 = vmatprep.mubr.f32.mxu0 0.0
      %4830 = vmatmul.mubr.f32.gmra.mrb[0].mxu0 %v4148
      %v4831 = vpop.f32.mrb[0].mxu0
      %v4832 = vadd.f32 0.0, %v4831
      %v4833 = vpop.f32.mrb[0].mxu0
      %4834 = vmatprep.mubr.f32.mxu0 0.0
      %4835 = vmatmul.mubr.f32.gmra.mrb[0].mxu0 %v4150
      %v4836 = vpop.f32.mrb[0].mxu0
      %v4837 = vadd.f32 0.0, %v4836
      %v4838 = vpop.f32.mrb[0].mxu0
      %4839 = vmatprep.mubr.f32.mxu0 0.0
      %4840 = vmatmul.mubr.f32.gmra.mrb[0].mxu0 %v4152
      %v4841 = vpop.f32.mrb[0].mxu0
      %v4842 = vadd.f32 0.0, %v4841
      %v4843 = vpop.f32.mrb[0].mxu0
      %4844 = vmatprep.mubr.f32.mxu0 0.0
      %4845 = vmatmul.mubr.f32.gmra.mrb[0].mxu0 %v4154
      %v4846 = vpop.f32.mrb[0].mxu0
      %v4847 = vadd.f32 0.0, %v4846
      %v4848 = vpop.f32.mrb[0].mxu0
      %4849 = vmatprep.mubr.f32.mxu0 0.0
      %4850 = vmatmul.mubr.f32.gmra.mrb[0].mxu0 %v4156
      %v4851 = vpop.f32.mrb[0].mxu0
      %v4852 = vadd.f32 0.0, %v4851
      %v4853 = vpop.f32.mrb[0].mxu0
      %4854 = vmatprep.mubr.f32.mxu0 0.0
      %4855 = vmatmul.mubr.f32.gmra.mrb[0].mxu0 %v4158
      %v4856 = vpop.f32.mrb[0].mxu0
      %v4857 = vadd.f32 0.0, %v4856
      %v4858 = vpop.f32.mrb[0].mxu0
      %4859 = vmatprep.mubr.f32.mxu0 0.0
      %4860 = vmatmul.mubr.f32.gmra.mrb[0].mxu0 %v4160
      %v4861 = vpop.f32.mrb[0].mxu0
      %v4862 = vadd.f32 0.0, %v4861
      %v4863 = vpop.f32.mrb[0].mxu0
      %4864 = vmatprep.mubr.f32.mxu0 0.0
      %4865 = vmatmul.mubr.f32.gmra.mrb[0].mxu0 %v4162
      %v4866 = vpop.f32.mrb[0].mxu0
      %v4867 = vadd.f32 0.0, %v4866
      %v4868 = vpop.f32.mrb[0].mxu0
      %4869 = vmatprep.mubr.f32.mxu0 0.0
      %4870 = vmatmul.mubr.f32.gmra.mrb[0].mxu0 %v4164
      %v4871 = vpop.f32.mrb[0].mxu0
      %v4872 = vadd.f32 0.0, %v4871
      %v4873 = vpop.f32.mrb[0].mxu0
      %4874 = vmatprep.mubr.f32.mxu0 0.0
      %4875 = vmatmul.mubr.f32.gmra.mrb[0].mxu0 %v4166
      %v4876 = vpop.f32.mrb[0].mxu0
      %v4877 = vadd.f32 0.0, %v4876
      %v4878 = vpop.f32.mrb[0].mxu0
      %4879 = vmatprep.mubr.f32.mxu0 0.0
      %4880 = vmatmul.mubr.f32.gmra.mrb[0].mxu0 %v4741
      %v4881 = vpop.f32.mrb[0].mxu0
      %v4882 = vadd.f32 0.0, %v4881
      %v4883 = vpop.f32.mrb[0].mxu0
      %4884 = vmatprep.mubr.f32.mxu0 0.0
      %4885 = vmatmul.mubr.f32.gmra.mrb[0].mxu0 %v4743
      %v4886 = vpop.f32.mrb[0].mxu0
      %v4887 = vadd.f32 0.0, %v4886
      %v4888 = vpop.f32.mrb[0].mxu0
      %4889 = vdwg.mxu0
      %v4890 = vadd.f32 %v4717, %v4812
      %v4891 = vadd.f32 %v4718, %v4817
      %v4892 = vadd.f32 %v4719, %v4822
      %v4893 = vadd.f32 %v4720, %v4827
      %v4894 = vadd.f32 %v4721, %v4832
      %v4895 = vadd.f32 %v4722, %v4837
      %v4896 = vadd.f32 %v4723, %v4842
      %v4897 = vadd.f32 %v4724, %v4847
      %v4898 = vadd.f32 %v4725, %v4852
      %v4899 = vadd.f32 %v4726, %v4857
      %v4900 = vadd.f32 %v4727, %v4862
      %v4901 = vadd.f32 %v4728, %v4867
      %v4902 = vadd.f32 %v4729, %v4872
      %v4903 = vadd.f32 %v4730, %v4877
      %v4904 = vadd.f32 %v4731, %v4882
      %v4905 = vadd.f32 %v4732, %v4887
      %v4906 = vrot.slane %v465, 2
      %v4907 = vrot.slane %v466, 2
      %v4908 = vsel %vm894, %v4906, %v4907
      %v4909 = vrot.slane %v467, 2
      %v4910 = vsel %vm894, %v4907, %v4909
      %s4911 = scalar_lea.vmem %s3, 184
      %v4912 = vld [vmem:[%s4911] sm:$0xff]
      %v4913 = vsel %vm539, %v4908, 0
      %v4915 = vsel %vm539, %v4910, 0
      %4917 = vmatprep.subr.mxu0 0.0
      %4918 = vmatpush1.msra.mxu0 %v4912
      %4919 = vmatprep.subr.mxu0 0.0
      %4920 = vmatpush1.msra.mxu0 0.0
      %4921 = vmatprep.subr.mxu0 0.0
      %4922 = vmatpush1.msra.mxu0 0.0
      %4923 = vmatprep.subr.mxu0 0.0
      %4924 = vmatpush1.msra.mxu0 0.0
      %4925 = vmatprep.subr.mxu0 0.0
      %4926 = vmatpush1.msra.mxu0 0.0
      %4927 = vmatprep.subr.mxu0 0.0
      %4928 = vmatpush1.msra.mxu0 0.0
      %4929 = vmatprep.subr.mxu0 0.0
      %4930 = vmatpush1.msra.mxu0 0.0
      %4931 = vmatprep.subr.mxu0 0.0
      %4932 = vmatpush1.msra.mxu0 0.0
      %4933 = vmatprep.subr.mxu0 0.0
      %4934 = vmatpush1.msra.mxu0 0.0
      %4935 = vmatprep.subr.mxu0 0.0
      %4936 = vmatpush1.msra.mxu0 0.0
      %4937 = vmatprep.subr.mxu0 0.0
      %4938 = vmatpush1.msra.mxu0 0.0
      %4939 = vmatprep.subr.mxu0 0.0
      %4940 = vmatpush1.msra.mxu0 0.0
      %4941 = vmatprep.subr.mxu0 0.0
      %4942 = vmatpush1.msra.mxu0 0.0
      %4943 = vmatprep.subr.mxu0 0.0
      %4944 = vmatpush1.msra.mxu0 0.0
      %4945 = vmatprep.subr.mxu0 0.0
      %4946 = vmatpush1.msra.mxu0 0.0
      %4947 = vmatprep.subr.mxu0 0.0
      %4948 = vmatpush1.msra.mxu0 0.0
      %4949 = vmatprep.subr.mxu0 0.0
      %4950 = vmatpush1.msra.mxu0 0.0
      %4951 = vmatprep.subr.mxu0 0.0
      %4952 = vmatpush1.msra.mxu0 0.0
      %4953 = vmatprep.subr.mxu0 0.0
      %4954 = vmatpush1.msra.mxu0 0.0
      %4955 = vmatprep.subr.mxu0 0.0
      %4956 = vmatpush1.msra.mxu0 0.0
      %4957 = vmatprep.subr.mxu0 0.0
      %4958 = vmatpush1.msra.mxu0 0.0
      %4959 = vmatprep.subr.mxu0 0.0
      %4960 = vmatpush1.msra.mxu0 0.0
      %4961 = vmatprep.subr.mxu0 0.0
      %4962 = vmatpush1.msra.mxu0 0.0
      %4963 = vmatprep.subr.mxu0 0.0
      %4964 = vmatpush1.msra.mxu0 0.0
      %4965 = vmatprep.subr.mxu0 0.0
      %4966 = vmatpush1.msra.mxu0 0.0
      %4967 = vmatprep.subr.mxu0 0.0
      %4968 = vmatpush1.msra.mxu0 0.0
      %4969 = vmatprep.subr.mxu0 0.0
      %4970 = vmatpush1.msra.mxu0 0.0
      %4971 = vmatprep.subr.mxu0 0.0
      %4972 = vmatpush1.msra.mxu0 0.0
      %4973 = vmatprep.subr.mxu0 0.0
      %4974 = vmatpush1.msra.mxu0 0.0
      %4975 = vmatprep.subr.mxu0 0.0
      %4976 = vmatpush1.msra.mxu0 0.0
      %4977 = vmatprep.subr.mxu0 0.0
      %4978 = vmatpush1.msra.mxu0 0.0
      %4979 = vmatprep.subr.mxu0 0.0
      %4980 = vmatpush1.msra.mxu0 0.0
      %4981 = vmatprep.mubr.f32.mxu0 0.0
      %4982 = vmatmul.mubr.f32.gmra.mrb[0].mxu0 %v4375
      %v4983 = vpop.f32.mrb[0].mxu0
      %v4984 = vadd.f32 0.0, %v4983
      %v4985 = vpop.f32.mrb[0].mxu0
      %4986 = vmatprep.mubr.f32.mxu0 0.0
      %4987 = vmatmul.mubr.f32.gmra.mrb[0].mxu0 %v4377
      %v4988 = vpop.f32.mrb[0].mxu0
      %v4989 = vadd.f32 0.0, %v4988
      %v4990 = vpop.f32.mrb[0].mxu0
      %4991 = vmatprep.mubr.f32.mxu0 0.0
      %4992 = vmatmul.mubr.f32.gmra.mrb[0].mxu0 %v4379
      %v4993 = vpop.f32.mrb[0].mxu0
      %v4994 = vadd.f32 0.0, %v4993
      %v4995 = vpop.f32.mrb[0].mxu0
      %4996 = vmatprep.mubr.f32.mxu0 0.0
      %4997 = vmatmul.mubr.f32.gmra.mrb[0].mxu0 %v4381
      %v4998 = vpop.f32.mrb[0].mxu0
      %v4999 = vadd.f32 0.0, %v4998
      %v5000 = vpop.f32.mrb[0].mxu0
      %5001 = vmatprep.mubr.f32.mxu0 0.0
      %5002 = vmatmul.mubr.f32.gmra.mrb[0].mxu0 %v4383
      %v5003 = vpop.f32.mrb[0].mxu0
      %v5004 = vadd.f32 0.0, %v5003
      %v5005 = vpop.f32.mrb[0].mxu0
      %5006 = vmatprep.mubr.f32.mxu0 0.0
      %5007 = vmatmul.mubr.f32.gmra.mrb[0].mxu0 %v4385
      %v5008 = vpop.f32.mrb[0].mxu0
      %v5009 = vadd.f32 0.0, %v5008
      %v5010 = vpop.f32.mrb[0].mxu0
      %5011 = vmatprep.mubr.f32.mxu0 0.0
      %5012 = vmatmul.mubr.f32.gmra.mrb[0].mxu0 %v4387
      %v5013 = vpop.f32.mrb[0].mxu0
      %v5014 = vadd.f32 0.0, %v5013
      %v5015 = vpop.f32.mrb[0].mxu0
      %5016 = vmatprep.mubr.f32.mxu0 0.0
      %5017 = vmatmul.mubr.f32.gmra.mrb[0].mxu0 %v4389
      %v5018 = vpop.f32.mrb[0].mxu0
      %v5019 = vadd.f32 0.0, %v5018
      %v5020 = vpop.f32.mrb[0].mxu0
      %5021 = vmatprep.mubr.f32.mxu0 0.0
      %5022 = vmatmul.mubr.f32.gmra.mrb[0].mxu0 %v4391
      %v5023 = vpop.f32.mrb[0].mxu0
      %v5024 = vadd.f32 0.0, %v5023
      %v5025 = vpop.f32.mrb[0].mxu0
      %5026 = vmatprep.mubr.f32.mxu0 0.0
      %5027 = vmatmul.mubr.f32.gmra.mrb[0].mxu0 %v4393
      %v5028 = vpop.f32.mrb[0].mxu0
      %v5029 = vadd.f32 0.0, %v5028
      %v5030 = vpop.f32.mrb[0].mxu0
      %5031 = vmatprep.mubr.f32.mxu0 0.0
      %5032 = vmatmul.mubr.f32.gmra.mrb[0].mxu0 %v4395
      %v5033 = vpop.f32.mrb[0].mxu0
      %v5034 = vadd.f32 0.0, %v5033
      %v5035 = vpop.f32.mrb[0].mxu0
      %5036 = vmatprep.mubr.f32.mxu0 0.0
      %5037 = vmatmul.mubr.f32.gmra.mrb[0].mxu0 %v4397
      %v5038 = vpop.f32.mrb[0].mxu0
      %v5039 = vadd.f32 0.0, %v5038
      %v5040 = vpop.f32.mrb[0].mxu0
      %5041 = vmatprep.mubr.f32.mxu0 0.0
      %5042 = vmatmul.mubr.f32.gmra.mrb[0].mxu0 %v4399
      %v5043 = vpop.f32.mrb[0].mxu0
      %v5044 = vadd.f32 0.0, %v5043
      %v5045 = vpop.f32.mrb[0].mxu0
      %5046 = vmatprep.mubr.f32.mxu0 0.0
      %5047 = vmatmul.mubr.f32.gmra.mrb[0].mxu0 %v4401
      %v5048 = vpop.f32.mrb[0].mxu0
      %v5049 = vadd.f32 0.0, %v5048
      %v5050 = vpop.f32.mrb[0].mxu0
      %5051 = vmatprep.mubr.f32.mxu0 0.0
      %5052 = vmatmul.mubr.f32.gmra.mrb[0].mxu0 %v4913
      %v5053 = vpop.f32.mrb[0].mxu0
      %v5054 = vadd.f32 0.0, %v5053
      %v5055 = vpop.f32.mrb[0].mxu0
      %5056 = vmatprep.mubr.f32.mxu0 0.0
      %5057 = vmatmul.mubr.f32.gmra.mrb[0].mxu0 %v4915
      %v5058 = vpop.f32.mrb[0].mxu0
      %v5059 = vadd.f32 0.0, %v5058
      %v5060 = vpop.f32.mrb[0].mxu0
      %5061 = vdwg.mxu0
      %v5062 = vadd.f32 %v4890, %v4984
      %v5063 = vadd.f32 %v4891, %v4989
      %v5064 = vadd.f32 %v4892, %v4994
      %v5065 = vadd.f32 %v4893, %v4999
      %v5066 = vadd.f32 %v4894, %v5004
      %v5067 = vadd.f32 %v4895, %v5009
      %v5068 = vadd.f32 %v4896, %v5014
      %v5069 = vadd.f32 %v4897, %v5019
      %v5070 = vadd.f32 %v4898, %v5024
      %v5071 = vadd.f32 %v4899, %v5029
      %v5072 = vadd.f32 %v4900, %v5034
      %v5073 = vadd.f32 %v4901, %v5039
      %v5074 = vadd.f32 %v4902, %v5044
      %v5075 = vadd.f32 %v4903, %v5049
      %v5076 = vadd.f32 %v4904, %v5054
      %v5077 = vadd.f32 %v4905, %v5059
      %s5078 = scalar_lea.vmem %s3, 192
      %v5079 = vld [vmem:[%s5078] sm:$0xff]
      %v5081 = vsel %vm539, %v468, 0
      %v5084 = vsel %vm539, %v469, 0
      %5086 = vmatprep.subr.mxu0 0.0
      %5087 = vmatpush1.msra.mxu0 %v5079
      %5088 = vmatprep.subr.mxu0 0.0
      %5089 = vmatpush1.msra.mxu0 0.0
      %5090 = vmatprep.subr.mxu0 0.0
      %5091 = vmatpush1.msra.mxu0 0.0
      %5092 = vmatprep.subr.mxu0 0.0
      %5093 = vmatpush1.msra.mxu0 0.0
      %5094 = vmatprep.subr.mxu0 0.0
      %5095 = vmatpush1.msra.mxu0 0.0
      %5096 = vmatprep.subr.mxu0 0.0
      %5097 = vmatpush1.msra.mxu0 0.0
      %5098 = vmatprep.subr.mxu0 0.0
      %5099 = vmatpush1.msra.mxu0 0.0
      %5100 = vmatprep.subr.mxu0 0.0
      %5101 = vmatpush1.msra.mxu0 0.0
      %5102 = vmatprep.subr.mxu0 0.0
      %5103 = vmatpush1.msra.mxu0 0.0
      %5104 = vmatprep.subr.mxu0 0.0
      %5105 = vmatpush1.msra.mxu0 0.0
      %5106 = vmatprep.subr.mxu0 0.0
      %5107 = vmatpush1.msra.mxu0 0.0
      %5108 = vmatprep.subr.mxu0 0.0
      %5109 = vmatpush1.msra.mxu0 0.0
      %5110 = vmatprep.subr.mxu0 0.0
      %5111 = vmatpush1.msra.mxu0 0.0
      %5112 = vmatprep.subr.mxu0 0.0
      %5113 = vmatpush1.msra.mxu0 0.0
      %5114 = vmatprep.subr.mxu0 0.0
      %5115 = vmatpush1.msra.mxu0 0.0
      %5116 = vmatprep.subr.mxu0 0.0
      %5117 = vmatpush1.msra.mxu0 0.0
      %5118 = vmatprep.subr.mxu0 0.0
      %5119 = vmatpush1.msra.mxu0 0.0
      %5120 = vmatprep.subr.mxu0 0.0
      %5121 = vmatpush1.msra.mxu0 0.0
      %5122 = vmatprep.subr.mxu0 0.0
      %5123 = vmatpush1.msra.mxu0 0.0
      %5124 = vmatprep.subr.mxu0 0.0
      %5125 = vmatpush1.msra.mxu0 0.0
      %5126 = vmatprep.subr.mxu0 0.0
      %5127 = vmatpush1.msra.mxu0 0.0
      %5128 = vmatprep.subr.mxu0 0.0
      %5129 = vmatpush1.msra.mxu0 0.0
      %5130 = vmatprep.subr.mxu0 0.0
      %5131 = vmatpush1.msra.mxu0 0.0
      %5132 = vmatprep.subr.mxu0 0.0
      %5133 = vmatpush1.msra.mxu0 0.0
      %5134 = vmatprep.subr.mxu0 0.0
      %5135 = vmatpush1.msra.mxu0 0.0
      %5136 = vmatprep.subr.mxu0 0.0
      %5137 = vmatpush1.msra.mxu0 0.0
      %5138 = vmatprep.subr.mxu0 0.0
      %5139 = vmatpush1.msra.mxu0 0.0
      %5140 = vmatprep.subr.mxu0 0.0
      %5141 = vmatpush1.msra.mxu0 0.0
      %5142 = vmatprep.subr.mxu0 0.0
      %5143 = vmatpush1.msra.mxu0 0.0
      %5144 = vmatprep.subr.mxu0 0.0
      %5145 = vmatpush1.msra.mxu0 0.0
      %5146 = vmatprep.subr.mxu0 0.0
      %5147 = vmatpush1.msra.mxu0 0.0
      %5148 = vmatprep.subr.mxu0 0.0
      %5149 = vmatpush1.msra.mxu0 0.0
      %5150 = vmatprep.mubr.f32.mxu0 0.0
      %5151 = vmatmul.mubr.f32.gmra.mrb[0].mxu0 %v3890
      %v5152 = vpop.f32.mrb[0].mxu0
      %v5153 = vadd.f32 0.0, %v5152
      %v5154 = vpop.f32.mrb[0].mxu0
      %5155 = vmatprep.mubr.f32.mxu0 0.0
      %5156 = vmatmul.mubr.f32.gmra.mrb[0].mxu0 %v3893
      %v5157 = vpop.f32.mrb[0].mxu0
      %v5158 = vadd.f32 0.0, %v5157
      %v5159 = vpop.f32.mrb[0].mxu0
      %5160 = vmatprep.mubr.f32.mxu0 0.0
      %5161 = vmatmul.mubr.f32.gmra.mrb[0].mxu0 %v3896
      %v5162 = vpop.f32.mrb[0].mxu0
      %v5163 = vadd.f32 0.0, %v5162
      %v5164 = vpop.f32.mrb[0].mxu0
      %5165 = vmatprep.mubr.f32.mxu0 0.0
      %5166 = vmatmul.mubr.f32.gmra.mrb[0].mxu0 %v3899
      %v5167 = vpop.f32.mrb[0].mxu0
      %v5168 = vadd.f32 0.0, %v5167
      %v5169 = vpop.f32.mrb[0].mxu0
      %5170 = vmatprep.mubr.f32.mxu0 0.0
      %5171 = vmatmul.mubr.f32.gmra.mrb[0].mxu0 %v3902
      %v5172 = vpop.f32.mrb[0].mxu0
      %v5173 = vadd.f32 0.0, %v5172
      %v5174 = vpop.f32.mrb[0].mxu0
      %5175 = vmatprep.mubr.f32.mxu0 0.0
      %5176 = vmatmul.mubr.f32.gmra.mrb[0].mxu0 %v3905
      %v5177 = vpop.f32.mrb[0].mxu0
      %v5178 = vadd.f32 0.0, %v5177
      %v5179 = vpop.f32.mrb[0].mxu0
      %5180 = vmatprep.mubr.f32.mxu0 0.0
      %5181 = vmatmul.mubr.f32.gmra.mrb[0].mxu0 %v3908
      %v5182 = vpop.f32.mrb[0].mxu0
      %v5183 = vadd.f32 0.0, %v5182
      %v5184 = vpop.f32.mrb[0].mxu0
      %5185 = vmatprep.mubr.f32.mxu0 0.0
      %5186 = vmatmul.mubr.f32.gmra.mrb[0].mxu0 %v3911
      %v5187 = vpop.f32.mrb[0].mxu0
      %v5188 = vadd.f32 0.0, %v5187
      %v5189 = vpop.f32.mrb[0].mxu0
      %5190 = vmatprep.mubr.f32.mxu0 0.0
      %5191 = vmatmul.mubr.f32.gmra.mrb[0].mxu0 %v3914
      %v5192 = vpop.f32.mrb[0].mxu0
      %v5193 = vadd.f32 0.0, %v5192
      %v5194 = vpop.f32.mrb[0].mxu0
      %5195 = vmatprep.mubr.f32.mxu0 0.0
      %5196 = vmatmul.mubr.f32.gmra.mrb[0].mxu0 %v3917
      %v5197 = vpop.f32.mrb[0].mxu0
      %v5198 = vadd.f32 0.0, %v5197
      %v5199 = vpop.f32.mrb[0].mxu0
      %5200 = vmatprep.mubr.f32.mxu0 0.0
      %5201 = vmatmul.mubr.f32.gmra.mrb[0].mxu0 %v3920
      %v5202 = vpop.f32.mrb[0].mxu0
      %v5203 = vadd.f32 0.0, %v5202
      %v5204 = vpop.f32.mrb[0].mxu0
      %5205 = vmatprep.mubr.f32.mxu0 0.0
      %5206 = vmatmul.mubr.f32.gmra.mrb[0].mxu0 %v3923
      %v5207 = vpop.f32.mrb[0].mxu0
      %v5208 = vadd.f32 0.0, %v5207
      %v5209 = vpop.f32.mrb[0].mxu0
      %5210 = vmatprep.mubr.f32.mxu0 0.0
      %5211 = vmatmul.mubr.f32.gmra.mrb[0].mxu0 %v4567
      %v5212 = vpop.f32.mrb[0].mxu0
      %v5213 = vadd.f32 0.0, %v5212
      %v5214 = vpop.f32.mrb[0].mxu0
      %5215 = vmatprep.mubr.f32.mxu0 0.0
      %5216 = vmatmul.mubr.f32.gmra.mrb[0].mxu0 %v4570
      %v5217 = vpop.f32.mrb[0].mxu0
      %v5218 = vadd.f32 0.0, %v5217
      %v5219 = vpop.f32.mrb[0].mxu0
      %5220 = vmatprep.mubr.f32.mxu0 0.0
      %5221 = vmatmul.mubr.f32.gmra.mrb[0].mxu0 %v5081
      %v5222 = vpop.f32.mrb[0].mxu0
      %v5223 = vadd.f32 0.0, %v5222
      %v5224 = vpop.f32.mrb[0].mxu0
      %5225 = vmatprep.mubr.f32.mxu0 0.0
      %5226 = vmatmul.mubr.f32.gmra.mrb[0].mxu0 %v5084
      %v5227 = vpop.f32.mrb[0].mxu0
      %v5228 = vadd.f32 0.0, %v5227
      %v5229 = vpop.f32.mrb[0].mxu0
      %5230 = vdwg.mxu0
      %v5231 = vadd.f32 %v5062, %v5153
      %v5232 = vadd.f32 %v5063, %v5158
      %v5233 = vadd.f32 %v5064, %v5163
      %v5234 = vadd.f32 %v5065, %v5168
      %v5235 = vadd.f32 %v5066, %v5173
      %v5236 = vadd.f32 %v5067, %v5178
      %v5237 = vadd.f32 %v5068, %v5183
      %v5238 = vadd.f32 %v5069, %v5188
      %v5239 = vadd.f32 %v5070, %v5193
      %v5240 = vadd.f32 %v5071, %v5198
      %v5241 = vadd.f32 %v5072, %v5203
      %v5242 = vadd.f32 %v5073, %v5208
      %v5243 = vadd.f32 %v5074, %v5213
      %v5244 = vadd.f32 %v5075, %v5218
      %v5245 = vadd.f32 %v5076, %v5223
      %v5246 = vadd.f32 %v5077, %v5228
      %v5248 = vrot.slane %v468, 1
      %v5249 = vrot.slane %v469, 1
      %v5250 = vsel %vm496, %v5248, %v5249
      %v5251 = vrot.slane %v470, 1
      %v5252 = vsel %vm496, %v5249, %v5251
      %s5253 = scalar_lea.vmem %s3, 200
      %v5254 = vld [vmem:[%s5253] sm:$0xff]
      %v5255 = vsel %vm539, %v5250, 0
      %v5257 = vsel %vm539, %v5252, 0
      %5259 = vmatprep.subr.mxu0 0.0
      %5260 = vmatpush1.msra.mxu0 %v5254
      %5261 = vmatprep.subr.mxu0 0.0
      %5262 = vmatpush1.msra.mxu0 0.0
      %5263 = vmatprep.subr.mxu0 0.0
      %5264 = vmatpush1.msra.mxu0 0.0
      %5265 = vmatprep.subr.mxu0 0.0
      %5266 = vmatpush1.msra.mxu0 0.0
      %5267 = vmatprep.subr.mxu0 0.0
      %5268 = vmatpush1.msra.mxu0 0.0
      %5269 = vmatprep.subr.mxu0 0.0
      %5270 = vmatpush1.msra.mxu0 0.0
      %5271 = vmatprep.subr.mxu0 0.0
      %5272 = vmatpush1.msra.mxu0 0.0
      %5273 = vmatprep.subr.mxu0 0.0
      %5274 = vmatpush1.msra.mxu0 0.0
      %5275 = vmatprep.subr.mxu0 0.0
      %5276 = vmatpush1.msra.mxu0 0.0
      %5277 = vmatprep.subr.mxu0 0.0
      %5278 = vmatpush1.msra.mxu0 0.0
      %5279 = vmatprep.subr.mxu0 0.0
      %5280 = vmatpush1.msra.mxu0 0.0
      %5281 = vmatprep.subr.mxu0 0.0
      %5282 = vmatpush1.msra.mxu0 0.0
      %5283 = vmatprep.subr.mxu0 0.0
      %5284 = vmatpush1.msra.mxu0 0.0
      %5285 = vmatprep.subr.mxu0 0.0
      %5286 = vmatpush1.msra.mxu0 0.0
      %5287 = vmatprep.subr.mxu0 0.0
      %5288 = vmatpush1.msra.mxu0 0.0
      %5289 = vmatprep.subr.mxu0 0.0
      %5290 = vmatpush1.msra.mxu0 0.0
      %5291 = vmatprep.subr.mxu0 0.0
      %5292 = vmatpush1.msra.mxu0 0.0
      %5293 = vmatprep.subr.mxu0 0.0
      %5294 = vmatpush1.msra.mxu0 0.0
      %5295 = vmatprep.subr.mxu0 0.0
      %5296 = vmatpush1.msra.mxu0 0.0
      %5297 = vmatprep.subr.mxu0 0.0
      %5298 = vmatpush1.msra.mxu0 0.0
      %5299 = vmatprep.subr.mxu0 0.0
      %5300 = vmatpush1.msra.mxu0 0.0
      %5301 = vmatprep.subr.mxu0 0.0
      %5302 = vmatpush1.msra.mxu0 0.0
      %5303 = vmatprep.subr.mxu0 0.0
      %5304 = vmatpush1.msra.mxu0 0.0
      %5305 = vmatprep.subr.mxu0 0.0
      %5306 = vmatpush1.msra.mxu0 0.0
      %5307 = vmatprep.subr.mxu0 0.0
      %5308 = vmatpush1.msra.mxu0 0.0
      %5309 = vmatprep.subr.mxu0 0.0
      %5310 = vmatpush1.msra.mxu0 0.0
      %5311 = vmatprep.subr.mxu0 0.0
      %5312 = vmatpush1.msra.mxu0 0.0
      %5313 = vmatprep.subr.mxu0 0.0
      %5314 = vmatpush1.msra.mxu0 0.0
      %5315 = vmatprep.subr.mxu0 0.0
      %5316 = vmatpush1.msra.mxu0 0.0
      %5317 = vmatprep.subr.mxu0 0.0
      %5318 = vmatpush1.msra.mxu0 0.0
      %5319 = vmatprep.subr.mxu0 0.0
      %5320 = vmatpush1.msra.mxu0 0.0
      %5321 = vmatprep.subr.mxu0 0.0
      %5322 = vmatpush1.msra.mxu0 0.0
      %5323 = vmatprep.mubr.f32.mxu0 0.0
      %5324 = vmatmul.mubr.f32.gmra.mrb[0].mxu0 %v4144
      %v5325 = vpop.f32.mrb[0].mxu0
      %v5326 = vadd.f32 0.0, %v5325
      %v5327 = vpop.f32.mrb[0].mxu0
      %5328 = vmatprep.mubr.f32.mxu0 0.0
      %5329 = vmatmul.mubr.f32.gmra.mrb[0].mxu0 %v4146
      %v5330 = vpop.f32.mrb[0].mxu0
      %v5331 = vadd.f32 0.0, %v5330
      %v5332 = vpop.f32.mrb[0].mxu0
      %5333 = vmatprep.mubr.f32.mxu0 0.0
      %5334 = vmatmul.mubr.f32.gmra.mrb[0].mxu0 %v4148
      %v5335 = vpop.f32.mrb[0].mxu0
      %v5336 = vadd.f32 0.0, %v5335
      %v5337 = vpop.f32.mrb[0].mxu0
      %5338 = vmatprep.mubr.f32.mxu0 0.0
      %5339 = vmatmul.mubr.f32.gmra.mrb[0].mxu0 %v4150
      %v5340 = vpop.f32.mrb[0].mxu0
      %v5341 = vadd.f32 0.0, %v5340
      %v5342 = vpop.f32.mrb[0].mxu0
      %5343 = vmatprep.mubr.f32.mxu0 0.0
      %5344 = vmatmul.mubr.f32.gmra.mrb[0].mxu0 %v4152
      %v5345 = vpop.f32.mrb[0].mxu0
      %v5346 = vadd.f32 0.0, %v5345
      %v5347 = vpop.f32.mrb[0].mxu0
      %5348 = vmatprep.mubr.f32.mxu0 0.0
      %5349 = vmatmul.mubr.f32.gmra.mrb[0].mxu0 %v4154
      %v5350 = vpop.f32.mrb[0].mxu0
      %v5351 = vadd.f32 0.0, %v5350
      %v5352 = vpop.f32.mrb[0].mxu0
      %5353 = vmatprep.mubr.f32.mxu0 0.0
      %5354 = vmatmul.mubr.f32.gmra.mrb[0].mxu0 %v4156
      %v5355 = vpop.f32.mrb[0].mxu0
      %v5356 = vadd.f32 0.0, %v5355
      %v5357 = vpop.f32.mrb[0].mxu0
      %5358 = vmatprep.mubr.f32.mxu0 0.0
      %5359 = vmatmul.mubr.f32.gmra.mrb[0].mxu0 %v4158
      %v5360 = vpop.f32.mrb[0].mxu0
      %v5361 = vadd.f32 0.0, %v5360
      %v5362 = vpop.f32.mrb[0].mxu0
      %5363 = vmatprep.mubr.f32.mxu0 0.0
      %5364 = vmatmul.mubr.f32.gmra.mrb[0].mxu0 %v4160
      %v5365 = vpop.f32.mrb[0].mxu0
      %v5366 = vadd.f32 0.0, %v5365
      %v5367 = vpop.f32.mrb[0].mxu0
      %5368 = vmatprep.mubr.f32.mxu0 0.0
      %5369 = vmatmul.mubr.f32.gmra.mrb[0].mxu0 %v4162
      %v5370 = vpop.f32.mrb[0].mxu0
      %v5371 = vadd.f32 0.0, %v5370
      %v5372 = vpop.f32.mrb[0].mxu0
      %5373 = vmatprep.mubr.f32.mxu0 0.0
      %5374 = vmatmul.mubr.f32.gmra.mrb[0].mxu0 %v4164
      %v5375 = vpop.f32.mrb[0].mxu0
      %v5376 = vadd.f32 0.0, %v5375
      %v5377 = vpop.f32.mrb[0].mxu0
      %5378 = vmatprep.mubr.f32.mxu0 0.0
      %5379 = vmatmul.mubr.f32.gmra.mrb[0].mxu0 %v4166
      %v5380 = vpop.f32.mrb[0].mxu0
      %v5381 = vadd.f32 0.0, %v5380
      %v5382 = vpop.f32.mrb[0].mxu0
      %5383 = vmatprep.mubr.f32.mxu0 0.0
      %5384 = vmatmul.mubr.f32.gmra.mrb[0].mxu0 %v4741
      %v5385 = vpop.f32.mrb[0].mxu0
      %v5386 = vadd.f32 0.0, %v5385
      %v5387 = vpop.f32.mrb[0].mxu0
      %5388 = vmatprep.mubr.f32.mxu0 0.0
      %5389 = vmatmul.mubr.f32.gmra.mrb[0].mxu0 %v4743
      %v5390 = vpop.f32.mrb[0].mxu0
      %v5391 = vadd.f32 0.0, %v5390
      %v5392 = vpop.f32.mrb[0].mxu0
      %5393 = vmatprep.mubr.f32.mxu0 0.0
      %5394 = vmatmul.mubr.f32.gmra.mrb[0].mxu0 %v5255
      %v5395 = vpop.f32.mrb[0].mxu0
      %v5396 = vadd.f32 0.0, %v5395
      %v5397 = vpop.f32.mrb[0].mxu0
      %5398 = vmatprep.mubr.f32.mxu0 0.0
      %5399 = vmatmul.mubr.f32.gmra.mrb[0].mxu0 %v5257
      %v5400 = vpop.f32.mrb[0].mxu0
      %v5401 = vadd.f32 0.0, %v5400
      %v5402 = vpop.f32.mrb[0].mxu0
      %5403 = vdwg.mxu0
      %v5404 = vadd.f32 %v5231, %v5326
      %v5405 = vadd.f32 %v5232, %v5331
      %v5406 = vadd.f32 %v5233, %v5336
      %v5407 = vadd.f32 %v5234, %v5341
      %v5408 = vadd.f32 %v5235, %v5346
      %v5409 = vadd.f32 %v5236, %v5351
      %v5410 = vadd.f32 %v5237, %v5356
      %v5411 = vadd.f32 %v5238, %v5361
      %v5412 = vadd.f32 %v5239, %v5366
      %v5413 = vadd.f32 %v5240, %v5371
      %v5414 = vadd.f32 %v5241, %v5376
      %v5415 = vadd.f32 %v5242, %v5381
      %v5416 = vadd.f32 %v5243, %v5386
      %v5417 = vadd.f32 %v5244, %v5391
      %v5418 = vadd.f32 %v5245, %v5396
      %v5419 = vadd.f32 %v5246, %v5401
      %v5420 = vrot.slane %v468, 2
      %v5421 = vrot.slane %v469, 2
      %v5422 = vsel %vm894, %v5420, %v5421
      %v5423 = vrot.slane %v470, 2
      %v5424 = vsel %vm894, %v5421, %v5423
      %s5425 = scalar_lea.vmem %s3, 208
      %v5426 = vld [vmem:[%s5425] sm:$0xff]
      %v5427 = vsel %vm539, %v5422, 0
      %v5429 = vsel %vm539, %v5424, 0
      %5431 = vmatprep.subr.mxu0 0.0
      %5432 = vmatpush1.msra.mxu0 %v5426
      %5433 = vmatprep.subr.mxu0 0.0
      %5434 = vmatpush1.msra.mxu0 0.0
      %5435 = vmatprep.subr.mxu0 0.0
      %5436 = vmatpush1.msra.mxu0 0.0
      %5437 = vmatprep.subr.mxu0 0.0
      %5438 = vmatpush1.msra.mxu0 0.0
      %5439 = vmatprep.subr.mxu0 0.0
      %5440 = vmatpush1.msra.mxu0 0.0
      %5441 = vmatprep.subr.mxu0 0.0
      %5442 = vmatpush1.msra.mxu0 0.0
      %5443 = vmatprep.subr.mxu0 0.0
      %5444 = vmatpush1.msra.mxu0 0.0
      %5445 = vmatprep.subr.mxu0 0.0
      %5446 = vmatpush1.msra.mxu0 0.0
      %5447 = vmatprep.subr.mxu0 0.0
      %5448 = vmatpush1.msra.mxu0 0.0
      %5449 = vmatprep.subr.mxu0 0.0
      %5450 = vmatpush1.msra.mxu0 0.0
      %5451 = vmatprep.subr.mxu0 0.0
      %5452 = vmatpush1.msra.mxu0 0.0
      %5453 = vmatprep.subr.mxu0 0.0
      %5454 = vmatpush1.msra.mxu0 0.0
      %5455 = vmatprep.subr.mxu0 0.0
      %5456 = vmatpush1.msra.mxu0 0.0
      %5457 = vmatprep.subr.mxu0 0.0
      %5458 = vmatpush1.msra.mxu0 0.0
      %5459 = vmatprep.subr.mxu0 0.0
      %5460 = vmatpush1.msra.mxu0 0.0
      %5461 = vmatprep.subr.mxu0 0.0
      %5462 = vmatpush1.msra.mxu0 0.0
      %5463 = vmatprep.subr.mxu0 0.0
      %5464 = vmatpush1.msra.mxu0 0.0
      %5465 = vmatprep.subr.mxu0 0.0
      %5466 = vmatpush1.msra.mxu0 0.0
      %5467 = vmatprep.subr.mxu0 0.0
      %5468 = vmatpush1.msra.mxu0 0.0
      %5469 = vmatprep.subr.mxu0 0.0
      %5470 = vmatpush1.msra.mxu0 0.0
      %5471 = vmatprep.subr.mxu0 0.0
      %5472 = vmatpush1.msra.mxu0 0.0
      %5473 = vmatprep.subr.mxu0 0.0
      %5474 = vmatpush1.msra.mxu0 0.0
      %5475 = vmatprep.subr.mxu0 0.0
      %5476 = vmatpush1.msra.mxu0 0.0
      %5477 = vmatprep.subr.mxu0 0.0
      %5478 = vmatpush1.msra.mxu0 0.0
      %5479 = vmatprep.subr.mxu0 0.0
      %5480 = vmatpush1.msra.mxu0 0.0
      %5481 = vmatprep.subr.mxu0 0.0
      %5482 = vmatpush1.msra.mxu0 0.0
      %5483 = vmatprep.subr.mxu0 0.0
      %5484 = vmatpush1.msra.mxu0 0.0
      %5485 = vmatprep.subr.mxu0 0.0
      %5486 = vmatpush1.msra.mxu0 0.0
      %5487 = vmatprep.subr.mxu0 0.0
      %5488 = vmatpush1.msra.mxu0 0.0
      %5489 = vmatprep.subr.mxu0 0.0
      %5490 = vmatpush1.msra.mxu0 0.0
      %5491 = vmatprep.subr.mxu0 0.0
      %5492 = vmatpush1.msra.mxu0 0.0
      %5493 = vmatprep.subr.mxu0 0.0
      %5494 = vmatpush1.msra.mxu0 0.0
      %5495 = vmatprep.mubr.f32.mxu0 0.0
      %5496 = vmatmul.mubr.f32.gmra.mrb[0].mxu0 %v4379
      %v5497 = vpop.f32.mrb[0].mxu0
      %v5498 = vadd.f32 0.0, %v5497
      %v5499 = vpop.f32.mrb[0].mxu0
      %5500 = vmatprep.mubr.f32.mxu0 0.0
      %5501 = vmatmul.mubr.f32.gmra.mrb[0].mxu0 %v4381
      %v5502 = vpop.f32.mrb[0].mxu0
      %v5503 = vadd.f32 0.0, %v5502
      %v5504 = vpop.f32.mrb[0].mxu0
      %5505 = vmatprep.mubr.f32.mxu0 0.0
      %5506 = vmatmul.mubr.f32.gmra.mrb[0].mxu0 %v4383
      %v5507 = vpop.f32.mrb[0].mxu0
      %v5508 = vadd.f32 0.0, %v5507
      %v5509 = vpop.f32.mrb[0].mxu0
      %5510 = vmatprep.mubr.f32.mxu0 0.0
      %5511 = vmatmul.mubr.f32.gmra.mrb[0].mxu0 %v4385
      %v5512 = vpop.f32.mrb[0].mxu0
      %v5513 = vadd.f32 0.0, %v5512
      %v5514 = vpop.f32.mrb[0].mxu0
      %5515 = vmatprep.mubr.f32.mxu0 0.0
      %5516 = vmatmul.mubr.f32.gmra.mrb[0].mxu0 %v4387
      %v5517 = vpop.f32.mrb[0].mxu0
      %v5518 = vadd.f32 0.0, %v5517
      %v5519 = vpop.f32.mrb[0].mxu0
      %5520 = vmatprep.mubr.f32.mxu0 0.0
      %5521 = vmatmul.mubr.f32.gmra.mrb[0].mxu0 %v4389
      %v5522 = vpop.f32.mrb[0].mxu0
      %v5523 = vadd.f32 0.0, %v5522
      %v5524 = vpop.f32.mrb[0].mxu0
      %5525 = vmatprep.mubr.f32.mxu0 0.0
      %5526 = vmatmul.mubr.f32.gmra.mrb[0].mxu0 %v4391
      %v5527 = vpop.f32.mrb[0].mxu0
      %v5528 = vadd.f32 0.0, %v5527
      %v5529 = vpop.f32.mrb[0].mxu0
      %5530 = vmatprep.mubr.f32.mxu0 0.0
      %5531 = vmatmul.mubr.f32.gmra.mrb[0].mxu0 %v4393
      %v5532 = vpop.f32.mrb[0].mxu0
      %v5533 = vadd.f32 0.0, %v5532
      %v5534 = vpop.f32.mrb[0].mxu0
      %5535 = vmatprep.mubr.f32.mxu0 0.0
      %5536 = vmatmul.mubr.f32.gmra.mrb[0].mxu0 %v4395
      %v5537 = vpop.f32.mrb[0].mxu0
      %v5538 = vadd.f32 0.0, %v5537
      %v5539 = vpop.f32.mrb[0].mxu0
      %5540 = vmatprep.mubr.f32.mxu0 0.0
      %5541 = vmatmul.mubr.f32.gmra.mrb[0].mxu0 %v4397
      %v5542 = vpop.f32.mrb[0].mxu0
      %v5543 = vadd.f32 0.0, %v5542
      %v5544 = vpop.f32.mrb[0].mxu0
      %5545 = vmatprep.mubr.f32.mxu0 0.0
      %5546 = vmatmul.mubr.f32.gmra.mrb[0].mxu0 %v4399
      %v5547 = vpop.f32.mrb[0].mxu0
      %v5548 = vadd.f32 0.0, %v5547
      %v5549 = vpop.f32.mrb[0].mxu0
      %5550 = vmatprep.mubr.f32.mxu0 0.0
      %5551 = vmatmul.mubr.f32.gmra.mrb[0].mxu0 %v4401
      %v5552 = vpop.f32.mrb[0].mxu0
      %v5553 = vadd.f32 0.0, %v5552
      %v5554 = vpop.f32.mrb[0].mxu0
      %5555 = vmatprep.mubr.f32.mxu0 0.0
      %5556 = vmatmul.mubr.f32.gmra.mrb[0].mxu0 %v4913
      %v5557 = vpop.f32.mrb[0].mxu0
      %v5558 = vadd.f32 0.0, %v5557
      %v5559 = vpop.f32.mrb[0].mxu0
      %5560 = vmatprep.mubr.f32.mxu0 0.0
      %5561 = vmatmul.mubr.f32.gmra.mrb[0].mxu0 %v4915
      %v5562 = vpop.f32.mrb[0].mxu0
      %v5563 = vadd.f32 0.0, %v5562
      %v5564 = vpop.f32.mrb[0].mxu0
      %5565 = vmatprep.mubr.f32.mxu0 0.0
      %5566 = vmatmul.mubr.f32.gmra.mrb[0].mxu0 %v5427
      %v5567 = vpop.f32.mrb[0].mxu0
      %v5568 = vadd.f32 0.0, %v5567
      %v5569 = vpop.f32.mrb[0].mxu0
      %5570 = vmatprep.mubr.f32.mxu0 0.0
      %5571 = vmatmul.mubr.f32.gmra.mrb[0].mxu0 %v5429
      %v5572 = vpop.f32.mrb[0].mxu0
      %v5573 = vadd.f32 0.0, %v5572
      %v5574 = vpop.f32.mrb[0].mxu0
      %5575 = vdwg.mxu0
      %v5576 = vadd.f32 %v5404, %v5498
      %v5577 = vadd.f32 %v5405, %v5503
      %v5578 = vadd.f32 %v5406, %v5508
      %v5579 = vadd.f32 %v5407, %v5513
      %v5580 = vadd.f32 %v5408, %v5518
      %v5581 = vadd.f32 %v5409, %v5523
      %v5582 = vadd.f32 %v5410, %v5528
      %v5583 = vadd.f32 %v5411, %v5533
      %v5584 = vadd.f32 %v5412, %v5538
      %v5585 = vadd.f32 %v5413, %v5543
      %v5586 = vadd.f32 %v5414, %v5548
      %v5587 = vadd.f32 %v5415, %v5553
      %v5588 = vadd.f32 %v5416, %v5558
      %v5589 = vadd.f32 %v5417, %v5563
      %v5590 = vadd.f32 %v5418, %v5568
      %v5591 = vadd.f32 %v5419, %v5573
      %v5592 = vld [vmem:[%s4] sm:$0x1]
      %v5594 = vlaneseq
      %v5595 = vshrl.u32 %v5594, 7
      %v5596 = vsub.s32 0, %v5595
      %v5597 = vrot.slane %v5592, %v5596
      %v5599 = vadd.f32 %v5576, %v5597
      %v5600 = vadd.f32 %v5577, %v5597
      %v5601 = vadd.f32 %v5578, %v5597
      %v5602 = vadd.f32 %v5579, %v5597
      %v5603 = vadd.f32 %v5580, %v5597
      %v5604 = vadd.f32 %v5581, %v5597
      %v5605 = vadd.f32 %v5582, %v5597
      %v5606 = vadd.f32 %v5583, %v5597
      %v5607 = vadd.f32 %v5584, %v5597
      %v5608 = vadd.f32 %v5585, %v5597
      %v5609 = vadd.f32 %v5586, %v5597
      %v5610 = vadd.f32 %v5587, %v5597
      %v5611 = vadd.f32 %v5588, %v5597
      %v5612 = vadd.f32 %v5589, %v5597
      %v5613 = vadd.f32 %v5590, %v5597
      %v5614 = vadd.f32 %v5591, %v5597
      %5615 = vst.msk [vmem:[%s376] sm:$0xff] %vm539, %v5599
      %5616 = vst.msk [vmem:[%s376 + $0x8] sm:$0xff] %vm539, %v5600
      %5617 = vst.msk [vmem:[%s376 + $0x10] sm:$0xff] %vm539, %v5601
      %5618 = vst.msk [vmem:[%s376 + $0x18] sm:$0xff] %vm539, %v5602
      %5619 = vst.msk [vmem:[%s376 + $0x20] sm:$0xff] %vm539, %v5603
      %5620 = vst.msk [vmem:[%s376 + $0x28] sm:$0xff] %vm539, %v5604
      %5621 = vst.msk [vmem:[%s376 + $0x30] sm:$0xff] %vm539, %v5605
      %5622 = vst.msk [vmem:[%s376 + $0x38] sm:$0xff] %vm539, %v5606
      %5623 = vst.msk [vmem:[%s376 + $0x40] sm:$0xff] %vm539, %v5607
      %5624 = vst.msk [vmem:[%s376 + $0x48] sm:$0xff] %vm539, %v5608
      %5625 = vst.msk [vmem:[%s376 + $0x50] sm:$0xff] %vm539, %v5609
      %5626 = vst.msk [vmem:[%s376 + $0x58] sm:$0xff] %vm539, %v5610
      %5627 = vst.msk [vmem:[%s376 + $0x60] sm:$0xff] %vm539, %v5611
      %5628 = vst.msk [vmem:[%s376 + $0x68] sm:$0xff] %vm539, %v5612
      %5629 = vst.msk [vmem:[%s376 + $0x70] sm:$0xff] %vm539, %v5613
      %5630 = vst.msk [vmem:[%s376 + $0x78] sm:$0xff] %vm539, %v5614
      %p5631 = scmp.eq.s32.totalorder %s23, 0
      // Predicated region
      $region41: #{basic_res_block_forward.4} parent=39 // pred_check
        %p5632 = pneg %p5631
      $region42: #{basic_res_block_forward.4} parent=39 // pred_check_branch
        %5634 = sbr.rel (%p5632) target = $region44
      $region43: #{basic_res_block_forward.4} parent=39 // pred_region
        %vm5635 = vcmask 58368
        %5636 = vst.msk [vmem:[%s380] sm:$0x3] %vm5635, 0.0
      $region44: #{basic_res_block_forward.4} parent=39 // pred_fallthru
        _
      %v5637 = vsel %vm539, %v5599, 0.0
      %v5638 = vsel %vm539, %v5600, 0.0
      %v5639 = vadd.f32 %v5637, %v5638
      %v5640 = vsel %vm539, %v5601, 0.0
      %v5641 = vadd.f32 %v5639, %v5640
      %v5642 = vsel %vm539, %v5602, 0.0
      %v5643 = vadd.f32 %v5641, %v5642
      %v5644 = vsel %vm539, %v5603, 0.0
      %v5645 = vadd.f32 %v5643, %v5644
      %v5646 = vsel %vm539, %v5604, 0.0
      %v5647 = vadd.f32 %v5645, %v5646
      %v5648 = vsel %vm539, %v5605, 0.0
      %v5649 = vadd.f32 %v5647, %v5648
      %v5650 = vsel %vm539, %v5606, 0.0
      %v5651 = vadd.f32 %v5649, %v5650
      %v5652 = vsel %vm539, %v5607, 0.0
      %v5653 = vadd.f32 %v5651, %v5652
      %v5654 = vsel %vm539, %v5608, 0.0
      %v5655 = vadd.f32 %v5653, %v5654
      %v5656 = vsel %vm539, %v5609, 0.0
      %v5657 = vadd.f32 %v5655, %v5656
      %v5658 = vsel %vm539, %v5610, 0.0
      %v5659 = vadd.f32 %v5657, %v5658
      %v5660 = vsel %vm539, %v5611, 0.0
      %v5661 = vadd.f32 %v5659, %v5660
      %v5662 = vsel %vm539, %v5612, 0.0
      %v5663 = vadd.f32 %v5661, %v5662
      %v5664 = vsel %vm539, %v5613, 0.0
      %v5665 = vadd.f32 %v5663, %v5664
      %v5666 = vsel %vm539, %v5614, 0.0
      %v5667 = vadd.f32 %v5665, %v5666
      %v5668 = vrot.slane %v5667, 4
      %v5669 = vadd.f32 %v5667, %v5668
      %v5670 = vrot.slane %v5669, 2
      %v5671 = vadd.f32 %v5669, %v5670
      %v5672 = vrot.slane %v5671, 1
      %v5673 = vadd.f32 %v5671, %v5672
      %v5674 = vmul.f32 %v5599, %v5599
      %v5675 = vmul.f32 %v5600, %v5600
      %v5676 = vmul.f32 %v5601, %v5601
      %v5677 = vmul.f32 %v5602, %v5602
      %v5678 = vmul.f32 %v5603, %v5603
      %v5679 = vmul.f32 %v5604, %v5604
      %v5680 = vmul.f32 %v5605, %v5605
      %v5681 = vmul.f32 %v5606, %v5606
      %v5682 = vmul.f32 %v5607, %v5607
      %v5683 = vmul.f32 %v5608, %v5608
      %v5684 = vmul.f32 %v5609, %v5609
      %v5685 = vmul.f32 %v5610, %v5610
      %v5686 = vmul.f32 %v5611, %v5611
      %v5687 = vmul.f32 %v5612, %v5612
      %v5688 = vmul.f32 %v5613, %v5613
      %v5689 = vmul.f32 %v5614, %v5614
      %v5690 = vsel %vm539, %v5674, 0.0
      %v5691 = vsel %vm539, %v5675, 0.0
      %v5692 = vadd.f32 %v5690, %v5691
      %v5693 = vsel %vm539, %v5676, 0.0
      %v5694 = vadd.f32 %v5692, %v5693
      %v5695 = vsel %vm539, %v5677, 0.0
      %v5696 = vadd.f32 %v5694, %v5695
      %v5697 = vsel %vm539, %v5678, 0.0
      %v5698 = vadd.f32 %v5696, %v5697
      %v5699 = vsel %vm539, %v5679, 0.0
      %v5700 = vadd.f32 %v5698, %v5699
      %v5701 = vsel %vm539, %v5680, 0.0
      %v5702 = vadd.f32 %v5700, %v5701
      %v5703 = vsel %vm539, %v5681, 0.0
      %v5704 = vadd.f32 %v5702, %v5703
      %v5705 = vsel %vm539, %v5682, 0.0
      %v5706 = vadd.f32 %v5704, %v5705
      %v5707 = vsel %vm539, %v5683, 0.0
      %v5708 = vadd.f32 %v5706, %v5707
      %v5709 = vsel %vm539, %v5684, 0.0
      %v5710 = vadd.f32 %v5708, %v5709
      %v5711 = vsel %vm539, %v5685, 0.0
      %v5712 = vadd.f32 %v5710, %v5711
      %v5713 = vsel %vm539, %v5686, 0.0
      %v5714 = vadd.f32 %v5712, %v5713
      %v5715 = vsel %vm539, %v5687, 0.0
      %v5716 = vadd.f32 %v5714, %v5715
      %v5717 = vsel %vm539, %v5688, 0.0
      %v5718 = vadd.f32 %v5716, %v5717
      %v5719 = vsel %vm539, %v5689, 0.0
      %v5720 = vadd.f32 %v5718, %v5719
      %v5721 = vrot.slane %v5720, 4
      %v5722 = vadd.f32 %v5720, %v5721
      %v5723 = vrot.slane %v5722, 2
      %v5724 = vadd.f32 %v5722, %v5723
      %v5725 = vrot.slane %v5724, 1
      %v5726 = vadd.f32 %v5724, %v5725
      %v5727 = vld [vmem:[%s380] sm:$0x3]
      %vm5728 = vcmask 1040384
      %v5729 = vsel %vm5728, %v5673, %v5726
      %v5730 = vadd.f32 %v5727, %v5729
      %vm5731 = vcmask 58368
      %5732 = vst.msk [vmem:[%s380] sm:$0x3] %vm5731, %v5730
      %p5733 = scmp.lt.s32.totalorder %s22, 1
      %s5734 = scalar_select %p5733, %s22, 1
      %p5735 = scmp.lt.s32.totalorder %s23, 3
      %s5736 = scalar_select %p5735, %s23, 3
      %s5737 = smul.addr %s5736, 16
      %s5738 = smul.addr %s5734, 64
      %s5739 = sadd.s32 %s5737, %s5738
      %s5740 = smul.addr %s5739, 8
      %s5741 = scalar_lea.vmem %s5, %s5740
      %p5742 = scmp.lt.s32.totalorder %s22, 1
      %s5743 = scalar_select %p5742, %s22, 1
      %s5744 = smul.addr %s5743, 2
      %s5745 = scalar_lea.vmem %s6, %s5744
      // Predicated region
      $region45: #{basic_res_block_forward.4} parent=39 // pred_check
        %p5746 = pneg %p180
      $region46: #{basic_res_block_forward.4} parent=39 // pred_check_branch
        %5748 = sbr.rel (%p5746) target = $region48
      $region47: #{basic_res_block_forward.4} parent=39 // pred_region
        _
      $region48: #{basic_res_block_forward.4} parent=39 // pred_fallthru
        _
      // Predicated region
      $region49: #{basic_res_block_forward.4} parent=39 // pred_check
        %p5749 = pneg %p206
      $region50: #{basic_res_block_forward.4} parent=39 // pred_check_branch
        %5751 = sbr.rel (%p5749) target = $region52
      $region51: #{basic_res_block_forward.4} parent=39 // pred_region
        _
      $region52: #{basic_res_block_forward.4} parent=39 // pred_fallthru
        _
    $region40: #{basic_res_block_forward.4} parent=5 // pred_fallthru
      _
    %p5752 = scmp.le.s32.totalorder 2, %s13
    // Predicated region
    $region53: #{basic_res_block_forward.4} parent=5 // pred_check
      %p5753 = pneg %p5752
    $region54: #{basic_res_block_forward.4} parent=5 // pred_check_branch
      %5755 = sbr.rel (%p5753) target = $region56
    $region55: #{basic_res_block_forward.4} parent=5 // pred_region
      %s5756 = ssub.s32 %s13, 2
      // Predicated region
      $region57: #{basic_res_block_forward.4} parent=55 // pred_check
        %p5757 = pneg %p186
      $region58: #{basic_res_block_forward.4} parent=55 // pred_check_branch
        %5759 = sbr.rel (%p5757) target = $region60
      $region59: #{basic_res_block_forward.4} parent=55 // pred_region
        %p5760 = scmp.lt.s32.totalorder %s24, 1
        %s5761 = scalar_select %p5760, %s24, 1
        %p5762 = scmp.lt.s32.totalorder %s25, 3
        %s5763 = scalar_select %p5762, %s25, 3
        %s5764 = smul.addr %s5763, 16
        %s5765 = smul.addr %s5761, 64
        %s5766 = sadd.s32 %s5764, %s5765
        %s5767 = smul.addr %s5766, 8
        %s5768 = scalar_lea.vmem %s5, %s5767
      $region60: #{basic_res_block_forward.4} parent=55 // pred_fallthru
        _
      // Predicated region
      $region61: #{basic_res_block_forward.4} parent=55 // pred_check
        %p5769 = pneg %p212
      $region62: #{basic_res_block_forward.4} parent=55 // pred_check_branch
        %5771 = sbr.rel (%p5769) target = $region64
      $region63: #{basic_res_block_forward.4} parent=55 // pred_region
        %p5772 = scmp.lt.s32.totalorder %s24, 1
        %s5773 = scalar_select %p5772, %s24, 1
        %s5774 = smul.addr %s5773, 2
        %s5775 = scalar_lea.vmem %s6, %s5774
      $region64: #{basic_res_block_forward.4} parent=55 // pred_fallthru
        _
    $region56: #{basic_res_block_forward.4} parent=5 // pred_fallthru
      _
  $region6: #{basic_res_block_forward.4} parent=0 // loop_footer
    %s17 = sadd.s32 1, %s13
  $region7: #{basic_res_block_forward.4} parent=0 // loop_footer_branch
    %12 = sbr.rel target = $region3
  $region8: #{basic_res_block_forward.4} parent=0 // loop_exit
    _

</llo_original>
